<compile_context>
chip_gen: v7x
topology: tpu7x:2x2x1
jax: 0.10.0
libtpu: 0.0.40
codegen_flags: <defaults>
</compile_context>

<pallas_src>
import functools

import jax
import jax.numpy as jnp
from jax import lax
from jax.experimental import pallas as pl
from jax.experimental.pallas import tpu as pltpu

BN_EPS = 1e-5


def _round_up(x, m):
    return -(-x // m) * m


# ----------------------------------------------------------------------------
# Pallas kernel 1: tiled matmul, bf16 operands, f32 accumulation, fused
# per-column shift (BN), optional fused residual add, optional ReLU.
# Used for every 1x1 conv (conv1, conv3, downsample).
# ----------------------------------------------------------------------------
def _mm_kernel(*refs, relu, has_residual):
    if has_residual:
        a_ref, b_ref, t_ref, r_ref, o_ref, acc_ref = refs
    else:
        a_ref, b_ref, t_ref, o_ref, acc_ref = refs
        r_ref = None

    @pl.when(pl.program_id(2) == 0)
    def _():
        acc_ref[...] = jnp.zeros_like(acc_ref)

    acc_ref[...] += jnp.dot(a_ref[...], b_ref[...],
                            preferred_element_type=jnp.float32)

    @pl.when(pl.program_id(2) == pl.num_programs(2) - 1)
    def _():
        y = acc_ref[...] + t_ref[...]
        if has_residual:
            y = y + r_ref[...]
        if relu:
            y = jnp.maximum(y, 0.0)
        o_ref[...] = y.astype(o_ref.dtype)


def matmul_fused(a, b, shift, *, relu, residual=None):
    """out = relu?(a @ b + shift [+ residual]); a is cast to bf16, b is bf16."""
    M, K = a.shape
    Kb, Nc = b.shape
    assert K == Kb

    # Tile selection: full-dim K tile when small (no zero-padding of K), 256
    # wide N tiles when the channel count allows (fills the 256-wide MXU on
    # v6e/v7x), 128-row M tiles.
    tm = 128 if M >= 128 else _round_up(M, 8)
    if Nc % 256 == 0:
        tn = 256
    elif Nc % 128 == 0:
        tn = 128
    else:
        tn = Nc
    tk = K if K <= 2048 else 2048

    Mp = _round_up(M, tm)
    Np = _round_up(Nc, tn)
    Kp = _round_up(K, tk)

    a_p = jnp.pad(a.astype(jnp.bfloat16), ((0, Mp - M), (0, Kp - K)))
    b_p = jnp.pad(b.astype(jnp.bfloat16), ((0, Kp - K), (0, Np - Nc)))
    t_p = jnp.pad(shift.reshape(1, Nc).astype(jnp.float32),
                  ((0, 0), (0, Np - Nc)))

    operands = [a_p, b_p, t_p]
    in_specs = [
        pl.BlockSpec((tm, tk), lambda i, j, k: (i, k)),
        pl.BlockSpec((tk, tn), lambda i, j, k: (k, j)),
        pl.BlockSpec((1, tn), lambda i, j, k: (0, j)),
    ]
    has_res = residual is not None
    if has_res:
        r_p = jnp.pad(residual.astype(jnp.float32),
                      ((0, Mp - M), (0, Np - Nc)))
        operands.append(r_p)
        # index_map ignores k -> fetched once per (i, j), used at last k step.
        in_specs.append(pl.BlockSpec((tm, tn), lambda i, j, k: (i, j)))

    out = pl.pallas_call(
        functools.partial(_mm_kernel, relu=relu, has_residual=has_res),
        out_shape=jax.ShapeDtypeStruct((Mp, Np), jnp.float32),
        grid_spec=pltpu.PrefetchScalarGridSpec(
            num_scalar_prefetch=0,
            grid=(Mp // tm, Np // tn, Kp // tk),
            in_specs=in_specs,
            out_specs=pl.BlockSpec((tm, tn), lambda i, j, k: (i, j)),
            scratch_shapes=[pltpu.VMEM((tm, tn), jnp.float32)],
        ),
        compiler_params=pltpu.CompilerParams(
            dimension_semantics=("parallel", "parallel", "arbitrary")),
    )(*operands)
    return out[:M, :Nc]


# ----------------------------------------------------------------------------
# Pallas kernel 2: direct 3x3 conv (stride 1, arbitrary dilation) with fused
# BN shift + ReLU.  Reads the padded NHWC input once; the 9 taps are applied
# in-register via 9 MXU dots accumulated in f32 (no im2col materialization).
# ----------------------------------------------------------------------------
def _conv3x3_kernel(x_ref, w_ref, t_ref, o_ref, *, H, W, dilation, relu):
    d = dilation
    cout = o_ref.shape[-1]
    cin = x_ref.shape[-1]
    acc = jnp.zeros((H * W, cout), jnp.float32)
    for kh in range(3):
        for kw in range(3):
            tap = x_ref[pl.ds(kh * d, H), pl.ds(kw * d, W), :]
            tap = tap.reshape(H * W, cin)
            acc = acc + jnp.dot(tap, w_ref[kh * 3 + kw],
                                preferred_element_type=jnp.float32)
    y = acc + t_ref[...]
    if relu:
        y = jnp.maximum(y, 0.0)
    o_ref[...] = y.reshape(H, W, cout).astype(o_ref.dtype)


def conv3x3_bn_act(x, w9, shift, *, dilation, relu):
    """x: (N, H, W, Cin) f32; w9: (9, Cin, Cout) bf16 (BN scale folded)."""
    N, H, W, C = x.shape
    d = dilation
    Cout = w9.shape[-1]
    if Cout % 256 == 0:
        tn = 256
    elif Cout % 128 == 0:
        tn = 128
    else:
        tn = Cout

    xp = jnp.pad(x, ((0, 0), (d, d), (d, d), (0, 0))).astype(jnp.bfloat16)
    Hp, Wp = H + 2 * d, W + 2 * d

    return pl.pallas_call(
        functools.partial(_conv3x3_kernel, H=H, W=W, dilation=d, relu=relu),
        out_shape=jax.ShapeDtypeStruct((N, H, W, Cout), jnp.float32),
        grid_spec=pltpu.PrefetchScalarGridSpec(
            num_scalar_prefetch=0,
            grid=(N, Cout // tn),
            in_specs=[
                pl.BlockSpec((None, Hp, Wp, C), lambda n, j: (n, 0, 0, 0)),
                pl.BlockSpec((9, C, tn), lambda n, j: (0, 0, j)),
                pl.BlockSpec((1, tn), lambda n, j: (0, j)),
            ],
            out_specs=pl.BlockSpec((None, H, W, tn), lambda n, j: (n, 0, 0, j)),
        ),
        compiler_params=pltpu.CompilerParams(
            dimension_semantics=("parallel", "parallel")),
    )(xp, w9, shift.reshape(1, Cout).astype(jnp.float32))


# ----------------------------------------------------------------------------
# Wrappers (NHWC activations).
# ----------------------------------------------------------------------------
def conv1x1_bn_act(x, w, shift, *, relu, residual=None):
    """x: (N, H, W, Cin); w: (Cin, Cout) bf16 (BN scale folded)."""
    N, H, W, C = x.shape
    a = x.reshape(N * H * W, C)
    res = None
    if residual is not None:
        res = residual.reshape(N * H * W, residual.shape[-1])
    out = matmul_fused(a, w, shift, relu=relu, residual=res)
    return out.reshape(N, H, W, -1)


def bottleneck_forward(x_nchw, params, *, stride=1, dilation=1):
    x = jnp.transpose(x_nchw, (0, 2, 3, 1))  # NHWC

    h = conv1x1_bn_act(x, params["conv1_w"], params["conv1_shift"], relu=True)
    h = conv3x3_bn_act(h, params["conv2_w"], params["conv2_shift"],
                       dilation=dilation, relu=True)
    if stride > 1:
        # TODO(synk): strided 3x3 is computed at stride 1 then subsampled
        # (bit-exact with PyTorch, but not minimal work for stride > 1).
        h = h[:, ::stride, ::stride, :]

    if "down_w" in params:
        xs = x[:, ::stride, ::stride, :] if stride > 1 else x
        identity = conv1x1_bn_act(xs, params["down_w"], params["down_shift"],
                                  relu=False)
    else:
        identity = x

    out = conv1x1_bn_act(h, params["conv3_w"], params["conv3_shift"],
                         relu=True, residual=identity)
    return jnp.transpose(out, (0, 3, 1, 2))  # back to NCHW


# ----------------------------------------------------------------------------
# Parameters: conv weights + inference-mode BN buffers, with BN folded once
# (host-side) into bf16 weight matrices + f32 shift vectors.
# ----------------------------------------------------------------------------
def fold_conv_bn(w, bn, kind):
    gamma, beta, mean, var = bn
    scale = gamma / jnp.sqrt(var + BN_EPS)
    shift = beta - mean * scale
    cout = w.shape[0]
    if kind == "1x1":
        wm = w.reshape(cout, -1).T * scale[None, :]                 # (Cin, Cout)
    else:  # 3x3 -> (KH*KW, Cin, Cout)
        wm = w.transpose(2, 3, 1, 0).reshape(9, w.shape[1], cout) * scale[None, None, :]
    return wm.astype(jnp.bfloat16), shift.astype(jnp.float32)


def build_params(key, inplanes, planes, *, stride=1, base_width=64, groups=1):
    assert groups == 1 and base_width == 64  # TODO(synk): grouped conv not implemented
    width = int(planes * (base_width / 64.0)) * groups
    expansion = 4
    keys = jax.random.split(key, 16)

    def kaiming(k, shape):
        fan_out = shape[0] * shape[2] * shape[3]
        return jax.random.normal(k, shape, jnp.float32) * (2.0 / fan_out) ** 0.5

    def bn_params(k, c):
        k1, k2, k3, k4 = jax.random.split(k, 4)
        gamma = 1.0 + 0.2 * jax.random.normal(k1, (c,), jnp.float32)
        beta = 0.1 * jax.random.normal(k2, (c,), jnp.float32)
        mean = 0.1 * jax.random.normal(k3, (c,), jnp.float32)
        var = 1.0 + 0.2 * jax.random.uniform(k4, (c,), jnp.float32)
        return (gamma, beta, mean, var)

    raw = {}
    raw["w1"] = kaiming(keys[0], (width, inplanes, 1, 1))
    raw["bn1"] = bn_params(keys[1], width)
    raw["w2"] = kaiming(keys[2], (width, width, 3, 3))
    raw["bn2"] = bn_params(keys[3], width)
    raw["w3"] = kaiming(keys[4], (planes * expansion, width, 1, 1))
    raw["bn3"] = bn_params(keys[5], planes * expansion)
    if stride != 1 or inplanes != planes * expansion:
        raw["wd"] = kaiming(keys[6], (planes * expansion, inplanes, 1, 1))
        raw["bnd"] = bn_params(keys[7], planes * expansion)

    params = {}
    params["conv1_w"], params["conv1_shift"] = fold_conv_bn(raw["w1"], raw["bn1"], "1x1")
    params["conv2_w"], params["conv2_shift"] = fold_conv_bn(raw["w2"], raw["bn2"], "3x3")
    params["conv3_w"], params["conv3_shift"] = fold_conv_bn(raw["w3"], raw["bn3"], "1x1")
    if "wd" in raw:
        params["down_w"], params["down_shift"] = fold_conv_bn(raw["wd"], raw["bnd"], "1x1")
    return raw, params


# ----------------------------------------------------------------------------
# Pure-JAX reference (f32) for correctness checking.
# ----------------------------------------------------------------------------
def ref_bottleneck(x, raw, *, stride, dilation):
    def conv(x, w, stride=1, dilation=1, padding=0):
        return lax.conv_general_dilated(
            x, w, window_strides=(stride, stride),
            padding=((padding, padding), (padding, padding)),
            rhs_dilation=(dilation, dilation),
            dimension_numbers=("NCHW", "OIHW", "NCHW"))

    def bn(x, p):
        gamma, beta, mean, var = p
        s = gamma / jnp.sqrt(var + BN_EPS)
        b = beta - mean * s
        return x * s[None, :, None, None] + b[None, :, None, None]

    out = jax.nn.relu(bn(conv(x, raw["w1"]), raw["bn1"]))
    out = jax.nn.relu(bn(conv(out, raw["w2"], stride, dilation, dilation), raw["bn2"]))
    out = bn(conv(out, raw["w3"]), raw["bn3"])
    if "wd" in raw:
        identity = bn(conv(x, raw["wd"], stride), raw["bnd"])
    else:
        identity = x
    return jax.nn.relu(out + identity)


# ----------------------------------------------------------------------------
# Demo / self-test.
# ----------------------------------------------------------------------------
if __name__ == "__main__":
    key = jax.random.PRNGKey(0)

    configs = [
        # (inplanes, planes, stride, dilation)  -- downsample iff stride!=1 or Cin != 4*planes
        (64, 32, 1, 1),    # channel-expanding block with downsample
        (128, 32, 2, 1),   # strided block with strided downsample
        (128, 32, 1, 2),   # dilated block, identity shortcut (no downsample)
    ]

    H = W = 16
    N = 2
    for inplanes, planes, stride, dilation in configs:
        key, kp, kx = jax.random.split(key, 3)
        raw, params = build_params(kp, inplanes, planes, stride=stride)
        x = jax.random.normal(kx, (N, inplanes, H, W), jnp.float32)

        fwd = jax.jit(functools.partial(bottleneck_forward,
                                        stride=stride, dilation=dilation))
        out = jax.block_until_ready(fwd(x, params))

        oh = (H + stride - 1) // stride
        assert out.shape == (N, planes * 4, oh, oh), out.shape

        ref = ref_bottleneck(x, raw, stride=stride, dilation=dilation)
        err = jnp.linalg.norm(out - ref) / (jnp.linalg.norm(ref) + 1e-6)
        assert float(err) < 5e-2, (inplanes, planes, stride, dilation, float(err))

    print("KERNEL_OK")
</pallas_src>

<mosaic_0001>
module attributes {stable_mosaic.version = 11 : i64} {
  func.func @_mm_kernel(%arg0: i32, %arg1: i32, %arg2: i32, %arg3: memref<128x64xbf16, #tpu.memory_space<vmem>>, %arg4: memref<64x32xbf16, #tpu.memory_space<vmem>>, %arg5: memref<1x32xf32, #tpu.memory_space<vmem>>, %arg6: memref<128x32xf32, #tpu.memory_space<vmem>>, %arg7: memref<128x32xf32, #tpu.memory_space<vmem>>) attributes {dimension_semantics = [#tpu.dimension_semantics<parallel>, #tpu.dimension_semantics<parallel>, #tpu.dimension_semantics<arbitrary>], iteration_bounds = array<i64: 4, 1, 1>, scalar_prefetch = 0 : i64, scratch_operands = 1 : i64, tpu.core_type = #tpu.core_type<tc>, window_params = [{transform_indices = @transform_0, window_bounds = array<i64: 128, 64>}, {transform_indices = @transform_1, window_bounds = array<i64: 64, 32>}, {transform_indices = @transform_2, window_bounds = array<i64: 1, 32>}, {transform_indices = @transform_3, window_bounds = array<i64: 128, 32>}]} {
    %c0_i32 = arith.constant 0 : i32
    %0 = arith.cmpi eq, %arg2, %c0_i32 : i32
    %1 = arith.extui %0 : i1 to i32
    %c0_i32_0 = arith.constant 0 : i32
    %2 = arith.cmpi ne, %1, %c0_i32_0 : i32
    scf.if %2 {
      %cst_10 = arith.constant 0.000000e+00 : f32
      %12 = vector.broadcast %cst_10 : f32 to vector<128x32xf32>
      %c0_11 = arith.constant 0 : index
      %c0_12 = arith.constant 0 : index
      %13 = vector.load %arg7[%c0_11, %c0_12] : memref<128x32xf32, #tpu.memory_space<vmem>>, vector<128x32xf32>
      tpu.vector_store %arg7[%c0_11, %c0_12], %12 {strides = array<i32>} : memref<128x32xf32, #tpu.memory_space<vmem>>, vector<128x32xf32>,
    } else {
    }
    %c0 = arith.constant 0 : index
    %c0_1 = arith.constant 0 : index
    %3 = vector.load %arg7[%c0, %c0_1] : memref<128x32xf32, #tpu.memory_space<vmem>>, vector<128x32xf32>
    %c0_2 = arith.constant 0 : index
    %c0_3 = arith.constant 0 : index
    %4 = vector.load %arg3[%c0_2, %c0_3] : memref<128x64xbf16, #tpu.memory_space<vmem>>, vector<128x64xbf16>
    %c0_4 = arith.constant 0 : index
    %c0_5 = arith.constant 0 : index
    %5 = vector.load %arg4[%c0_4, %c0_5] : memref<64x32xbf16, #tpu.memory_space<vmem>>, vector<64x32xbf16>
    %cst = arith.constant dense<0.000000e+00> : vector<128x32xf32>
    %6 = tpu.matmul %4, %5, %cst {dimension_numbers = #tpu.dot_dimension_numbers<[1], [0], [0], [1], [0, 0, 1, 1], [], []>} : vector<128x64xbf16>, vector<64x32xbf16>, vector<128x32xf32> -> vector<128x32xf32>
    %7 = arith.addf %3, %6 : vector<128x32xf32>
    %c0_6 = arith.constant 0 : index
    %c0_7 = arith.constant 0 : index
    %8 = vector.load %arg7[%c0_6, %c0_7] : memref<128x32xf32, #tpu.memory_space<vmem>>, vector<128x32xf32>
    tpu.vector_store %arg7[%c0_6, %c0_7], %7 {strides = array<i32>} : memref<128x32xf32, #tpu.memory_space<vmem>>, vector<128x32xf32>,
    %c0_i32_8 = arith.constant 0 : i32
    %9 = arith.cmpi eq, %arg2, %c0_i32_8 : i32
    %10 = arith.extui %9 : i1 to i32
    %c0_i32_9 = arith.constant 0 : i32
    %11 = arith.cmpi ne, %10, %c0_i32_9 : i32
    scf.if %11 {
      %c0_10 = arith.constant 0 : index
      %c0_11 = arith.constant 0 : index
      %12 = vector.load %arg7[%c0_10, %c0_11] : memref<128x32xf32, #tpu.memory_space<vmem>>, vector<128x32xf32>
      %c0_12 = arith.constant 0 : index
      %c0_13 = arith.constant 0 : index
      %13 = vector.load %arg5[%c0_12, %c0_13] : memref<1x32xf32, #tpu.memory_space<vmem>>, vector<1x32xf32>
      %14 = vector.broadcast %13 : vector<1x32xf32> to vector<128x32xf32>
      %15 = arith.addf %12, %14 : vector<128x32xf32>
      %cst_14 = arith.constant 0.000000e+00 : f32
      %16 = vector.broadcast %cst_14 : f32 to vector<128x32xf32>
      %17 = arith.maximumf %15, %16 : vector<128x32xf32>
      %c0_15 = arith.constant 0 : index
      %c0_16 = arith.constant 0 : index
      %18 = vector.load %arg6[%c0_15, %c0_16] : memref<128x32xf32, #tpu.memory_space<vmem>>, vector<128x32xf32>
      tpu.vector_store %arg6[%c0_15, %c0_16], %17 {strides = array<i32>} : memref<128x32xf32, #tpu.memory_space<vmem>>, vector<128x32xf32>,
    } else {
    }
    return
  }
  func.func @transform_0(%arg0: i32, %arg1: i32, %arg2: i32) -> (i32, i32) {
    %c0_i32 = arith.constant 0 : i32
    return %arg0, %arg2 : i32, i32
  }
  func.func @transform_1(%arg0: i32, %arg1: i32, %arg2: i32) -> (i32, i32) {
    %c0_i32 = arith.constant 0 : i32
    return %arg2, %arg1 : i32, i32
  }
  func.func @transform_2(%arg0: i32, %arg1: i32, %arg2: i32) -> (i32, i32) {
    %c0_i32 = arith.constant 0 : i32
    %c0_i32_0 = arith.constant 0 : i32
    return %c0_i32, %arg1 : i32, i32
  }
  func.func @transform_3(%arg0: i32, %arg1: i32, %arg2: i32) -> (i32, i32) {
    %c0_i32 = arith.constant 0 : i32
    return %arg0, %arg1 : i32, i32
  }
}

module attributes {stable_mosaic.version = 11 : i64} {
  func.func @_conv3x3_kernel(%arg0: i32, %arg1: i32, %arg2: memref<1x18x18x32xbf16, #tpu.memory_space<vmem>>, %arg3: memref<9x32x32xbf16, #tpu.memory_space<vmem>>, %arg4: memref<1x32xf32, #tpu.memory_space<vmem>>, %arg5: memref<1x16x16x32xf32, #tpu.memory_space<vmem>>) attributes {dimension_semantics = [#tpu.dimension_semantics<parallel>, #tpu.dimension_semantics<parallel>], iteration_bounds = array<i64: 2, 1>, scalar_prefetch = 0 : i64, scratch_operands = 0 : i64, tpu.core_type = #tpu.core_type<tc>, window_params = [{transform_indices = @transform_0, window_bounds = array<i64: 1, 18, 18, 32>}, {transform_indices = @transform_1, window_bounds = array<i64: 9, 32, 32>}, {transform_indices = @transform_2, window_bounds = array<i64: 1, 32>}, {transform_indices = @transform_3, window_bounds = array<i64: 1, 16, 16, 32>}]} {
    %cst = arith.constant 0.000000e+00 : f32
    %0 = vector.broadcast %cst : f32 to vector<256x32xf32>
    %c0 = arith.constant 0 : index
    %c0_0 = arith.constant 0 : index
    %c0_1 = arith.constant 0 : index
    %c0_2 = arith.constant 0 : index
    %1 = vector.load %arg2[%c0, %c0_0, %c0_1, %c0_2] : memref<1x18x18x32xbf16, #tpu.memory_space<vmem>>, vector<1x16x16x32xbf16>
    %2 = vector.shape_cast %1 : vector<1x16x16x32xbf16> to vector<16x16x32xbf16>
    %3 = vector.shape_cast %2 : vector<16x16x32xbf16> to vector<256x32xbf16>
    %c0_3 = arith.constant 0 : index
    %c0_4 = arith.constant 0 : index
    %c0_5 = arith.constant 0 : index
    %4 = vector.load %arg3[%c0_3, %c0_4, %c0_5] : memref<9x32x32xbf16, #tpu.memory_space<vmem>>, vector<1x32x32xbf16>
    %5 = vector.shape_cast %4 : vector<1x32x32xbf16> to vector<32x32xbf16>
    %cst_6 = arith.constant dense<0.000000e+00> : vector<256x32xf32>
    %6 = tpu.matmul %3, %5, %cst_6 {dimension_numbers = #tpu.dot_dimension_numbers<[1], [0], [0], [1], [0, 0, 1, 1], [], []>} : vector<256x32xbf16>, vector<32x32xbf16>, vector<256x32xf32> -> vector<256x32xf32>
    %7 = arith.addf %0, %6 : vector<256x32xf32>
    %c0_7 = arith.constant 0 : index
    %c0_8 = arith.constant 0 : index
    %c1 = arith.constant 1 : index
    %c0_9 = arith.constant 0 : index
    %8 = vector.load %arg2[%c0_7, %c0_8, %c1, %c0_9] : memref<1x18x18x32xbf16, #tpu.memory_space<vmem>>, vector<1x16x16x32xbf16>
    %9 = vector.shape_cast %8 : vector<1x16x16x32xbf16> to vector<16x16x32xbf16>
    %10 = vector.shape_cast %9 : vector<16x16x32xbf16> to vector<256x32xbf16>
    %c1_10 = arith.constant 1 : index
    %c0_11 = arith.constant 0 : index
    %c0_12 = arith.constant 0 : index
    %11 = vector.load %arg3[%c1_10, %c0_11, %c0_12] : memref<9x32x32xbf16, #tpu.memory_space<vmem>>, vector<1x32x32xbf16>
    %12 = vector.shape_cast %11 : vector<1x32x32xbf16> to vector<32x32xbf16>
    %cst_13 = arith.constant dense<0.000000e+00> : vector<256x32xf32>
    %13 = tpu.matmul %10, %12, %cst_13 {dimension_numbers = #tpu.dot_dimension_numbers<[1], [0], [0], [1], [0, 0, 1, 1], [], []>} : vector<256x32xbf16>, vector<32x32xbf16>, vector<256x32xf32> -> vector<256x32xf32>
    %14 = arith.addf %7, %13 : vector<256x32xf32>
    %c0_14 = arith.constant 0 : index
    %c0_15 = arith.constant 0 : index
    %c2 = arith.constant 2 : index
    %c0_16 = arith.constant 0 : index
    %15 = vector.load %arg2[%c0_14, %c0_15, %c2, %c0_16] : memref<1x18x18x32xbf16, #tpu.memory_space<vmem>>, vector<1x16x16x32xbf16>
    %16 = vector.shape_cast %15 : vector<1x16x16x32xbf16> to vector<16x16x32xbf16>
    %17 = vector.shape_cast %16 : vector<16x16x32xbf16> to vector<256x32xbf16>
    %c2_17 = arith.constant 2 : index
    %c0_18 = arith.constant 0 : index
    %c0_19 = arith.constant 0 : index
    %18 = vector.load %arg3[%c2_17, %c0_18, %c0_19] : memref<9x32x32xbf16, #tpu.memory_space<vmem>>, vector<1x32x32xbf16>
    %19 = vector.shape_cast %18 : vector<1x32x32xbf16> to vector<32x32xbf16>
    %cst_20 = arith.constant dense<0.000000e+00> : vector<256x32xf32>
    %20 = tpu.matmul %17, %19, %cst_20 {dimension_numbers = #tpu.dot_dimension_numbers<[1], [0], [0], [1], [0, 0, 1, 1], [], []>} : vector<256x32xbf16>, vector<32x32xbf16>, vector<256x32xf32> -> vector<256x32xf32>
    %21 = arith.addf %14, %20 : vector<256x32xf32>
    %c0_21 = arith.constant 0 : index
    %c1_22 = arith.constant 1 : index
    %c0_23 = arith.constant 0 : index
    %c0_24 = arith.constant 0 : index
    %22 = vector.load %arg2[%c0_21, %c1_22, %c0_23, %c0_24] : memref<1x18x18x32xbf16, #tpu.memory_space<vmem>>, vector<1x16x16x32xbf16>
    %23 = vector.shape_cast %22 : vector<1x16x16x32xbf16> to vector<16x16x32xbf16>
    %24 = vector.shape_cast %23 : vector<16x16x32xbf16> to vector<256x32xbf16>
    %c3 = arith.constant 3 : index
    %c0_25 = arith.constant 0 : index
    %c0_26 = arith.constant 0 : index
    %25 = vector.load %arg3[%c3, %c0_25, %c0_26] : memref<9x32x32xbf16, #tpu.memory_space<vmem>>, vector<1x32x32xbf16>
    %26 = vector.shape_cast %25 : vector<1x32x32xbf16> to vector<32x32xbf16>
    %cst_27 = arith.constant dense<0.000000e+00> : vector<256x32xf32>
    %27 = tpu.matmul %24, %26, %cst_27 {dimension_numbers = #tpu.dot_dimension_numbers<[1], [0], [0], [1], [0, 0, 1, 1], [], []>} : vector<256x32xbf16>, vector<32x32xbf16>, vector<256x32xf32> -> vector<256x32xf32>
    %28 = arith.addf %21, %27 : vector<256x32xf32>
    %c0_28 = arith.constant 0 : index
    %c1_29 = arith.constant 1 : index
    %c1_30 = arith.constant 1 : index
    %c0_31 = arith.constant 0 : index
    %29 = vector.load %arg2[%c0_28, %c1_29, %c1_30, %c0_31] : memref<1x18x18x32xbf16, #tpu.memory_space<vmem>>, vector<1x16x16x32xbf16>
    %30 = vector.shape_cast %29 : vector<1x16x16x32xbf16> to vector<16x16x32xbf16>
    %31 = vector.shape_cast %30 : vector<16x16x32xbf16> to vector<256x32xbf16>
    %c4 = arith.constant 4 : index
    %c0_32 = arith.constant 0 : index
    %c0_33 = arith.constant 0 : index
    %32 = vector.load %arg3[%c4, %c0_32, %c0_33] : memref<9x32x32xbf16, #tpu.memory_space<vmem>>, vector<1x32x32xbf16>
    %33 = vector.shape_cast %32 : vector<1x32x32xbf16> to vector<32x32xbf16>
    %cst_34 = arith.constant dense<0.000000e+00> : vector<256x32xf32>
    %34 = tpu.matmul %31, %33, %cst_34 {dimension_numbers = #tpu.dot_dimension_numbers<[1], [0], [0], [1], [0, 0, 1, 1], [], []>} : vector<256x32xbf16>, vector<32x32xbf16>, vector<256x32xf32> -> vector<256x32xf32>
    %35 = arith.addf %28, %34 : vector<256x32xf32>
    %c0_35 = arith.constant 0 : index
    %c1_36 = arith.constant 1 : index
    %c2_37 = arith.constant 2 : index
    %c0_38 = arith.constant 0 : index
    %36 = vector.load %arg2[%c0_35, %c1_36, %c2_37, %c0_38] : memref<1x18x18x32xbf16, #tpu.memory_space<vmem>>, vector<1x16x16x32xbf16>
    %37 = vector.shape_cast %36 : vector<1x16x16x32xbf16> to vector<16x16x32xbf16>
    %38 = vector.shape_cast %37 : vector<16x16x32xbf16> to vector<256x32xbf16>
    %c5 = arith.constant 5 : index
    %c0_39 = arith.constant 0 : index
    %c0_40 = arith.constant 0 : index
    %39 = vector.load %arg3[%c5, %c0_39, %c0_40] : memref<9x32x32xbf16, #tpu.memory_space<vmem>>, vector<1x32x32xbf16>
    %40 = vector.shape_cast %39 : vector<1x32x32xbf16> to vector<32x32xbf16>
    %cst_41 = arith.constant dense<0.000000e+00> : vector<256x32xf32>
    %41 = tpu.matmul %38, %40, %cst_41 {dimension_numbers = #tpu.dot_dimension_numbers<[1], [0], [0], [1], [0, 0, 1, 1], [], []>} : vector<256x32xbf16>, vector<32x32xbf16>, vector<256x32xf32> -> vector<256x32xf32>
    %42 = arith.addf %35, %41 : vector<256x32xf32>
    %c0_42 = arith.constant 0 : index
    %c2_43 = arith.constant 2 : index
    %c0_44 = arith.constant 0 : index
    %c0_45 = arith.constant 0 : index
    %43 = vector.load %arg2[%c0_42, %c2_43, %c0_44, %c0_45] : memref<1x18x18x32xbf16, #tpu.memory_space<vmem>>, vector<1x16x16x32xbf16>
    %44 = vector.shape_cast %43 : vector<1x16x16x32xbf16> to vector<16x16x32xbf16>
    %45 = vector.shape_cast %44 : vector<16x16x32xbf16> to vector<256x32xbf16>
    %c6 = arith.constant 6 : index
    %c0_46 = arith.constant 0 : index
    %c0_47 = arith.constant 0 : index
    %46 = vector.load %arg3[%c6, %c0_46, %c0_47] : memref<9x32x32xbf16, #tpu.memory_space<vmem>>, vector<1x32x32xbf16>
    %47 = vector.shape_cast %46 : vector<1x32x32xbf16> to vector<32x32xbf16>
    %cst_48 = arith.constant dense<0.000000e+00> : vector<256x32xf32>
    %48 = tpu.matmul %45, %47, %cst_48 {dimension_numbers = #tpu.dot_dimension_numbers<[1], [0], [0], [1], [0, 0, 1, 1], [], []>} : vector<256x32xbf16>, vector<32x32xbf16>, vector<256x32xf32> -> vector<256x32xf32>
    %49 = arith.addf %42, %48 : vector<256x32xf32>
    %c0_49 = arith.constant 0 : index
    %c2_50 = arith.constant 2 : index
    %c1_51 = arith.constant 1 : index
    %c0_52 = arith.constant 0 : index
    %50 = vector.load %arg2[%c0_49, %c2_50, %c1_51, %c0_52] : memref<1x18x18x32xbf16, #tpu.memory_space<vmem>>, vector<1x16x16x32xbf16>
    %51 = vector.shape_cast %50 : vector<1x16x16x32xbf16> to vector<16x16x32xbf16>
    %52 = vector.shape_cast %51 : vector<16x16x32xbf16> to vector<256x32xbf16>
    %c7 = arith.constant 7 : index
    %c0_53 = arith.constant 0 : index
    %c0_54 = arith.constant 0 : index
    %53 = vector.load %arg3[%c7, %c0_53, %c0_54] : memref<9x32x32xbf16, #tpu.memory_space<vmem>>, vector<1x32x32xbf16>
    %54 = vector.shape_cast %53 : vector<1x32x32xbf16> to vector<32x32xbf16>
    %cst_55 = arith.constant dense<0.000000e+00> : vector<256x32xf32>
    %55 = tpu.matmul %52, %54, %cst_55 {dimension_numbers = #tpu.dot_dimension_numbers<[1], [0], [0], [1], [0, 0, 1, 1], [], []>} : vector<256x32xbf16>, vector<32x32xbf16>, vector<256x32xf32> -> vector<256x32xf32>
    %56 = arith.addf %49, %55 : vector<256x32xf32>
    %c0_56 = arith.constant 0 : index
    %c2_57 = arith.constant 2 : index
    %c2_58 = arith.constant 2 : index
    %c0_59 = arith.constant 0 : index
    %57 = vector.load %arg2[%c0_56, %c2_57, %c2_58, %c0_59] : memref<1x18x18x32xbf16, #tpu.memory_space<vmem>>, vector<1x16x16x32xbf16>
    %58 = vector.shape_cast %57 : vector<1x16x16x32xbf16> to vector<16x16x32xbf16>
    %59 = vector.shape_cast %58 : vector<16x16x32xbf16> to vector<256x32xbf16>
    %c8 = arith.constant 8 : index
    %c0_60 = arith.constant 0 : index
    %c0_61 = arith.constant 0 : index
    %60 = vector.load %arg3[%c8, %c0_60, %c0_61] : memref<9x32x32xbf16, #tpu.memory_space<vmem>>, vector<1x32x32xbf16>
    %61 = vector.shape_cast %60 : vector<1x32x32xbf16> to vector<32x32xbf16>
    %cst_62 = arith.constant dense<0.000000e+00> : vector<256x32xf32>
    %62 = tpu.matmul %59, %61, %cst_62 {dimension_numbers = #tpu.dot_dimension_numbers<[1], [0], [0], [1], [0, 0, 1, 1], [], []>} : vector<256x32xbf16>, vector<32x32xbf16>, vector<256x32xf32> -> vector<256x32xf32>
    %63 = arith.addf %56, %62 : vector<256x32xf32>
    %c0_63 = arith.constant 0 : index
    %c0_64 = arith.constant 0 : index
    %64 = vector.load %arg4[%c0_63, %c0_64] : memref<1x32xf32, #tpu.memory_space<vmem>>, vector<1x32xf32>
    %65 = vector.broadcast %64 : vector<1x32xf32> to vector<256x32xf32>
    %66 = arith.addf %63, %65 : vector<256x32xf32>
    %cst_65 = arith.constant 0.000000e+00 : f32
    %67 = vector.broadcast %cst_65 : f32 to vector<256x32xf32>
    %68 = arith.maximumf %66, %67 : vector<256x32xf32>
    %69 = vector.shape_cast %68 : vector<256x32xf32> to vector<16x16x32xf32>
    %c0_66 = arith.constant 0 : index
    %c0_67 = arith.constant 0 : index
    %c0_68 = arith.constant 0 : index
    %c0_69 = arith.constant 0 : index
    %70 = vector.load %arg5[%c0_66, %c0_67, %c0_68, %c0_69] : memref<1x16x16x32xf32, #tpu.memory_space<vmem>>, vector<1x16x16x32xf32>
    %71 = vector.shape_cast %70 : vector<1x16x16x32xf32> to vector<16x16x32xf32>
    %72 = vector.shape_cast %69 : vector<16x16x32xf32> to vector<1x16x16x32xf32>
    tpu.vector_store %arg5[%c0_66, %c0_67, %c0_68, %c0_69], %72 {strides = array<i32>} : memref<1x16x16x32xf32, #tpu.memory_space<vmem>>, vector<1x16x16x32xf32>,
    return
  }
  func.func @transform_0(%arg0: i32, %arg1: i32) -> (i32, i32, i32, i32) {
    %c0_i32 = arith.constant 0 : i32
    %c0_i32_0 = arith.constant 0 : i32
    %c0_i32_1 = arith.constant 0 : i32
    %c0_i32_2 = arith.constant 0 : i32
    return %arg0, %c0_i32, %c0_i32_0, %c0_i32_1 : i32, i32, i32, i32
  }
  func.func @transform_1(%arg0: i32, %arg1: i32) -> (i32, i32, i32) {
    %c0_i32 = arith.constant 0 : i32
    %c0_i32_0 = arith.constant 0 : i32
    %c0_i32_1 = arith.constant 0 : i32
    return %c0_i32, %c0_i32_0, %arg1 : i32, i32, i32
  }
  func.func @transform_2(%arg0: i32, %arg1: i32) -> (i32, i32) {
    %c0_i32 = arith.constant 0 : i32
    %c0_i32_0 = arith.constant 0 : i32
    return %c0_i32, %arg1 : i32, i32
  }
  func.func @transform_3(%arg0: i32, %arg1: i32) -> (i32, i32, i32, i32) {
    %c0_i32 = arith.constant 0 : i32
    %c0_i32_0 = arith.constant 0 : i32
    %c0_i32_1 = arith.constant 0 : i32
    return %arg0, %c0_i32, %c0_i32_0, %arg1 : i32, i32, i32, i32
  }
}

module attributes {stable_mosaic.version = 11 : i64} {
  func.func @_mm_kernel(%arg0: i32, %arg1: i32, %arg2: i32, %arg3: memref<128x64xbf16, #tpu.memory_space<vmem>>, %arg4: memref<64x128xbf16, #tpu.memory_space<vmem>>, %arg5: memref<1x128xf32, #tpu.memory_space<vmem>>, %arg6: memref<128x128xf32, #tpu.memory_space<vmem>>, %arg7: memref<128x128xf32, #tpu.memory_space<vmem>>) attributes {dimension_semantics = [#tpu.dimension_semantics<parallel>, #tpu.dimension_semantics<parallel>, #tpu.dimension_semantics<arbitrary>], iteration_bounds = array<i64: 4, 1, 1>, scalar_prefetch = 0 : i64, scratch_operands = 1 : i64, tpu.core_type = #tpu.core_type<tc>, window_params = [{transform_indices = @transform_0, window_bounds = array<i64: 128, 64>}, {transform_indices = @transform_1, window_bounds = array<i64: 64, 128>}, {transform_indices = @transform_2, window_bounds = array<i64: 1, 128>}, {transform_indices = @transform_3, window_bounds = array<i64: 128, 128>}]} {
    %c0_i32 = arith.constant 0 : i32
    %0 = arith.cmpi eq, %arg2, %c0_i32 : i32
    %1 = arith.extui %0 : i1 to i32
    %c0_i32_0 = arith.constant 0 : i32
    %2 = arith.cmpi ne, %1, %c0_i32_0 : i32
    scf.if %2 {
      %cst_10 = arith.constant 0.000000e+00 : f32
      %12 = vector.broadcast %cst_10 : f32 to vector<128x128xf32>
      %c0_11 = arith.constant 0 : index
      %c0_12 = arith.constant 0 : index
      %13 = vector.load %arg7[%c0_11, %c0_12] : memref<128x128xf32, #tpu.memory_space<vmem>>, vector<128x128xf32>
      tpu.vector_store %arg7[%c0_11, %c0_12], %12 {strides = array<i32>} : memref<128x128xf32, #tpu.memory_space<vmem>>, vector<128x128xf32>,
    } else {
    }
    %c0 = arith.constant 0 : index
    %c0_1 = arith.constant 0 : index
    %3 = vector.load %arg7[%c0, %c0_1] : memref<128x128xf32, #tpu.memory_space<vmem>>, vector<128x128xf32>
    %c0_2 = arith.constant 0 : index
    %c0_3 = arith.constant 0 : index
    %4 = vector.load %arg3[%c0_2, %c0_3] : memref<128x64xbf16, #tpu.memory_space<vmem>>, vector<128x64xbf16>
    %c0_4 = arith.constant 0 : index
    %c0_5 = arith.constant 0 : index
    %5 = vector.load %arg4[%c0_4, %c0_5] : memref<64x128xbf16, #tpu.memory_space<vmem>>, vector<64x128xbf16>
    %cst = arith.constant dense<0.000000e+00> : vector<128x128xf32>
    %6 = tpu.matmul %4, %5, %cst {dimension_numbers = #tpu.dot_dimension_numbers<[1], [0], [0], [1], [0, 0, 1, 1], [], []>} : vector<128x64xbf16>, vector<64x128xbf16>, vector<128x128xf32> -> vector<128x128xf32>
    %7 = arith.addf %3, %6 : vector<128x128xf32>
    %c0_6 = arith.constant 0 : index
    %c0_7 = arith.constant 0 : index
    %8 = vector.load %arg7[%c0_6, %c0_7] : memref<128x128xf32, #tpu.memory_space<vmem>>, vector<128x128xf32>
    tpu.vector_store %arg7[%c0_6, %c0_7], %7 {strides = array<i32>} : memref<128x128xf32, #tpu.memory_space<vmem>>, vector<128x128xf32>,
    %c0_i32_8 = arith.constant 0 : i32
    %9 = arith.cmpi eq, %arg2, %c0_i32_8 : i32
    %10 = arith.extui %9 : i1 to i32
    %c0_i32_9 = arith.constant 0 : i32
    %11 = arith.cmpi ne, %10, %c0_i32_9 : i32
    scf.if %11 {
      %c0_10 = arith.constant 0 : index
      %c0_11 = arith.constant 0 : index
      %12 = vector.load %arg7[%c0_10, %c0_11] : memref<128x128xf32, #tpu.memory_space<vmem>>, vector<128x128xf32>
      %c0_12 = arith.constant 0 : index
      %c0_13 = arith.constant 0 : index
      %13 = vector.load %arg5[%c0_12, %c0_13] : memref<1x128xf32, #tpu.memory_space<vmem>>, vector<1x128xf32>
      %14 = vector.broadcast %13 : vector<1x128xf32> to vector<128x128xf32>
      %15 = arith.addf %12, %14 : vector<128x128xf32>
      %c0_14 = arith.constant 0 : index
      %c0_15 = arith.constant 0 : index
      %16 = vector.load %arg6[%c0_14, %c0_15] : memref<128x128xf32, #tpu.memory_space<vmem>>, vector<128x128xf32>
      tpu.vector_store %arg6[%c0_14, %c0_15], %15 {strides = array<i32>} : memref<128x128xf32, #tpu.memory_space<vmem>>, vector<128x128xf32>,
    } else {
    }
    return
  }
  func.func @transform_0(%arg0: i32, %arg1: i32, %arg2: i32) -> (i32, i32) {
    %c0_i32 = arith.constant 0 : i32
    return %arg0, %arg2 : i32, i32
  }
  func.func @transform_1(%arg0: i32, %arg1: i32, %arg2: i32) -> (i32, i32) {
    %c0_i32 = arith.constant 0 : i32
    return %arg2, %arg1 : i32, i32
  }
  func.func @transform_2(%arg0: i32, %arg1: i32, %arg2: i32) -> (i32, i32) {
    %c0_i32 = arith.constant 0 : i32
    %c0_i32_0 = arith.constant 0 : i32
    return %c0_i32, %arg1 : i32, i32
  }
  func.func @transform_3(%arg0: i32, %arg1: i32, %arg2: i32) -> (i32, i32) {
    %c0_i32 = arith.constant 0 : i32
    return %arg0, %arg1 : i32, i32
  }
}

module attributes {stable_mosaic.version = 11 : i64} {
  func.func @_mm_kernel(%arg0: i32, %arg1: i32, %arg2: i32, %arg3: memref<128x32xbf16, #tpu.memory_space<vmem>>, %arg4: memref<32x128xbf16, #tpu.memory_space<vmem>>, %arg5: memref<1x128xf32, #tpu.memory_space<vmem>>, %arg6: memref<128x128xf32, #tpu.memory_space<vmem>>, %arg7: memref<128x128xf32, #tpu.memory_space<vmem>>, %arg8: memref<128x128xf32, #tpu.memory_space<vmem>>) attributes {dimension_semantics = [#tpu.dimension_semantics<parallel>, #tpu.dimension_semantics<parallel>, #tpu.dimension_semantics<arbitrary>], iteration_bounds = array<i64: 4, 1, 1>, scalar_prefetch = 0 : i64, scratch_operands = 1 : i64, tpu.core_type = #tpu.core_type<tc>, window_params = [{transform_indices = @transform_0, window_bounds = array<i64: 128, 32>}, {transform_indices = @transform_1, window_bounds = array<i64: 32, 128>}, {transform_indices = @transform_2, window_bounds = array<i64: 1, 128>}, {transform_indices = @transform_3, window_bounds = array<i64: 128, 128>}, {transform_indices = @transform_4, window_bounds = array<i64: 128, 128>}]} {
    %c0_i32 = arith.constant 0 : i32
    %0 = arith.cmpi eq, %arg2, %c0_i32 : i32
    %1 = arith.extui %0 : i1 to i32
    %c0_i32_0 = arith.constant 0 : i32
    %2 = arith.cmpi ne, %1, %c0_i32_0 : i32
    scf.if %2 {
      %cst_10 = arith.constant 0.000000e+00 : f32
      %12 = vector.broadcast %cst_10 : f32 to vector<128x128xf32>
      %c0_11 = arith.constant 0 : index
      %c0_12 = arith.constant 0 : index
      %13 = vector.load %arg8[%c0_11, %c0_12] : memref<128x128xf32, #tpu.memory_space<vmem>>, vector<128x128xf32>
      tpu.vector_store %arg8[%c0_11, %c0_12], %12 {strides = array<i32>} : memref<128x128xf32, #tpu.memory_space<vmem>>, vector<128x128xf32>,
    } else {
    }
    %c0 = arith.constant 0 : index
    %c0_1 = arith.constant 0 : index
    %3 = vector.load %arg8[%c0, %c0_1] : memref<128x128xf32, #tpu.memory_space<vmem>>, vector<128x128xf32>
    %c0_2 = arith.constant 0 : index
    %c0_3 = arith.constant 0 : index
    %4 = vector.load %arg3[%c0_2, %c0_3] : memref<128x32xbf16, #tpu.memory_space<vmem>>, vector<128x32xbf16>
    %c0_4 = arith.constant 0 : index
    %c0_5 = arith.constant 0 : index
    %5 = vector.load %arg4[%c0_4, %c0_5] : memref<32x128xbf16, #tpu.memory_space<vmem>>, vector<32x128xbf16>
    %cst = arith.constant dense<0.000000e+00> : vector<128x128xf32>
    %6 = tpu.matmul %4, %5, %cst {dimension_numbers = #tpu.dot_dimension_numbers<[1], [0], [0], [1], [0, 0, 1, 1], [], []>} : vector<128x32xbf16>, vector<32x128xbf16>, vector<128x128xf32> -> vector<128x128xf32>
    %7 = arith.addf %3, %6 : vector<128x128xf32>
    %c0_6 = arith.constant 0 : index
    %c0_7 = arith.constant 0 : index
    %8 = vector.load %arg8[%c0_6, %c0_7] : memref<128x128xf32, #tpu.memory_space<vmem>>, vector<128x128xf32>
    tpu.vector_store %arg8[%c0_6, %c0_7], %7 {strides = array<i32>} : memref<128x128xf32, #tpu.memory_space<vmem>>, vector<128x128xf32>,
    %c0_i32_8 = arith.constant 0 : i32
    %9 = arith.cmpi eq, %arg2, %c0_i32_8 : i32
    %10 = arith.extui %9 : i1 to i32
    %c0_i32_9 = arith.constant 0 : i32
    %11 = arith.cmpi ne, %10, %c0_i32_9 : i32
    scf.if %11 {
      %c0_10 = arith.constant 0 : index
      %c0_11 = arith.constant 0 : index
      %12 = vector.load %arg8[%c0_10, %c0_11] : memref<128x128xf32, #tpu.memory_space<vmem>>, vector<128x128xf32>
      %c0_12 = arith.constant 0 : index
      %c0_13 = arith.constant 0 : index
      %13 = vector.load %arg5[%c0_12, %c0_13] : memref<1x128xf32, #tpu.memory_space<vmem>>, vector<1x128xf32>
      %14 = vector.broadcast %13 : vector<1x128xf32> to vector<128x128xf32>
      %15 = arith.addf %12, %14 : vector<128x128xf32>
      %c0_14 = arith.constant 0 : index
      %c0_15 = arith.constant 0 : index
      %16 = vector.load %arg6[%c0_14, %c0_15] : memref<128x128xf32, #tpu.memory_space<vmem>>, vector<128x128xf32>
      %17 = arith.addf %15, %16 : vector<128x128xf32>
      %cst_16 = arith.constant 0.000000e+00 : f32
      %18 = vector.broadcast %cst_16 : f32 to vector<128x128xf32>
      %19 = arith.maximumf %17, %18 : vector<128x128xf32>
      %c0_17 = arith.constant 0 : index
      %c0_18 = arith.constant 0 : index
      %20 = vector.load %arg7[%c0_17, %c0_18] : memref<128x128xf32, #tpu.memory_space<vmem>>, vector<128x128xf32>
      tpu.vector_store %arg7[%c0_17, %c0_18], %19 {strides = array<i32>} : memref<128x128xf32, #tpu.memory_space<vmem>>, vector<128x128xf32>,
    } else {
    }
    return
  }
  func.func @transform_0(%arg0: i32, %arg1: i32, %arg2: i32) -> (i32, i32) {
    %c0_i32 = arith.constant 0 : i32
    return %arg0, %arg2 : i32, i32
  }
  func.func @transform_1(%arg0: i32, %arg1: i32, %arg2: i32) -> (i32, i32) {
    %c0_i32 = arith.constant 0 : i32
    return %arg2, %arg1 : i32, i32
  }
  func.func @transform_2(%arg0: i32, %arg1: i32, %arg2: i32) -> (i32, i32) {
    %c0_i32 = arith.constant 0 : i32
    %c0_i32_0 = arith.constant 0 : i32
    return %c0_i32, %arg1 : i32, i32
  }
  func.func @transform_3(%arg0: i32, %arg1: i32, %arg2: i32) -> (i32, i32) {
    %c0_i32 = arith.constant 0 : i32
    return %arg0, %arg1 : i32, i32
  }
  func.func @transform_4(%arg0: i32, %arg1: i32, %arg2: i32) -> (i32, i32) {
    %c0_i32 = arith.constant 0 : i32
    return %arg0, %arg1 : i32, i32
  }
}

</mosaic_0001>

<llo_original>
// kernel: bottleneck_forward.4
$region0: #{bottleneck_forward.4}
  #allocation0 [shape = 'u32[]', space=smem, size = 0x4, offset = 0x4, fixed_abs, tag = 'smem constant byte address 0x4 - core index']
  #allocation1 [shape = 'u32[144,128]{1,0:T(1,128)}', space=vmem, size = 0x12000, scoped, tag = 'internal scratch']
  #allocation2 [shape = 'f32[128,32]{1,0:T(8,128)}', space=vmem, size = 0x10000, scoped, tag = 'scratch operand']
  %s0 = inlined_call_operand.vmem [shape: bf16[512,64], index: 0, kind: input, shape index: {}]
  %s1 = inlined_call_operand.vmem [shape: bf16[64,32], index: 1, kind: input, shape index: {}]
  %s2 = inlined_call_operand.vmem [shape: f32[1,32], index: 2, kind: input, shape index: {}]
  %s3 = inlined_call_operand.vmem [shape: f32[512,32], index: 3, kind: output, shape index: {}]
  %s4 = sld [smem:[#allocation0]]
  $region53: #{bottleneck_forward.4} parent=0
    _
  %s6 = ssub.s32 1, %s4
  %s7 = scalar_select 0, %s6, %s4
  loop: start=0, step=1, limit=6
  $region2: #{bottleneck_forward.4} parent=0 // loop_pre_header
    _
  $region3: #{bottleneck_forward.4} parent=0 // loop_header
    %s9 = sphi 0, %s13
    %p10 = scmp.ge.s32.totalorder %s9, 6
    %s16 = sphi 0, %s35
    %s17 = sphi 0, %s31
    %s18 = sphi 0, %s27
    %s19 = sphi 0, %s16
    %s20 = sphi 0, %s17
    %s21 = sphi 0, %s18
    %s22 = sphi 0, %s19
    %s23 = sphi 0, %s20
    %s24 = sphi 0, %s21
    %s40 = sphi 0, %s42
    %s43 = sphi 0, %s40
    %s44 = sphi 0, %s43
    %s60 = sphi 0, %s44
    %s68 = sphi 0, %s70
    %s71 = sphi 0, %s68
    %s72 = sphi 0, %s71
    %s88 = sphi 0, %s72
    %s94 = sphi 0, %s96
    %s97 = sphi 0, %s94
    %s98 = sphi 0, %s97
    %s114 = sphi 0, %s98
    %s122 = sphi 0, %s124
    %s125 = sphi 0, %s122
    %s126 = sphi 0, %s125
    %s142 = sphi 0, %s126
  $region4: #{bottleneck_forward.4} parent=0 // loop_header_branch
    %12 = sbr.rel (%p10) target = $region8
  $region5: #{bottleneck_forward.4} parent=0 // loop_body
    %s14 = ssub.s32 %s9, 1
    %s15 = ssub.s32 %s9, 2
    %s25 = sadd.s32 1, %s18
    %p26 = scmp.ge.s32.totalorder %s25, 1
    %s27 = scalar_select %p26, 0, %s25
    %s28 = sadd.s32 1, %s17
    %s29 = scalar_select %p26, %s28, %s17
    %p30 = scmp.ge.s32.totalorder %s29, 1
    %s31 = scalar_select %p30, 0, %s29
    %s32 = sadd.s32 1, %s16
    %s33 = scalar_select %p30, %s32, %s16
    %p34 = scmp.ge.s32.totalorder %s33, 4
    %s35 = scalar_select %p34, 0, %s33
    %s36 = ssub.s32 %s16, %s35
    %s37 = ssub.s32 %s18, %s27
    %s38 = sor.u32 %s36, %s37
    %p39 = scmp.eq.s32.totalorder %s38, 0
    %s41 = sadd.s32 %s40, 1
    %s42 = scalar_select %p39, %s40, %s41
    %p45 = pneg %p39
    %p46 = scmp.eq.s32.totalorder %s9, 3
    %p47 = por %p45, %p46
    %p48 = scmp.ne.s32.totalorder %s40, %s43
    %p49 = scmp.eq.s32.totalorder %s9, 0
    %p50 = por %p48, %p49
    %p51 = scmp.ne.s32.totalorder %s40, %s43
    %p52 = scmp.eq.s32.totalorder %s14, 3
    %p53 = por %p51, %p52
    %p54 = scmp.ne.s32.totalorder %s43, %s44
    %p55 = scmp.eq.s32.totalorder %s14, 0
    %p56 = por %p54, %p55
    %p57 = scmp.ne.s32.totalorder %s43, %s44
    %p58 = scmp.eq.s32.totalorder %s15, 3
    %p59 = por %p57, %p58
    %p61 = scmp.ne.s32.totalorder %s44, %s60
    %p62 = scmp.eq.s32.totalorder %s15, 0
    %p63 = por %p61, %p62
    %s64 = ssub.s32 %s18, %s27
    %s65 = ssub.s32 %s17, %s31
    %s66 = sor.u32 %s64, %s65
    %p67 = scmp.eq.s32.totalorder %s66, 0
    %s69 = sadd.s32 %s68, 1
    %s70 = scalar_select %p67, %s68, %s69
    %p73 = pneg %p67
    %p74 = scmp.eq.s32.totalorder %s9, 3
    %p75 = por %p73, %p74
    %p76 = scmp.ne.s32.totalorder %s68, %s71
    %p77 = scmp.eq.s32.totalorder %s9, 0
    %p78 = por %p76, %p77
    %p79 = scmp.ne.s32.totalorder %s68, %s71
    %p80 = scmp.eq.s32.totalorder %s14, 3
    %p81 = por %p79, %p80
    %p82 = scmp.ne.s32.totalorder %s71, %s72
    %p83 = scmp.eq.s32.totalorder %s14, 0
    %p84 = por %p82, %p83
    %p85 = scmp.ne.s32.totalorder %s71, %s72
    %p86 = scmp.eq.s32.totalorder %s15, 3
    %p87 = por %p85, %p86
    %p89 = scmp.ne.s32.totalorder %s72, %s88
    %p90 = scmp.eq.s32.totalorder %s15, 0
    %p91 = por %p89, %p90
    %s92 = ssub.s32 %s17, %s31
    %p93 = scmp.eq.s32.totalorder %s92, 0
    %s95 = sadd.s32 %s94, 1
    %s96 = scalar_select %p93, %s94, %s95
    %p99 = pneg %p93
    %p100 = scmp.eq.s32.totalorder %s9, 3
    %p101 = por %p99, %p100
    %p102 = scmp.ne.s32.totalorder %s94, %s97
    %p103 = scmp.eq.s32.totalorder %s9, 0
    %p104 = por %p102, %p103
    %p105 = scmp.ne.s32.totalorder %s94, %s97
    %p106 = scmp.eq.s32.totalorder %s14, 3
    %p107 = por %p105, %p106
    %p108 = scmp.ne.s32.totalorder %s97, %s98
    %p109 = scmp.eq.s32.totalorder %s14, 0
    %p110 = por %p108, %p109
    %p111 = scmp.ne.s32.totalorder %s97, %s98
    %p112 = scmp.eq.s32.totalorder %s15, 3
    %p113 = por %p111, %p112
    %p115 = scmp.ne.s32.totalorder %s98, %s114
    %p116 = scmp.eq.s32.totalorder %s15, 0
    %p117 = por %p115, %p116
    %s118 = ssub.s32 %s16, %s35
    %s119 = ssub.s32 %s17, %s31
    %s120 = sor.u32 %s118, %s119
    %p121 = scmp.eq.s32.totalorder %s120, 0
    %s123 = sadd.s32 %s122, 1
    %s124 = scalar_select %p121, %s122, %s123
    %p127 = pneg %p121
    %p128 = scmp.eq.s32.totalorder %s9, 3
    %p129 = por %p127, %p128
    %p130 = scmp.ne.s32.totalorder %s122, %s125
    %p131 = scmp.eq.s32.totalorder %s9, 0
    %p132 = por %p130, %p131
    %p133 = scmp.ne.s32.totalorder %s122, %s125
    %p134 = scmp.eq.s32.totalorder %s14, 3
    %p135 = por %p133, %p134
    %p136 = scmp.ne.s32.totalorder %s125, %s126
    %p137 = scmp.eq.s32.totalorder %s14, 0
    %p138 = por %p136, %p137
    %p139 = scmp.ne.s32.totalorder %s125, %s126
    %p140 = scmp.eq.s32.totalorder %s15, 3
    %p141 = por %p139, %p140
    %p143 = scmp.ne.s32.totalorder %s126, %s142
    %p144 = scmp.eq.s32.totalorder %s15, 0
    %p145 = por %p143, %p144
    %p146 = scmp.le.s32.totalorder 1, %s9
    %p147 = scmp.lt.s32.totalorder %s9, 5
    %p148 = pnand %p146, %p147
    %p149 = pneg %p148
    // Predicated region
    $region9: #{bottleneck_forward.4} parent=5 // pred_check
      _
    $region10: #{bottleneck_forward.4} parent=5 // pred_check_branch
      %151 = sbr.rel (%p148) target = $region12
    $region11: #{bottleneck_forward.4} parent=5 // pred_region
      %s152 = ssub.s32 %s9, 1
      // Predicated region
      $region13: #{bottleneck_forward.4} parent=11 // pred_check
        %p153 = pneg %p84
      $region14: #{bottleneck_forward.4} parent=11 // pred_check_branch
        %155 = sbr.rel (%p153) target = $region16
      $region15: #{bottleneck_forward.4} parent=11 // pred_region
        %s156 = smul.u32 8, %s21
        %p157 = scmp.lt.s32.totalorder %s156, 7
        %s158 = scalar_select %p157, %s156, 7
        %p159 = scmp.lt.s32.totalorder %s20, 0
        %s160 = scalar_select %p159, %s20, 0
        %s161 = sadd.s32 %s160, %s158
        %s162 = smul.addr %s161, 4
        %s163 = scalar_lea.vmem %s1, %s162
        %s164 = smul.u32 8, %s21
      $region16: #{bottleneck_forward.4} parent=11 // pred_fallthru
        _
      // Predicated region
      $region17: #{bottleneck_forward.4} parent=11 // pred_check
        %p165 = pneg %p110
      $region18: #{bottleneck_forward.4} parent=11 // pred_check_branch
        %167 = sbr.rel (%p165) target = $region20
      $region19: #{bottleneck_forward.4} parent=11 // pred_region
        %p168 = scmp.lt.s32.totalorder %s20, 0
        %s169 = scalar_select %p168, %s20, 0
        %s170 = scalar_lea.vmem %s2, %s169
      $region20: #{bottleneck_forward.4} parent=11 // pred_fallthru
        _
    $region12: #{bottleneck_forward.4} parent=5 // pred_fallthru
      _
    %p171 = scmp.lt.s32.totalorder %s9, 4
    // Predicated region
    $region21: #{bottleneck_forward.4} parent=5 // pred_check
      %p172 = pneg %p171
    $region22: #{bottleneck_forward.4} parent=5 // pred_check_branch
      %174 = sbr.rel (%p172) target = $region24
    $region23: #{bottleneck_forward.4} parent=5 // pred_region
      // Predicated region
      $region25: #{bottleneck_forward.4} parent=23 // pred_check
        %p175 = pneg %p50
      $region26: #{bottleneck_forward.4} parent=23 // pred_check_branch
        %177 = sbr.rel (%p175) target = $region28
      $region27: #{bottleneck_forward.4} parent=23 // pred_region
        %s178 = smul.u32 16, %s16
        %p179 = scmp.lt.s32.totalorder %s178, 63
        %s180 = scalar_select %p179, %s178, 63
        %p181 = scmp.lt.s32.totalorder %s18, 0
        %s182 = scalar_select %p181, %s18, 0
        %s183 = sadd.s32 %s182, %s180
        %s184 = smul.addr %s183, 4
        %s185 = scalar_lea.vmem %s0, %s184
        %s186 = smul.u32 16, %s16
      $region28: #{bottleneck_forward.4} parent=23 // pred_fallthru
        _
    $region24: #{bottleneck_forward.4} parent=5 // pred_fallthru
      _
    %p187 = scmp.le.s32.totalorder 1, %s9
    %p188 = scmp.lt.s32.totalorder %s9, 5
    %p189 = pnand %p187, %p188
    %p190 = pneg %p189
    // Predicated region
    $region29: #{bottleneck_forward.4} parent=5 // pred_check
      _
    $region30: #{bottleneck_forward.4} parent=5 // pred_check_branch
      %192 = sbr.rel (%p189) target = $region32
    $region31: #{bottleneck_forward.4} parent=5 // pred_region
      %s193 = ssub.s32 %s9, 1
      %s194 = smul.u32 16, %s19
      %p195 = scmp.lt.s32.totalorder %s194, 63
      %s196 = scalar_select %p195, %s194, 63
      %p197 = scmp.lt.s32.totalorder %s21, 0
      %s198 = scalar_select %p197, %s21, 0
      %s199 = sadd.s32 %s198, %s196
      %s200 = smul.addr %s199, 4
      %s201 = scalar_lea.vmem %s0, %s200
      %p202 = pneg %p56
      %p203 = pneg %p53
      %s204 = smul.u32 8, %s21
      %p205 = scmp.lt.s32.totalorder %s204, 7
      %s206 = scalar_select %p205, %s204, 7
      %p207 = scmp.lt.s32.totalorder %s20, 0
      %s208 = scalar_select %p207, %s20, 0
      %s209 = sadd.s32 %s208, %s206
      %s210 = smul.addr %s209, 4
      %s211 = scalar_lea.vmem %s1, %s210
      %p212 = pneg %p84
      %p213 = pneg %p81
      %p214 = scmp.lt.s32.totalorder %s20, 0
      %s215 = scalar_select %p214, %s20, 0
      %s216 = scalar_lea.vmem %s2, %s215
      %p217 = pneg %p110
      %p218 = pneg %p107
      %p219 = pneg %p138
      %p220 = pneg %p135
      %s221 = smul.u32 16, %s19
      %p222 = scmp.lt.s32.totalorder %s221, 63
      %s223 = scalar_select %p222, %s221, 63
      %p224 = scmp.lt.s32.totalorder %s20, 0
      %s225 = scalar_select %p224, %s20, 0
      %s226 = sadd.s32 %s225, %s223
      %s227 = smul.addr %s226, 8
      %s228 = scalar_lea.vmem %s3, %s227
      %s229 = smul.u32 16, %s19
      %p230 = scmp.lt.s32.totalorder %s229, 63
      %s231 = scalar_select %p230, %s229, 63
      %p232 = scmp.lt.s32.totalorder %s21, 0
      %s233 = scalar_select %p232, %s21, 0
      %s234 = sadd.s32 %s233, %s231
      %s235 = smul.addr %s234, 4
      %s236 = scalar_lea.vmem %s0, %s235
      %s237 = smul.u32 16, %s19
      %s238 = smul.u32 8, %s21
      %p239 = scmp.lt.s32.totalorder %s238, 7
      %s240 = scalar_select %p239, %s238, 7
      %p241 = scmp.lt.s32.totalorder %s20, 0
      %s242 = scalar_select %p241, %s20, 0
      %s243 = sadd.s32 %s242, %s240
      %s244 = smul.addr %s243, 4
      %s245 = scalar_lea.vmem %s1, %s244
      %s246 = smul.u32 8, %s21
      %p247 = scmp.lt.s32.totalorder %s20, 0
      %s248 = scalar_select %p247, %s20, 0
      %s249 = scalar_lea.vmem %s2, %s248
      %s250 = smul.u32 16, %s19
      %p251 = scmp.lt.s32.totalorder %s250, 63
      %s252 = scalar_select %p251, %s250, 63
      %p253 = scmp.lt.s32.totalorder %s20, 0
      %s254 = scalar_select %p253, %s20, 0
      %s255 = sadd.s32 %s254, %s252
      %s256 = smul.addr %s255, 8
      %s257 = scalar_lea.vmem %s3, %s256
      %s258 = smul.u32 16, %s19
      %p260 = scmp.eq.s32.totalorder %s21, 0
      // Predicated region
      $region33: #{bottleneck_forward.4} parent=31 // pred_check
        %p261 = pneg %p260
      $region34: #{bottleneck_forward.4} parent=31 // pred_check_branch
        %263 = sbr.rel (%p261) target = $region36
      $region35: #{bottleneck_forward.4} parent=31 // pred_region
        %vm264 = vcmask 261120
        %265 = vst.msk [vmem:[#allocation2] sm:$0xff] %vm264, 0.0
        %266 = vst.msk [vmem:[#allocation2 + $0x8] sm:$0xff] %vm264, 0.0
        %267 = vst.msk [vmem:[#allocation2 + $0x10] sm:$0xff] %vm264, 0.0
        %268 = vst.msk [vmem:[#allocation2 + $0x18] sm:$0xff] %vm264, 0.0
        %269 = vst.msk [vmem:[#allocation2 + $0x20] sm:$0xff] %vm264, 0.0
        %270 = vst.msk [vmem:[#allocation2 + $0x28] sm:$0xff] %vm264, 0.0
        %271 = vst.msk [vmem:[#allocation2 + $0x30] sm:$0xff] %vm264, 0.0
        %272 = vst.msk [vmem:[#allocation2 + $0x38] sm:$0xff] %vm264, 0.0
        %273 = vst.msk [vmem:[#allocation2 + $0x40] sm:$0xff] %vm264, 0.0
        %274 = vst.msk [vmem:[#allocation2 + $0x48] sm:$0xff] %vm264, 0.0
        %275 = vst.msk [vmem:[#allocation2 + $0x50] sm:$0xff] %vm264, 0.0
        %276 = vst.msk [vmem:[#allocation2 + $0x58] sm:$0xff] %vm264, 0.0
        %277 = vst.msk [vmem:[#allocation2 + $0x60] sm:$0xff] %vm264, 0.0
        %278 = vst.msk [vmem:[#allocation2 + $0x68] sm:$0xff] %vm264, 0.0
        %279 = vst.msk [vmem:[#allocation2 + $0x70] sm:$0xff] %vm264, 0.0
        %280 = vst.msk [vmem:[#allocation2 + $0x78] sm:$0xff] %vm264, 0.0
      $region36: #{bottleneck_forward.4} parent=31 // pred_fallthru
        _
      %v281 = vld [vmem:[#allocation2] sm:$0xff]
      %v282 = vld [vmem:[#allocation2 + $0x8] sm:$0xff]
      %v283 = vld [vmem:[#allocation2 + $0x10] sm:$0xff]
      %v284 = vld [vmem:[#allocation2 + $0x18] sm:$0xff]
      %v285 = vld [vmem:[#allocation2 + $0x20] sm:$0xff]
      %v286 = vld [vmem:[#allocation2 + $0x28] sm:$0xff]
      %v287 = vld [vmem:[#allocation2 + $0x30] sm:$0xff]
      %v288 = vld [vmem:[#allocation2 + $0x38] sm:$0xff]
      %v289 = vld [vmem:[#allocation2 + $0x40] sm:$0xff]
      %v290 = vld [vmem:[#allocation2 + $0x48] sm:$0xff]
      %v291 = vld [vmem:[#allocation2 + $0x50] sm:$0xff]
      %v292 = vld [vmem:[#allocation2 + $0x58] sm:$0xff]
      %v293 = vld [vmem:[#allocation2 + $0x60] sm:$0xff]
      %v294 = vld [vmem:[#allocation2 + $0x68] sm:$0xff]
      %v295 = vld [vmem:[#allocation2 + $0x70] sm:$0xff]
      %v296 = vld [vmem:[#allocation2 + $0x78] sm:$0xff]
      %v297 = vld [vmem:[%s236] sm:$0xf]
      %v298 = vld [vmem:[%s236 + $0x4] sm:$0xf]
      %v299 = vld [vmem:[%s236 + $0x8] sm:$0xf]
      %v300 = vld [vmem:[%s236 + $0xc] sm:$0xf]
      %v301 = vld [vmem:[%s236 + $0x10] sm:$0xf]
      %v302 = vld [vmem:[%s236 + $0x14] sm:$0xf]
      %v303 = vld [vmem:[%s236 + $0x18] sm:$0xf]
      %v304 = vld [vmem:[%s236 + $0x1c] sm:$0xf]
      %v305 = vld [vmem:[%s236 + $0x20] sm:$0xf]
      %v306 = vld [vmem:[%s236 + $0x24] sm:$0xf]
      %v307 = vld [vmem:[%s236 + $0x28] sm:$0xf]
      %v308 = vld [vmem:[%s236 + $0x2c] sm:$0xf]
      %v309 = vld [vmem:[%s236 + $0x30] sm:$0xf]
      %v310 = vld [vmem:[%s236 + $0x34] sm:$0xf]
      %v311 = vld [vmem:[%s236 + $0x38] sm:$0xf]
      %v312 = vld [vmem:[%s236 + $0x3c] sm:$0xf]
      %v313 = vld [vmem:[%s245] sm:$0xf]
      %v314 = vld [vmem:[%s245 + $0x4] sm:$0xf]
      %v315 = vld [vmem:[%s245 + $0x8] sm:$0xf]
      %v316 = vld [vmem:[%s245 + $0xc] sm:$0xf]
      %v317 = vld [vmem:[%s245 + $0x10] sm:$0xf]
      %v318 = vld [vmem:[%s245 + $0x14] sm:$0xf]
      %v319 = vld [vmem:[%s245 + $0x18] sm:$0xf]
      %v320 = vld [vmem:[%s245 + $0x1c] sm:$0xf]
      %v337 = vunpack.c.l.b16 %v297
      %v338 = vunpack.c.l.b16 %v298
      %v339 = vunpack.c.l.b16 %v299
      %v340 = vunpack.c.l.b16 %v300
      %v341 = vunpack.c.l.b16 %v301
      %v342 = vunpack.c.l.b16 %v302
      %v343 = vunpack.c.l.b16 %v303
      %v344 = vunpack.c.l.b16 %v304
      %v345 = vunpack.c.l.b16 %v305
      %v346 = vunpack.c.l.b16 %v306
      %v347 = vunpack.c.l.b16 %v307
      %v348 = vunpack.c.l.b16 %v308
      %v349 = vunpack.c.l.b16 %v309
      %v350 = vunpack.c.l.b16 %v310
      %v351 = vunpack.c.l.b16 %v311
      %v352 = vunpack.c.l.b16 %v312
      %v353 = vpack.c.b16 %v338, %v337
      %v354 = vpack.c.b16 %v340, %v339
      %v355 = vpack.c.b16 %v342, %v341
      %v356 = vpack.c.b16 %v344, %v343
      %v357 = vpack.c.b16 %v346, %v345
      %v358 = vpack.c.b16 %v348, %v347
      %v359 = vpack.c.b16 %v350, %v349
      %v360 = vpack.c.b16 %v352, %v351
      %v369 = vunpack.c.l.b16 %v313
      %v370 = vunpack.c.l.b16 %v314
      %v371 = vunpack.c.l.b16 %v315
      %v372 = vunpack.c.l.b16 %v316
      %v373 = vunpack.c.l.b16 %v317
      %v374 = vunpack.c.l.b16 %v318
      %v375 = vunpack.c.l.b16 %v319
      %v376 = vunpack.c.l.b16 %v320
      %v377 = vpack.c.b16 %v370, %v369
      %v378 = vpack.c.b16 %v372, %v371
      %v379 = vpack.c.b16 %v374, %v373
      %v380 = vpack.c.b16 %v376, %v375
      %vm385 = vcmask 523264
      %v387 = vsel %vm385, %v353, 0
      %v390 = vsel %vm385, %v354, 0
      %v393 = vsel %vm385, %v355, 0
      %v396 = vsel %vm385, %v356, 0
      %v399 = vsel %vm385, %v357, 0
      %v402 = vsel %vm385, %v358, 0
      %v405 = vsel %vm385, %v359, 0
      %v408 = vsel %vm385, %v360, 0
      %410 = vmatprep.subr.bf16.mxu0 0
      %411 = vmatpush1.bf16.msra.mxu0 %v377
      %412 = vmatprep.subr.bf16.mxu0 0
      %413 = vmatpush1.bf16.msra.mxu0 %v378
      %414 = vmatprep.subr.bf16.mxu0 0
      %415 = vmatpush1.bf16.msra.mxu0 %v379
      %416 = vmatprep.subr.bf16.mxu0 0
      %417 = vmatpush1.bf16.msra.mxu0 %v380
      %418 = vmatprep.subr.bf16.mxu0 0
      %419 = vmatpush1.bf16.msra.mxu0 0
      %420 = vmatprep.subr.bf16.mxu0 0
      %421 = vmatpush1.bf16.msra.mxu0 0
      %422 = vmatprep.subr.bf16.mxu0 0
      %423 = vmatpush1.bf16.msra.mxu0 0
      %424 = vmatprep.subr.bf16.mxu0 0
      %425 = vmatpush1.bf16.msra.mxu0 0
      %426 = vmatprep.subr.bf16.mxu0 0
      %427 = vmatpush1.bf16.msra.mxu0 0
      %428 = vmatprep.subr.bf16.mxu0 0
      %429 = vmatpush1.bf16.msra.mxu0 0
      %430 = vmatprep.subr.bf16.mxu0 0
      %431 = vmatpush1.bf16.msra.mxu0 0
      %432 = vmatprep.subr.bf16.mxu0 0
      %433 = vmatpush1.bf16.msra.mxu0 0
      %434 = vmatprep.subr.bf16.mxu0 0
      %435 = vmatpush1.bf16.msra.mxu0 0
      %436 = vmatprep.subr.bf16.mxu0 0
      %437 = vmatpush1.bf16.msra.mxu0 0
      %438 = vmatprep.subr.bf16.mxu0 0
      %439 = vmatpush1.bf16.msra.mxu0 0
      %440 = vmatprep.subr.bf16.mxu0 0
      %441 = vmatpush1.bf16.msra.mxu0 0
      %442 = vmatprep.mubr.bf16.mxu0 0
      %443 = vmatmul.mubr.bf16.gmra.mrb[0].mxu0 %v387
      %v444 = vpop.f32.mrb[0].mxu0
      %v445 = vadd.f32 0.0, %v444
      %v446 = vpop.f32.mrb[0].mxu0
      %v447 = vpop.f32.mrb[0].mxu0
      %v448 = vadd.f32 0.0, %v447
      %v449 = vpop.f32.mrb[0].mxu0
      %450 = vmatprep.mubr.bf16.mxu0 0
      %451 = vmatmul.mubr.bf16.gmra.mrb[0].mxu0 %v390
      %v452 = vpop.f32.mrb[0].mxu0
      %v453 = vadd.f32 0.0, %v452
      %v454 = vpop.f32.mrb[0].mxu0
      %v455 = vpop.f32.mrb[0].mxu0
      %v456 = vadd.f32 0.0, %v455
      %v457 = vpop.f32.mrb[0].mxu0
      %458 = vmatprep.mubr.bf16.mxu0 0
      %459 = vmatmul.mubr.bf16.gmra.mrb[0].mxu0 %v393
      %v460 = vpop.f32.mrb[0].mxu0
      %v461 = vadd.f32 0.0, %v460
      %v462 = vpop.f32.mrb[0].mxu0
      %v463 = vpop.f32.mrb[0].mxu0
      %v464 = vadd.f32 0.0, %v463
      %v465 = vpop.f32.mrb[0].mxu0
      %466 = vmatprep.mubr.bf16.mxu0 0
      %467 = vmatmul.mubr.bf16.gmra.mrb[0].mxu0 %v396
      %v468 = vpop.f32.mrb[0].mxu0
      %v469 = vadd.f32 0.0, %v468
      %v470 = vpop.f32.mrb[0].mxu0
      %v471 = vpop.f32.mrb[0].mxu0
      %v472 = vadd.f32 0.0, %v471
      %v473 = vpop.f32.mrb[0].mxu0
      %474 = vmatprep.mubr.bf16.mxu0 0
      %475 = vmatmul.mubr.bf16.gmra.mrb[0].mxu0 %v399
      %v476 = vpop.f32.mrb[0].mxu0
      %v477 = vadd.f32 0.0, %v476
      %v478 = vpop.f32.mrb[0].mxu0
      %v479 = vpop.f32.mrb[0].mxu0
      %v480 = vadd.f32 0.0, %v479
      %v481 = vpop.f32.mrb[0].mxu0
      %482 = vmatprep.mubr.bf16.mxu0 0
      %483 = vmatmul.mubr.bf16.gmra.mrb[0].mxu0 %v402
      %v484 = vpop.f32.mrb[0].mxu0
      %v485 = vadd.f32 0.0, %v484
      %v486 = vpop.f32.mrb[0].mxu0
      %v487 = vpop.f32.mrb[0].mxu0
      %v488 = vadd.f32 0.0, %v487
      %v489 = vpop.f32.mrb[0].mxu0
      %490 = vmatprep.mubr.bf16.mxu0 0
      %491 = vmatmul.mubr.bf16.gmra.mrb[0].mxu0 %v405
      %v492 = vpop.f32.mrb[0].mxu0
      %v493 = vadd.f32 0.0, %v492
      %v494 = vpop.f32.mrb[0].mxu0
      %v495 = vpop.f32.mrb[0].mxu0
      %v496 = vadd.f32 0.0, %v495
      %v497 = vpop.f32.mrb[0].mxu0
      %498 = vmatprep.mubr.bf16.mxu0 0
      %499 = vmatmul.mubr.bf16.gmra.mrb[0].mxu0 %v408
      %v500 = vpop.f32.mrb[0].mxu0
      %v501 = vadd.f32 0.0, %v500
      %v502 = vpop.f32.mrb[0].mxu0
      %v503 = vpop.f32.mrb[0].mxu0
      %v504 = vadd.f32 0.0, %v503
      %v505 = vpop.f32.mrb[0].mxu0
      %506 = vdwg.mxu0
      %v507 = vadd.f32 %v281, %v445
      %v508 = vadd.f32 %v282, %v448
      %v509 = vadd.f32 %v283, %v453
      %v510 = vadd.f32 %v284, %v456
      %v511 = vadd.f32 %v285, %v461
      %v512 = vadd.f32 %v286, %v464
      %v513 = vadd.f32 %v287, %v469
      %v514 = vadd.f32 %v288, %v472
      %v515 = vadd.f32 %v289, %v477
      %v516 = vadd.f32 %v290, %v480
      %v517 = vadd.f32 %v291, %v485
      %v518 = vadd.f32 %v292, %v488
      %v519 = vadd.f32 %v293, %v493
      %v520 = vadd.f32 %v294, %v496
      %v521 = vadd.f32 %v295, %v501
      %v522 = vadd.f32 %v296, %v504
      %vm523 = vcmask 261120
      %524 = vst.msk [vmem:[#allocation2] sm:$0xff] %vm523, %v507
      %525 = vst.msk [vmem:[#allocation2 + $0x8] sm:$0xff] %vm523, %v508
      %526 = vst.msk [vmem:[#allocation2 + $0x10] sm:$0xff] %vm523, %v509
      %527 = vst.msk [vmem:[#allocation2 + $0x18] sm:$0xff] %vm523, %v510
      %528 = vst.msk [vmem:[#allocation2 + $0x20] sm:$0xff] %vm523, %v511
      %529 = vst.msk [vmem:[#allocation2 + $0x28] sm:$0xff] %vm523, %v512
      %530 = vst.msk [vmem:[#allocation2 + $0x30] sm:$0xff] %vm523, %v513
      %531 = vst.msk [vmem:[#allocation2 + $0x38] sm:$0xff] %vm523, %v514
      %532 = vst.msk [vmem:[#allocation2 + $0x40] sm:$0xff] %vm523, %v515
      %533 = vst.msk [vmem:[#allocation2 + $0x48] sm:$0xff] %vm523, %v516
      %534 = vst.msk [vmem:[#allocation2 + $0x50] sm:$0xff] %vm523, %v517
      %535 = vst.msk [vmem:[#allocation2 + $0x58] sm:$0xff] %vm523, %v518
      %536 = vst.msk [vmem:[#allocation2 + $0x60] sm:$0xff] %vm523, %v519
      %537 = vst.msk [vmem:[#allocation2 + $0x68] sm:$0xff] %vm523, %v520
      %538 = vst.msk [vmem:[#allocation2 + $0x70] sm:$0xff] %vm523, %v521
      %539 = vst.msk [vmem:[#allocation2 + $0x78] sm:$0xff] %vm523, %v522
      // Predicated region
      $region37: #{bottleneck_forward.4} parent=31 // pred_check
        %p540 = pneg %p260
      $region38: #{bottleneck_forward.4} parent=31 // pred_check_branch
        %542 = sbr.rel (%p540) target = $region40
      $region39: #{bottleneck_forward.4} parent=31 // pred_region
        %v543 = vld [vmem:[#allocation2] sm:$0xff]
        %v544 = vld [vmem:[#allocation2 + $0x8] sm:$0xff]
        %v545 = vld [vmem:[#allocation2 + $0x10] sm:$0xff]
        %v546 = vld [vmem:[#allocation2 + $0x18] sm:$0xff]
        %v547 = vld [vmem:[#allocation2 + $0x20] sm:$0xff]
        %v548 = vld [vmem:[#allocation2 + $0x28] sm:$0xff]
        %v549 = vld [vmem:[#allocation2 + $0x30] sm:$0xff]
        %v550 = vld [vmem:[#allocation2 + $0x38] sm:$0xff]
        %v551 = vld [vmem:[#allocation2 + $0x40] sm:$0xff]
        %v552 = vld [vmem:[#allocation2 + $0x48] sm:$0xff]
        %v553 = vld [vmem:[#allocation2 + $0x50] sm:$0xff]
        %v554 = vld [vmem:[#allocation2 + $0x58] sm:$0xff]
        %v555 = vld [vmem:[#allocation2 + $0x60] sm:$0xff]
        %v556 = vld [vmem:[#allocation2 + $0x68] sm:$0xff]
        %v557 = vld [vmem:[#allocation2 + $0x70] sm:$0xff]
        %v558 = vld [vmem:[#allocation2 + $0x78] sm:$0xff]
        %v559 = vld [vmem:[%s249] sm:$0x1]
        %v561 = vlaneseq
        %v562 = vshrl.u32 %v561, 7
        %v563 = vsub.s32 0, %v562
        %v564 = vrot.slane %v559, %v563
        %v566 = vadd.f32 %v543, %v564
        %v567 = vadd.f32 %v544, %v564
        %v568 = vadd.f32 %v545, %v564
        %v569 = vadd.f32 %v546, %v564
        %v570 = vadd.f32 %v547, %v564
        %v571 = vadd.f32 %v548, %v564
        %v572 = vadd.f32 %v549, %v564
        %v573 = vadd.f32 %v550, %v564
        %v574 = vadd.f32 %v551, %v564
        %v575 = vadd.f32 %v552, %v564
        %v576 = vadd.f32 %v553, %v564
        %v577 = vadd.f32 %v554, %v564
        %v578 = vadd.f32 %v555, %v564
        %v579 = vadd.f32 %v556, %v564
        %v580 = vadd.f32 %v557, %v564
        %v581 = vadd.f32 %v558, %v564
        %v582 = vmax.f32 %v566, 0.0
        %v583 = vmax.f32 %v567, 0.0
        %v584 = vmax.f32 %v568, 0.0
        %v585 = vmax.f32 %v569, 0.0
        %v586 = vmax.f32 %v570, 0.0
        %v587 = vmax.f32 %v571, 0.0
        %v588 = vmax.f32 %v572, 0.0
        %v589 = vmax.f32 %v573, 0.0
        %v590 = vmax.f32 %v574, 0.0
        %v591 = vmax.f32 %v575, 0.0
        %v592 = vmax.f32 %v576, 0.0
        %v593 = vmax.f32 %v577, 0.0
        %v594 = vmax.f32 %v578, 0.0
        %v595 = vmax.f32 %v579, 0.0
        %v596 = vmax.f32 %v580, 0.0
        %v597 = vmax.f32 %v581, 0.0
        %598 = vst.msk [vmem:[%s257] sm:$0xff] %vm523, %v582
        %599 = vst.msk [vmem:[%s257 + $0x8] sm:$0xff] %vm523, %v583
        %600 = vst.msk [vmem:[%s257 + $0x10] sm:$0xff] %vm523, %v584
        %601 = vst.msk [vmem:[%s257 + $0x18] sm:$0xff] %vm523, %v585
        %602 = vst.msk [vmem:[%s257 + $0x20] sm:$0xff] %vm523, %v586
        %603 = vst.msk [vmem:[%s257 + $0x28] sm:$0xff] %vm523, %v587
        %604 = vst.msk [vmem:[%s257 + $0x30] sm:$0xff] %vm523, %v588
        %605 = vst.msk [vmem:[%s257 + $0x38] sm:$0xff] %vm523, %v589
        %606 = vst.msk [vmem:[%s257 + $0x40] sm:$0xff] %vm523, %v590
        %607 = vst.msk [vmem:[%s257 + $0x48] sm:$0xff] %vm523, %v591
        %608 = vst.msk [vmem:[%s257 + $0x50] sm:$0xff] %vm523, %v592
        %609 = vst.msk [vmem:[%s257 + $0x58] sm:$0xff] %vm523, %v593
        %610 = vst.msk [vmem:[%s257 + $0x60] sm:$0xff] %vm523, %v594
        %611 = vst.msk [vmem:[%s257 + $0x68] sm:$0xff] %vm523, %v595
        %612 = vst.msk [vmem:[%s257 + $0x70] sm:$0xff] %vm523, %v596
        %613 = vst.msk [vmem:[%s257 + $0x78] sm:$0xff] %vm523, %v597
      $region40: #{bottleneck_forward.4} parent=31 // pred_fallthru
        _
      %s614 = smul.u32 16, %s19
      %p615 = scmp.lt.s32.totalorder %s614, 63
      %s616 = scalar_select %p615, %s614, 63
      %p617 = scmp.lt.s32.totalorder %s20, 0
      %s618 = scalar_select %p617, %s20, 0
      %s619 = sadd.s32 %s618, %s616
      %s620 = smul.addr %s619, 8
      %s621 = scalar_lea.vmem %s3, %s620
      // Predicated region
      $region41: #{bottleneck_forward.4} parent=31 // pred_check
        %p622 = pneg %p135
      $region42: #{bottleneck_forward.4} parent=31 // pred_check_branch
        %624 = sbr.rel (%p622) target = $region44
      $region43: #{bottleneck_forward.4} parent=31 // pred_region
        %s625 = smul.u32 16, %s19
      $region44: #{bottleneck_forward.4} parent=31 // pred_fallthru
        _
    $region32: #{bottleneck_forward.4} parent=5 // pred_fallthru
      _
    %p626 = scmp.le.s32.totalorder 2, %s9
    // Predicated region
    $region45: #{bottleneck_forward.4} parent=5 // pred_check
      %p627 = pneg %p626
    $region46: #{bottleneck_forward.4} parent=5 // pred_check_branch
      %629 = sbr.rel (%p627) target = $region48
    $region47: #{bottleneck_forward.4} parent=5 // pred_region
      %s630 = ssub.s32 %s9, 2
      // Predicated region
      $region49: #{bottleneck_forward.4} parent=47 // pred_check
        %p631 = pneg %p141
      $region50: #{bottleneck_forward.4} parent=47 // pred_check_branch
        %633 = sbr.rel (%p631) target = $region52
      $region51: #{bottleneck_forward.4} parent=47 // pred_region
        %s634 = smul.u32 16, %s22
        %p635 = scmp.lt.s32.totalorder %s634, 63
        %s636 = scalar_select %p635, %s634, 63
        %p637 = scmp.lt.s32.totalorder %s23, 0
        %s638 = scalar_select %p637, %s23, 0
        %s639 = sadd.s32 %s638, %s636
        %s640 = smul.addr %s639, 8
        %s641 = scalar_lea.vmem %s3, %s640
      $region52: #{bottleneck_forward.4} parent=47 // pred_fallthru
        _
    $region48: #{bottleneck_forward.4} parent=5 // pred_fallthru
      _
  $region6: #{bottleneck_forward.4} parent=0 // loop_footer
    %s13 = sadd.s32 1, %s9
  $region7: #{bottleneck_forward.4} parent=0 // loop_footer_branch
    %8 = sbr.rel target = $region3
  $region8: #{bottleneck_forward.4} parent=0 // loop_exit
    _

// kernel: bottleneck_forward.7
$region0: #{bottleneck_forward.7}
  #allocation0 [shape = 'u32[]', space=smem, size = 0x4, offset = 0x4, fixed_abs, tag = 'smem constant byte address 0x4 - core index']
  #allocation1 [shape = 'u32[144,128]{1,0:T(1,128)}', space=vmem, size = 0x12000, scoped, tag = 'internal scratch']
  #allocation2 [shape = 'f32[128,128]{1,0:T(8,128)}', space=vmem, size = 0x10000, scoped, tag = 'scratch operand']
  %s0 = inlined_call_operand.vmem [shape: bf16[512,32], index: 0, kind: input, shape index: {}]
  %s1 = inlined_call_operand.vmem [shape: bf16[32,128], index: 1, kind: input, shape index: {}]
  %s2 = inlined_call_operand.vmem [shape: f32[1,128], index: 2, kind: input, shape index: {}]
  %s3 = inlined_call_operand.vmem [shape: f32[512,128], index: 3, kind: input, shape index: {}]
  %s4 = inlined_call_operand.hbm [shape: f32[512,128], index: 4, kind: output, shape index: {}]
  %s5 = sld [smem:[#allocation0]]
  $region57: #{bottleneck_forward.7} parent=0
    _
  %s7 = ssub.s32 1, %s5
  %s8 = scalar_select 0, %s7, %s5
  $region1: #{bottleneck_forward.7} parent=0
    #allocation3 [shape = 'u8[131072]{0}', space=vmem, size = 0x20000, scoped, tag = 'output window, operand 0']
    #allocation4 [shape = 's32[2]{0}', space=sflag, size = 0x8, scoped, tag = 'scoped memory for bottleneck_forward.7']
    %9 = vsyncpa [#allocation4], 0
    %s10 = scalar_lea.sflag [#allocation4], 1
    %11 = vsyncpa %s10, 0
    loop: start=0, step=1, limit=6
    $region2: #{bottleneck_forward.7} parent=1 // loop_pre_header
      _
    $region3: #{bottleneck_forward.7} parent=1 // loop_header
      %s13 = sphi 0, %s17
      %p14 = scmp.ge.s32.totalorder %s13, 6
      %s20 = sphi 0, %s39
      %s21 = sphi 0, %s35
      %s22 = sphi 0, %s31
      %s23 = sphi 0, %s20
      %s24 = sphi 0, %s21
      %s25 = sphi 0, %s22
      %s26 = sphi 0, %s23
      %s27 = sphi 0, %s24
      %s28 = sphi 0, %s25
      %s44 = sphi 0, %s46
      %s47 = sphi 0, %s44
      %s48 = sphi 0, %s47
      %s64 = sphi 0, %s48
      %s72 = sphi 0, %s74
      %s75 = sphi 0, %s72
      %s76 = sphi 0, %s75
      %s92 = sphi 0, %s76
      %s98 = sphi 0, %s100
      %s101 = sphi 0, %s98
      %s102 = sphi 0, %s101
      %s118 = sphi 0, %s102
      %s126 = sphi 0, %s128
      %s129 = sphi 0, %s126
      %s130 = sphi 0, %s129
      %s146 = sphi 0, %s130
      %s154 = sphi 0, %s156
      %s157 = sphi 0, %s154
      %s158 = sphi 0, %s157
      %s174 = sphi 0, %s158
    $region4: #{bottleneck_forward.7} parent=1 // loop_header_branch
      %16 = sbr.rel (%p14) target = $region8
    $region5: #{bottleneck_forward.7} parent=1 // loop_body
      %s18 = ssub.s32 %s13, 1
      %s19 = ssub.s32 %s13, 2
      %s29 = sadd.s32 1, %s22
      %p30 = scmp.ge.s32.totalorder %s29, 1
      %s31 = scalar_select %p30, 0, %s29
      %s32 = sadd.s32 1, %s21
      %s33 = scalar_select %p30, %s32, %s21
      %p34 = scmp.ge.s32.totalorder %s33, 1
      %s35 = scalar_select %p34, 0, %s33
      %s36 = sadd.s32 1, %s20
      %s37 = scalar_select %p34, %s36, %s20
      %p38 = scmp.ge.s32.totalorder %s37, 4
      %s39 = scalar_select %p38, 0, %s37
      %s40 = ssub.s32 %s20, %s39
      %s41 = ssub.s32 %s22, %s31
      %s42 = sor.u32 %s40, %s41
      %p43 = scmp.eq.s32.totalorder %s42, 0
      %s45 = sadd.s32 %s44, 1
      %s46 = scalar_select %p43, %s44, %s45
      %p49 = pneg %p43
      %p50 = scmp.eq.s32.totalorder %s13, 3
      %p51 = por %p49, %p50
      %p52 = scmp.ne.s32.totalorder %s44, %s47
      %p53 = scmp.eq.s32.totalorder %s13, 0
      %p54 = por %p52, %p53
      %p55 = scmp.ne.s32.totalorder %s44, %s47
      %p56 = scmp.eq.s32.totalorder %s18, 3
      %p57 = por %p55, %p56
      %p58 = scmp.ne.s32.totalorder %s47, %s48
      %p59 = scmp.eq.s32.totalorder %s18, 0
      %p60 = por %p58, %p59
      %p61 = scmp.ne.s32.totalorder %s47, %s48
      %p62 = scmp.eq.s32.totalorder %s19, 3
      %p63 = por %p61, %p62
      %p65 = scmp.ne.s32.totalorder %s48, %s64
      %p66 = scmp.eq.s32.totalorder %s19, 0
      %p67 = por %p65, %p66
      %s68 = ssub.s32 %s22, %s31
      %s69 = ssub.s32 %s21, %s35
      %s70 = sor.u32 %s68, %s69
      %p71 = scmp.eq.s32.totalorder %s70, 0
      %s73 = sadd.s32 %s72, 1
      %s74 = scalar_select %p71, %s72, %s73
      %p77 = pneg %p71
      %p78 = scmp.eq.s32.totalorder %s13, 3
      %p79 = por %p77, %p78
      %p80 = scmp.ne.s32.totalorder %s72, %s75
      %p81 = scmp.eq.s32.totalorder %s13, 0
      %p82 = por %p80, %p81
      %p83 = scmp.ne.s32.totalorder %s72, %s75
      %p84 = scmp.eq.s32.totalorder %s18, 3
      %p85 = por %p83, %p84
      %p86 = scmp.ne.s32.totalorder %s75, %s76
      %p87 = scmp.eq.s32.totalorder %s18, 0
      %p88 = por %p86, %p87
      %p89 = scmp.ne.s32.totalorder %s75, %s76
      %p90 = scmp.eq.s32.totalorder %s19, 3
      %p91 = por %p89, %p90
      %p93 = scmp.ne.s32.totalorder %s76, %s92
      %p94 = scmp.eq.s32.totalorder %s19, 0
      %p95 = por %p93, %p94
      %s96 = ssub.s32 %s21, %s35
      %p97 = scmp.eq.s32.totalorder %s96, 0
      %s99 = sadd.s32 %s98, 1
      %s100 = scalar_select %p97, %s98, %s99
      %p103 = pneg %p97
      %p104 = scmp.eq.s32.totalorder %s13, 3
      %p105 = por %p103, %p104
      %p106 = scmp.ne.s32.totalorder %s98, %s101
      %p107 = scmp.eq.s32.totalorder %s13, 0
      %p108 = por %p106, %p107
      %p109 = scmp.ne.s32.totalorder %s98, %s101
      %p110 = scmp.eq.s32.totalorder %s18, 3
      %p111 = por %p109, %p110
      %p112 = scmp.ne.s32.totalorder %s101, %s102
      %p113 = scmp.eq.s32.totalorder %s18, 0
      %p114 = por %p112, %p113
      %p115 = scmp.ne.s32.totalorder %s101, %s102
      %p116 = scmp.eq.s32.totalorder %s19, 3
      %p117 = por %p115, %p116
      %p119 = scmp.ne.s32.totalorder %s102, %s118
      %p120 = scmp.eq.s32.totalorder %s19, 0
      %p121 = por %p119, %p120
      %s122 = ssub.s32 %s20, %s39
      %s123 = ssub.s32 %s21, %s35
      %s124 = sor.u32 %s122, %s123
      %p125 = scmp.eq.s32.totalorder %s124, 0
      %s127 = sadd.s32 %s126, 1
      %s128 = scalar_select %p125, %s126, %s127
      %p131 = pneg %p125
      %p132 = scmp.eq.s32.totalorder %s13, 3
      %p133 = por %p131, %p132
      %p134 = scmp.ne.s32.totalorder %s126, %s129
      %p135 = scmp.eq.s32.totalorder %s13, 0
      %p136 = por %p134, %p135
      %p137 = scmp.ne.s32.totalorder %s126, %s129
      %p138 = scmp.eq.s32.totalorder %s18, 3
      %p139 = por %p137, %p138
      %p140 = scmp.ne.s32.totalorder %s129, %s130
      %p141 = scmp.eq.s32.totalorder %s18, 0
      %p142 = por %p140, %p141
      %p143 = scmp.ne.s32.totalorder %s129, %s130
      %p144 = scmp.eq.s32.totalorder %s19, 3
      %p145 = por %p143, %p144
      %p147 = scmp.ne.s32.totalorder %s130, %s146
      %p148 = scmp.eq.s32.totalorder %s19, 0
      %p149 = por %p147, %p148
      %s150 = ssub.s32 %s20, %s39
      %s151 = ssub.s32 %s21, %s35
      %s152 = sor.u32 %s150, %s151
      %p153 = scmp.eq.s32.totalorder %s152, 0
      %s155 = sadd.s32 %s154, 1
      %s156 = scalar_select %p153, %s154, %s155
      %p159 = pneg %p153
      %p160 = scmp.eq.s32.totalorder %s13, 3
      %p161 = por %p159, %p160
      %p162 = scmp.ne.s32.totalorder %s154, %s157
      %p163 = scmp.eq.s32.totalorder %s13, 0
      %p164 = por %p162, %p163
      %p165 = scmp.ne.s32.totalorder %s154, %s157
      %p166 = scmp.eq.s32.totalorder %s18, 3
      %p167 = por %p165, %p166
      %p168 = scmp.ne.s32.totalorder %s157, %s158
      %p169 = scmp.eq.s32.totalorder %s18, 0
      %p170 = por %p168, %p169
      %p171 = scmp.ne.s32.totalorder %s157, %s158
      %p172 = scmp.eq.s32.totalorder %s19, 3
      %p173 = por %p171, %p172
      %p175 = scmp.ne.s32.totalorder %s158, %s174
      %p176 = scmp.eq.s32.totalorder %s19, 0
      %p177 = por %p175, %p176
      %p178 = scmp.le.s32.totalorder 1, %s13
      %p179 = scmp.lt.s32.totalorder %s13, 5
      %p180 = pnand %p178, %p179
      %p181 = pneg %p180
      // Predicated region
      $region9: #{bottleneck_forward.7} parent=5 // pred_check
        _
      $region10: #{bottleneck_forward.7} parent=5 // pred_check_branch
        %183 = sbr.rel (%p180) target = $region12
      $region11: #{bottleneck_forward.7} parent=5 // pred_region
        %s184 = ssub.s32 %s13, 1
        // Predicated region
        $region13: #{bottleneck_forward.7} parent=11 // pred_check
          %p185 = pneg %p88
        $region14: #{bottleneck_forward.7} parent=11 // pred_check_branch
          %187 = sbr.rel (%p185) target = $region16
        $region15: #{bottleneck_forward.7} parent=11 // pred_region
          %s188 = smul.u32 4, %s25
          %p189 = scmp.lt.s32.totalorder %s188, 3
          %s190 = scalar_select %p189, %s188, 3
          %p191 = scmp.lt.s32.totalorder %s24, 0
          %s192 = scalar_select %p191, %s24, 0
          %s193 = sadd.s32 %s192, %s190
          %s194 = smul.addr %s193, 4
          %s195 = scalar_lea.vmem %s1, %s194
          %s196 = smul.u32 4, %s25
        $region16: #{bottleneck_forward.7} parent=11 // pred_fallthru
          _
        // Predicated region
        $region17: #{bottleneck_forward.7} parent=11 // pred_check
          %p197 = pneg %p114
        $region18: #{bottleneck_forward.7} parent=11 // pred_check_branch
          %199 = sbr.rel (%p197) target = $region20
        $region19: #{bottleneck_forward.7} parent=11 // pred_region
          %p200 = scmp.lt.s32.totalorder %s24, 0
          %s201 = scalar_select %p200, %s24, 0
          %s202 = scalar_lea.vmem %s2, %s201
        $region20: #{bottleneck_forward.7} parent=11 // pred_fallthru
          _
      $region12: #{bottleneck_forward.7} parent=5 // pred_fallthru
        _
      %p203 = scmp.lt.s32.totalorder %s13, 4
      // Predicated region
      $region21: #{bottleneck_forward.7} parent=5 // pred_check
        %p204 = pneg %p203
      $region22: #{bottleneck_forward.7} parent=5 // pred_check_branch
        %206 = sbr.rel (%p204) target = $region24
      $region23: #{bottleneck_forward.7} parent=5 // pred_region
        // Predicated region
        $region25: #{bottleneck_forward.7} parent=23 // pred_check
          %p207 = pneg %p54
        $region26: #{bottleneck_forward.7} parent=23 // pred_check_branch
          %209 = sbr.rel (%p207) target = $region28
        $region27: #{bottleneck_forward.7} parent=23 // pred_region
          %s210 = smul.u32 16, %s20
          %p211 = scmp.lt.s32.totalorder %s210, 63
          %s212 = scalar_select %p211, %s210, 63
          %p213 = scmp.lt.s32.totalorder %s22, 0
          %s214 = scalar_select %p213, %s22, 0
          %s215 = sadd.s32 %s214, %s212
          %s216 = smul.addr %s215, 4
          %s217 = scalar_lea.vmem %s0, %s216
          %s218 = smul.u32 16, %s20
        $region28: #{bottleneck_forward.7} parent=23 // pred_fallthru
          _
        // Predicated region
        $region29: #{bottleneck_forward.7} parent=23 // pred_check
          %p219 = pneg %p136
        $region30: #{bottleneck_forward.7} parent=23 // pred_check_branch
          %221 = sbr.rel (%p219) target = $region32
        $region31: #{bottleneck_forward.7} parent=23 // pred_region
          %s222 = smul.u32 16, %s20
          %p223 = scmp.lt.s32.totalorder %s222, 63
          %s224 = scalar_select %p223, %s222, 63
          %p225 = scmp.lt.s32.totalorder %s21, 0
          %s226 = scalar_select %p225, %s21, 0
          %s227 = sadd.s32 %s226, %s224
          %s228 = smul.addr %s227, 8
          %s229 = scalar_lea.vmem %s3, %s228
          %s230 = smul.u32 16, %s20
        $region32: #{bottleneck_forward.7} parent=23 // pred_fallthru
          _
      $region24: #{bottleneck_forward.7} parent=5 // pred_fallthru
        _
      %p231 = scmp.le.s32.totalorder 1, %s13
      %p232 = scmp.lt.s32.totalorder %s13, 5
      %p233 = pnand %p231, %p232
      %p234 = pneg %p233
      // Predicated region
      $region33: #{bottleneck_forward.7} parent=5 // pred_check
        _
      $region34: #{bottleneck_forward.7} parent=5 // pred_check_branch
        %236 = sbr.rel (%p233) target = $region36
      $region35: #{bottleneck_forward.7} parent=5 // pred_region
        %s237 = ssub.s32 %s13, 1
        %s238 = smul.u32 16, %s23
        %p239 = scmp.lt.s32.totalorder %s238, 63
        %s240 = scalar_select %p239, %s238, 63
        %p241 = scmp.lt.s32.totalorder %s25, 0
        %s242 = scalar_select %p241, %s25, 0
        %s243 = sadd.s32 %s242, %s240
        %s244 = smul.addr %s243, 4
        %s245 = scalar_lea.vmem %s0, %s244
        %p246 = pneg %p60
        %p247 = pneg %p57
        %s248 = smul.u32 4, %s25
        %p249 = scmp.lt.s32.totalorder %s248, 3
        %s250 = scalar_select %p249, %s248, 3
        %p251 = scmp.lt.s32.totalorder %s24, 0
        %s252 = scalar_select %p251, %s24, 0
        %s253 = sadd.s32 %s252, %s250
        %s254 = smul.addr %s253, 4
        %s255 = scalar_lea.vmem %s1, %s254
        %p256 = pneg %p88
        %p257 = pneg %p85
        %p258 = scmp.lt.s32.totalorder %s24, 0
        %s259 = scalar_select %p258, %s24, 0
        %s260 = scalar_lea.vmem %s2, %s259
        %p261 = pneg %p114
        %p262 = pneg %p111
        %s263 = smul.u32 16, %s23
        %p264 = scmp.lt.s32.totalorder %s263, 63
        %s265 = scalar_select %p264, %s263, 63
        %p266 = scmp.lt.s32.totalorder %s24, 0
        %s267 = scalar_select %p266, %s24, 0
        %s268 = sadd.s32 %s267, %s265
        %s269 = smul.addr %s268, 8
        %s270 = scalar_lea.vmem %s3, %s269
        %p271 = pneg %p142
        %p272 = pneg %p139
        %p273 = pneg %p170
        %p274 = pneg %p167
        %s275 = sand.u32 %s157, 1
        %s276 = scalar_lea.sflag [#allocation4], %s275
        %s277 = sand.u32 %s157, 1
        %s278 = smul.addr %s277, 128
        %s279 = scalar_lea.vmem [#allocation3], %s278
        %s280 = smul.u32 16, %s23
        %p281 = scmp.lt.s32.totalorder %s280, 63
        %s282 = scalar_select %p281, %s280, 63
        %p283 = scmp.lt.s32.totalorder %s25, 0
        %s284 = scalar_select %p283, %s25, 0
        %s285 = sadd.s32 %s284, %s282
        %s286 = smul.addr %s285, 4
        %s287 = scalar_lea.vmem %s0, %s286
        %s288 = smul.u32 16, %s23
        %s289 = smul.u32 4, %s25
        %p290 = scmp.lt.s32.totalorder %s289, 3
        %s291 = scalar_select %p290, %s289, 3
        %p292 = scmp.lt.s32.totalorder %s24, 0
        %s293 = scalar_select %p292, %s24, 0
        %s294 = sadd.s32 %s293, %s291
        %s295 = smul.addr %s294, 4
        %s296 = scalar_lea.vmem %s1, %s295
        %s297 = smul.u32 4, %s25
        %p298 = scmp.lt.s32.totalorder %s24, 0
        %s299 = scalar_select %p298, %s24, 0
        %s300 = scalar_lea.vmem %s2, %s299
        %s301 = smul.u32 16, %s23
        %p302 = scmp.lt.s32.totalorder %s301, 63
        %s303 = scalar_select %p302, %s301, 63
        %p304 = scmp.lt.s32.totalorder %s24, 0
        %s305 = scalar_select %p304, %s24, 0
        %s306 = sadd.s32 %s305, %s303
        %s307 = smul.addr %s306, 8
        %s308 = scalar_lea.vmem %s3, %s307
        %s309 = smul.u32 16, %s23
        %s310 = smul.u32 16, %s23
        %p312 = scmp.eq.s32.totalorder %s25, 0
        // Predicated region
        $region37: #{bottleneck_forward.7} parent=35 // pred_check
          %p313 = pneg %p312
        $region38: #{bottleneck_forward.7} parent=35 // pred_check_branch
          %315 = sbr.rel (%p313) target = $region40
        $region39: #{bottleneck_forward.7} parent=35 // pred_region
          %316 = vst [vmem:[#allocation2] sm:$0xff] 0.0
          %317 = vst [vmem:[#allocation2 + $0x8] sm:$0xff] 0.0
          %318 = vst [vmem:[#allocation2 + $0x10] sm:$0xff] 0.0
          %319 = vst [vmem:[#allocation2 + $0x18] sm:$0xff] 0.0
          %320 = vst [vmem:[#allocation2 + $0x20] sm:$0xff] 0.0
          %321 = vst [vmem:[#allocation2 + $0x28] sm:$0xff] 0.0
          %322 = vst [vmem:[#allocation2 + $0x30] sm:$0xff] 0.0
          %323 = vst [vmem:[#allocation2 + $0x38] sm:$0xff] 0.0
          %324 = vst [vmem:[#allocation2 + $0x40] sm:$0xff] 0.0
          %325 = vst [vmem:[#allocation2 + $0x48] sm:$0xff] 0.0
          %326 = vst [vmem:[#allocation2 + $0x50] sm:$0xff] 0.0
          %327 = vst [vmem:[#allocation2 + $0x58] sm:$0xff] 0.0
          %328 = vst [vmem:[#allocation2 + $0x60] sm:$0xff] 0.0
          %329 = vst [vmem:[#allocation2 + $0x68] sm:$0xff] 0.0
          %330 = vst [vmem:[#allocation2 + $0x70] sm:$0xff] 0.0
          %331 = vst [vmem:[#allocation2 + $0x78] sm:$0xff] 0.0
        $region40: #{bottleneck_forward.7} parent=35 // pred_fallthru
          _
        %v332 = vld [vmem:[#allocation2] sm:$0xff]
        %v333 = vld [vmem:[#allocation2 + $0x8] sm:$0xff]
        %v334 = vld [vmem:[#allocation2 + $0x10] sm:$0xff]
        %v335 = vld [vmem:[#allocation2 + $0x18] sm:$0xff]
        %v336 = vld [vmem:[#allocation2 + $0x20] sm:$0xff]
        %v337 = vld [vmem:[#allocation2 + $0x28] sm:$0xff]
        %v338 = vld [vmem:[#allocation2 + $0x30] sm:$0xff]
        %v339 = vld [vmem:[#allocation2 + $0x38] sm:$0xff]
        %v340 = vld [vmem:[#allocation2 + $0x40] sm:$0xff]
        %v341 = vld [vmem:[#allocation2 + $0x48] sm:$0xff]
        %v342 = vld [vmem:[#allocation2 + $0x50] sm:$0xff]
        %v343 = vld [vmem:[#allocation2 + $0x58] sm:$0xff]
        %v344 = vld [vmem:[#allocation2 + $0x60] sm:$0xff]
        %v345 = vld [vmem:[#allocation2 + $0x68] sm:$0xff]
        %v346 = vld [vmem:[#allocation2 + $0x70] sm:$0xff]
        %v347 = vld [vmem:[#allocation2 + $0x78] sm:$0xff]
        %v348 = vld [vmem:[%s287] sm:$0xf]
        %v349 = vld [vmem:[%s287 + $0x4] sm:$0xf]
        %v350 = vld [vmem:[%s287 + $0x8] sm:$0xf]
        %v351 = vld [vmem:[%s287 + $0xc] sm:$0xf]
        %v352 = vld [vmem:[%s287 + $0x10] sm:$0xf]
        %v353 = vld [vmem:[%s287 + $0x14] sm:$0xf]
        %v354 = vld [vmem:[%s287 + $0x18] sm:$0xf]
        %v355 = vld [vmem:[%s287 + $0x1c] sm:$0xf]
        %v356 = vld [vmem:[%s287 + $0x20] sm:$0xf]
        %v357 = vld [vmem:[%s287 + $0x24] sm:$0xf]
        %v358 = vld [vmem:[%s287 + $0x28] sm:$0xf]
        %v359 = vld [vmem:[%s287 + $0x2c] sm:$0xf]
        %v360 = vld [vmem:[%s287 + $0x30] sm:$0xf]
        %v361 = vld [vmem:[%s287 + $0x34] sm:$0xf]
        %v362 = vld [vmem:[%s287 + $0x38] sm:$0xf]
        %v363 = vld [vmem:[%s287 + $0x3c] sm:$0xf]
        %v364 = vld [vmem:[%s296] sm:$0xf]
        %v365 = vld [vmem:[%s296 + $0x4] sm:$0xf]
        %v366 = vld [vmem:[%s296 + $0x8] sm:$0xf]
        %v367 = vld [vmem:[%s296 + $0xc] sm:$0xf]
        %v384 = vunpack.c.l.b16 %v348
        %v385 = vunpack.c.l.b16 %v349
        %v386 = vunpack.c.l.b16 %v350
        %v387 = vunpack.c.l.b16 %v351
        %v388 = vunpack.c.l.b16 %v352
        %v389 = vunpack.c.l.b16 %v353
        %v390 = vunpack.c.l.b16 %v354
        %v391 = vunpack.c.l.b16 %v355
        %v392 = vunpack.c.l.b16 %v356
        %v393 = vunpack.c.l.b16 %v357
        %v394 = vunpack.c.l.b16 %v358
        %v395 = vunpack.c.l.b16 %v359
        %v396 = vunpack.c.l.b16 %v360
        %v397 = vunpack.c.l.b16 %v361
        %v398 = vunpack.c.l.b16 %v362
        %v399 = vunpack.c.l.b16 %v363
        %v400 = vpack.c.b16 %v385, %v384
        %v401 = vpack.c.b16 %v387, %v386
        %v402 = vpack.c.b16 %v389, %v388
        %v403 = vpack.c.b16 %v391, %v390
        %v404 = vpack.c.b16 %v393, %v392
        %v405 = vpack.c.b16 %v395, %v394
        %v406 = vpack.c.b16 %v397, %v396
        %v407 = vpack.c.b16 %v399, %v398
        %v412 = vunpack.c.l.b16 %v364
        %v413 = vunpack.c.l.b16 %v365
        %v414 = vunpack.c.l.b16 %v366
        %v415 = vunpack.c.l.b16 %v367
        %v416 = vpack.c.b16 %v413, %v412
        %v417 = vpack.c.b16 %v415, %v414
        %vm420 = vcmask 261120
        %v422 = vsel %vm420, %v400, 0
        %v425 = vsel %vm420, %v401, 0
        %v428 = vsel %vm420, %v402, 0
        %v431 = vsel %vm420, %v403, 0
        %v434 = vsel %vm420, %v404, 0
        %v437 = vsel %vm420, %v405, 0
        %v440 = vsel %vm420, %v406, 0
        %v443 = vsel %vm420, %v407, 0
        %445 = vmatprep.subr.bf16.mxu0 0
        %446 = vmatpush1.bf16.msra.mxu0 %v416
        %447 = vmatprep.subr.bf16.mxu0 0
        %448 = vmatpush1.bf16.msra.mxu0 %v417
        %449 = vmatprep.subr.bf16.mxu0 0
        %450 = vmatpush1.bf16.msra.mxu0 0
        %451 = vmatprep.subr.bf16.mxu0 0
        %452 = vmatpush1.bf16.msra.mxu0 0
        %453 = vmatprep.subr.bf16.mxu0 0
        %454 = vmatpush1.bf16.msra.mxu0 0
        %455 = vmatprep.subr.bf16.mxu0 0
        %456 = vmatpush1.bf16.msra.mxu0 0
        %457 = vmatprep.subr.bf16.mxu0 0
        %458 = vmatpush1.bf16.msra.mxu0 0
        %459 = vmatprep.subr.bf16.mxu0 0
        %460 = vmatpush1.bf16.msra.mxu0 0
        %461 = vmatprep.subr.bf16.mxu0 0
        %462 = vmatpush1.bf16.msra.mxu0 0
        %463 = vmatprep.subr.bf16.mxu0 0
        %464 = vmatpush1.bf16.msra.mxu0 0
        %465 = vmatprep.subr.bf16.mxu0 0
        %466 = vmatpush1.bf16.msra.mxu0 0
        %467 = vmatprep.subr.bf16.mxu0 0
        %468 = vmatpush1.bf16.msra.mxu0 0
        %469 = vmatprep.subr.bf16.mxu0 0
        %470 = vmatpush1.bf16.msra.mxu0 0
        %471 = vmatprep.subr.bf16.mxu0 0
        %472 = vmatpush1.bf16.msra.mxu0 0
        %473 = vmatprep.subr.bf16.mxu0 0
        %474 = vmatpush1.bf16.msra.mxu0 0
        %475 = vmatprep.subr.bf16.mxu0 0
        %476 = vmatpush1.bf16.msra.mxu0 0
        %477 = vmatprep.mubr.bf16.mxu0 0
        %478 = vmatmul.mubr.bf16.gmra.mrb[0].mxu0 %v422
        %v479 = vpop.f32.mrb[0].mxu0
        %v480 = vadd.f32 0.0, %v479
        %v481 = vpop.f32.mrb[0].mxu0
        %v482 = vpop.f32.mrb[0].mxu0
        %v483 = vadd.f32 0.0, %v482
        %v484 = vpop.f32.mrb[0].mxu0
        %485 = vmatprep.mubr.bf16.mxu0 0
        %486 = vmatmul.mubr.bf16.gmra.mrb[0].mxu0 %v425
        %v487 = vpop.f32.mrb[0].mxu0
        %v488 = vadd.f32 0.0, %v487
        %v489 = vpop.f32.mrb[0].mxu0
        %v490 = vpop.f32.mrb[0].mxu0
        %v491 = vadd.f32 0.0, %v490
        %v492 = vpop.f32.mrb[0].mxu0
        %493 = vmatprep.mubr.bf16.mxu0 0
        %494 = vmatmul.mubr.bf16.gmra.mrb[0].mxu0 %v428
        %v495 = vpop.f32.mrb[0].mxu0
        %v496 = vadd.f32 0.0, %v495
        %v497 = vpop.f32.mrb[0].mxu0
        %v498 = vpop.f32.mrb[0].mxu0
        %v499 = vadd.f32 0.0, %v498
        %v500 = vpop.f32.mrb[0].mxu0
        %501 = vmatprep.mubr.bf16.mxu0 0
        %502 = vmatmul.mubr.bf16.gmra.mrb[0].mxu0 %v431
        %v503 = vpop.f32.mrb[0].mxu0
        %v504 = vadd.f32 0.0, %v503
        %v505 = vpop.f32.mrb[0].mxu0
        %v506 = vpop.f32.mrb[0].mxu0
        %v507 = vadd.f32 0.0, %v506
        %v508 = vpop.f32.mrb[0].mxu0
        %509 = vmatprep.mubr.bf16.mxu0 0
        %510 = vmatmul.mubr.bf16.gmra.mrb[0].mxu0 %v434
        %v511 = vpop.f32.mrb[0].mxu0
        %v512 = vadd.f32 0.0, %v511
        %v513 = vpop.f32.mrb[0].mxu0
        %v514 = vpop.f32.mrb[0].mxu0
        %v515 = vadd.f32 0.0, %v514
        %v516 = vpop.f32.mrb[0].mxu0
        %517 = vmatprep.mubr.bf16.mxu0 0
        %518 = vmatmul.mubr.bf16.gmra.mrb[0].mxu0 %v437
        %v519 = vpop.f32.mrb[0].mxu0
        %v520 = vadd.f32 0.0, %v519
        %v521 = vpop.f32.mrb[0].mxu0
        %v522 = vpop.f32.mrb[0].mxu0
        %v523 = vadd.f32 0.0, %v522
        %v524 = vpop.f32.mrb[0].mxu0
        %525 = vmatprep.mubr.bf16.mxu0 0
        %526 = vmatmul.mubr.bf16.gmra.mrb[0].mxu0 %v440
        %v527 = vpop.f32.mrb[0].mxu0
        %v528 = vadd.f32 0.0, %v527
        %v529 = vpop.f32.mrb[0].mxu0
        %v530 = vpop.f32.mrb[0].mxu0
        %v531 = vadd.f32 0.0, %v530
        %v532 = vpop.f32.mrb[0].mxu0
        %533 = vmatprep.mubr.bf16.mxu0 0
        %534 = vmatmul.mubr.bf16.gmra.mrb[0].mxu0 %v443
        %v535 = vpop.f32.mrb[0].mxu0
        %v536 = vadd.f32 0.0, %v535
        %v537 = vpop.f32.mrb[0].mxu0
        %v538 = vpop.f32.mrb[0].mxu0
        %v539 = vadd.f32 0.0, %v538
        %v540 = vpop.f32.mrb[0].mxu0
        %541 = vdwg.mxu0
        %v542 = vadd.f32 %v332, %v480
        %v543 = vadd.f32 %v333, %v483
        %v544 = vadd.f32 %v334, %v488
        %v545 = vadd.f32 %v335, %v491
        %v546 = vadd.f32 %v336, %v496
        %v547 = vadd.f32 %v337, %v499
        %v548 = vadd.f32 %v338, %v504
        %v549 = vadd.f32 %v339, %v507
        %v550 = vadd.f32 %v340, %v512
        %v551 = vadd.f32 %v341, %v515
        %v552 = vadd.f32 %v342, %v520
        %v553 = vadd.f32 %v343, %v523
        %v554 = vadd.f32 %v344, %v528
        %v555 = vadd.f32 %v345, %v531
        %v556 = vadd.f32 %v346, %v536
        %v557 = vadd.f32 %v347, %v539
        %558 = vst [vmem:[#allocation2] sm:$0xff] %v542
        %559 = vst [vmem:[#allocation2 + $0x8] sm:$0xff] %v543
        %560 = vst [vmem:[#allocation2 + $0x10] sm:$0xff] %v544
        %561 = vst [vmem:[#allocation2 + $0x18] sm:$0xff] %v545
        %562 = vst [vmem:[#allocation2 + $0x20] sm:$0xff] %v546
        %563 = vst [vmem:[#allocation2 + $0x28] sm:$0xff] %v547
        %564 = vst [vmem:[#allocation2 + $0x30] sm:$0xff] %v548
        %565 = vst [vmem:[#allocation2 + $0x38] sm:$0xff] %v549
        %566 = vst [vmem:[#allocation2 + $0x40] sm:$0xff] %v550
        %567 = vst [vmem:[#allocation2 + $0x48] sm:$0xff] %v551
        %568 = vst [vmem:[#allocation2 + $0x50] sm:$0xff] %v552
        %569 = vst [vmem:[#allocation2 + $0x58] sm:$0xff] %v553
        %570 = vst [vmem:[#allocation2 + $0x60] sm:$0xff] %v554
        %571 = vst [vmem:[#allocation2 + $0x68] sm:$0xff] %v555
        %572 = vst [vmem:[#allocation2 + $0x70] sm:$0xff] %v556
        %573 = vst [vmem:[#allocation2 + $0x78] sm:$0xff] %v557
        // Predicated region
        $region41: #{bottleneck_forward.7} parent=35 // pred_check
          %p574 = pneg %p312
        $region42: #{bottleneck_forward.7} parent=35 // pred_check_branch
          %576 = sbr.rel (%p574) target = $region44
        $region43: #{bottleneck_forward.7} parent=35 // pred_region
          %v577 = vld [vmem:[#allocation2] sm:$0xff]
          %v578 = vld [vmem:[#allocation2 + $0x8] sm:$0xff]
          %v579 = vld [vmem:[#allocation2 + $0x10] sm:$0xff]
          %v580 = vld [vmem:[#allocation2 + $0x18] sm:$0xff]
          %v581 = vld [vmem:[#allocation2 + $0x20] sm:$0xff]
          %v582 = vld [vmem:[#allocation2 + $0x28] sm:$0xff]
          %v583 = vld [vmem:[#allocation2 + $0x30] sm:$0xff]
          %v584 = vld [vmem:[#allocation2 + $0x38] sm:$0xff]
          %v585 = vld [vmem:[#allocation2 + $0x40] sm:$0xff]
          %v586 = vld [vmem:[#allocation2 + $0x48] sm:$0xff]
          %v587 = vld [vmem:[#allocation2 + $0x50] sm:$0xff]
          %v588 = vld [vmem:[#allocation2 + $0x58] sm:$0xff]
          %v589 = vld [vmem:[#allocation2 + $0x60] sm:$0xff]
          %v590 = vld [vmem:[#allocation2 + $0x68] sm:$0xff]
          %v591 = vld [vmem:[#allocation2 + $0x70] sm:$0xff]
          %v592 = vld [vmem:[#allocation2 + $0x78] sm:$0xff]
          %v593 = vld [vmem:[%s300] sm:$0x1]
          %v595 = vlaneseq
          %v596 = vshrl.u32 %v595, 7
          %v597 = vsub.s32 0, %v596
          %v598 = vrot.slane %v593, %v597
          %v600 = vadd.f32 %v577, %v598
          %v601 = vadd.f32 %v578, %v598
          %v602 = vadd.f32 %v579, %v598
          %v603 = vadd.f32 %v580, %v598
          %v604 = vadd.f32 %v581, %v598
          %v605 = vadd.f32 %v582, %v598
          %v606 = vadd.f32 %v583, %v598
          %v607 = vadd.f32 %v584, %v598
          %v608 = vadd.f32 %v585, %v598
          %v609 = vadd.f32 %v586, %v598
          %v610 = vadd.f32 %v587, %v598
          %v611 = vadd.f32 %v588, %v598
          %v612 = vadd.f32 %v589, %v598
          %v613 = vadd.f32 %v590, %v598
          %v614 = vadd.f32 %v591, %v598
          %v615 = vadd.f32 %v592, %v598
          %v616 = vld [vmem:[%s308] sm:$0xff]
          %v617 = vld [vmem:[%s308 + $0x8] sm:$0xff]
          %v618 = vld [vmem:[%s308 + $0x10] sm:$0xff]
          %v619 = vld [vmem:[%s308 + $0x18] sm:$0xff]
          %v620 = vld [vmem:[%s308 + $0x20] sm:$0xff]
          %v621 = vld [vmem:[%s308 + $0x28] sm:$0xff]
          %v622 = vld [vmem:[%s308 + $0x30] sm:$0xff]
          %v623 = vld [vmem:[%s308 + $0x38] sm:$0xff]
          %v624 = vld [vmem:[%s308 + $0x40] sm:$0xff]
          %v625 = vld [vmem:[%s308 + $0x48] sm:$0xff]
          %v626 = vld [vmem:[%s308 + $0x50] sm:$0xff]
          %v627 = vld [vmem:[%s308 + $0x58] sm:$0xff]
          %v628 = vld [vmem:[%s308 + $0x60] sm:$0xff]
          %v629 = vld [vmem:[%s308 + $0x68] sm:$0xff]
          %v630 = vld [vmem:[%s308 + $0x70] sm:$0xff]
          %v631 = vld [vmem:[%s308 + $0x78] sm:$0xff]
          %v632 = vadd.f32 %v600, %v616
          %v633 = vadd.f32 %v601, %v617
          %v634 = vadd.f32 %v602, %v618
          %v635 = vadd.f32 %v603, %v619
          %v636 = vadd.f32 %v604, %v620
          %v637 = vadd.f32 %v605, %v621
          %v638 = vadd.f32 %v606, %v622
          %v639 = vadd.f32 %v607, %v623
          %v640 = vadd.f32 %v608, %v624
          %v641 = vadd.f32 %v609, %v625
          %v642 = vadd.f32 %v610, %v626
          %v643 = vadd.f32 %v611, %v627
          %v644 = vadd.f32 %v612, %v628
          %v645 = vadd.f32 %v613, %v629
          %v646 = vadd.f32 %v614, %v630
          %v647 = vadd.f32 %v615, %v631
          %v648 = vmax.f32 %v632, 0.0
          %v649 = vmax.f32 %v633, 0.0
          %v650 = vmax.f32 %v634, 0.0
          %v651 = vmax.f32 %v635, 0.0
          %v652 = vmax.f32 %v636, 0.0
          %v653 = vmax.f32 %v637, 0.0
          %v654 = vmax.f32 %v638, 0.0
          %v655 = vmax.f32 %v639, 0.0
          %v656 = vmax.f32 %v640, 0.0
          %v657 = vmax.f32 %v641, 0.0
          %v658 = vmax.f32 %v642, 0.0
          %v659 = vmax.f32 %v643, 0.0
          %v660 = vmax.f32 %v644, 0.0
          %v661 = vmax.f32 %v645, 0.0
          %v662 = vmax.f32 %v646, 0.0
          %v663 = vmax.f32 %v647, 0.0
          %664 = vst [vmem:[%s279] sm:$0xff] %v648
          %665 = vst [vmem:[%s279 + $0x8] sm:$0xff] %v649
          %666 = vst [vmem:[%s279 + $0x10] sm:$0xff] %v650
          %667 = vst [vmem:[%s279 + $0x18] sm:$0xff] %v651
          %668 = vst [vmem:[%s279 + $0x20] sm:$0xff] %v652
          %669 = vst [vmem:[%s279 + $0x28] sm:$0xff] %v653
          %670 = vst [vmem:[%s279 + $0x30] sm:$0xff] %v654
          %671 = vst [vmem:[%s279 + $0x38] sm:$0xff] %v655
          %672 = vst [vmem:[%s279 + $0x40] sm:$0xff] %v656
          %673 = vst [vmem:[%s279 + $0x48] sm:$0xff] %v657
          %674 = vst [vmem:[%s279 + $0x50] sm:$0xff] %v658
          %675 = vst [vmem:[%s279 + $0x58] sm:$0xff] %v659
          %676 = vst [vmem:[%s279 + $0x60] sm:$0xff] %v660
          %677 = vst [vmem:[%s279 + $0x68] sm:$0xff] %v661
          %678 = vst [vmem:[%s279 + $0x70] sm:$0xff] %v662
          %679 = vst [vmem:[%s279 + $0x78] sm:$0xff] %v663
        $region44: #{bottleneck_forward.7} parent=35 // pred_fallthru
          _
        %s680 = sand.u32 %s157, 1
        %s681 = scalar_lea.sflag [#allocation4], %s680
        %s682 = sand.u32 %s157, 1
        %s683 = smul.addr %s682, 128
        %s684 = scalar_lea.vmem [#allocation3], %s683
        // Predicated region
        $region45: #{bottleneck_forward.7} parent=35 // pred_check
          %p685 = pneg %p167
        $region46: #{bottleneck_forward.7} parent=35 // pred_check_branch
          %687 = sbr.rel (%p685) target = $region48
        $region47: #{bottleneck_forward.7} parent=35 // pred_region
          %s688 = smul.u32 16, %s23
          %s690 = ssub.s32 2048, 2048
          %691 = vsyncadd %s681, %s690
          %s692 = sadd.s32 %s24, %s688
          %s693 = smul.addr %s692, 128
          %s694 = scalar_lea.hbm %s4, %s693
          %s695 = sshll.u32 %s684, 4
          %s696 = int_to_ptr.vmem [resolvable:$true] %s695
          %701 = dma.vmem_to_hbm [thread:$0]  %s696, 2048, %s694, %s681, 128, 128, 8
        $region48: #{bottleneck_forward.7} parent=35 // pred_fallthru
          _
      $region36: #{bottleneck_forward.7} parent=5 // pred_fallthru
        _
      %p702 = scmp.le.s32.totalorder 2, %s13
      // Predicated region
      $region49: #{bottleneck_forward.7} parent=5 // pred_check
        %p703 = pneg %p702
      $region50: #{bottleneck_forward.7} parent=5 // pred_check_branch
        %705 = sbr.rel (%p703) target = $region52
      $region51: #{bottleneck_forward.7} parent=5 // pred_region
        %s706 = ssub.s32 %s13, 2
        // Predicated region
        $region53: #{bottleneck_forward.7} parent=51 // pred_check
          %p707 = pneg %p173
        $region54: #{bottleneck_forward.7} parent=51 // pred_check_branch
          %709 = sbr.rel (%p707) target = $region56
        $region55: #{bottleneck_forward.7} parent=51 // pred_region
          %s710 = sand.u32 %s158, 1
          %s711 = scalar_lea.sflag [#allocation4], %s710
          %s712 = sand.u32 %s158, 1
          %s713 = smul.addr %s712, 128
          %s714 = scalar_lea.vmem [#allocation3], %s713
          %715 = dma.done %s711, 2048
        $region56: #{bottleneck_forward.7} parent=51 // pred_fallthru
          _
      $region52: #{bottleneck_forward.7} parent=5 // pred_fallthru
        _
    $region6: #{bottleneck_forward.7} parent=1 // loop_footer
      %s17 = sadd.s32 1, %s13
    $region7: #{bottleneck_forward.7} parent=1 // loop_footer_branch
      %12 = sbr.rel target = $region3
    $region8: #{bottleneck_forward.7} parent=1 // loop_exit
      _
    %716 = vsyncpa [#allocation4], 1
    %s717 = scalar_lea.sflag [#allocation4], 1
    %718 = vsyncpa %s717, 1

// kernel: bottleneck_forward.6
$region0: #{bottleneck_forward.6}
  #allocation0 [shape = 'u32[]', space=smem, size = 0x4, offset = 0x4, fixed_abs, tag = 'smem constant byte address 0x4 - core index']
  #allocation1 [shape = 'u32[144,128]{1,0:T(1,128)}', space=vmem, size = 0x12000, scoped, tag = 'internal scratch']
  #allocation2 [shape = 'f32[128,128]{1,0:T(8,128)}', space=vmem, size = 0x10000, scoped, tag = 'scratch operand']
  %s0 = inlined_call_operand.vmem [shape: bf16[512,64], index: 0, kind: input, shape index: {}]
  %s1 = inlined_call_operand.vmem [shape: bf16[64,128], index: 1, kind: input, shape index: {}]
  %s2 = inlined_call_operand.vmem [shape: f32[1,128], index: 2, kind: input, shape index: {}]
  %s3 = inlined_call_operand.vmem [shape: f32[512,128], index: 3, kind: output, shape index: {}]
  %s4 = sld [smem:[#allocation0]]
  $region53: #{bottleneck_forward.6} parent=0
    _
  %s6 = ssub.s32 1, %s4
  %s7 = scalar_select 0, %s6, %s4
  loop: start=0, step=1, limit=6
  $region2: #{bottleneck_forward.6} parent=0 // loop_pre_header
    _
  $region3: #{bottleneck_forward.6} parent=0 // loop_header
    %s9 = sphi 0, %s13
    %p10 = scmp.ge.s32.totalorder %s9, 6
    %s16 = sphi 0, %s35
    %s17 = sphi 0, %s31
    %s18 = sphi 0, %s27
    %s19 = sphi 0, %s16
    %s20 = sphi 0, %s17
    %s21 = sphi 0, %s18
    %s22 = sphi 0, %s19
    %s23 = sphi 0, %s20
    %s24 = sphi 0, %s21
    %s40 = sphi 0, %s42
    %s43 = sphi 0, %s40
    %s44 = sphi 0, %s43
    %s60 = sphi 0, %s44
    %s68 = sphi 0, %s70
    %s71 = sphi 0, %s68
    %s72 = sphi 0, %s71
    %s88 = sphi 0, %s72
    %s94 = sphi 0, %s96
    %s97 = sphi 0, %s94
    %s98 = sphi 0, %s97
    %s114 = sphi 0, %s98
    %s122 = sphi 0, %s124
    %s125 = sphi 0, %s122
    %s126 = sphi 0, %s125
    %s142 = sphi 0, %s126
  $region4: #{bottleneck_forward.6} parent=0 // loop_header_branch
    %12 = sbr.rel (%p10) target = $region8
  $region5: #{bottleneck_forward.6} parent=0 // loop_body
    %s14 = ssub.s32 %s9, 1
    %s15 = ssub.s32 %s9, 2
    %s25 = sadd.s32 1, %s18
    %p26 = scmp.ge.s32.totalorder %s25, 1
    %s27 = scalar_select %p26, 0, %s25
    %s28 = sadd.s32 1, %s17
    %s29 = scalar_select %p26, %s28, %s17
    %p30 = scmp.ge.s32.totalorder %s29, 1
    %s31 = scalar_select %p30, 0, %s29
    %s32 = sadd.s32 1, %s16
    %s33 = scalar_select %p30, %s32, %s16
    %p34 = scmp.ge.s32.totalorder %s33, 4
    %s35 = scalar_select %p34, 0, %s33
    %s36 = ssub.s32 %s16, %s35
    %s37 = ssub.s32 %s18, %s27
    %s38 = sor.u32 %s36, %s37
    %p39 = scmp.eq.s32.totalorder %s38, 0
    %s41 = sadd.s32 %s40, 1
    %s42 = scalar_select %p39, %s40, %s41
    %p45 = pneg %p39
    %p46 = scmp.eq.s32.totalorder %s9, 3
    %p47 = por %p45, %p46
    %p48 = scmp.ne.s32.totalorder %s40, %s43
    %p49 = scmp.eq.s32.totalorder %s9, 0
    %p50 = por %p48, %p49
    %p51 = scmp.ne.s32.totalorder %s40, %s43
    %p52 = scmp.eq.s32.totalorder %s14, 3
    %p53 = por %p51, %p52
    %p54 = scmp.ne.s32.totalorder %s43, %s44
    %p55 = scmp.eq.s32.totalorder %s14, 0
    %p56 = por %p54, %p55
    %p57 = scmp.ne.s32.totalorder %s43, %s44
    %p58 = scmp.eq.s32.totalorder %s15, 3
    %p59 = por %p57, %p58
    %p61 = scmp.ne.s32.totalorder %s44, %s60
    %p62 = scmp.eq.s32.totalorder %s15, 0
    %p63 = por %p61, %p62
    %s64 = ssub.s32 %s18, %s27
    %s65 = ssub.s32 %s17, %s31
    %s66 = sor.u32 %s64, %s65
    %p67 = scmp.eq.s32.totalorder %s66, 0
    %s69 = sadd.s32 %s68, 1
    %s70 = scalar_select %p67, %s68, %s69
    %p73 = pneg %p67
    %p74 = scmp.eq.s32.totalorder %s9, 3
    %p75 = por %p73, %p74
    %p76 = scmp.ne.s32.totalorder %s68, %s71
    %p77 = scmp.eq.s32.totalorder %s9, 0
    %p78 = por %p76, %p77
    %p79 = scmp.ne.s32.totalorder %s68, %s71
    %p80 = scmp.eq.s32.totalorder %s14, 3
    %p81 = por %p79, %p80
    %p82 = scmp.ne.s32.totalorder %s71, %s72
    %p83 = scmp.eq.s32.totalorder %s14, 0
    %p84 = por %p82, %p83
    %p85 = scmp.ne.s32.totalorder %s71, %s72
    %p86 = scmp.eq.s32.totalorder %s15, 3
    %p87 = por %p85, %p86
    %p89 = scmp.ne.s32.totalorder %s72, %s88
    %p90 = scmp.eq.s32.totalorder %s15, 0
    %p91 = por %p89, %p90
    %s92 = ssub.s32 %s17, %s31
    %p93 = scmp.eq.s32.totalorder %s92, 0
    %s95 = sadd.s32 %s94, 1
    %s96 = scalar_select %p93, %s94, %s95
    %p99 = pneg %p93
    %p100 = scmp.eq.s32.totalorder %s9, 3
    %p101 = por %p99, %p100
    %p102 = scmp.ne.s32.totalorder %s94, %s97
    %p103 = scmp.eq.s32.totalorder %s9, 0
    %p104 = por %p102, %p103
    %p105 = scmp.ne.s32.totalorder %s94, %s97
    %p106 = scmp.eq.s32.totalorder %s14, 3
    %p107 = por %p105, %p106
    %p108 = scmp.ne.s32.totalorder %s97, %s98
    %p109 = scmp.eq.s32.totalorder %s14, 0
    %p110 = por %p108, %p109
    %p111 = scmp.ne.s32.totalorder %s97, %s98
    %p112 = scmp.eq.s32.totalorder %s15, 3
    %p113 = por %p111, %p112
    %p115 = scmp.ne.s32.totalorder %s98, %s114
    %p116 = scmp.eq.s32.totalorder %s15, 0
    %p117 = por %p115, %p116
    %s118 = ssub.s32 %s16, %s35
    %s119 = ssub.s32 %s17, %s31
    %s120 = sor.u32 %s118, %s119
    %p121 = scmp.eq.s32.totalorder %s120, 0
    %s123 = sadd.s32 %s122, 1
    %s124 = scalar_select %p121, %s122, %s123
    %p127 = pneg %p121
    %p128 = scmp.eq.s32.totalorder %s9, 3
    %p129 = por %p127, %p128
    %p130 = scmp.ne.s32.totalorder %s122, %s125
    %p131 = scmp.eq.s32.totalorder %s9, 0
    %p132 = por %p130, %p131
    %p133 = scmp.ne.s32.totalorder %s122, %s125
    %p134 = scmp.eq.s32.totalorder %s14, 3
    %p135 = por %p133, %p134
    %p136 = scmp.ne.s32.totalorder %s125, %s126
    %p137 = scmp.eq.s32.totalorder %s14, 0
    %p138 = por %p136, %p137
    %p139 = scmp.ne.s32.totalorder %s125, %s126
    %p140 = scmp.eq.s32.totalorder %s15, 3
    %p141 = por %p139, %p140
    %p143 = scmp.ne.s32.totalorder %s126, %s142
    %p144 = scmp.eq.s32.totalorder %s15, 0
    %p145 = por %p143, %p144
    %p146 = scmp.le.s32.totalorder 1, %s9
    %p147 = scmp.lt.s32.totalorder %s9, 5
    %p148 = pnand %p146, %p147
    %p149 = pneg %p148
    // Predicated region
    $region9: #{bottleneck_forward.6} parent=5 // pred_check
      _
    $region10: #{bottleneck_forward.6} parent=5 // pred_check_branch
      %151 = sbr.rel (%p148) target = $region12
    $region11: #{bottleneck_forward.6} parent=5 // pred_region
      %s152 = ssub.s32 %s9, 1
      // Predicated region
      $region13: #{bottleneck_forward.6} parent=11 // pred_check
        %p153 = pneg %p84
      $region14: #{bottleneck_forward.6} parent=11 // pred_check_branch
        %155 = sbr.rel (%p153) target = $region16
      $region15: #{bottleneck_forward.6} parent=11 // pred_region
        %s156 = smul.u32 8, %s21
        %p157 = scmp.lt.s32.totalorder %s156, 7
        %s158 = scalar_select %p157, %s156, 7
        %p159 = scmp.lt.s32.totalorder %s20, 0
        %s160 = scalar_select %p159, %s20, 0
        %s161 = sadd.s32 %s160, %s158
        %s162 = smul.addr %s161, 4
        %s163 = scalar_lea.vmem %s1, %s162
        %s164 = smul.u32 8, %s21
      $region16: #{bottleneck_forward.6} parent=11 // pred_fallthru
        _
      // Predicated region
      $region17: #{bottleneck_forward.6} parent=11 // pred_check
        %p165 = pneg %p110
      $region18: #{bottleneck_forward.6} parent=11 // pred_check_branch
        %167 = sbr.rel (%p165) target = $region20
      $region19: #{bottleneck_forward.6} parent=11 // pred_region
        %p168 = scmp.lt.s32.totalorder %s20, 0
        %s169 = scalar_select %p168, %s20, 0
        %s170 = scalar_lea.vmem %s2, %s169
      $region20: #{bottleneck_forward.6} parent=11 // pred_fallthru
        _
    $region12: #{bottleneck_forward.6} parent=5 // pred_fallthru
      _
    %p171 = scmp.lt.s32.totalorder %s9, 4
    // Predicated region
    $region21: #{bottleneck_forward.6} parent=5 // pred_check
      %p172 = pneg %p171
    $region22: #{bottleneck_forward.6} parent=5 // pred_check_branch
      %174 = sbr.rel (%p172) target = $region24
    $region23: #{bottleneck_forward.6} parent=5 // pred_region
      // Predicated region
      $region25: #{bottleneck_forward.6} parent=23 // pred_check
        %p175 = pneg %p50
      $region26: #{bottleneck_forward.6} parent=23 // pred_check_branch
        %177 = sbr.rel (%p175) target = $region28
      $region27: #{bottleneck_forward.6} parent=23 // pred_region
        %s178 = smul.u32 16, %s16
        %p179 = scmp.lt.s32.totalorder %s178, 63
        %s180 = scalar_select %p179, %s178, 63
        %p181 = scmp.lt.s32.totalorder %s18, 0
        %s182 = scalar_select %p181, %s18, 0
        %s183 = sadd.s32 %s182, %s180
        %s184 = smul.addr %s183, 4
        %s185 = scalar_lea.vmem %s0, %s184
        %s186 = smul.u32 16, %s16
      $region28: #{bottleneck_forward.6} parent=23 // pred_fallthru
        _
    $region24: #{bottleneck_forward.6} parent=5 // pred_fallthru
      _
    %p187 = scmp.le.s32.totalorder 1, %s9
    %p188 = scmp.lt.s32.totalorder %s9, 5
    %p189 = pnand %p187, %p188
    %p190 = pneg %p189
    // Predicated region
    $region29: #{bottleneck_forward.6} parent=5 // pred_check
      _
    $region30: #{bottleneck_forward.6} parent=5 // pred_check_branch
      %192 = sbr.rel (%p189) target = $region32
    $region31: #{bottleneck_forward.6} parent=5 // pred_region
      %s193 = ssub.s32 %s9, 1
      %s194 = smul.u32 16, %s19
      %p195 = scmp.lt.s32.totalorder %s194, 63
      %s196 = scalar_select %p195, %s194, 63
      %p197 = scmp.lt.s32.totalorder %s21, 0
      %s198 = scalar_select %p197, %s21, 0
      %s199 = sadd.s32 %s198, %s196
      %s200 = smul.addr %s199, 4
      %s201 = scalar_lea.vmem %s0, %s200
      %p202 = pneg %p56
      %p203 = pneg %p53
      %s204 = smul.u32 8, %s21
      %p205 = scmp.lt.s32.totalorder %s204, 7
      %s206 = scalar_select %p205, %s204, 7
      %p207 = scmp.lt.s32.totalorder %s20, 0
      %s208 = scalar_select %p207, %s20, 0
      %s209 = sadd.s32 %s208, %s206
      %s210 = smul.addr %s209, 4
      %s211 = scalar_lea.vmem %s1, %s210
      %p212 = pneg %p84
      %p213 = pneg %p81
      %p214 = scmp.lt.s32.totalorder %s20, 0
      %s215 = scalar_select %p214, %s20, 0
      %s216 = scalar_lea.vmem %s2, %s215
      %p217 = pneg %p110
      %p218 = pneg %p107
      %p219 = pneg %p138
      %p220 = pneg %p135
      %s221 = smul.u32 16, %s19
      %p222 = scmp.lt.s32.totalorder %s221, 63
      %s223 = scalar_select %p222, %s221, 63
      %p224 = scmp.lt.s32.totalorder %s20, 0
      %s225 = scalar_select %p224, %s20, 0
      %s226 = sadd.s32 %s225, %s223
      %s227 = smul.addr %s226, 8
      %s228 = scalar_lea.vmem %s3, %s227
      %s229 = smul.u32 16, %s19
      %p230 = scmp.lt.s32.totalorder %s229, 63
      %s231 = scalar_select %p230, %s229, 63
      %p232 = scmp.lt.s32.totalorder %s21, 0
      %s233 = scalar_select %p232, %s21, 0
      %s234 = sadd.s32 %s233, %s231
      %s235 = smul.addr %s234, 4
      %s236 = scalar_lea.vmem %s0, %s235
      %s237 = smul.u32 16, %s19
      %s238 = smul.u32 8, %s21
      %p239 = scmp.lt.s32.totalorder %s238, 7
      %s240 = scalar_select %p239, %s238, 7
      %p241 = scmp.lt.s32.totalorder %s20, 0
      %s242 = scalar_select %p241, %s20, 0
      %s243 = sadd.s32 %s242, %s240
      %s244 = smul.addr %s243, 4
      %s245 = scalar_lea.vmem %s1, %s244
      %s246 = smul.u32 8, %s21
      %p247 = scmp.lt.s32.totalorder %s20, 0
      %s248 = scalar_select %p247, %s20, 0
      %s249 = scalar_lea.vmem %s2, %s248
      %s250 = smul.u32 16, %s19
      %p251 = scmp.lt.s32.totalorder %s250, 63
      %s252 = scalar_select %p251, %s250, 63
      %p253 = scmp.lt.s32.totalorder %s20, 0
      %s254 = scalar_select %p253, %s20, 0
      %s255 = sadd.s32 %s254, %s252
      %s256 = smul.addr %s255, 8
      %s257 = scalar_lea.vmem %s3, %s256
      %s258 = smul.u32 16, %s19
      %p260 = scmp.eq.s32.totalorder %s21, 0
      // Predicated region
      $region33: #{bottleneck_forward.6} parent=31 // pred_check
        %p261 = pneg %p260
      $region34: #{bottleneck_forward.6} parent=31 // pred_check_branch
        %263 = sbr.rel (%p261) target = $region36
      $region35: #{bottleneck_forward.6} parent=31 // pred_region
        %264 = vst [vmem:[#allocation2] sm:$0xff] 0.0
        %265 = vst [vmem:[#allocation2 + $0x8] sm:$0xff] 0.0
        %266 = vst [vmem:[#allocation2 + $0x10] sm:$0xff] 0.0
        %267 = vst [vmem:[#allocation2 + $0x18] sm:$0xff] 0.0
        %268 = vst [vmem:[#allocation2 + $0x20] sm:$0xff] 0.0
        %269 = vst [vmem:[#allocation2 + $0x28] sm:$0xff] 0.0
        %270 = vst [vmem:[#allocation2 + $0x30] sm:$0xff] 0.0
        %271 = vst [vmem:[#allocation2 + $0x38] sm:$0xff] 0.0
        %272 = vst [vmem:[#allocation2 + $0x40] sm:$0xff] 0.0
        %273 = vst [vmem:[#allocation2 + $0x48] sm:$0xff] 0.0
        %274 = vst [vmem:[#allocation2 + $0x50] sm:$0xff] 0.0
        %275 = vst [vmem:[#allocation2 + $0x58] sm:$0xff] 0.0
        %276 = vst [vmem:[#allocation2 + $0x60] sm:$0xff] 0.0
        %277 = vst [vmem:[#allocation2 + $0x68] sm:$0xff] 0.0
        %278 = vst [vmem:[#allocation2 + $0x70] sm:$0xff] 0.0
        %279 = vst [vmem:[#allocation2 + $0x78] sm:$0xff] 0.0
      $region36: #{bottleneck_forward.6} parent=31 // pred_fallthru
        _
      %v280 = vld [vmem:[#allocation2] sm:$0xff]
      %v281 = vld [vmem:[#allocation2 + $0x8] sm:$0xff]
      %v282 = vld [vmem:[#allocation2 + $0x10] sm:$0xff]
      %v283 = vld [vmem:[#allocation2 + $0x18] sm:$0xff]
      %v284 = vld [vmem:[#allocation2 + $0x20] sm:$0xff]
      %v285 = vld [vmem:[#allocation2 + $0x28] sm:$0xff]
      %v286 = vld [vmem:[#allocation2 + $0x30] sm:$0xff]
      %v287 = vld [vmem:[#allocation2 + $0x38] sm:$0xff]
      %v288 = vld [vmem:[#allocation2 + $0x40] sm:$0xff]
      %v289 = vld [vmem:[#allocation2 + $0x48] sm:$0xff]
      %v290 = vld [vmem:[#allocation2 + $0x50] sm:$0xff]
      %v291 = vld [vmem:[#allocation2 + $0x58] sm:$0xff]
      %v292 = vld [vmem:[#allocation2 + $0x60] sm:$0xff]
      %v293 = vld [vmem:[#allocation2 + $0x68] sm:$0xff]
      %v294 = vld [vmem:[#allocation2 + $0x70] sm:$0xff]
      %v295 = vld [vmem:[#allocation2 + $0x78] sm:$0xff]
      %v296 = vld [vmem:[%s236] sm:$0xf]
      %v297 = vld [vmem:[%s236 + $0x4] sm:$0xf]
      %v298 = vld [vmem:[%s236 + $0x8] sm:$0xf]
      %v299 = vld [vmem:[%s236 + $0xc] sm:$0xf]
      %v300 = vld [vmem:[%s236 + $0x10] sm:$0xf]
      %v301 = vld [vmem:[%s236 + $0x14] sm:$0xf]
      %v302 = vld [vmem:[%s236 + $0x18] sm:$0xf]
      %v303 = vld [vmem:[%s236 + $0x1c] sm:$0xf]
      %v304 = vld [vmem:[%s236 + $0x20] sm:$0xf]
      %v305 = vld [vmem:[%s236 + $0x24] sm:$0xf]
      %v306 = vld [vmem:[%s236 + $0x28] sm:$0xf]
      %v307 = vld [vmem:[%s236 + $0x2c] sm:$0xf]
      %v308 = vld [vmem:[%s236 + $0x30] sm:$0xf]
      %v309 = vld [vmem:[%s236 + $0x34] sm:$0xf]
      %v310 = vld [vmem:[%s236 + $0x38] sm:$0xf]
      %v311 = vld [vmem:[%s236 + $0x3c] sm:$0xf]
      %v312 = vld [vmem:[%s245] sm:$0xf]
      %v313 = vld [vmem:[%s245 + $0x4] sm:$0xf]
      %v314 = vld [vmem:[%s245 + $0x8] sm:$0xf]
      %v315 = vld [vmem:[%s245 + $0xc] sm:$0xf]
      %v316 = vld [vmem:[%s245 + $0x10] sm:$0xf]
      %v317 = vld [vmem:[%s245 + $0x14] sm:$0xf]
      %v318 = vld [vmem:[%s245 + $0x18] sm:$0xf]
      %v319 = vld [vmem:[%s245 + $0x1c] sm:$0xf]
      %v336 = vunpack.c.l.b16 %v296
      %v337 = vunpack.c.l.b16 %v297
      %v338 = vunpack.c.l.b16 %v298
      %v339 = vunpack.c.l.b16 %v299
      %v340 = vunpack.c.l.b16 %v300
      %v341 = vunpack.c.l.b16 %v301
      %v342 = vunpack.c.l.b16 %v302
      %v343 = vunpack.c.l.b16 %v303
      %v344 = vunpack.c.l.b16 %v304
      %v345 = vunpack.c.l.b16 %v305
      %v346 = vunpack.c.l.b16 %v306
      %v347 = vunpack.c.l.b16 %v307
      %v348 = vunpack.c.l.b16 %v308
      %v349 = vunpack.c.l.b16 %v309
      %v350 = vunpack.c.l.b16 %v310
      %v351 = vunpack.c.l.b16 %v311
      %v352 = vpack.c.b16 %v337, %v336
      %v353 = vpack.c.b16 %v339, %v338
      %v354 = vpack.c.b16 %v341, %v340
      %v355 = vpack.c.b16 %v343, %v342
      %v356 = vpack.c.b16 %v345, %v344
      %v357 = vpack.c.b16 %v347, %v346
      %v358 = vpack.c.b16 %v349, %v348
      %v359 = vpack.c.b16 %v351, %v350
      %v368 = vunpack.c.l.b16 %v312
      %v369 = vunpack.c.l.b16 %v313
      %v370 = vunpack.c.l.b16 %v314
      %v371 = vunpack.c.l.b16 %v315
      %v372 = vunpack.c.l.b16 %v316
      %v373 = vunpack.c.l.b16 %v317
      %v374 = vunpack.c.l.b16 %v318
      %v375 = vunpack.c.l.b16 %v319
      %v376 = vpack.c.b16 %v369, %v368
      %v377 = vpack.c.b16 %v371, %v370
      %v378 = vpack.c.b16 %v373, %v372
      %v379 = vpack.c.b16 %v375, %v374
      %vm384 = vcmask 523264
      %v386 = vsel %vm384, %v352, 0
      %v389 = vsel %vm384, %v353, 0
      %v392 = vsel %vm384, %v354, 0
      %v395 = vsel %vm384, %v355, 0
      %v398 = vsel %vm384, %v356, 0
      %v401 = vsel %vm384, %v357, 0
      %v404 = vsel %vm384, %v358, 0
      %v407 = vsel %vm384, %v359, 0
      %409 = vmatprep.subr.bf16.mxu0 0
      %410 = vmatpush1.bf16.msra.mxu0 %v376
      %411 = vmatprep.subr.bf16.mxu0 0
      %412 = vmatpush1.bf16.msra.mxu0 %v377
      %413 = vmatprep.subr.bf16.mxu0 0
      %414 = vmatpush1.bf16.msra.mxu0 %v378
      %415 = vmatprep.subr.bf16.mxu0 0
      %416 = vmatpush1.bf16.msra.mxu0 %v379
      %417 = vmatprep.subr.bf16.mxu0 0
      %418 = vmatpush1.bf16.msra.mxu0 0
      %419 = vmatprep.subr.bf16.mxu0 0
      %420 = vmatpush1.bf16.msra.mxu0 0
      %421 = vmatprep.subr.bf16.mxu0 0
      %422 = vmatpush1.bf16.msra.mxu0 0
      %423 = vmatprep.subr.bf16.mxu0 0
      %424 = vmatpush1.bf16.msra.mxu0 0
      %425 = vmatprep.subr.bf16.mxu0 0
      %426 = vmatpush1.bf16.msra.mxu0 0
      %427 = vmatprep.subr.bf16.mxu0 0
      %428 = vmatpush1.bf16.msra.mxu0 0
      %429 = vmatprep.subr.bf16.mxu0 0
      %430 = vmatpush1.bf16.msra.mxu0 0
      %431 = vmatprep.subr.bf16.mxu0 0
      %432 = vmatpush1.bf16.msra.mxu0 0
      %433 = vmatprep.subr.bf16.mxu0 0
      %434 = vmatpush1.bf16.msra.mxu0 0
      %435 = vmatprep.subr.bf16.mxu0 0
      %436 = vmatpush1.bf16.msra.mxu0 0
      %437 = vmatprep.subr.bf16.mxu0 0
      %438 = vmatpush1.bf16.msra.mxu0 0
      %439 = vmatprep.subr.bf16.mxu0 0
      %440 = vmatpush1.bf16.msra.mxu0 0
      %441 = vmatprep.mubr.bf16.mxu0 0
      %442 = vmatmul.mubr.bf16.gmra.mrb[0].mxu0 %v386
      %v443 = vpop.f32.mrb[0].mxu0
      %v444 = vadd.f32 0.0, %v443
      %v445 = vpop.f32.mrb[0].mxu0
      %v446 = vpop.f32.mrb[0].mxu0
      %v447 = vadd.f32 0.0, %v446
      %v448 = vpop.f32.mrb[0].mxu0
      %449 = vmatprep.mubr.bf16.mxu0 0
      %450 = vmatmul.mubr.bf16.gmra.mrb[0].mxu0 %v389
      %v451 = vpop.f32.mrb[0].mxu0
      %v452 = vadd.f32 0.0, %v451
      %v453 = vpop.f32.mrb[0].mxu0
      %v454 = vpop.f32.mrb[0].mxu0
      %v455 = vadd.f32 0.0, %v454
      %v456 = vpop.f32.mrb[0].mxu0
      %457 = vmatprep.mubr.bf16.mxu0 0
      %458 = vmatmul.mubr.bf16.gmra.mrb[0].mxu0 %v392
      %v459 = vpop.f32.mrb[0].mxu0
      %v460 = vadd.f32 0.0, %v459
      %v461 = vpop.f32.mrb[0].mxu0
      %v462 = vpop.f32.mrb[0].mxu0
      %v463 = vadd.f32 0.0, %v462
      %v464 = vpop.f32.mrb[0].mxu0
      %465 = vmatprep.mubr.bf16.mxu0 0
      %466 = vmatmul.mubr.bf16.gmra.mrb[0].mxu0 %v395
      %v467 = vpop.f32.mrb[0].mxu0
      %v468 = vadd.f32 0.0, %v467
      %v469 = vpop.f32.mrb[0].mxu0
      %v470 = vpop.f32.mrb[0].mxu0
      %v471 = vadd.f32 0.0, %v470
      %v472 = vpop.f32.mrb[0].mxu0
      %473 = vmatprep.mubr.bf16.mxu0 0
      %474 = vmatmul.mubr.bf16.gmra.mrb[0].mxu0 %v398
      %v475 = vpop.f32.mrb[0].mxu0
      %v476 = vadd.f32 0.0, %v475
      %v477 = vpop.f32.mrb[0].mxu0
      %v478 = vpop.f32.mrb[0].mxu0
      %v479 = vadd.f32 0.0, %v478
      %v480 = vpop.f32.mrb[0].mxu0
      %481 = vmatprep.mubr.bf16.mxu0 0
      %482 = vmatmul.mubr.bf16.gmra.mrb[0].mxu0 %v401
      %v483 = vpop.f32.mrb[0].mxu0
      %v484 = vadd.f32 0.0, %v483
      %v485 = vpop.f32.mrb[0].mxu0
      %v486 = vpop.f32.mrb[0].mxu0
      %v487 = vadd.f32 0.0, %v486
      %v488 = vpop.f32.mrb[0].mxu0
      %489 = vmatprep.mubr.bf16.mxu0 0
      %490 = vmatmul.mubr.bf16.gmra.mrb[0].mxu0 %v404
      %v491 = vpop.f32.mrb[0].mxu0
      %v492 = vadd.f32 0.0, %v491
      %v493 = vpop.f32.mrb[0].mxu0
      %v494 = vpop.f32.mrb[0].mxu0
      %v495 = vadd.f32 0.0, %v494
      %v496 = vpop.f32.mrb[0].mxu0
      %497 = vmatprep.mubr.bf16.mxu0 0
      %498 = vmatmul.mubr.bf16.gmra.mrb[0].mxu0 %v407
      %v499 = vpop.f32.mrb[0].mxu0
      %v500 = vadd.f32 0.0, %v499
      %v501 = vpop.f32.mrb[0].mxu0
      %v502 = vpop.f32.mrb[0].mxu0
      %v503 = vadd.f32 0.0, %v502
      %v504 = vpop.f32.mrb[0].mxu0
      %505 = vdwg.mxu0
      %v506 = vadd.f32 %v280, %v444
      %v507 = vadd.f32 %v281, %v447
      %v508 = vadd.f32 %v282, %v452
      %v509 = vadd.f32 %v283, %v455
      %v510 = vadd.f32 %v284, %v460
      %v511 = vadd.f32 %v285, %v463
      %v512 = vadd.f32 %v286, %v468
      %v513 = vadd.f32 %v287, %v471
      %v514 = vadd.f32 %v288, %v476
      %v515 = vadd.f32 %v289, %v479
      %v516 = vadd.f32 %v290, %v484
      %v517 = vadd.f32 %v291, %v487
      %v518 = vadd.f32 %v292, %v492
      %v519 = vadd.f32 %v293, %v495
      %v520 = vadd.f32 %v294, %v500
      %v521 = vadd.f32 %v295, %v503
      %522 = vst [vmem:[#allocation2] sm:$0xff] %v506
      %523 = vst [vmem:[#allocation2 + $0x8] sm:$0xff] %v507
      %524 = vst [vmem:[#allocation2 + $0x10] sm:$0xff] %v508
      %525 = vst [vmem:[#allocation2 + $0x18] sm:$0xff] %v509
      %526 = vst [vmem:[#allocation2 + $0x20] sm:$0xff] %v510
      %527 = vst [vmem:[#allocation2 + $0x28] sm:$0xff] %v511
      %528 = vst [vmem:[#allocation2 + $0x30] sm:$0xff] %v512
      %529 = vst [vmem:[#allocation2 + $0x38] sm:$0xff] %v513
      %530 = vst [vmem:[#allocation2 + $0x40] sm:$0xff] %v514
      %531 = vst [vmem:[#allocation2 + $0x48] sm:$0xff] %v515
      %532 = vst [vmem:[#allocation2 + $0x50] sm:$0xff] %v516
      %533 = vst [vmem:[#allocation2 + $0x58] sm:$0xff] %v517
      %534 = vst [vmem:[#allocation2 + $0x60] sm:$0xff] %v518
      %535 = vst [vmem:[#allocation2 + $0x68] sm:$0xff] %v519
      %536 = vst [vmem:[#allocation2 + $0x70] sm:$0xff] %v520
      %537 = vst [vmem:[#allocation2 + $0x78] sm:$0xff] %v521
      // Predicated region
      $region37: #{bottleneck_forward.6} parent=31 // pred_check
        %p538 = pneg %p260
      $region38: #{bottleneck_forward.6} parent=31 // pred_check_branch
        %540 = sbr.rel (%p538) target = $region40
      $region39: #{bottleneck_forward.6} parent=31 // pred_region
        %v541 = vld [vmem:[#allocation2] sm:$0xff]
        %v542 = vld [vmem:[#allocation2 + $0x8] sm:$0xff]
        %v543 = vld [vmem:[#allocation2 + $0x10] sm:$0xff]
        %v544 = vld [vmem:[#allocation2 + $0x18] sm:$0xff]
        %v545 = vld [vmem:[#allocation2 + $0x20] sm:$0xff]
        %v546 = vld [vmem:[#allocation2 + $0x28] sm:$0xff]
        %v547 = vld [vmem:[#allocation2 + $0x30] sm:$0xff]
        %v548 = vld [vmem:[#allocation2 + $0x38] sm:$0xff]
        %v549 = vld [vmem:[#allocation2 + $0x40] sm:$0xff]
        %v550 = vld [vmem:[#allocation2 + $0x48] sm:$0xff]
        %v551 = vld [vmem:[#allocation2 + $0x50] sm:$0xff]
        %v552 = vld [vmem:[#allocation2 + $0x58] sm:$0xff]
        %v553 = vld [vmem:[#allocation2 + $0x60] sm:$0xff]
        %v554 = vld [vmem:[#allocation2 + $0x68] sm:$0xff]
        %v555 = vld [vmem:[#allocation2 + $0x70] sm:$0xff]
        %v556 = vld [vmem:[#allocation2 + $0x78] sm:$0xff]
        %v557 = vld [vmem:[%s249] sm:$0x1]
        %v559 = vlaneseq
        %v560 = vshrl.u32 %v559, 7
        %v561 = vsub.s32 0, %v560
        %v562 = vrot.slane %v557, %v561
        %v564 = vadd.f32 %v541, %v562
        %v565 = vadd.f32 %v542, %v562
        %v566 = vadd.f32 %v543, %v562
        %v567 = vadd.f32 %v544, %v562
        %v568 = vadd.f32 %v545, %v562
        %v569 = vadd.f32 %v546, %v562
        %v570 = vadd.f32 %v547, %v562
        %v571 = vadd.f32 %v548, %v562
        %v572 = vadd.f32 %v549, %v562
        %v573 = vadd.f32 %v550, %v562
        %v574 = vadd.f32 %v551, %v562
        %v575 = vadd.f32 %v552, %v562
        %v576 = vadd.f32 %v553, %v562
        %v577 = vadd.f32 %v554, %v562
        %v578 = vadd.f32 %v555, %v562
        %v579 = vadd.f32 %v556, %v562
        %580 = vst [vmem:[%s257] sm:$0xff] %v564
        %581 = vst [vmem:[%s257 + $0x8] sm:$0xff] %v565
        %582 = vst [vmem:[%s257 + $0x10] sm:$0xff] %v566
        %583 = vst [vmem:[%s257 + $0x18] sm:$0xff] %v567
        %584 = vst [vmem:[%s257 + $0x20] sm:$0xff] %v568
        %585 = vst [vmem:[%s257 + $0x28] sm:$0xff] %v569
        %586 = vst [vmem:[%s257 + $0x30] sm:$0xff] %v570
        %587 = vst [vmem:[%s257 + $0x38] sm:$0xff] %v571
        %588 = vst [vmem:[%s257 + $0x40] sm:$0xff] %v572
        %589 = vst [vmem:[%s257 + $0x48] sm:$0xff] %v573
        %590 = vst [vmem:[%s257 + $0x50] sm:$0xff] %v574
        %591 = vst [vmem:[%s257 + $0x58] sm:$0xff] %v575
        %592 = vst [vmem:[%s257 + $0x60] sm:$0xff] %v576
        %593 = vst [vmem:[%s257 + $0x68] sm:$0xff] %v577
        %594 = vst [vmem:[%s257 + $0x70] sm:$0xff] %v578
        %595 = vst [vmem:[%s257 + $0x78] sm:$0xff] %v579
      $region40: #{bottleneck_forward.6} parent=31 // pred_fallthru
        _
      %s596 = smul.u32 16, %s19
      %p597 = scmp.lt.s32.totalorder %s596, 63
      %s598 = scalar_select %p597, %s596, 63
      %p599 = scmp.lt.s32.totalorder %s20, 0
      %s600 = scalar_select %p599, %s20, 0
      %s601 = sadd.s32 %s600, %s598
      %s602 = smul.addr %s601, 8
      %s603 = scalar_lea.vmem %s3, %s602
      // Predicated region
      $region41: #{bottleneck_forward.6} parent=31 // pred_check
        %p604 = pneg %p135
      $region42: #{bottleneck_forward.6} parent=31 // pred_check_branch
        %606 = sbr.rel (%p604) target = $region44
      $region43: #{bottleneck_forward.6} parent=31 // pred_region
        %s607 = smul.u32 16, %s19
      $region44: #{bottleneck_forward.6} parent=31 // pred_fallthru
        _
    $region32: #{bottleneck_forward.6} parent=5 // pred_fallthru
      _
    %p608 = scmp.le.s32.totalorder 2, %s9
    // Predicated region
    $region45: #{bottleneck_forward.6} parent=5 // pred_check
      %p609 = pneg %p608
    $region46: #{bottleneck_forward.6} parent=5 // pred_check_branch
      %611 = sbr.rel (%p609) target = $region48
    $region47: #{bottleneck_forward.6} parent=5 // pred_region
      %s612 = ssub.s32 %s9, 2
      // Predicated region
      $region49: #{bottleneck_forward.6} parent=47 // pred_check
        %p613 = pneg %p141
      $region50: #{bottleneck_forward.6} parent=47 // pred_check_branch
        %615 = sbr.rel (%p613) target = $region52
      $region51: #{bottleneck_forward.6} parent=47 // pred_region
        %s616 = smul.u32 16, %s22
        %p617 = scmp.lt.s32.totalorder %s616, 63
        %s618 = scalar_select %p617, %s616, 63
        %p619 = scmp.lt.s32.totalorder %s23, 0
        %s620 = scalar_select %p619, %s23, 0
        %s621 = sadd.s32 %s620, %s618
        %s622 = smul.addr %s621, 8
        %s623 = scalar_lea.vmem %s3, %s622
      $region52: #{bottleneck_forward.6} parent=47 // pred_fallthru
        _
    $region48: #{bottleneck_forward.6} parent=5 // pred_fallthru
      _
  $region6: #{bottleneck_forward.6} parent=0 // loop_footer
    %s13 = sadd.s32 1, %s9
  $region7: #{bottleneck_forward.6} parent=0 // loop_footer_branch
    %8 = sbr.rel target = $region3
  $region8: #{bottleneck_forward.6} parent=0 // loop_exit
    _

// kernel: bottleneck_forward.5
$region0: #{bottleneck_forward.5}
  #allocation0 [shape = 'u32[]', space=smem, size = 0x4, offset = 0x4, fixed_abs, tag = 'smem constant byte address 0x4 - core index']
  #allocation1 [shape = 'u32[144,128]{1,0:T(1,128)}', space=vmem, size = 0x12000, scoped, tag = 'internal scratch']
  %s0 = inlined_call_operand.vmem [shape: bf16[2,18,18,32], index: 0, kind: input, shape index: {}]
  %s1 = inlined_call_operand.vmem [shape: bf16[9,32,32], index: 1, kind: input, shape index: {}]
  %s2 = inlined_call_operand.vmem [shape: f32[1,32], index: 2, kind: input, shape index: {}]
  %s3 = inlined_call_operand.vmem [shape: f32[2,16,16,32], index: 3, kind: output, shape index: {}]
  %s4 = sld [smem:[#allocation0]]
  $region45: #{bottleneck_forward.5} parent=0
    _
  %s6 = ssub.s32 1, %s4
  %s7 = scalar_select 0, %s6, %s4
  loop: start=0, step=1, limit=4
  $region2: #{bottleneck_forward.5} parent=0 // loop_pre_header
    _
  $region3: #{bottleneck_forward.5} parent=0 // loop_header
    %s9 = sphi 0, %s13
    %p10 = scmp.ge.s32.totalorder %s9, 4
    %s16 = sphi 0, %s28
    %s17 = sphi 0, %s24
    %s18 = sphi 0, %s16
    %s19 = sphi 0, %s17
    %s20 = sphi 0, %s18
    %s21 = sphi 0, %s19
    %s31 = sphi 0, %s33
    %s34 = sphi 0, %s31
    %s35 = sphi 0, %s34
    %s51 = sphi 0, %s35
    %s57 = sphi 0, %s59
    %s60 = sphi 0, %s57
    %s61 = sphi 0, %s60
    %s77 = sphi 0, %s61
    %s83 = sphi 0, %s85
    %s86 = sphi 0, %s83
    %s87 = sphi 0, %s86
    %s103 = sphi 0, %s87
    %s111 = sphi 0, %s113
    %s114 = sphi 0, %s111
    %s115 = sphi 0, %s114
    %s131 = sphi 0, %s115
  $region4: #{bottleneck_forward.5} parent=0 // loop_header_branch
    %12 = sbr.rel (%p10) target = $region8
  $region5: #{bottleneck_forward.5} parent=0 // loop_body
    %s14 = ssub.s32 %s9, 1
    %s15 = ssub.s32 %s9, 2
    %s22 = sadd.s32 1, %s17
    %p23 = scmp.ge.s32.totalorder %s22, 1
    %s24 = scalar_select %p23, 0, %s22
    %s25 = sadd.s32 1, %s16
    %s26 = scalar_select %p23, %s25, %s16
    %p27 = scmp.ge.s32.totalorder %s26, 2
    %s28 = scalar_select %p27, 0, %s26
    %s29 = ssub.s32 %s16, %s28
    %p30 = scmp.eq.s32.totalorder %s29, 0
    %s32 = sadd.s32 %s31, 1
    %s33 = scalar_select %p30, %s31, %s32
    %p36 = pneg %p30
    %p37 = scmp.eq.s32.totalorder %s9, 1
    %p38 = por %p36, %p37
    %p39 = scmp.ne.s32.totalorder %s31, %s34
    %p40 = scmp.eq.s32.totalorder %s9, 0
    %p41 = por %p39, %p40
    %p42 = scmp.ne.s32.totalorder %s31, %s34
    %p43 = scmp.eq.s32.totalorder %s14, 1
    %p44 = por %p42, %p43
    %p45 = scmp.ne.s32.totalorder %s34, %s35
    %p46 = scmp.eq.s32.totalorder %s14, 0
    %p47 = por %p45, %p46
    %p48 = scmp.ne.s32.totalorder %s34, %s35
    %p49 = scmp.eq.s32.totalorder %s15, 1
    %p50 = por %p48, %p49
    %p52 = scmp.ne.s32.totalorder %s35, %s51
    %p53 = scmp.eq.s32.totalorder %s15, 0
    %p54 = por %p52, %p53
    %s55 = ssub.s32 %s17, %s24
    %p56 = scmp.eq.s32.totalorder %s55, 0
    %s58 = sadd.s32 %s57, 1
    %s59 = scalar_select %p56, %s57, %s58
    %p62 = pneg %p56
    %p63 = scmp.eq.s32.totalorder %s9, 1
    %p64 = por %p62, %p63
    %p65 = scmp.ne.s32.totalorder %s57, %s60
    %p66 = scmp.eq.s32.totalorder %s9, 0
    %p67 = por %p65, %p66
    %p68 = scmp.ne.s32.totalorder %s57, %s60
    %p69 = scmp.eq.s32.totalorder %s14, 1
    %p70 = por %p68, %p69
    %p71 = scmp.ne.s32.totalorder %s60, %s61
    %p72 = scmp.eq.s32.totalorder %s14, 0
    %p73 = por %p71, %p72
    %p74 = scmp.ne.s32.totalorder %s60, %s61
    %p75 = scmp.eq.s32.totalorder %s15, 1
    %p76 = por %p74, %p75
    %p78 = scmp.ne.s32.totalorder %s61, %s77
    %p79 = scmp.eq.s32.totalorder %s15, 0
    %p80 = por %p78, %p79
    %s81 = ssub.s32 %s17, %s24
    %p82 = scmp.eq.s32.totalorder %s81, 0
    %s84 = sadd.s32 %s83, 1
    %s85 = scalar_select %p82, %s83, %s84
    %p88 = pneg %p82
    %p89 = scmp.eq.s32.totalorder %s9, 1
    %p90 = por %p88, %p89
    %p91 = scmp.ne.s32.totalorder %s83, %s86
    %p92 = scmp.eq.s32.totalorder %s9, 0
    %p93 = por %p91, %p92
    %p94 = scmp.ne.s32.totalorder %s83, %s86
    %p95 = scmp.eq.s32.totalorder %s14, 1
    %p96 = por %p94, %p95
    %p97 = scmp.ne.s32.totalorder %s86, %s87
    %p98 = scmp.eq.s32.totalorder %s14, 0
    %p99 = por %p97, %p98
    %p100 = scmp.ne.s32.totalorder %s86, %s87
    %p101 = scmp.eq.s32.totalorder %s15, 1
    %p102 = por %p100, %p101
    %p104 = scmp.ne.s32.totalorder %s87, %s103
    %p105 = scmp.eq.s32.totalorder %s15, 0
    %p106 = por %p104, %p105
    %s107 = ssub.s32 %s16, %s28
    %s108 = ssub.s32 %s17, %s24
    %s109 = sor.u32 %s107, %s108
    %p110 = scmp.eq.s32.totalorder %s109, 0
    %s112 = sadd.s32 %s111, 1
    %s113 = scalar_select %p110, %s111, %s112
    %p116 = pneg %p110
    %p117 = scmp.eq.s32.totalorder %s9, 1
    %p118 = por %p116, %p117
    %p119 = scmp.ne.s32.totalorder %s111, %s114
    %p120 = scmp.eq.s32.totalorder %s9, 0
    %p121 = por %p119, %p120
    %p122 = scmp.ne.s32.totalorder %s111, %s114
    %p123 = scmp.eq.s32.totalorder %s14, 1
    %p124 = por %p122, %p123
    %p125 = scmp.ne.s32.totalorder %s114, %s115
    %p126 = scmp.eq.s32.totalorder %s14, 0
    %p127 = por %p125, %p126
    %p128 = scmp.ne.s32.totalorder %s114, %s115
    %p129 = scmp.eq.s32.totalorder %s15, 1
    %p130 = por %p128, %p129
    %p132 = scmp.ne.s32.totalorder %s115, %s131
    %p133 = scmp.eq.s32.totalorder %s15, 0
    %p134 = por %p132, %p133
    %p135 = scmp.le.s32.totalorder 1, %s9
    %p136 = scmp.lt.s32.totalorder %s9, 3
    %p137 = pnand %p135, %p136
    %p138 = pneg %p137
    // Predicated region
    $region9: #{bottleneck_forward.5} parent=5 // pred_check
      _
    $region10: #{bottleneck_forward.5} parent=5 // pred_check_branch
      %140 = sbr.rel (%p137) target = $region12
    $region11: #{bottleneck_forward.5} parent=5 // pred_region
      %s141 = ssub.s32 %s9, 1
      // Predicated region
      $region13: #{bottleneck_forward.5} parent=11 // pred_check
        %p142 = pneg %p73
      $region14: #{bottleneck_forward.5} parent=11 // pred_check_branch
        %144 = sbr.rel (%p142) target = $region16
      $region15: #{bottleneck_forward.5} parent=11 // pred_region
        %p145 = scmp.lt.s32.totalorder %s19, 0
        %s146 = scalar_select %p145, %s19, 0
        %s147 = smul.addr %s146, 4
        %s148 = scalar_lea.vmem %s1, %s147
      $region16: #{bottleneck_forward.5} parent=11 // pred_fallthru
        _
      // Predicated region
      $region17: #{bottleneck_forward.5} parent=11 // pred_check
        %p149 = pneg %p99
      $region18: #{bottleneck_forward.5} parent=11 // pred_check_branch
        %151 = sbr.rel (%p149) target = $region20
      $region19: #{bottleneck_forward.5} parent=11 // pred_region
        %p152 = scmp.lt.s32.totalorder %s19, 0
        %s153 = scalar_select %p152, %s19, 0
        %s154 = scalar_lea.vmem %s2, %s153
      $region20: #{bottleneck_forward.5} parent=11 // pred_fallthru
        _
    $region12: #{bottleneck_forward.5} parent=5 // pred_fallthru
      _
    %p155 = scmp.lt.s32.totalorder %s9, 2
    // Predicated region
    $region21: #{bottleneck_forward.5} parent=5 // pred_check
      %p156 = pneg %p155
    $region22: #{bottleneck_forward.5} parent=5 // pred_check_branch
      %158 = sbr.rel (%p156) target = $region24
    $region23: #{bottleneck_forward.5} parent=5 // pred_region
      // Predicated region
      $region25: #{bottleneck_forward.5} parent=23 // pred_check
        %p159 = pneg %p41
      $region26: #{bottleneck_forward.5} parent=23 // pred_check_branch
        %161 = sbr.rel (%p159) target = $region28
      $region27: #{bottleneck_forward.5} parent=23 // pred_region
        %p162 = scmp.lt.s32.totalorder %s16, 1
        %s163 = scalar_select %p162, %s16, 1
        %s164 = smul.addr %s163, 54
        %s165 = smul.addr %s164, 4
        %s166 = scalar_lea.vmem %s0, %s165
      $region28: #{bottleneck_forward.5} parent=23 // pred_fallthru
        _
    $region24: #{bottleneck_forward.5} parent=5 // pred_fallthru
      _
    %p167 = scmp.le.s32.totalorder 1, %s9
    %p168 = scmp.lt.s32.totalorder %s9, 3
    %p169 = pnand %p167, %p168
    %p170 = pneg %p169
    // Predicated region
    $region29: #{bottleneck_forward.5} parent=5 // pred_check
      _
    $region30: #{bottleneck_forward.5} parent=5 // pred_check_branch
      %172 = sbr.rel (%p169) target = $region32
    $region31: #{bottleneck_forward.5} parent=5 // pred_region
      %s173 = ssub.s32 %s9, 1
      %p174 = scmp.lt.s32.totalorder %s18, 1
      %s175 = scalar_select %p174, %s18, 1
      %s176 = smul.addr %s175, 54
      %s177 = smul.addr %s176, 4
      %s178 = scalar_lea.vmem %s0, %s177
      %p179 = pneg %p47
      %p180 = pneg %p44
      %p181 = scmp.lt.s32.totalorder %s19, 0
      %s182 = scalar_select %p181, %s19, 0
      %s183 = smul.addr %s182, 4
      %s184 = scalar_lea.vmem %s1, %s183
      %p185 = pneg %p73
      %p186 = pneg %p70
      %p187 = scmp.lt.s32.totalorder %s19, 0
      %s188 = scalar_select %p187, %s19, 0
      %s189 = scalar_lea.vmem %s2, %s188
      %p190 = pneg %p99
      %p191 = pneg %p96
      %p192 = pneg %p127
      %p193 = pneg %p124
      %p194 = scmp.lt.s32.totalorder %s18, 1
      %s195 = scalar_select %p194, %s18, 1
      %p196 = scmp.lt.s32.totalorder %s19, 0
      %s197 = scalar_select %p196, %s19, 0
      %s198 = smul.addr %s195, 32
      %s199 = sadd.s32 %s197, %s198
      %s200 = smul.addr %s199, 8
      %s201 = scalar_lea.vmem %s3, %s200
      %p202 = scmp.lt.s32.totalorder %s18, 1
      %s203 = scalar_select %p202, %s18, 1
      %s204 = smul.addr %s203, 54
      %s205 = smul.addr %s204, 4
      %s206 = scalar_lea.vmem %s0, %s205
      %p207 = scmp.lt.s32.totalorder %s19, 0
      %s208 = scalar_select %p207, %s19, 0
      %s209 = smul.addr %s208, 4
      %s210 = scalar_lea.vmem %s1, %s209
      %p211 = scmp.lt.s32.totalorder %s19, 0
      %s212 = scalar_select %p211, %s19, 0
      %s213 = scalar_lea.vmem %s2, %s212
      %p214 = scmp.lt.s32.totalorder %s18, 1
      %s215 = scalar_select %p214, %s18, 1
      %p216 = scmp.lt.s32.totalorder %s19, 0
      %s217 = scalar_select %p216, %s19, 0
      %s218 = smul.addr %s215, 32
      %s219 = sadd.s32 %s217, %s218
      %s220 = smul.addr %s219, 8
      %s221 = scalar_lea.vmem %s3, %s220
      %v223 = vld [vmem:[%s206] sm:$0xf]
      %v224 = vld [vmem:[%s206 + $0x4] sm:$0xf]
      %v225 = vld [vmem:[%s206 + $0xc] sm:$0xf]
      %v226 = vld [vmem:[%s206 + $0x10] sm:$0xf]
      %v227 = vld [vmem:[%s206 + $0x18] sm:$0xf]
      %v228 = vld [vmem:[%s206 + $0x1c] sm:$0xf]
      %v229 = vld [vmem:[%s206 + $0x24] sm:$0xf]
      %v230 = vld [vmem:[%s206 + $0x28] sm:$0xf]
      %v231 = vld [vmem:[%s206 + $0x30] sm:$0xf]
      %v232 = vld [vmem:[%s206 + $0x34] sm:$0xf]
      %v233 = vld [vmem:[%s206 + $0x3c] sm:$0xf]
      %v234 = vld [vmem:[%s206 + $0x40] sm:$0xf]
      %v235 = vld [vmem:[%s206 + $0x48] sm:$0xf]
      %v236 = vld [vmem:[%s206 + $0x4c] sm:$0xf]
      %v237 = vld [vmem:[%s206 + $0x54] sm:$0xf]
      %v238 = vld [vmem:[%s206 + $0x58] sm:$0xf]
      %v239 = vld [vmem:[%s206 + $0x60] sm:$0xf]
      %v240 = vld [vmem:[%s206 + $0x64] sm:$0xf]
      %v241 = vld [vmem:[%s206 + $0x6c] sm:$0xf]
      %v242 = vld [vmem:[%s206 + $0x70] sm:$0xf]
      %v243 = vld [vmem:[%s206 + $0x78] sm:$0xf]
      %v244 = vld [vmem:[%s206 + $0x7c] sm:$0xf]
      %v245 = vld [vmem:[%s206 + $0x84] sm:$0xf]
      %v246 = vld [vmem:[%s206 + $0x88] sm:$0xf]
      %v247 = vld [vmem:[%s206 + $0x90] sm:$0xf]
      %v248 = vld [vmem:[%s206 + $0x94] sm:$0xf]
      %v249 = vld [vmem:[%s206 + $0x9c] sm:$0xf]
      %v250 = vld [vmem:[%s206 + $0xa0] sm:$0xf]
      %v251 = vld [vmem:[%s206 + $0xa8] sm:$0xf]
      %v252 = vld [vmem:[%s206 + $0xac] sm:$0xf]
      %v253 = vld [vmem:[%s206 + $0xb4] sm:$0xf]
      %v254 = vld [vmem:[%s206 + $0xb8] sm:$0xf]
      %v255 = vld [vmem:[%s210] sm:$0xf]
      %v256 = vld [vmem:[%s210 + $0x4] sm:$0xf]
      %v257 = vld [vmem:[%s210 + $0x8] sm:$0xf]
      %v258 = vld [vmem:[%s210 + $0xc] sm:$0xf]
      %v259 = vld [vmem:[%s206 + $0x8] sm:$0x1]
      %v260 = vld [vmem:[%s206 + $0x14] sm:$0x1]
      %v261 = vld [vmem:[%s206 + $0x20] sm:$0x1]
      %v262 = vld [vmem:[%s206 + $0x2c] sm:$0x1]
      %v263 = vld [vmem:[%s206 + $0x38] sm:$0x1]
      %v264 = vld [vmem:[%s206 + $0x44] sm:$0x1]
      %v265 = vld [vmem:[%s206 + $0x50] sm:$0x1]
      %v266 = vld [vmem:[%s206 + $0x5c] sm:$0x1]
      %v267 = vld [vmem:[%s206 + $0x68] sm:$0x1]
      %v268 = vld [vmem:[%s206 + $0x74] sm:$0x1]
      %v269 = vld [vmem:[%s206 + $0x80] sm:$0x1]
      %v270 = vld [vmem:[%s206 + $0x8c] sm:$0x1]
      %v271 = vld [vmem:[%s206 + $0x98] sm:$0x1]
      %v272 = vld [vmem:[%s206 + $0xa4] sm:$0x1]
      %v273 = vld [vmem:[%s206 + $0xb0] sm:$0x1]
      %v274 = vld [vmem:[%s206 + $0xbc] sm:$0x1]
      %vm275 = vsmask.f32 3328
      %vm276 = vsmask.f32 7440
      %vm277 = vmor %vm275, %vm276
      %v279 = vshrl.u32 %v223, 16
      %v281 = vrot.slane %v279, 4
      %v282 = vshll.u32 %v223, 16
      %v284 = vrot.slane %v282, 5
      %v285 = vor.u32 %v281, %v284
      %v286 = vrot.slane %v285, 4
      %v288 = vshll.u32 %v224, 16
      %v290 = vrot.slane %v288, 5
      %v291 = vsel %vm277, %v286, %v290
      %v292 = vshrl.u32 %v224, 16
      %v294 = vrot.slane %v292, 4
      %v295 = vor.u32 %v294, %v290
      %v296 = vrot.slane %v295, 4
      %v298 = vshll.u32 %v259, 16
      %v300 = vrot.slane %v298, 5
      %v301 = vsel %vm277, %v296, %v300
      %v303 = vshrl.u32 %v225, 16
      %v305 = vrot.slane %v303, 4
      %v306 = vshll.u32 %v225, 16
      %v308 = vrot.slane %v306, 5
      %v309 = vor.u32 %v305, %v308
      %v310 = vrot.slane %v309, 4
      %v312 = vshll.u32 %v226, 16
      %v314 = vrot.slane %v312, 5
      %v315 = vsel %vm277, %v310, %v314
      %v316 = vshrl.u32 %v226, 16
      %v318 = vrot.slane %v316, 4
      %v319 = vor.u32 %v318, %v314
      %v320 = vrot.slane %v319, 4
      %v322 = vshll.u32 %v260, 16
      %v324 = vrot.slane %v322, 5
      %v325 = vsel %vm277, %v320, %v324
      %v327 = vshrl.u32 %v227, 16
      %v329 = vrot.slane %v327, 4
      %v330 = vshll.u32 %v227, 16
      %v332 = vrot.slane %v330, 5
      %v333 = vor.u32 %v329, %v332
      %v334 = vrot.slane %v333, 4
      %v336 = vshll.u32 %v228, 16
      %v338 = vrot.slane %v336, 5
      %v339 = vsel %vm277, %v334, %v338
      %v340 = vshrl.u32 %v228, 16
      %v342 = vrot.slane %v340, 4
      %v343 = vor.u32 %v342, %v338
      %v344 = vrot.slane %v343, 4
      %v346 = vshll.u32 %v261, 16
      %v348 = vrot.slane %v346, 5
      %v349 = vsel %vm277, %v344, %v348
      %v351 = vshrl.u32 %v229, 16
      %v353 = vrot.slane %v351, 4
      %v354 = vshll.u32 %v229, 16
      %v356 = vrot.slane %v354, 5
      %v357 = vor.u32 %v353, %v356
      %v358 = vrot.slane %v357, 4
      %v360 = vshll.u32 %v230, 16
      %v362 = vrot.slane %v360, 5
      %v363 = vsel %vm277, %v358, %v362
      %v364 = vshrl.u32 %v230, 16
      %v366 = vrot.slane %v364, 4
      %v367 = vor.u32 %v366, %v362
      %v368 = vrot.slane %v367, 4
      %v370 = vshll.u32 %v262, 16
      %v372 = vrot.slane %v370, 5
      %v373 = vsel %vm277, %v368, %v372
      %v375 = vshrl.u32 %v231, 16
      %v377 = vrot.slane %v375, 4
      %v378 = vshll.u32 %v231, 16
      %v380 = vrot.slane %v378, 5
      %v381 = vor.u32 %v377, %v380
      %v382 = vrot.slane %v381, 4
      %v384 = vshll.u32 %v232, 16
      %v386 = vrot.slane %v384, 5
      %v387 = vsel %vm277, %v382, %v386
      %v388 = vshrl.u32 %v232, 16
      %v390 = vrot.slane %v388, 4
      %v391 = vor.u32 %v390, %v386
      %v392 = vrot.slane %v391, 4
      %v394 = vshll.u32 %v263, 16
      %v396 = vrot.slane %v394, 5
      %v397 = vsel %vm277, %v392, %v396
      %v399 = vshrl.u32 %v233, 16
      %v401 = vrot.slane %v399, 4
      %v402 = vshll.u32 %v233, 16
      %v404 = vrot.slane %v402, 5
      %v405 = vor.u32 %v401, %v404
      %v406 = vrot.slane %v405, 4
      %v408 = vshll.u32 %v234, 16
      %v410 = vrot.slane %v408, 5
      %v411 = vsel %vm277, %v406, %v410
      %v412 = vshrl.u32 %v234, 16
      %v414 = vrot.slane %v412, 4
      %v415 = vor.u32 %v414, %v410
      %v416 = vrot.slane %v415, 4
      %v418 = vshll.u32 %v264, 16
      %v420 = vrot.slane %v418, 5
      %v421 = vsel %vm277, %v416, %v420
      %v423 = vshrl.u32 %v235, 16
      %v425 = vrot.slane %v423, 4
      %v426 = vshll.u32 %v235, 16
      %v428 = vrot.slane %v426, 5
      %v429 = vor.u32 %v425, %v428
      %v430 = vrot.slane %v429, 4
      %v432 = vshll.u32 %v236, 16
      %v434 = vrot.slane %v432, 5
      %v435 = vsel %vm277, %v430, %v434
      %v436 = vshrl.u32 %v236, 16
      %v438 = vrot.slane %v436, 4
      %v439 = vor.u32 %v438, %v434
      %v440 = vrot.slane %v439, 4
      %v442 = vshll.u32 %v265, 16
      %v444 = vrot.slane %v442, 5
      %v445 = vsel %vm277, %v440, %v444
      %v447 = vshrl.u32 %v237, 16
      %v449 = vrot.slane %v447, 4
      %v450 = vshll.u32 %v237, 16
      %v452 = vrot.slane %v450, 5
      %v453 = vor.u32 %v449, %v452
      %v454 = vrot.slane %v453, 4
      %v456 = vshll.u32 %v238, 16
      %v458 = vrot.slane %v456, 5
      %v459 = vsel %vm277, %v454, %v458
      %v460 = vshrl.u32 %v238, 16
      %v462 = vrot.slane %v460, 4
      %v463 = vor.u32 %v462, %v458
      %v464 = vrot.slane %v463, 4
      %v466 = vshll.u32 %v266, 16
      %v468 = vrot.slane %v466, 5
      %v469 = vsel %vm277, %v464, %v468
      %v471 = vshrl.u32 %v239, 16
      %v473 = vrot.slane %v471, 4
      %v474 = vshll.u32 %v239, 16
      %v476 = vrot.slane %v474, 5
      %v477 = vor.u32 %v473, %v476
      %v478 = vrot.slane %v477, 4
      %v480 = vshll.u32 %v240, 16
      %v482 = vrot.slane %v480, 5
      %v483 = vsel %vm277, %v478, %v482
      %v484 = vshrl.u32 %v240, 16
      %v486 = vrot.slane %v484, 4
      %v487 = vor.u32 %v486, %v482
      %v488 = vrot.slane %v487, 4
      %v490 = vshll.u32 %v267, 16
      %v492 = vrot.slane %v490, 5
      %v493 = vsel %vm277, %v488, %v492
      %v495 = vshrl.u32 %v241, 16
      %v497 = vrot.slane %v495, 4
      %v498 = vshll.u32 %v241, 16
      %v500 = vrot.slane %v498, 5
      %v501 = vor.u32 %v497, %v500
      %v502 = vrot.slane %v501, 4
      %v504 = vshll.u32 %v242, 16
      %v506 = vrot.slane %v504, 5
      %v507 = vsel %vm277, %v502, %v506
      %v508 = vshrl.u32 %v242, 16
      %v510 = vrot.slane %v508, 4
      %v511 = vor.u32 %v510, %v506
      %v512 = vrot.slane %v511, 4
      %v514 = vshll.u32 %v268, 16
      %v516 = vrot.slane %v514, 5
      %v517 = vsel %vm277, %v512, %v516
      %v519 = vshrl.u32 %v243, 16
      %v521 = vrot.slane %v519, 4
      %v522 = vshll.u32 %v243, 16
      %v524 = vrot.slane %v522, 5
      %v525 = vor.u32 %v521, %v524
      %v526 = vrot.slane %v525, 4
      %v528 = vshll.u32 %v244, 16
      %v530 = vrot.slane %v528, 5
      %v531 = vsel %vm277, %v526, %v530
      %v532 = vshrl.u32 %v244, 16
      %v534 = vrot.slane %v532, 4
      %v535 = vor.u32 %v534, %v530
      %v536 = vrot.slane %v535, 4
      %v538 = vshll.u32 %v269, 16
      %v540 = vrot.slane %v538, 5
      %v541 = vsel %vm277, %v536, %v540
      %v543 = vshrl.u32 %v245, 16
      %v545 = vrot.slane %v543, 4
      %v546 = vshll.u32 %v245, 16
      %v548 = vrot.slane %v546, 5
      %v549 = vor.u32 %v545, %v548
      %v550 = vrot.slane %v549, 4
      %v552 = vshll.u32 %v246, 16
      %v554 = vrot.slane %v552, 5
      %v555 = vsel %vm277, %v550, %v554
      %v556 = vshrl.u32 %v246, 16
      %v558 = vrot.slane %v556, 4
      %v559 = vor.u32 %v558, %v554
      %v560 = vrot.slane %v559, 4
      %v562 = vshll.u32 %v270, 16
      %v564 = vrot.slane %v562, 5
      %v565 = vsel %vm277, %v560, %v564
      %v567 = vshrl.u32 %v247, 16
      %v569 = vrot.slane %v567, 4
      %v570 = vshll.u32 %v247, 16
      %v572 = vrot.slane %v570, 5
      %v573 = vor.u32 %v569, %v572
      %v574 = vrot.slane %v573, 4
      %v576 = vshll.u32 %v248, 16
      %v578 = vrot.slane %v576, 5
      %v579 = vsel %vm277, %v574, %v578
      %v580 = vshrl.u32 %v248, 16
      %v582 = vrot.slane %v580, 4
      %v583 = vor.u32 %v582, %v578
      %v584 = vrot.slane %v583, 4
      %v586 = vshll.u32 %v271, 16
      %v588 = vrot.slane %v586, 5
      %v589 = vsel %vm277, %v584, %v588
      %v591 = vshrl.u32 %v249, 16
      %v593 = vrot.slane %v591, 4
      %v594 = vshll.u32 %v249, 16
      %v596 = vrot.slane %v594, 5
      %v597 = vor.u32 %v593, %v596
      %v598 = vrot.slane %v597, 4
      %v600 = vshll.u32 %v250, 16
      %v602 = vrot.slane %v600, 5
      %v603 = vsel %vm277, %v598, %v602
      %v604 = vshrl.u32 %v250, 16
      %v606 = vrot.slane %v604, 4
      %v607 = vor.u32 %v606, %v602
      %v608 = vrot.slane %v607, 4
      %v610 = vshll.u32 %v272, 16
      %v612 = vrot.slane %v610, 5
      %v613 = vsel %vm277, %v608, %v612
      %v615 = vshrl.u32 %v251, 16
      %v617 = vrot.slane %v615, 4
      %v618 = vshll.u32 %v251, 16
      %v620 = vrot.slane %v618, 5
      %v621 = vor.u32 %v617, %v620
      %v622 = vrot.slane %v621, 4
      %v624 = vshll.u32 %v252, 16
      %v626 = vrot.slane %v624, 5
      %v627 = vsel %vm277, %v622, %v626
      %v628 = vshrl.u32 %v252, 16
      %v630 = vrot.slane %v628, 4
      %v631 = vor.u32 %v630, %v626
      %v632 = vrot.slane %v631, 4
      %v634 = vshll.u32 %v273, 16
      %v636 = vrot.slane %v634, 5
      %v637 = vsel %vm277, %v632, %v636
      %v639 = vshrl.u32 %v253, 16
      %v641 = vrot.slane %v639, 4
      %v642 = vshll.u32 %v253, 16
      %v644 = vrot.slane %v642, 5
      %v645 = vor.u32 %v641, %v644
      %v646 = vrot.slane %v645, 4
      %v648 = vshll.u32 %v254, 16
      %v650 = vrot.slane %v648, 5
      %v651 = vsel %vm277, %v646, %v650
      %v652 = vshrl.u32 %v254, 16
      %v654 = vrot.slane %v652, 4
      %v655 = vor.u32 %v654, %v650
      %v656 = vrot.slane %v655, 4
      %v658 = vshll.u32 %v274, 16
      %v660 = vrot.slane %v658, 5
      %v661 = vsel %vm277, %v656, %v660
      %s662 = scalar_lea.vmem %s210, 16
      %v663 = vld [vmem:[%s662] sm:$0xf]
      %v664 = vld [vmem:[%s662 + $0x4] sm:$0xf]
      %v665 = vld [vmem:[%s662 + $0x8] sm:$0xf]
      %v666 = vld [vmem:[%s662 + $0xc] sm:$0xf]
      %v667 = vunpack.c.l.b16 %v291
      %v668 = vunpack.c.l.b16 %v301
      %v669 = vunpack.c.l.b16 %v315
      %v670 = vunpack.c.l.b16 %v325
      %v671 = vunpack.c.l.b16 %v339
      %v672 = vunpack.c.l.b16 %v349
      %v673 = vunpack.c.l.b16 %v363
      %v674 = vunpack.c.l.b16 %v373
      %v675 = vunpack.c.l.b16 %v387
      %v676 = vunpack.c.l.b16 %v397
      %v677 = vunpack.c.l.b16 %v411
      %v678 = vunpack.c.l.b16 %v421
      %v679 = vunpack.c.l.b16 %v435
      %v680 = vunpack.c.l.b16 %v445
      %v681 = vunpack.c.l.b16 %v459
      %v682 = vunpack.c.l.b16 %v469
      %v683 = vunpack.c.l.b16 %v483
      %v684 = vunpack.c.l.b16 %v493
      %v685 = vunpack.c.l.b16 %v507
      %v686 = vunpack.c.l.b16 %v517
      %v687 = vunpack.c.l.b16 %v531
      %v688 = vunpack.c.l.b16 %v541
      %v689 = vunpack.c.l.b16 %v555
      %v690 = vunpack.c.l.b16 %v565
      %v691 = vunpack.c.l.b16 %v579
      %v692 = vunpack.c.l.b16 %v589
      %v693 = vunpack.c.l.b16 %v603
      %v694 = vunpack.c.l.b16 %v613
      %v695 = vunpack.c.l.b16 %v627
      %v696 = vunpack.c.l.b16 %v637
      %v697 = vunpack.c.l.b16 %v651
      %v698 = vunpack.c.l.b16 %v661
      %v699 = vpack.c.b16 %v668, %v667
      %v700 = vpack.c.b16 %v670, %v669
      %v701 = vpack.c.b16 %v672, %v671
      %v702 = vpack.c.b16 %v674, %v673
      %v703 = vpack.c.b16 %v676, %v675
      %v704 = vpack.c.b16 %v678, %v677
      %v705 = vpack.c.b16 %v680, %v679
      %v706 = vpack.c.b16 %v682, %v681
      %v707 = vpack.c.b16 %v684, %v683
      %v708 = vpack.c.b16 %v686, %v685
      %v709 = vpack.c.b16 %v688, %v687
      %v710 = vpack.c.b16 %v690, %v689
      %v711 = vpack.c.b16 %v692, %v691
      %v712 = vpack.c.b16 %v694, %v693
      %v713 = vpack.c.b16 %v696, %v695
      %v714 = vpack.c.b16 %v698, %v697
      %v719 = vunpack.c.l.b16 %v663
      %v720 = vunpack.c.l.b16 %v664
      %v721 = vunpack.c.l.b16 %v665
      %v722 = vunpack.c.l.b16 %v666
      %v723 = vpack.c.b16 %v720, %v719
      %v724 = vpack.c.b16 %v722, %v721
      %vm727 = vcmask 261120
      %v729 = vsel %vm727, %v699, 0
      %v732 = vsel %vm727, %v700, 0
      %v735 = vsel %vm727, %v701, 0
      %v738 = vsel %vm727, %v702, 0
      %v741 = vsel %vm727, %v703, 0
      %v744 = vsel %vm727, %v704, 0
      %v747 = vsel %vm727, %v705, 0
      %v750 = vsel %vm727, %v706, 0
      %v753 = vsel %vm727, %v707, 0
      %v756 = vsel %vm727, %v708, 0
      %v759 = vsel %vm727, %v709, 0
      %v762 = vsel %vm727, %v710, 0
      %v765 = vsel %vm727, %v711, 0
      %v768 = vsel %vm727, %v712, 0
      %v771 = vsel %vm727, %v713, 0
      %v774 = vsel %vm727, %v714, 0
      %776 = vmatprep.subr.bf16.mxu0 0
      %777 = vmatpush1.bf16.msra.mxu0 %v723
      %778 = vmatprep.subr.bf16.mxu0 0
      %779 = vmatpush1.bf16.msra.mxu0 %v724
      %780 = vmatprep.subr.bf16.mxu0 0
      %781 = vmatpush1.bf16.msra.mxu0 0
      %782 = vmatprep.subr.bf16.mxu0 0
      %783 = vmatpush1.bf16.msra.mxu0 0
      %784 = vmatprep.subr.bf16.mxu0 0
      %785 = vmatpush1.bf16.msra.mxu0 0
      %786 = vmatprep.subr.bf16.mxu0 0
      %787 = vmatpush1.bf16.msra.mxu0 0
      %788 = vmatprep.subr.bf16.mxu0 0
      %789 = vmatpush1.bf16.msra.mxu0 0
      %790 = vmatprep.subr.bf16.mxu0 0
      %791 = vmatpush1.bf16.msra.mxu0 0
      %792 = vmatprep.subr.bf16.mxu0 0
      %793 = vmatpush1.bf16.msra.mxu0 0
      %794 = vmatprep.subr.bf16.mxu0 0
      %795 = vmatpush1.bf16.msra.mxu0 0
      %796 = vmatprep.subr.bf16.mxu0 0
      %797 = vmatpush1.bf16.msra.mxu0 0
      %798 = vmatprep.subr.bf16.mxu0 0
      %799 = vmatpush1.bf16.msra.mxu0 0
      %800 = vmatprep.subr.bf16.mxu0 0
      %801 = vmatpush1.bf16.msra.mxu0 0
      %802 = vmatprep.subr.bf16.mxu0 0
      %803 = vmatpush1.bf16.msra.mxu0 0
      %804 = vmatprep.subr.bf16.mxu0 0
      %805 = vmatpush1.bf16.msra.mxu0 0
      %806 = vmatprep.subr.bf16.mxu0 0
      %807 = vmatpush1.bf16.msra.mxu0 0
      %808 = vmatprep.mubr.bf16.mxu0 0
      %809 = vmatmul.mubr.bf16.gmra.mrb[0].mxu0 %v729
      %v810 = vpop.f32.mrb[0].mxu0
      %v811 = vadd.f32 0.0, %v810
      %v812 = vpop.f32.mrb[0].mxu0
      %v813 = vpop.f32.mrb[0].mxu0
      %v814 = vadd.f32 0.0, %v813
      %v815 = vpop.f32.mrb[0].mxu0
      %816 = vmatprep.mubr.bf16.mxu0 0
      %817 = vmatmul.mubr.bf16.gmra.mrb[0].mxu0 %v732
      %v818 = vpop.f32.mrb[0].mxu0
      %v819 = vadd.f32 0.0, %v818
      %v820 = vpop.f32.mrb[0].mxu0
      %v821 = vpop.f32.mrb[0].mxu0
      %v822 = vadd.f32 0.0, %v821
      %v823 = vpop.f32.mrb[0].mxu0
      %824 = vmatprep.mubr.bf16.mxu0 0
      %825 = vmatmul.mubr.bf16.gmra.mrb[0].mxu0 %v735
      %v826 = vpop.f32.mrb[0].mxu0
      %v827 = vadd.f32 0.0, %v826
      %v828 = vpop.f32.mrb[0].mxu0
      %v829 = vpop.f32.mrb[0].mxu0
      %v830 = vadd.f32 0.0, %v829
      %v831 = vpop.f32.mrb[0].mxu0
      %832 = vmatprep.mubr.bf16.mxu0 0
      %833 = vmatmul.mubr.bf16.gmra.mrb[0].mxu0 %v738
      %v834 = vpop.f32.mrb[0].mxu0
      %v835 = vadd.f32 0.0, %v834
      %v836 = vpop.f32.mrb[0].mxu0
      %v837 = vpop.f32.mrb[0].mxu0
      %v838 = vadd.f32 0.0, %v837
      %v839 = vpop.f32.mrb[0].mxu0
      %840 = vmatprep.mubr.bf16.mxu0 0
      %841 = vmatmul.mubr.bf16.gmra.mrb[0].mxu0 %v741
      %v842 = vpop.f32.mrb[0].mxu0
      %v843 = vadd.f32 0.0, %v842
      %v844 = vpop.f32.mrb[0].mxu0
      %v845 = vpop.f32.mrb[0].mxu0
      %v846 = vadd.f32 0.0, %v845
      %v847 = vpop.f32.mrb[0].mxu0
      %848 = vmatprep.mubr.bf16.mxu0 0
      %849 = vmatmul.mubr.bf16.gmra.mrb[0].mxu0 %v744
      %v850 = vpop.f32.mrb[0].mxu0
      %v851 = vadd.f32 0.0, %v850
      %v852 = vpop.f32.mrb[0].mxu0
      %v853 = vpop.f32.mrb[0].mxu0
      %v854 = vadd.f32 0.0, %v853
      %v855 = vpop.f32.mrb[0].mxu0
      %856 = vmatprep.mubr.bf16.mxu0 0
      %857 = vmatmul.mubr.bf16.gmra.mrb[0].mxu0 %v747
      %v858 = vpop.f32.mrb[0].mxu0
      %v859 = vadd.f32 0.0, %v858
      %v860 = vpop.f32.mrb[0].mxu0
      %v861 = vpop.f32.mrb[0].mxu0
      %v862 = vadd.f32 0.0, %v861
      %v863 = vpop.f32.mrb[0].mxu0
      %864 = vmatprep.mubr.bf16.mxu0 0
      %865 = vmatmul.mubr.bf16.gmra.mrb[0].mxu0 %v750
      %v866 = vpop.f32.mrb[0].mxu0
      %v867 = vadd.f32 0.0, %v866
      %v868 = vpop.f32.mrb[0].mxu0
      %v869 = vpop.f32.mrb[0].mxu0
      %v870 = vadd.f32 0.0, %v869
      %v871 = vpop.f32.mrb[0].mxu0
      %872 = vmatprep.mubr.bf16.mxu0 0
      %873 = vmatmul.mubr.bf16.gmra.mrb[0].mxu0 %v753
      %v874 = vpop.f32.mrb[0].mxu0
      %v875 = vadd.f32 0.0, %v874
      %v876 = vpop.f32.mrb[0].mxu0
      %v877 = vpop.f32.mrb[0].mxu0
      %v878 = vadd.f32 0.0, %v877
      %v879 = vpop.f32.mrb[0].mxu0
      %880 = vmatprep.mubr.bf16.mxu0 0
      %881 = vmatmul.mubr.bf16.gmra.mrb[0].mxu0 %v756
      %v882 = vpop.f32.mrb[0].mxu0
      %v883 = vadd.f32 0.0, %v882
      %v884 = vpop.f32.mrb[0].mxu0
      %v885 = vpop.f32.mrb[0].mxu0
      %v886 = vadd.f32 0.0, %v885
      %v887 = vpop.f32.mrb[0].mxu0
      %888 = vmatprep.mubr.bf16.mxu0 0
      %889 = vmatmul.mubr.bf16.gmra.mrb[0].mxu0 %v759
      %v890 = vpop.f32.mrb[0].mxu0
      %v891 = vadd.f32 0.0, %v890
      %v892 = vpop.f32.mrb[0].mxu0
      %v893 = vpop.f32.mrb[0].mxu0
      %v894 = vadd.f32 0.0, %v893
      %v895 = vpop.f32.mrb[0].mxu0
      %896 = vmatprep.mubr.bf16.mxu0 0
      %897 = vmatmul.mubr.bf16.gmra.mrb[0].mxu0 %v762
      %v898 = vpop.f32.mrb[0].mxu0
      %v899 = vadd.f32 0.0, %v898
      %v900 = vpop.f32.mrb[0].mxu0
      %v901 = vpop.f32.mrb[0].mxu0
      %v902 = vadd.f32 0.0, %v901
      %v903 = vpop.f32.mrb[0].mxu0
      %904 = vmatprep.mubr.bf16.mxu0 0
      %905 = vmatmul.mubr.bf16.gmra.mrb[0].mxu0 %v765
      %v906 = vpop.f32.mrb[0].mxu0
      %v907 = vadd.f32 0.0, %v906
      %v908 = vpop.f32.mrb[0].mxu0
      %v909 = vpop.f32.mrb[0].mxu0
      %v910 = vadd.f32 0.0, %v909
      %v911 = vpop.f32.mrb[0].mxu0
      %912 = vmatprep.mubr.bf16.mxu0 0
      %913 = vmatmul.mubr.bf16.gmra.mrb[0].mxu0 %v768
      %v914 = vpop.f32.mrb[0].mxu0
      %v915 = vadd.f32 0.0, %v914
      %v916 = vpop.f32.mrb[0].mxu0
      %v917 = vpop.f32.mrb[0].mxu0
      %v918 = vadd.f32 0.0, %v917
      %v919 = vpop.f32.mrb[0].mxu0
      %920 = vmatprep.mubr.bf16.mxu0 0
      %921 = vmatmul.mubr.bf16.gmra.mrb[0].mxu0 %v771
      %v922 = vpop.f32.mrb[0].mxu0
      %v923 = vadd.f32 0.0, %v922
      %v924 = vpop.f32.mrb[0].mxu0
      %v925 = vpop.f32.mrb[0].mxu0
      %v926 = vadd.f32 0.0, %v925
      %v927 = vpop.f32.mrb[0].mxu0
      %928 = vmatprep.mubr.bf16.mxu0 0
      %929 = vmatmul.mubr.bf16.gmra.mrb[0].mxu0 %v774
      %v930 = vpop.f32.mrb[0].mxu0
      %v931 = vadd.f32 0.0, %v930
      %v932 = vpop.f32.mrb[0].mxu0
      %v933 = vpop.f32.mrb[0].mxu0
      %v934 = vadd.f32 0.0, %v933
      %v935 = vpop.f32.mrb[0].mxu0
      %936 = vdwg.mxu0
      %v969 = vunpack.c.l.b16 %v223
      %v970 = vunpack.c.l.b16 %v224
      %v971 = vunpack.c.l.b16 %v225
      %v972 = vunpack.c.l.b16 %v226
      %v973 = vunpack.c.l.b16 %v227
      %v974 = vunpack.c.l.b16 %v228
      %v975 = vunpack.c.l.b16 %v229
      %v976 = vunpack.c.l.b16 %v230
      %v977 = vunpack.c.l.b16 %v231
      %v978 = vunpack.c.l.b16 %v232
      %v979 = vunpack.c.l.b16 %v233
      %v980 = vunpack.c.l.b16 %v234
      %v981 = vunpack.c.l.b16 %v235
      %v982 = vunpack.c.l.b16 %v236
      %v983 = vunpack.c.l.b16 %v237
      %v984 = vunpack.c.l.b16 %v238
      %v985 = vunpack.c.l.b16 %v239
      %v986 = vunpack.c.l.b16 %v240
      %v987 = vunpack.c.l.b16 %v241
      %v988 = vunpack.c.l.b16 %v242
      %v989 = vunpack.c.l.b16 %v243
      %v990 = vunpack.c.l.b16 %v244
      %v991 = vunpack.c.l.b16 %v245
      %v992 = vunpack.c.l.b16 %v246
      %v993 = vunpack.c.l.b16 %v247
      %v994 = vunpack.c.l.b16 %v248
      %v995 = vunpack.c.l.b16 %v249
      %v996 = vunpack.c.l.b16 %v250
      %v997 = vunpack.c.l.b16 %v251
      %v998 = vunpack.c.l.b16 %v252
      %v999 = vunpack.c.l.b16 %v253
      %v1000 = vunpack.c.l.b16 %v254
      %v1001 = vpack.c.b16 %v970, %v969
      %v1002 = vpack.c.b16 %v972, %v971
      %v1003 = vpack.c.b16 %v974, %v973
      %v1004 = vpack.c.b16 %v976, %v975
      %v1005 = vpack.c.b16 %v978, %v977
      %v1006 = vpack.c.b16 %v980, %v979
      %v1007 = vpack.c.b16 %v982, %v981
      %v1008 = vpack.c.b16 %v984, %v983
      %v1009 = vpack.c.b16 %v986, %v985
      %v1010 = vpack.c.b16 %v988, %v987
      %v1011 = vpack.c.b16 %v990, %v989
      %v1012 = vpack.c.b16 %v992, %v991
      %v1013 = vpack.c.b16 %v994, %v993
      %v1014 = vpack.c.b16 %v996, %v995
      %v1015 = vpack.c.b16 %v998, %v997
      %v1016 = vpack.c.b16 %v1000, %v999
      %v1021 = vunpack.c.l.b16 %v255
      %v1022 = vunpack.c.l.b16 %v256
      %v1023 = vunpack.c.l.b16 %v257
      %v1024 = vunpack.c.l.b16 %v258
      %v1025 = vpack.c.b16 %v1022, %v1021
      %v1026 = vpack.c.b16 %v1024, %v1023
      %v1030 = vsel %vm727, %v1001, 0
      %v1033 = vsel %vm727, %v1002, 0
      %v1036 = vsel %vm727, %v1003, 0
      %v1039 = vsel %vm727, %v1004, 0
      %v1042 = vsel %vm727, %v1005, 0
      %v1045 = vsel %vm727, %v1006, 0
      %v1048 = vsel %vm727, %v1007, 0
      %v1051 = vsel %vm727, %v1008, 0
      %v1054 = vsel %vm727, %v1009, 0
      %v1057 = vsel %vm727, %v1010, 0
      %v1060 = vsel %vm727, %v1011, 0
      %v1063 = vsel %vm727, %v1012, 0
      %v1066 = vsel %vm727, %v1013, 0
      %v1069 = vsel %vm727, %v1014, 0
      %v1072 = vsel %vm727, %v1015, 0
      %v1075 = vsel %vm727, %v1016, 0
      %1077 = vmatprep.subr.bf16.mxu0 0
      %1078 = vmatpush1.bf16.msra.mxu0 %v1025
      %1079 = vmatprep.subr.bf16.mxu0 0
      %1080 = vmatpush1.bf16.msra.mxu0 %v1026
      %1081 = vmatprep.subr.bf16.mxu0 0
      %1082 = vmatpush1.bf16.msra.mxu0 0
      %1083 = vmatprep.subr.bf16.mxu0 0
      %1084 = vmatpush1.bf16.msra.mxu0 0
      %1085 = vmatprep.subr.bf16.mxu0 0
      %1086 = vmatpush1.bf16.msra.mxu0 0
      %1087 = vmatprep.subr.bf16.mxu0 0
      %1088 = vmatpush1.bf16.msra.mxu0 0
      %1089 = vmatprep.subr.bf16.mxu0 0
      %1090 = vmatpush1.bf16.msra.mxu0 0
      %1091 = vmatprep.subr.bf16.mxu0 0
      %1092 = vmatpush1.bf16.msra.mxu0 0
      %1093 = vmatprep.subr.bf16.mxu0 0
      %1094 = vmatpush1.bf16.msra.mxu0 0
      %1095 = vmatprep.subr.bf16.mxu0 0
      %1096 = vmatpush1.bf16.msra.mxu0 0
      %1097 = vmatprep.subr.bf16.mxu0 0
      %1098 = vmatpush1.bf16.msra.mxu0 0
      %1099 = vmatprep.subr.bf16.mxu0 0
      %1100 = vmatpush1.bf16.msra.mxu0 0
      %1101 = vmatprep.subr.bf16.mxu0 0
      %1102 = vmatpush1.bf16.msra.mxu0 0
      %1103 = vmatprep.subr.bf16.mxu0 0
      %1104 = vmatpush1.bf16.msra.mxu0 0
      %1105 = vmatprep.subr.bf16.mxu0 0
      %1106 = vmatpush1.bf16.msra.mxu0 0
      %1107 = vmatprep.subr.bf16.mxu0 0
      %1108 = vmatpush1.bf16.msra.mxu0 0
      %1109 = vmatprep.mubr.bf16.mxu0 0
      %1110 = vmatmul.mubr.bf16.gmra.mrb[0].mxu0 %v1030
      %v1111 = vpop.f32.mrb[0].mxu0
      %v1112 = vadd.f32 %v811, %v1111
      %v1113 = vpop.f32.mrb[0].mxu0
      %v1114 = vpop.f32.mrb[0].mxu0
      %v1115 = vadd.f32 %v814, %v1114
      %v1116 = vpop.f32.mrb[0].mxu0
      %1117 = vmatprep.mubr.bf16.mxu0 0
      %1118 = vmatmul.mubr.bf16.gmra.mrb[0].mxu0 %v1033
      %v1119 = vpop.f32.mrb[0].mxu0
      %v1120 = vadd.f32 %v819, %v1119
      %v1121 = vpop.f32.mrb[0].mxu0
      %v1122 = vpop.f32.mrb[0].mxu0
      %v1123 = vadd.f32 %v822, %v1122
      %v1124 = vpop.f32.mrb[0].mxu0
      %1125 = vmatprep.mubr.bf16.mxu0 0
      %1126 = vmatmul.mubr.bf16.gmra.mrb[0].mxu0 %v1036
      %v1127 = vpop.f32.mrb[0].mxu0
      %v1128 = vadd.f32 %v827, %v1127
      %v1129 = vpop.f32.mrb[0].mxu0
      %v1130 = vpop.f32.mrb[0].mxu0
      %v1131 = vadd.f32 %v830, %v1130
      %v1132 = vpop.f32.mrb[0].mxu0
      %1133 = vmatprep.mubr.bf16.mxu0 0
      %1134 = vmatmul.mubr.bf16.gmra.mrb[0].mxu0 %v1039
      %v1135 = vpop.f32.mrb[0].mxu0
      %v1136 = vadd.f32 %v835, %v1135
      %v1137 = vpop.f32.mrb[0].mxu0
      %v1138 = vpop.f32.mrb[0].mxu0
      %v1139 = vadd.f32 %v838, %v1138
      %v1140 = vpop.f32.mrb[0].mxu0
      %1141 = vmatprep.mubr.bf16.mxu0 0
      %1142 = vmatmul.mubr.bf16.gmra.mrb[0].mxu0 %v1042
      %v1143 = vpop.f32.mrb[0].mxu0
      %v1144 = vadd.f32 %v843, %v1143
      %v1145 = vpop.f32.mrb[0].mxu0
      %v1146 = vpop.f32.mrb[0].mxu0
      %v1147 = vadd.f32 %v846, %v1146
      %v1148 = vpop.f32.mrb[0].mxu0
      %1149 = vmatprep.mubr.bf16.mxu0 0
      %1150 = vmatmul.mubr.bf16.gmra.mrb[0].mxu0 %v1045
      %v1151 = vpop.f32.mrb[0].mxu0
      %v1152 = vadd.f32 %v851, %v1151
      %v1153 = vpop.f32.mrb[0].mxu0
      %v1154 = vpop.f32.mrb[0].mxu0
      %v1155 = vadd.f32 %v854, %v1154
      %v1156 = vpop.f32.mrb[0].mxu0
      %1157 = vmatprep.mubr.bf16.mxu0 0
      %1158 = vmatmul.mubr.bf16.gmra.mrb[0].mxu0 %v1048
      %v1159 = vpop.f32.mrb[0].mxu0
      %v1160 = vadd.f32 %v859, %v1159
      %v1161 = vpop.f32.mrb[0].mxu0
      %v1162 = vpop.f32.mrb[0].mxu0
      %v1163 = vadd.f32 %v862, %v1162
      %v1164 = vpop.f32.mrb[0].mxu0
      %1165 = vmatprep.mubr.bf16.mxu0 0
      %1166 = vmatmul.mubr.bf16.gmra.mrb[0].mxu0 %v1051
      %v1167 = vpop.f32.mrb[0].mxu0
      %v1168 = vadd.f32 %v867, %v1167
      %v1169 = vpop.f32.mrb[0].mxu0
      %v1170 = vpop.f32.mrb[0].mxu0
      %v1171 = vadd.f32 %v870, %v1170
      %v1172 = vpop.f32.mrb[0].mxu0
      %1173 = vmatprep.mubr.bf16.mxu0 0
      %1174 = vmatmul.mubr.bf16.gmra.mrb[0].mxu0 %v1054
      %v1175 = vpop.f32.mrb[0].mxu0
      %v1176 = vadd.f32 %v875, %v1175
      %v1177 = vpop.f32.mrb[0].mxu0
      %v1178 = vpop.f32.mrb[0].mxu0
      %v1179 = vadd.f32 %v878, %v1178
      %v1180 = vpop.f32.mrb[0].mxu0
      %1181 = vmatprep.mubr.bf16.mxu0 0
      %1182 = vmatmul.mubr.bf16.gmra.mrb[0].mxu0 %v1057
      %v1183 = vpop.f32.mrb[0].mxu0
      %v1184 = vadd.f32 %v883, %v1183
      %v1185 = vpop.f32.mrb[0].mxu0
      %v1186 = vpop.f32.mrb[0].mxu0
      %v1187 = vadd.f32 %v886, %v1186
      %v1188 = vpop.f32.mrb[0].mxu0
      %1189 = vmatprep.mubr.bf16.mxu0 0
      %1190 = vmatmul.mubr.bf16.gmra.mrb[0].mxu0 %v1060
      %v1191 = vpop.f32.mrb[0].mxu0
      %v1192 = vadd.f32 %v891, %v1191
      %v1193 = vpop.f32.mrb[0].mxu0
      %v1194 = vpop.f32.mrb[0].mxu0
      %v1195 = vadd.f32 %v894, %v1194
      %v1196 = vpop.f32.mrb[0].mxu0
      %1197 = vmatprep.mubr.bf16.mxu0 0
      %1198 = vmatmul.mubr.bf16.gmra.mrb[0].mxu0 %v1063
      %v1199 = vpop.f32.mrb[0].mxu0
      %v1200 = vadd.f32 %v899, %v1199
      %v1201 = vpop.f32.mrb[0].mxu0
      %v1202 = vpop.f32.mrb[0].mxu0
      %v1203 = vadd.f32 %v902, %v1202
      %v1204 = vpop.f32.mrb[0].mxu0
      %1205 = vmatprep.mubr.bf16.mxu0 0
      %1206 = vmatmul.mubr.bf16.gmra.mrb[0].mxu0 %v1066
      %v1207 = vpop.f32.mrb[0].mxu0
      %v1208 = vadd.f32 %v907, %v1207
      %v1209 = vpop.f32.mrb[0].mxu0
      %v1210 = vpop.f32.mrb[0].mxu0
      %v1211 = vadd.f32 %v910, %v1210
      %v1212 = vpop.f32.mrb[0].mxu0
      %1213 = vmatprep.mubr.bf16.mxu0 0
      %1214 = vmatmul.mubr.bf16.gmra.mrb[0].mxu0 %v1069
      %v1215 = vpop.f32.mrb[0].mxu0
      %v1216 = vadd.f32 %v915, %v1215
      %v1217 = vpop.f32.mrb[0].mxu0
      %v1218 = vpop.f32.mrb[0].mxu0
      %v1219 = vadd.f32 %v918, %v1218
      %v1220 = vpop.f32.mrb[0].mxu0
      %1221 = vmatprep.mubr.bf16.mxu0 0
      %1222 = vmatmul.mubr.bf16.gmra.mrb[0].mxu0 %v1072
      %v1223 = vpop.f32.mrb[0].mxu0
      %v1224 = vadd.f32 %v923, %v1223
      %v1225 = vpop.f32.mrb[0].mxu0
      %v1226 = vpop.f32.mrb[0].mxu0
      %v1227 = vadd.f32 %v926, %v1226
      %v1228 = vpop.f32.mrb[0].mxu0
      %1229 = vmatprep.mubr.bf16.mxu0 0
      %1230 = vmatmul.mubr.bf16.gmra.mrb[0].mxu0 %v1075
      %v1231 = vpop.f32.mrb[0].mxu0
      %v1232 = vadd.f32 %v931, %v1231
      %v1233 = vpop.f32.mrb[0].mxu0
      %v1234 = vpop.f32.mrb[0].mxu0
      %v1235 = vadd.f32 %v934, %v1234
      %v1236 = vpop.f32.mrb[0].mxu0
      %1237 = vdwg.mxu0
      %v1238 = vld [vmem:[%s206] sm:$0xe]
      %v1239 = vld [vmem:[%s206 + $0xc] sm:$0xe]
      %v1240 = vld [vmem:[%s206 + $0x18] sm:$0xe]
      %v1241 = vld [vmem:[%s206 + $0x24] sm:$0xe]
      %v1242 = vld [vmem:[%s206 + $0x30] sm:$0xe]
      %v1243 = vld [vmem:[%s206 + $0x3c] sm:$0xe]
      %v1244 = vld [vmem:[%s206 + $0x48] sm:$0xe]
      %v1245 = vld [vmem:[%s206 + $0x54] sm:$0xe]
      %v1246 = vld [vmem:[%s206 + $0x60] sm:$0xe]
      %v1247 = vld [vmem:[%s206 + $0x6c] sm:$0xe]
      %v1248 = vld [vmem:[%s206 + $0x78] sm:$0xe]
      %v1249 = vld [vmem:[%s206 + $0x84] sm:$0xe]
      %v1250 = vld [vmem:[%s206 + $0x90] sm:$0xe]
      %v1251 = vld [vmem:[%s206 + $0x9c] sm:$0xe]
      %v1252 = vld [vmem:[%s206 + $0xa8] sm:$0xe]
      %v1253 = vld [vmem:[%s206 + $0xb4] sm:$0xe]
      %vm1286 = vcmask 1042432
      %vm1287 = vcmask 1046532
      %vm1288 = vmor %vm1286, %vm1287
      %v1289 = vrot.slane %v1238, 5
      %v1290 = vrot.slane %v1289, 4
      %v1291 = vrot.slane %v224, 5
      %v1292 = vsel %vm1288, %v1290, %v1291
      %v1293 = vrot.slane %v1291, 4
      %v1294 = vrot.slane %v259, 5
      %v1295 = vsel %vm1288, %v1293, %v1294
      %v1296 = vrot.slane %v1239, 5
      %v1297 = vrot.slane %v1296, 4
      %v1298 = vrot.slane %v226, 5
      %v1299 = vsel %vm1288, %v1297, %v1298
      %v1300 = vrot.slane %v1298, 4
      %v1301 = vrot.slane %v260, 5
      %v1302 = vsel %vm1288, %v1300, %v1301
      %v1303 = vrot.slane %v1240, 5
      %v1304 = vrot.slane %v1303, 4
      %v1305 = vrot.slane %v228, 5
      %v1306 = vsel %vm1288, %v1304, %v1305
      %v1307 = vrot.slane %v1305, 4
      %v1308 = vrot.slane %v261, 5
      %v1309 = vsel %vm1288, %v1307, %v1308
      %v1310 = vrot.slane %v1241, 5
      %v1311 = vrot.slane %v1310, 4
      %v1312 = vrot.slane %v230, 5
      %v1313 = vsel %vm1288, %v1311, %v1312
      %v1314 = vrot.slane %v1312, 4
      %v1315 = vrot.slane %v262, 5
      %v1316 = vsel %vm1288, %v1314, %v1315
      %v1317 = vrot.slane %v1242, 5
      %v1318 = vrot.slane %v1317, 4
      %v1319 = vrot.slane %v232, 5
      %v1320 = vsel %vm1288, %v1318, %v1319
      %v1321 = vrot.slane %v1319, 4
      %v1322 = vrot.slane %v263, 5
      %v1323 = vsel %vm1288, %v1321, %v1322
      %v1324 = vrot.slane %v1243, 5
      %v1325 = vrot.slane %v1324, 4
      %v1326 = vrot.slane %v234, 5
      %v1327 = vsel %vm1288, %v1325, %v1326
      %v1328 = vrot.slane %v1326, 4
      %v1329 = vrot.slane %v264, 5
      %v1330 = vsel %vm1288, %v1328, %v1329
      %v1331 = vrot.slane %v1244, 5
      %v1332 = vrot.slane %v1331, 4
      %v1333 = vrot.slane %v236, 5
      %v1334 = vsel %vm1288, %v1332, %v1333
      %v1335 = vrot.slane %v1333, 4
      %v1336 = vrot.slane %v265, 5
      %v1337 = vsel %vm1288, %v1335, %v1336
      %v1338 = vrot.slane %v1245, 5
      %v1339 = vrot.slane %v1338, 4
      %v1340 = vrot.slane %v238, 5
      %v1341 = vsel %vm1288, %v1339, %v1340
      %v1342 = vrot.slane %v1340, 4
      %v1343 = vrot.slane %v266, 5
      %v1344 = vsel %vm1288, %v1342, %v1343
      %v1345 = vrot.slane %v1246, 5
      %v1346 = vrot.slane %v1345, 4
      %v1347 = vrot.slane %v240, 5
      %v1348 = vsel %vm1288, %v1346, %v1347
      %v1349 = vrot.slane %v1347, 4
      %v1350 = vrot.slane %v267, 5
      %v1351 = vsel %vm1288, %v1349, %v1350
      %v1352 = vrot.slane %v1247, 5
      %v1353 = vrot.slane %v1352, 4
      %v1354 = vrot.slane %v242, 5
      %v1355 = vsel %vm1288, %v1353, %v1354
      %v1356 = vrot.slane %v1354, 4
      %v1357 = vrot.slane %v268, 5
      %v1358 = vsel %vm1288, %v1356, %v1357
      %v1359 = vrot.slane %v1248, 5
      %v1360 = vrot.slane %v1359, 4
      %v1361 = vrot.slane %v244, 5
      %v1362 = vsel %vm1288, %v1360, %v1361
      %v1363 = vrot.slane %v1361, 4
      %v1364 = vrot.slane %v269, 5
      %v1365 = vsel %vm1288, %v1363, %v1364
      %v1366 = vrot.slane %v1249, 5
      %v1367 = vrot.slane %v1366, 4
      %v1368 = vrot.slane %v246, 5
      %v1369 = vsel %vm1288, %v1367, %v1368
      %v1370 = vrot.slane %v1368, 4
      %v1371 = vrot.slane %v270, 5
      %v1372 = vsel %vm1288, %v1370, %v1371
      %v1373 = vrot.slane %v1250, 5
      %v1374 = vrot.slane %v1373, 4
      %v1375 = vrot.slane %v248, 5
      %v1376 = vsel %vm1288, %v1374, %v1375
      %v1377 = vrot.slane %v1375, 4
      %v1378 = vrot.slane %v271, 5
      %v1379 = vsel %vm1288, %v1377, %v1378
      %v1380 = vrot.slane %v1251, 5
      %v1381 = vrot.slane %v1380, 4
      %v1382 = vrot.slane %v250, 5
      %v1383 = vsel %vm1288, %v1381, %v1382
      %v1384 = vrot.slane %v1382, 4
      %v1385 = vrot.slane %v272, 5
      %v1386 = vsel %vm1288, %v1384, %v1385
      %v1387 = vrot.slane %v1252, 5
      %v1388 = vrot.slane %v1387, 4
      %v1389 = vrot.slane %v252, 5
      %v1390 = vsel %vm1288, %v1388, %v1389
      %v1391 = vrot.slane %v1389, 4
      %v1392 = vrot.slane %v273, 5
      %v1393 = vsel %vm1288, %v1391, %v1392
      %v1394 = vrot.slane %v1253, 5
      %v1395 = vrot.slane %v1394, 4
      %v1396 = vrot.slane %v254, 5
      %v1397 = vsel %vm1288, %v1395, %v1396
      %v1398 = vrot.slane %v1396, 4
      %v1399 = vrot.slane %v274, 5
      %v1400 = vsel %vm1288, %v1398, %v1399
      %s1401 = scalar_lea.vmem %s210, 32
      %v1402 = vld [vmem:[%s1401] sm:$0xf]
      %v1403 = vld [vmem:[%s1401 + $0x4] sm:$0xf]
      %v1404 = vld [vmem:[%s1401 + $0x8] sm:$0xf]
      %v1405 = vld [vmem:[%s1401 + $0xc] sm:$0xf]
      %v1406 = vunpack.c.l.b16 %v1292
      %v1407 = vunpack.c.l.b16 %v1295
      %v1408 = vunpack.c.l.b16 %v1299
      %v1409 = vunpack.c.l.b16 %v1302
      %v1410 = vunpack.c.l.b16 %v1306
      %v1411 = vunpack.c.l.b16 %v1309
      %v1412 = vunpack.c.l.b16 %v1313
      %v1413 = vunpack.c.l.b16 %v1316
      %v1414 = vunpack.c.l.b16 %v1320
      %v1415 = vunpack.c.l.b16 %v1323
      %v1416 = vunpack.c.l.b16 %v1327
      %v1417 = vunpack.c.l.b16 %v1330
      %v1418 = vunpack.c.l.b16 %v1334
      %v1419 = vunpack.c.l.b16 %v1337
      %v1420 = vunpack.c.l.b16 %v1341
      %v1421 = vunpack.c.l.b16 %v1344
      %v1422 = vunpack.c.l.b16 %v1348
      %v1423 = vunpack.c.l.b16 %v1351
      %v1424 = vunpack.c.l.b16 %v1355
      %v1425 = vunpack.c.l.b16 %v1358
      %v1426 = vunpack.c.l.b16 %v1362
      %v1427 = vunpack.c.l.b16 %v1365
      %v1428 = vunpack.c.l.b16 %v1369
      %v1429 = vunpack.c.l.b16 %v1372
      %v1430 = vunpack.c.l.b16 %v1376
      %v1431 = vunpack.c.l.b16 %v1379
      %v1432 = vunpack.c.l.b16 %v1383
      %v1433 = vunpack.c.l.b16 %v1386
      %v1434 = vunpack.c.l.b16 %v1390
      %v1435 = vunpack.c.l.b16 %v1393
      %v1436 = vunpack.c.l.b16 %v1397
      %v1437 = vunpack.c.l.b16 %v1400
      %v1438 = vpack.c.b16 %v1407, %v1406
      %v1439 = vpack.c.b16 %v1409, %v1408
      %v1440 = vpack.c.b16 %v1411, %v1410
      %v1441 = vpack.c.b16 %v1413, %v1412
      %v1442 = vpack.c.b16 %v1415, %v1414
      %v1443 = vpack.c.b16 %v1417, %v1416
      %v1444 = vpack.c.b16 %v1419, %v1418
      %v1445 = vpack.c.b16 %v1421, %v1420
      %v1446 = vpack.c.b16 %v1423, %v1422
      %v1447 = vpack.c.b16 %v1425, %v1424
      %v1448 = vpack.c.b16 %v1427, %v1426
      %v1449 = vpack.c.b16 %v1429, %v1428
      %v1450 = vpack.c.b16 %v1431, %v1430
      %v1451 = vpack.c.b16 %v1433, %v1432
      %v1452 = vpack.c.b16 %v1435, %v1434
      %v1453 = vpack.c.b16 %v1437, %v1436
      %v1458 = vunpack.c.l.b16 %v1402
      %v1459 = vunpack.c.l.b16 %v1403
      %v1460 = vunpack.c.l.b16 %v1404
      %v1461 = vunpack.c.l.b16 %v1405
      %v1462 = vpack.c.b16 %v1459, %v1458
      %v1463 = vpack.c.b16 %v1461, %v1460
      %v1467 = vsel %vm727, %v1438, 0
      %v1470 = vsel %vm727, %v1439, 0
      %v1473 = vsel %vm727, %v1440, 0
      %v1476 = vsel %vm727, %v1441, 0
      %v1479 = vsel %vm727, %v1442, 0
      %v1482 = vsel %vm727, %v1443, 0
      %v1485 = vsel %vm727, %v1444, 0
      %v1488 = vsel %vm727, %v1445, 0
      %v1491 = vsel %vm727, %v1446, 0
      %v1494 = vsel %vm727, %v1447, 0
      %v1497 = vsel %vm727, %v1448, 0
      %v1500 = vsel %vm727, %v1449, 0
      %v1503 = vsel %vm727, %v1450, 0
      %v1506 = vsel %vm727, %v1451, 0
      %v1509 = vsel %vm727, %v1452, 0
      %v1512 = vsel %vm727, %v1453, 0
      %1514 = vmatprep.subr.bf16.mxu0 0
      %1515 = vmatpush1.bf16.msra.mxu0 %v1462
      %1516 = vmatprep.subr.bf16.mxu0 0
      %1517 = vmatpush1.bf16.msra.mxu0 %v1463
      %1518 = vmatprep.subr.bf16.mxu0 0
      %1519 = vmatpush1.bf16.msra.mxu0 0
      %1520 = vmatprep.subr.bf16.mxu0 0
      %1521 = vmatpush1.bf16.msra.mxu0 0
      %1522 = vmatprep.subr.bf16.mxu0 0
      %1523 = vmatpush1.bf16.msra.mxu0 0
      %1524 = vmatprep.subr.bf16.mxu0 0
      %1525 = vmatpush1.bf16.msra.mxu0 0
      %1526 = vmatprep.subr.bf16.mxu0 0
      %1527 = vmatpush1.bf16.msra.mxu0 0
      %1528 = vmatprep.subr.bf16.mxu0 0
      %1529 = vmatpush1.bf16.msra.mxu0 0
      %1530 = vmatprep.subr.bf16.mxu0 0
      %1531 = vmatpush1.bf16.msra.mxu0 0
      %1532 = vmatprep.subr.bf16.mxu0 0
      %1533 = vmatpush1.bf16.msra.mxu0 0
      %1534 = vmatprep.subr.bf16.mxu0 0
      %1535 = vmatpush1.bf16.msra.mxu0 0
      %1536 = vmatprep.subr.bf16.mxu0 0
      %1537 = vmatpush1.bf16.msra.mxu0 0
      %1538 = vmatprep.subr.bf16.mxu0 0
      %1539 = vmatpush1.bf16.msra.mxu0 0
      %1540 = vmatprep.subr.bf16.mxu0 0
      %1541 = vmatpush1.bf16.msra.mxu0 0
      %1542 = vmatprep.subr.bf16.mxu0 0
      %1543 = vmatpush1.bf16.msra.mxu0 0
      %1544 = vmatprep.subr.bf16.mxu0 0
      %1545 = vmatpush1.bf16.msra.mxu0 0
      %1546 = vmatprep.mubr.bf16.mxu0 0
      %1547 = vmatmul.mubr.bf16.gmra.mrb[0].mxu0 %v1467
      %v1548 = vpop.f32.mrb[0].mxu0
      %v1549 = vadd.f32 0.0, %v1548
      %v1550 = vpop.f32.mrb[0].mxu0
      %v1551 = vpop.f32.mrb[0].mxu0
      %v1552 = vadd.f32 0.0, %v1551
      %v1553 = vpop.f32.mrb[0].mxu0
      %1554 = vmatprep.mubr.bf16.mxu0 0
      %1555 = vmatmul.mubr.bf16.gmra.mrb[0].mxu0 %v1470
      %v1556 = vpop.f32.mrb[0].mxu0
      %v1557 = vadd.f32 0.0, %v1556
      %v1558 = vpop.f32.mrb[0].mxu0
      %v1559 = vpop.f32.mrb[0].mxu0
      %v1560 = vadd.f32 0.0, %v1559
      %v1561 = vpop.f32.mrb[0].mxu0
      %1562 = vmatprep.mubr.bf16.mxu0 0
      %1563 = vmatmul.mubr.bf16.gmra.mrb[0].mxu0 %v1473
      %v1564 = vpop.f32.mrb[0].mxu0
      %v1565 = vadd.f32 0.0, %v1564
      %v1566 = vpop.f32.mrb[0].mxu0
      %v1567 = vpop.f32.mrb[0].mxu0
      %v1568 = vadd.f32 0.0, %v1567
      %v1569 = vpop.f32.mrb[0].mxu0
      %1570 = vmatprep.mubr.bf16.mxu0 0
      %1571 = vmatmul.mubr.bf16.gmra.mrb[0].mxu0 %v1476
      %v1572 = vpop.f32.mrb[0].mxu0
      %v1573 = vadd.f32 0.0, %v1572
      %v1574 = vpop.f32.mrb[0].mxu0
      %v1575 = vpop.f32.mrb[0].mxu0
      %v1576 = vadd.f32 0.0, %v1575
      %v1577 = vpop.f32.mrb[0].mxu0
      %1578 = vmatprep.mubr.bf16.mxu0 0
      %1579 = vmatmul.mubr.bf16.gmra.mrb[0].mxu0 %v1479
      %v1580 = vpop.f32.mrb[0].mxu0
      %v1581 = vadd.f32 0.0, %v1580
      %v1582 = vpop.f32.mrb[0].mxu0
      %v1583 = vpop.f32.mrb[0].mxu0
      %v1584 = vadd.f32 0.0, %v1583
      %v1585 = vpop.f32.mrb[0].mxu0
      %1586 = vmatprep.mubr.bf16.mxu0 0
      %1587 = vmatmul.mubr.bf16.gmra.mrb[0].mxu0 %v1482
      %v1588 = vpop.f32.mrb[0].mxu0
      %v1589 = vadd.f32 0.0, %v1588
      %v1590 = vpop.f32.mrb[0].mxu0
      %v1591 = vpop.f32.mrb[0].mxu0
      %v1592 = vadd.f32 0.0, %v1591
      %v1593 = vpop.f32.mrb[0].mxu0
      %1594 = vmatprep.mubr.bf16.mxu0 0
      %1595 = vmatmul.mubr.bf16.gmra.mrb[0].mxu0 %v1485
      %v1596 = vpop.f32.mrb[0].mxu0
      %v1597 = vadd.f32 0.0, %v1596
      %v1598 = vpop.f32.mrb[0].mxu0
      %v1599 = vpop.f32.mrb[0].mxu0
      %v1600 = vadd.f32 0.0, %v1599
      %v1601 = vpop.f32.mrb[0].mxu0
      %1602 = vmatprep.mubr.bf16.mxu0 0
      %1603 = vmatmul.mubr.bf16.gmra.mrb[0].mxu0 %v1488
      %v1604 = vpop.f32.mrb[0].mxu0
      %v1605 = vadd.f32 0.0, %v1604
      %v1606 = vpop.f32.mrb[0].mxu0
      %v1607 = vpop.f32.mrb[0].mxu0
      %v1608 = vadd.f32 0.0, %v1607
      %v1609 = vpop.f32.mrb[0].mxu0
      %1610 = vmatprep.mubr.bf16.mxu0 0
      %1611 = vmatmul.mubr.bf16.gmra.mrb[0].mxu0 %v1491
      %v1612 = vpop.f32.mrb[0].mxu0
      %v1613 = vadd.f32 0.0, %v1612
      %v1614 = vpop.f32.mrb[0].mxu0
      %v1615 = vpop.f32.mrb[0].mxu0
      %v1616 = vadd.f32 0.0, %v1615
      %v1617 = vpop.f32.mrb[0].mxu0
      %1618 = vmatprep.mubr.bf16.mxu0 0
      %1619 = vmatmul.mubr.bf16.gmra.mrb[0].mxu0 %v1494
      %v1620 = vpop.f32.mrb[0].mxu0
      %v1621 = vadd.f32 0.0, %v1620
      %v1622 = vpop.f32.mrb[0].mxu0
      %v1623 = vpop.f32.mrb[0].mxu0
      %v1624 = vadd.f32 0.0, %v1623
      %v1625 = vpop.f32.mrb[0].mxu0
      %1626 = vmatprep.mubr.bf16.mxu0 0
      %1627 = vmatmul.mubr.bf16.gmra.mrb[0].mxu0 %v1497
      %v1628 = vpop.f32.mrb[0].mxu0
      %v1629 = vadd.f32 0.0, %v1628
      %v1630 = vpop.f32.mrb[0].mxu0
      %v1631 = vpop.f32.mrb[0].mxu0
      %v1632 = vadd.f32 0.0, %v1631
      %v1633 = vpop.f32.mrb[0].mxu0
      %1634 = vmatprep.mubr.bf16.mxu0 0
      %1635 = vmatmul.mubr.bf16.gmra.mrb[0].mxu0 %v1500
      %v1636 = vpop.f32.mrb[0].mxu0
      %v1637 = vadd.f32 0.0, %v1636
      %v1638 = vpop.f32.mrb[0].mxu0
      %v1639 = vpop.f32.mrb[0].mxu0
      %v1640 = vadd.f32 0.0, %v1639
      %v1641 = vpop.f32.mrb[0].mxu0
      %1642 = vmatprep.mubr.bf16.mxu0 0
      %1643 = vmatmul.mubr.bf16.gmra.mrb[0].mxu0 %v1503
      %v1644 = vpop.f32.mrb[0].mxu0
      %v1645 = vadd.f32 0.0, %v1644
      %v1646 = vpop.f32.mrb[0].mxu0
      %v1647 = vpop.f32.mrb[0].mxu0
      %v1648 = vadd.f32 0.0, %v1647
      %v1649 = vpop.f32.mrb[0].mxu0
      %1650 = vmatprep.mubr.bf16.mxu0 0
      %1651 = vmatmul.mubr.bf16.gmra.mrb[0].mxu0 %v1506
      %v1652 = vpop.f32.mrb[0].mxu0
      %v1653 = vadd.f32 0.0, %v1652
      %v1654 = vpop.f32.mrb[0].mxu0
      %v1655 = vpop.f32.mrb[0].mxu0
      %v1656 = vadd.f32 0.0, %v1655
      %v1657 = vpop.f32.mrb[0].mxu0
      %1658 = vmatprep.mubr.bf16.mxu0 0
      %1659 = vmatmul.mubr.bf16.gmra.mrb[0].mxu0 %v1509
      %v1660 = vpop.f32.mrb[0].mxu0
      %v1661 = vadd.f32 0.0, %v1660
      %v1662 = vpop.f32.mrb[0].mxu0
      %v1663 = vpop.f32.mrb[0].mxu0
      %v1664 = vadd.f32 0.0, %v1663
      %v1665 = vpop.f32.mrb[0].mxu0
      %1666 = vmatprep.mubr.bf16.mxu0 0
      %1667 = vmatmul.mubr.bf16.gmra.mrb[0].mxu0 %v1512
      %v1668 = vpop.f32.mrb[0].mxu0
      %v1669 = vadd.f32 0.0, %v1668
      %v1670 = vpop.f32.mrb[0].mxu0
      %v1671 = vpop.f32.mrb[0].mxu0
      %v1672 = vadd.f32 0.0, %v1671
      %v1673 = vpop.f32.mrb[0].mxu0
      %1674 = vdwg.mxu0
      %v1675 = vadd.f32 %v1112, %v1549
      %v1676 = vadd.f32 %v1115, %v1552
      %v1677 = vadd.f32 %v1120, %v1557
      %v1678 = vadd.f32 %v1123, %v1560
      %v1679 = vadd.f32 %v1128, %v1565
      %v1680 = vadd.f32 %v1131, %v1568
      %v1681 = vadd.f32 %v1136, %v1573
      %v1682 = vadd.f32 %v1139, %v1576
      %v1683 = vadd.f32 %v1144, %v1581
      %v1684 = vadd.f32 %v1147, %v1584
      %v1685 = vadd.f32 %v1152, %v1589
      %v1686 = vadd.f32 %v1155, %v1592
      %v1687 = vadd.f32 %v1160, %v1597
      %v1688 = vadd.f32 %v1163, %v1600
      %v1689 = vadd.f32 %v1168, %v1605
      %v1690 = vadd.f32 %v1171, %v1608
      %v1691 = vadd.f32 %v1176, %v1613
      %v1692 = vadd.f32 %v1179, %v1616
      %v1693 = vadd.f32 %v1184, %v1621
      %v1694 = vadd.f32 %v1187, %v1624
      %v1695 = vadd.f32 %v1192, %v1629
      %v1696 = vadd.f32 %v1195, %v1632
      %v1697 = vadd.f32 %v1200, %v1637
      %v1698 = vadd.f32 %v1203, %v1640
      %v1699 = vadd.f32 %v1208, %v1645
      %v1700 = vadd.f32 %v1211, %v1648
      %v1701 = vadd.f32 %v1216, %v1653
      %v1702 = vadd.f32 %v1219, %v1656
      %v1703 = vadd.f32 %v1224, %v1661
      %v1704 = vadd.f32 %v1227, %v1664
      %v1705 = vadd.f32 %v1232, %v1669
      %v1706 = vadd.f32 %v1235, %v1672
      %s1707 = scalar_lea.vmem %s206, 12
      %v1708 = vld [vmem:[%s1707] sm:$0xf]
      %v1709 = vld [vmem:[%s1707 + $0x4] sm:$0xf]
      %v1710 = vld [vmem:[%s1707 + $0xc] sm:$0xf]
      %v1711 = vld [vmem:[%s1707 + $0x10] sm:$0xf]
      %v1712 = vld [vmem:[%s1707 + $0x18] sm:$0xf]
      %v1713 = vld [vmem:[%s1707 + $0x1c] sm:$0xf]
      %v1714 = vld [vmem:[%s1707 + $0x24] sm:$0xf]
      %v1715 = vld [vmem:[%s1707 + $0x28] sm:$0xf]
      %v1716 = vld [vmem:[%s1707 + $0x30] sm:$0xf]
      %v1717 = vld [vmem:[%s1707 + $0x34] sm:$0xf]
      %v1718 = vld [vmem:[%s1707 + $0x3c] sm:$0xf]
      %v1719 = vld [vmem:[%s1707 + $0x40] sm:$0xf]
      %v1720 = vld [vmem:[%s1707 + $0x48] sm:$0xf]
      %v1721 = vld [vmem:[%s1707 + $0x4c] sm:$0xf]
      %v1722 = vld [vmem:[%s1707 + $0x54] sm:$0xf]
      %v1723 = vld [vmem:[%s1707 + $0x58] sm:$0xf]
      %v1724 = vld [vmem:[%s1707 + $0x60] sm:$0xf]
      %v1725 = vld [vmem:[%s1707 + $0x64] sm:$0xf]
      %v1726 = vld [vmem:[%s1707 + $0x6c] sm:$0xf]
      %v1727 = vld [vmem:[%s1707 + $0x70] sm:$0xf]
      %v1728 = vld [vmem:[%s1707 + $0x78] sm:$0xf]
      %v1729 = vld [vmem:[%s1707 + $0x7c] sm:$0xf]
      %v1730 = vld [vmem:[%s1707 + $0x84] sm:$0xf]
      %v1731 = vld [vmem:[%s1707 + $0x88] sm:$0xf]
      %v1732 = vld [vmem:[%s1707 + $0x90] sm:$0xf]
      %v1733 = vld [vmem:[%s1707 + $0x94] sm:$0xf]
      %v1734 = vld [vmem:[%s1707 + $0x9c] sm:$0xf]
      %v1735 = vld [vmem:[%s1707 + $0xa0] sm:$0xf]
      %v1736 = vld [vmem:[%s1707 + $0xa8] sm:$0xf]
      %v1737 = vld [vmem:[%s1707 + $0xac] sm:$0xf]
      %v1738 = vld [vmem:[%s1707 + $0xb4] sm:$0xf]
      %v1739 = vld [vmem:[%s1707 + $0xb8] sm:$0xf]
      %s1740 = scalar_lea.vmem %s210, 48
      %v1741 = vld [vmem:[%s1740] sm:$0xf]
      %v1742 = vld [vmem:[%s1740 + $0x4] sm:$0xf]
      %v1743 = vld [vmem:[%s1740 + $0x8] sm:$0xf]
      %v1744 = vld [vmem:[%s1740 + $0xc] sm:$0xf]
      %v1777 = vunpack.c.l.b16 %v1708
      %v1778 = vunpack.c.l.b16 %v1709
      %v1779 = vunpack.c.l.b16 %v1710
      %v1780 = vunpack.c.l.b16 %v1711
      %v1781 = vunpack.c.l.b16 %v1712
      %v1782 = vunpack.c.l.b16 %v1713
      %v1783 = vunpack.c.l.b16 %v1714
      %v1784 = vunpack.c.l.b16 %v1715
      %v1785 = vunpack.c.l.b16 %v1716
      %v1786 = vunpack.c.l.b16 %v1717
      %v1787 = vunpack.c.l.b16 %v1718
      %v1788 = vunpack.c.l.b16 %v1719
      %v1789 = vunpack.c.l.b16 %v1720
      %v1790 = vunpack.c.l.b16 %v1721
      %v1791 = vunpack.c.l.b16 %v1722
      %v1792 = vunpack.c.l.b16 %v1723
      %v1793 = vunpack.c.l.b16 %v1724
      %v1794 = vunpack.c.l.b16 %v1725
      %v1795 = vunpack.c.l.b16 %v1726
      %v1796 = vunpack.c.l.b16 %v1727
      %v1797 = vunpack.c.l.b16 %v1728
      %v1798 = vunpack.c.l.b16 %v1729
      %v1799 = vunpack.c.l.b16 %v1730
      %v1800 = vunpack.c.l.b16 %v1731
      %v1801 = vunpack.c.l.b16 %v1732
      %v1802 = vunpack.c.l.b16 %v1733
      %v1803 = vunpack.c.l.b16 %v1734
      %v1804 = vunpack.c.l.b16 %v1735
      %v1805 = vunpack.c.l.b16 %v1736
      %v1806 = vunpack.c.l.b16 %v1737
      %v1807 = vunpack.c.l.b16 %v1738
      %v1808 = vunpack.c.l.b16 %v1739
      %v1809 = vpack.c.b16 %v1778, %v1777
      %v1810 = vpack.c.b16 %v1780, %v1779
      %v1811 = vpack.c.b16 %v1782, %v1781
      %v1812 = vpack.c.b16 %v1784, %v1783
      %v1813 = vpack.c.b16 %v1786, %v1785
      %v1814 = vpack.c.b16 %v1788, %v1787
      %v1815 = vpack.c.b16 %v1790, %v1789
      %v1816 = vpack.c.b16 %v1792, %v1791
      %v1817 = vpack.c.b16 %v1794, %v1793
      %v1818 = vpack.c.b16 %v1796, %v1795
      %v1819 = vpack.c.b16 %v1798, %v1797
      %v1820 = vpack.c.b16 %v1800, %v1799
      %v1821 = vpack.c.b16 %v1802, %v1801
      %v1822 = vpack.c.b16 %v1804, %v1803
      %v1823 = vpack.c.b16 %v1806, %v1805
      %v1824 = vpack.c.b16 %v1808, %v1807
      %v1829 = vunpack.c.l.b16 %v1741
      %v1830 = vunpack.c.l.b16 %v1742
      %v1831 = vunpack.c.l.b16 %v1743
      %v1832 = vunpack.c.l.b16 %v1744
      %v1833 = vpack.c.b16 %v1830, %v1829
      %v1834 = vpack.c.b16 %v1832, %v1831
      %v1838 = vsel %vm727, %v1809, 0
      %v1841 = vsel %vm727, %v1810, 0
      %v1844 = vsel %vm727, %v1811, 0
      %v1847 = vsel %vm727, %v1812, 0
      %v1850 = vsel %vm727, %v1813, 0
      %v1853 = vsel %vm727, %v1814, 0
      %v1856 = vsel %vm727, %v1815, 0
      %v1859 = vsel %vm727, %v1816, 0
      %v1862 = vsel %vm727, %v1817, 0
      %v1865 = vsel %vm727, %v1818, 0
      %v1868 = vsel %vm727, %v1819, 0
      %v1871 = vsel %vm727, %v1820, 0
      %v1874 = vsel %vm727, %v1821, 0
      %v1877 = vsel %vm727, %v1822, 0
      %v1880 = vsel %vm727, %v1823, 0
      %v1883 = vsel %vm727, %v1824, 0
      %1885 = vmatprep.subr.bf16.mxu0 0
      %1886 = vmatpush1.bf16.msra.mxu0 %v1833
      %1887 = vmatprep.subr.bf16.mxu0 0
      %1888 = vmatpush1.bf16.msra.mxu0 %v1834
      %1889 = vmatprep.subr.bf16.mxu0 0
      %1890 = vmatpush1.bf16.msra.mxu0 0
      %1891 = vmatprep.subr.bf16.mxu0 0
      %1892 = vmatpush1.bf16.msra.mxu0 0
      %1893 = vmatprep.subr.bf16.mxu0 0
      %1894 = vmatpush1.bf16.msra.mxu0 0
      %1895 = vmatprep.subr.bf16.mxu0 0
      %1896 = vmatpush1.bf16.msra.mxu0 0
      %1897 = vmatprep.subr.bf16.mxu0 0
      %1898 = vmatpush1.bf16.msra.mxu0 0
      %1899 = vmatprep.subr.bf16.mxu0 0
      %1900 = vmatpush1.bf16.msra.mxu0 0
      %1901 = vmatprep.subr.bf16.mxu0 0
      %1902 = vmatpush1.bf16.msra.mxu0 0
      %1903 = vmatprep.subr.bf16.mxu0 0
      %1904 = vmatpush1.bf16.msra.mxu0 0
      %1905 = vmatprep.subr.bf16.mxu0 0
      %1906 = vmatpush1.bf16.msra.mxu0 0
      %1907 = vmatprep.subr.bf16.mxu0 0
      %1908 = vmatpush1.bf16.msra.mxu0 0
      %1909 = vmatprep.subr.bf16.mxu0 0
      %1910 = vmatpush1.bf16.msra.mxu0 0
      %1911 = vmatprep.subr.bf16.mxu0 0
      %1912 = vmatpush1.bf16.msra.mxu0 0
      %1913 = vmatprep.subr.bf16.mxu0 0
      %1914 = vmatpush1.bf16.msra.mxu0 0
      %1915 = vmatprep.subr.bf16.mxu0 0
      %1916 = vmatpush1.bf16.msra.mxu0 0
      %1917 = vmatprep.mubr.bf16.mxu0 0
      %1918 = vmatmul.mubr.bf16.gmra.mrb[0].mxu0 %v1838
      %v1919 = vpop.f32.mrb[0].mxu0
      %v1920 = vadd.f32 0.0, %v1919
      %v1921 = vpop.f32.mrb[0].mxu0
      %v1922 = vpop.f32.mrb[0].mxu0
      %v1923 = vadd.f32 0.0, %v1922
      %v1924 = vpop.f32.mrb[0].mxu0
      %1925 = vmatprep.mubr.bf16.mxu0 0
      %1926 = vmatmul.mubr.bf16.gmra.mrb[0].mxu0 %v1841
      %v1927 = vpop.f32.mrb[0].mxu0
      %v1928 = vadd.f32 0.0, %v1927
      %v1929 = vpop.f32.mrb[0].mxu0
      %v1930 = vpop.f32.mrb[0].mxu0
      %v1931 = vadd.f32 0.0, %v1930
      %v1932 = vpop.f32.mrb[0].mxu0
      %1933 = vmatprep.mubr.bf16.mxu0 0
      %1934 = vmatmul.mubr.bf16.gmra.mrb[0].mxu0 %v1844
      %v1935 = vpop.f32.mrb[0].mxu0
      %v1936 = vadd.f32 0.0, %v1935
      %v1937 = vpop.f32.mrb[0].mxu0
      %v1938 = vpop.f32.mrb[0].mxu0
      %v1939 = vadd.f32 0.0, %v1938
      %v1940 = vpop.f32.mrb[0].mxu0
      %1941 = vmatprep.mubr.bf16.mxu0 0
      %1942 = vmatmul.mubr.bf16.gmra.mrb[0].mxu0 %v1847
      %v1943 = vpop.f32.mrb[0].mxu0
      %v1944 = vadd.f32 0.0, %v1943
      %v1945 = vpop.f32.mrb[0].mxu0
      %v1946 = vpop.f32.mrb[0].mxu0
      %v1947 = vadd.f32 0.0, %v1946
      %v1948 = vpop.f32.mrb[0].mxu0
      %1949 = vmatprep.mubr.bf16.mxu0 0
      %1950 = vmatmul.mubr.bf16.gmra.mrb[0].mxu0 %v1850
      %v1951 = vpop.f32.mrb[0].mxu0
      %v1952 = vadd.f32 0.0, %v1951
      %v1953 = vpop.f32.mrb[0].mxu0
      %v1954 = vpop.f32.mrb[0].mxu0
      %v1955 = vadd.f32 0.0, %v1954
      %v1956 = vpop.f32.mrb[0].mxu0
      %1957 = vmatprep.mubr.bf16.mxu0 0
      %1958 = vmatmul.mubr.bf16.gmra.mrb[0].mxu0 %v1853
      %v1959 = vpop.f32.mrb[0].mxu0
      %v1960 = vadd.f32 0.0, %v1959
      %v1961 = vpop.f32.mrb[0].mxu0
      %v1962 = vpop.f32.mrb[0].mxu0
      %v1963 = vadd.f32 0.0, %v1962
      %v1964 = vpop.f32.mrb[0].mxu0
      %1965 = vmatprep.mubr.bf16.mxu0 0
      %1966 = vmatmul.mubr.bf16.gmra.mrb[0].mxu0 %v1856
      %v1967 = vpop.f32.mrb[0].mxu0
      %v1968 = vadd.f32 0.0, %v1967
      %v1969 = vpop.f32.mrb[0].mxu0
      %v1970 = vpop.f32.mrb[0].mxu0
      %v1971 = vadd.f32 0.0, %v1970
      %v1972 = vpop.f32.mrb[0].mxu0
      %1973 = vmatprep.mubr.bf16.mxu0 0
      %1974 = vmatmul.mubr.bf16.gmra.mrb[0].mxu0 %v1859
      %v1975 = vpop.f32.mrb[0].mxu0
      %v1976 = vadd.f32 0.0, %v1975
      %v1977 = vpop.f32.mrb[0].mxu0
      %v1978 = vpop.f32.mrb[0].mxu0
      %v1979 = vadd.f32 0.0, %v1978
      %v1980 = vpop.f32.mrb[0].mxu0
      %1981 = vmatprep.mubr.bf16.mxu0 0
      %1982 = vmatmul.mubr.bf16.gmra.mrb[0].mxu0 %v1862
      %v1983 = vpop.f32.mrb[0].mxu0
      %v1984 = vadd.f32 0.0, %v1983
      %v1985 = vpop.f32.mrb[0].mxu0
      %v1986 = vpop.f32.mrb[0].mxu0
      %v1987 = vadd.f32 0.0, %v1986
      %v1988 = vpop.f32.mrb[0].mxu0
      %1989 = vmatprep.mubr.bf16.mxu0 0
      %1990 = vmatmul.mubr.bf16.gmra.mrb[0].mxu0 %v1865
      %v1991 = vpop.f32.mrb[0].mxu0
      %v1992 = vadd.f32 0.0, %v1991
      %v1993 = vpop.f32.mrb[0].mxu0
      %v1994 = vpop.f32.mrb[0].mxu0
      %v1995 = vadd.f32 0.0, %v1994
      %v1996 = vpop.f32.mrb[0].mxu0
      %1997 = vmatprep.mubr.bf16.mxu0 0
      %1998 = vmatmul.mubr.bf16.gmra.mrb[0].mxu0 %v1868
      %v1999 = vpop.f32.mrb[0].mxu0
      %v2000 = vadd.f32 0.0, %v1999
      %v2001 = vpop.f32.mrb[0].mxu0
      %v2002 = vpop.f32.mrb[0].mxu0
      %v2003 = vadd.f32 0.0, %v2002
      %v2004 = vpop.f32.mrb[0].mxu0
      %2005 = vmatprep.mubr.bf16.mxu0 0
      %2006 = vmatmul.mubr.bf16.gmra.mrb[0].mxu0 %v1871
      %v2007 = vpop.f32.mrb[0].mxu0
      %v2008 = vadd.f32 0.0, %v2007
      %v2009 = vpop.f32.mrb[0].mxu0
      %v2010 = vpop.f32.mrb[0].mxu0
      %v2011 = vadd.f32 0.0, %v2010
      %v2012 = vpop.f32.mrb[0].mxu0
      %2013 = vmatprep.mubr.bf16.mxu0 0
      %2014 = vmatmul.mubr.bf16.gmra.mrb[0].mxu0 %v1874
      %v2015 = vpop.f32.mrb[0].mxu0
      %v2016 = vadd.f32 0.0, %v2015
      %v2017 = vpop.f32.mrb[0].mxu0
      %v2018 = vpop.f32.mrb[0].mxu0
      %v2019 = vadd.f32 0.0, %v2018
      %v2020 = vpop.f32.mrb[0].mxu0
      %2021 = vmatprep.mubr.bf16.mxu0 0
      %2022 = vmatmul.mubr.bf16.gmra.mrb[0].mxu0 %v1877
      %v2023 = vpop.f32.mrb[0].mxu0
      %v2024 = vadd.f32 0.0, %v2023
      %v2025 = vpop.f32.mrb[0].mxu0
      %v2026 = vpop.f32.mrb[0].mxu0
      %v2027 = vadd.f32 0.0, %v2026
      %v2028 = vpop.f32.mrb[0].mxu0
      %2029 = vmatprep.mubr.bf16.mxu0 0
      %2030 = vmatmul.mubr.bf16.gmra.mrb[0].mxu0 %v1880
      %v2031 = vpop.f32.mrb[0].mxu0
      %v2032 = vadd.f32 0.0, %v2031
      %v2033 = vpop.f32.mrb[0].mxu0
      %v2034 = vpop.f32.mrb[0].mxu0
      %v2035 = vadd.f32 0.0, %v2034
      %v2036 = vpop.f32.mrb[0].mxu0
      %2037 = vmatprep.mubr.bf16.mxu0 0
      %2038 = vmatmul.mubr.bf16.gmra.mrb[0].mxu0 %v1883
      %v2039 = vpop.f32.mrb[0].mxu0
      %v2040 = vadd.f32 0.0, %v2039
      %v2041 = vpop.f32.mrb[0].mxu0
      %v2042 = vpop.f32.mrb[0].mxu0
      %v2043 = vadd.f32 0.0, %v2042
      %v2044 = vpop.f32.mrb[0].mxu0
      %2045 = vdwg.mxu0
      %v2046 = vadd.f32 %v1675, %v1920
      %v2047 = vadd.f32 %v1676, %v1923
      %v2048 = vadd.f32 %v1677, %v1928
      %v2049 = vadd.f32 %v1678, %v1931
      %v2050 = vadd.f32 %v1679, %v1936
      %v2051 = vadd.f32 %v1680, %v1939
      %v2052 = vadd.f32 %v1681, %v1944
      %v2053 = vadd.f32 %v1682, %v1947
      %v2054 = vadd.f32 %v1683, %v1952
      %v2055 = vadd.f32 %v1684, %v1955
      %v2056 = vadd.f32 %v1685, %v1960
      %v2057 = vadd.f32 %v1686, %v1963
      %v2058 = vadd.f32 %v1687, %v1968
      %v2059 = vadd.f32 %v1688, %v1971
      %v2060 = vadd.f32 %v1689, %v1976
      %v2061 = vadd.f32 %v1690, %v1979
      %v2062 = vadd.f32 %v1691, %v1984
      %v2063 = vadd.f32 %v1692, %v1987
      %v2064 = vadd.f32 %v1693, %v1992
      %v2065 = vadd.f32 %v1694, %v1995
      %v2066 = vadd.f32 %v1695, %v2000
      %v2067 = vadd.f32 %v1696, %v2003
      %v2068 = vadd.f32 %v1697, %v2008
      %v2069 = vadd.f32 %v1698, %v2011
      %v2070 = vadd.f32 %v1699, %v2016
      %v2071 = vadd.f32 %v1700, %v2019
      %v2072 = vadd.f32 %v1701, %v2024
      %v2073 = vadd.f32 %v1702, %v2027
      %v2074 = vadd.f32 %v1703, %v2032
      %v2075 = vadd.f32 %v1704, %v2035
      %v2076 = vadd.f32 %v1705, %v2040
      %v2077 = vadd.f32 %v1706, %v2043
      %v2078 = vld [vmem:[%s1707] sm:$0xf]
      %v2079 = vld [vmem:[%s1707 + $0x4] sm:$0xf]
      %v2080 = vld [vmem:[%s1707 + $0x8] sm:$0x1]
      %v2081 = vld [vmem:[%s1707 + $0xc] sm:$0xf]
      %v2082 = vld [vmem:[%s1707 + $0x10] sm:$0xf]
      %v2083 = vld [vmem:[%s1707 + $0x14] sm:$0x1]
      %v2084 = vld [vmem:[%s1707 + $0x18] sm:$0xf]
      %v2085 = vld [vmem:[%s1707 + $0x1c] sm:$0xf]
      %v2086 = vld [vmem:[%s1707 + $0x20] sm:$0x1]
      %v2087 = vld [vmem:[%s1707 + $0x24] sm:$0xf]
      %v2088 = vld [vmem:[%s1707 + $0x28] sm:$0xf]
      %v2089 = vld [vmem:[%s1707 + $0x2c] sm:$0x1]
      %v2090 = vld [vmem:[%s1707 + $0x30] sm:$0xf]
      %v2091 = vld [vmem:[%s1707 + $0x34] sm:$0xf]
      %v2092 = vld [vmem:[%s1707 + $0x38] sm:$0x1]
      %v2093 = vld [vmem:[%s1707 + $0x3c] sm:$0xf]
      %v2094 = vld [vmem:[%s1707 + $0x40] sm:$0xf]
      %v2095 = vld [vmem:[%s1707 + $0x44] sm:$0x1]
      %v2096 = vld [vmem:[%s1707 + $0x48] sm:$0xf]
      %v2097 = vld [vmem:[%s1707 + $0x4c] sm:$0xf]
      %v2098 = vld [vmem:[%s1707 + $0x50] sm:$0x1]
      %v2099 = vld [vmem:[%s1707 + $0x54] sm:$0xf]
      %v2100 = vld [vmem:[%s1707 + $0x58] sm:$0xf]
      %v2101 = vld [vmem:[%s1707 + $0x5c] sm:$0x1]
      %v2102 = vld [vmem:[%s1707 + $0x60] sm:$0xf]
      %v2103 = vld [vmem:[%s1707 + $0x64] sm:$0xf]
      %v2104 = vld [vmem:[%s1707 + $0x68] sm:$0x1]
      %v2105 = vld [vmem:[%s1707 + $0x6c] sm:$0xf]
      %v2106 = vld [vmem:[%s1707 + $0x70] sm:$0xf]
      %v2107 = vld [vmem:[%s1707 + $0x74] sm:$0x1]
      %v2108 = vld [vmem:[%s1707 + $0x78] sm:$0xf]
      %v2109 = vld [vmem:[%s1707 + $0x7c] sm:$0xf]
      %v2110 = vld [vmem:[%s1707 + $0x80] sm:$0x1]
      %v2111 = vld [vmem:[%s1707 + $0x84] sm:$0xf]
      %v2112 = vld [vmem:[%s1707 + $0x88] sm:$0xf]
      %v2113 = vld [vmem:[%s1707 + $0x8c] sm:$0x1]
      %v2114 = vld [vmem:[%s1707 + $0x90] sm:$0xf]
      %v2115 = vld [vmem:[%s1707 + $0x94] sm:$0xf]
      %v2116 = vld [vmem:[%s1707 + $0x98] sm:$0x1]
      %v2117 = vld [vmem:[%s1707 + $0x9c] sm:$0xf]
      %v2118 = vld [vmem:[%s1707 + $0xa0] sm:$0xf]
      %v2119 = vld [vmem:[%s1707 + $0xa4] sm:$0x1]
      %v2120 = vld [vmem:[%s1707 + $0xa8] sm:$0xf]
      %v2121 = vld [vmem:[%s1707 + $0xac] sm:$0xf]
      %v2122 = vld [vmem:[%s1707 + $0xb0] sm:$0x1]
      %v2123 = vld [vmem:[%s1707 + $0xb4] sm:$0xf]
      %v2124 = vld [vmem:[%s1707 + $0xb8] sm:$0xf]
      %v2125 = vld [vmem:[%s1707 + $0xbc] sm:$0x1]
      %v2127 = vshrl.u32 %v2078, 16
      %v2129 = vrot.slane %v2127, 4
      %v2130 = vshll.u32 %v2078, 16
      %v2132 = vrot.slane %v2130, 5
      %v2133 = vor.u32 %v2129, %v2132
      %v2134 = vrot.slane %v2133, 4
      %v2136 = vshll.u32 %v2079, 16
      %v2138 = vrot.slane %v2136, 5
      %v2139 = vsel %vm277, %v2134, %v2138
      %v2140 = vshrl.u32 %v2079, 16
      %v2142 = vrot.slane %v2140, 4
      %v2143 = vor.u32 %v2142, %v2138
      %v2144 = vrot.slane %v2143, 4
      %v2146 = vshll.u32 %v2080, 16
      %v2148 = vrot.slane %v2146, 5
      %v2149 = vsel %vm277, %v2144, %v2148
      %v2151 = vshrl.u32 %v2081, 16
      %v2153 = vrot.slane %v2151, 4
      %v2154 = vshll.u32 %v2081, 16
      %v2156 = vrot.slane %v2154, 5
      %v2157 = vor.u32 %v2153, %v2156
      %v2158 = vrot.slane %v2157, 4
      %v2160 = vshll.u32 %v2082, 16
      %v2162 = vrot.slane %v2160, 5
      %v2163 = vsel %vm277, %v2158, %v2162
      %v2164 = vshrl.u32 %v2082, 16
      %v2166 = vrot.slane %v2164, 4
      %v2167 = vor.u32 %v2166, %v2162
      %v2168 = vrot.slane %v2167, 4
      %v2170 = vshll.u32 %v2083, 16
      %v2172 = vrot.slane %v2170, 5
      %v2173 = vsel %vm277, %v2168, %v2172
      %v2175 = vshrl.u32 %v2084, 16
      %v2177 = vrot.slane %v2175, 4
      %v2178 = vshll.u32 %v2084, 16
      %v2180 = vrot.slane %v2178, 5
      %v2181 = vor.u32 %v2177, %v2180
      %v2182 = vrot.slane %v2181, 4
      %v2184 = vshll.u32 %v2085, 16
      %v2186 = vrot.slane %v2184, 5
      %v2187 = vsel %vm277, %v2182, %v2186
      %v2188 = vshrl.u32 %v2085, 16
      %v2190 = vrot.slane %v2188, 4
      %v2191 = vor.u32 %v2190, %v2186
      %v2192 = vrot.slane %v2191, 4
      %v2194 = vshll.u32 %v2086, 16
      %v2196 = vrot.slane %v2194, 5
      %v2197 = vsel %vm277, %v2192, %v2196
      %v2199 = vshrl.u32 %v2087, 16
      %v2201 = vrot.slane %v2199, 4
      %v2202 = vshll.u32 %v2087, 16
      %v2204 = vrot.slane %v2202, 5
      %v2205 = vor.u32 %v2201, %v2204
      %v2206 = vrot.slane %v2205, 4
      %v2208 = vshll.u32 %v2088, 16
      %v2210 = vrot.slane %v2208, 5
      %v2211 = vsel %vm277, %v2206, %v2210
      %v2212 = vshrl.u32 %v2088, 16
      %v2214 = vrot.slane %v2212, 4
      %v2215 = vor.u32 %v2214, %v2210
      %v2216 = vrot.slane %v2215, 4
      %v2218 = vshll.u32 %v2089, 16
      %v2220 = vrot.slane %v2218, 5
      %v2221 = vsel %vm277, %v2216, %v2220
      %v2223 = vshrl.u32 %v2090, 16
      %v2225 = vrot.slane %v2223, 4
      %v2226 = vshll.u32 %v2090, 16
      %v2228 = vrot.slane %v2226, 5
      %v2229 = vor.u32 %v2225, %v2228
      %v2230 = vrot.slane %v2229, 4
      %v2232 = vshll.u32 %v2091, 16
      %v2234 = vrot.slane %v2232, 5
      %v2235 = vsel %vm277, %v2230, %v2234
      %v2236 = vshrl.u32 %v2091, 16
      %v2238 = vrot.slane %v2236, 4
      %v2239 = vor.u32 %v2238, %v2234
      %v2240 = vrot.slane %v2239, 4
      %v2242 = vshll.u32 %v2092, 16
      %v2244 = vrot.slane %v2242, 5
      %v2245 = vsel %vm277, %v2240, %v2244
      %v2247 = vshrl.u32 %v2093, 16
      %v2249 = vrot.slane %v2247, 4
      %v2250 = vshll.u32 %v2093, 16
      %v2252 = vrot.slane %v2250, 5
      %v2253 = vor.u32 %v2249, %v2252
      %v2254 = vrot.slane %v2253, 4
      %v2256 = vshll.u32 %v2094, 16
      %v2258 = vrot.slane %v2256, 5
      %v2259 = vsel %vm277, %v2254, %v2258
      %v2260 = vshrl.u32 %v2094, 16
      %v2262 = vrot.slane %v2260, 4
      %v2263 = vor.u32 %v2262, %v2258
      %v2264 = vrot.slane %v2263, 4
      %v2266 = vshll.u32 %v2095, 16
      %v2268 = vrot.slane %v2266, 5
      %v2269 = vsel %vm277, %v2264, %v2268
      %v2271 = vshrl.u32 %v2096, 16
      %v2273 = vrot.slane %v2271, 4
      %v2274 = vshll.u32 %v2096, 16
      %v2276 = vrot.slane %v2274, 5
      %v2277 = vor.u32 %v2273, %v2276
      %v2278 = vrot.slane %v2277, 4
      %v2280 = vshll.u32 %v2097, 16
      %v2282 = vrot.slane %v2280, 5
      %v2283 = vsel %vm277, %v2278, %v2282
      %v2284 = vshrl.u32 %v2097, 16
      %v2286 = vrot.slane %v2284, 4
      %v2287 = vor.u32 %v2286, %v2282
      %v2288 = vrot.slane %v2287, 4
      %v2290 = vshll.u32 %v2098, 16
      %v2292 = vrot.slane %v2290, 5
      %v2293 = vsel %vm277, %v2288, %v2292
      %v2295 = vshrl.u32 %v2099, 16
      %v2297 = vrot.slane %v2295, 4
      %v2298 = vshll.u32 %v2099, 16
      %v2300 = vrot.slane %v2298, 5
      %v2301 = vor.u32 %v2297, %v2300
      %v2302 = vrot.slane %v2301, 4
      %v2304 = vshll.u32 %v2100, 16
      %v2306 = vrot.slane %v2304, 5
      %v2307 = vsel %vm277, %v2302, %v2306
      %v2308 = vshrl.u32 %v2100, 16
      %v2310 = vrot.slane %v2308, 4
      %v2311 = vor.u32 %v2310, %v2306
      %v2312 = vrot.slane %v2311, 4
      %v2314 = vshll.u32 %v2101, 16
      %v2316 = vrot.slane %v2314, 5
      %v2317 = vsel %vm277, %v2312, %v2316
      %v2319 = vshrl.u32 %v2102, 16
      %v2321 = vrot.slane %v2319, 4
      %v2322 = vshll.u32 %v2102, 16
      %v2324 = vrot.slane %v2322, 5
      %v2325 = vor.u32 %v2321, %v2324
      %v2326 = vrot.slane %v2325, 4
      %v2328 = vshll.u32 %v2103, 16
      %v2330 = vrot.slane %v2328, 5
      %v2331 = vsel %vm277, %v2326, %v2330
      %v2332 = vshrl.u32 %v2103, 16
      %v2334 = vrot.slane %v2332, 4
      %v2335 = vor.u32 %v2334, %v2330
      %v2336 = vrot.slane %v2335, 4
      %v2338 = vshll.u32 %v2104, 16
      %v2340 = vrot.slane %v2338, 5
      %v2341 = vsel %vm277, %v2336, %v2340
      %v2343 = vshrl.u32 %v2105, 16
      %v2345 = vrot.slane %v2343, 4
      %v2346 = vshll.u32 %v2105, 16
      %v2348 = vrot.slane %v2346, 5
      %v2349 = vor.u32 %v2345, %v2348
      %v2350 = vrot.slane %v2349, 4
      %v2352 = vshll.u32 %v2106, 16
      %v2354 = vrot.slane %v2352, 5
      %v2355 = vsel %vm277, %v2350, %v2354
      %v2356 = vshrl.u32 %v2106, 16
      %v2358 = vrot.slane %v2356, 4
      %v2359 = vor.u32 %v2358, %v2354
      %v2360 = vrot.slane %v2359, 4
      %v2362 = vshll.u32 %v2107, 16
      %v2364 = vrot.slane %v2362, 5
      %v2365 = vsel %vm277, %v2360, %v2364
      %v2367 = vshrl.u32 %v2108, 16
      %v2369 = vrot.slane %v2367, 4
      %v2370 = vshll.u32 %v2108, 16
      %v2372 = vrot.slane %v2370, 5
      %v2373 = vor.u32 %v2369, %v2372
      %v2374 = vrot.slane %v2373, 4
      %v2376 = vshll.u32 %v2109, 16
      %v2378 = vrot.slane %v2376, 5
      %v2379 = vsel %vm277, %v2374, %v2378
      %v2380 = vshrl.u32 %v2109, 16
      %v2382 = vrot.slane %v2380, 4
      %v2383 = vor.u32 %v2382, %v2378
      %v2384 = vrot.slane %v2383, 4
      %v2386 = vshll.u32 %v2110, 16
      %v2388 = vrot.slane %v2386, 5
      %v2389 = vsel %vm277, %v2384, %v2388
      %v2391 = vshrl.u32 %v2111, 16
      %v2393 = vrot.slane %v2391, 4
      %v2394 = vshll.u32 %v2111, 16
      %v2396 = vrot.slane %v2394, 5
      %v2397 = vor.u32 %v2393, %v2396
      %v2398 = vrot.slane %v2397, 4
      %v2400 = vshll.u32 %v2112, 16
      %v2402 = vrot.slane %v2400, 5
      %v2403 = vsel %vm277, %v2398, %v2402
      %v2404 = vshrl.u32 %v2112, 16
      %v2406 = vrot.slane %v2404, 4
      %v2407 = vor.u32 %v2406, %v2402
      %v2408 = vrot.slane %v2407, 4
      %v2410 = vshll.u32 %v2113, 16
      %v2412 = vrot.slane %v2410, 5
      %v2413 = vsel %vm277, %v2408, %v2412
      %v2415 = vshrl.u32 %v2114, 16
      %v2417 = vrot.slane %v2415, 4
      %v2418 = vshll.u32 %v2114, 16
      %v2420 = vrot.slane %v2418, 5
      %v2421 = vor.u32 %v2417, %v2420
      %v2422 = vrot.slane %v2421, 4
      %v2424 = vshll.u32 %v2115, 16
      %v2426 = vrot.slane %v2424, 5
      %v2427 = vsel %vm277, %v2422, %v2426
      %v2428 = vshrl.u32 %v2115, 16
      %v2430 = vrot.slane %v2428, 4
      %v2431 = vor.u32 %v2430, %v2426
      %v2432 = vrot.slane %v2431, 4
      %v2434 = vshll.u32 %v2116, 16
      %v2436 = vrot.slane %v2434, 5
      %v2437 = vsel %vm277, %v2432, %v2436
      %v2439 = vshrl.u32 %v2117, 16
      %v2441 = vrot.slane %v2439, 4
      %v2442 = vshll.u32 %v2117, 16
      %v2444 = vrot.slane %v2442, 5
      %v2445 = vor.u32 %v2441, %v2444
      %v2446 = vrot.slane %v2445, 4
      %v2448 = vshll.u32 %v2118, 16
      %v2450 = vrot.slane %v2448, 5
      %v2451 = vsel %vm277, %v2446, %v2450
      %v2452 = vshrl.u32 %v2118, 16
      %v2454 = vrot.slane %v2452, 4
      %v2455 = vor.u32 %v2454, %v2450
      %v2456 = vrot.slane %v2455, 4
      %v2458 = vshll.u32 %v2119, 16
      %v2460 = vrot.slane %v2458, 5
      %v2461 = vsel %vm277, %v2456, %v2460
      %v2463 = vshrl.u32 %v2120, 16
      %v2465 = vrot.slane %v2463, 4
      %v2466 = vshll.u32 %v2120, 16
      %v2468 = vrot.slane %v2466, 5
      %v2469 = vor.u32 %v2465, %v2468
      %v2470 = vrot.slane %v2469, 4
      %v2472 = vshll.u32 %v2121, 16
      %v2474 = vrot.slane %v2472, 5
      %v2475 = vsel %vm277, %v2470, %v2474
      %v2476 = vshrl.u32 %v2121, 16
      %v2478 = vrot.slane %v2476, 4
      %v2479 = vor.u32 %v2478, %v2474
      %v2480 = vrot.slane %v2479, 4
      %v2482 = vshll.u32 %v2122, 16
      %v2484 = vrot.slane %v2482, 5
      %v2485 = vsel %vm277, %v2480, %v2484
      %v2487 = vshrl.u32 %v2123, 16
      %v2489 = vrot.slane %v2487, 4
      %v2490 = vshll.u32 %v2123, 16
      %v2492 = vrot.slane %v2490, 5
      %v2493 = vor.u32 %v2489, %v2492
      %v2494 = vrot.slane %v2493, 4
      %v2496 = vshll.u32 %v2124, 16
      %v2498 = vrot.slane %v2496, 5
      %v2499 = vsel %vm277, %v2494, %v2498
      %v2500 = vshrl.u32 %v2124, 16
      %v2502 = vrot.slane %v2500, 4
      %v2503 = vor.u32 %v2502, %v2498
      %v2504 = vrot.slane %v2503, 4
      %v2506 = vshll.u32 %v2125, 16
      %v2508 = vrot.slane %v2506, 5
      %v2509 = vsel %vm277, %v2504, %v2508
      %s2510 = scalar_lea.vmem %s210, 64
      %v2511 = vld [vmem:[%s2510] sm:$0xf]
      %v2512 = vld [vmem:[%s2510 + $0x4] sm:$0xf]
      %v2513 = vld [vmem:[%s2510 + $0x8] sm:$0xf]
      %v2514 = vld [vmem:[%s2510 + $0xc] sm:$0xf]
      %v2515 = vunpack.c.l.b16 %v2139
      %v2516 = vunpack.c.l.b16 %v2149
      %v2517 = vunpack.c.l.b16 %v2163
      %v2518 = vunpack.c.l.b16 %v2173
      %v2519 = vunpack.c.l.b16 %v2187
      %v2520 = vunpack.c.l.b16 %v2197
      %v2521 = vunpack.c.l.b16 %v2211
      %v2522 = vunpack.c.l.b16 %v2221
      %v2523 = vunpack.c.l.b16 %v2235
      %v2524 = vunpack.c.l.b16 %v2245
      %v2525 = vunpack.c.l.b16 %v2259
      %v2526 = vunpack.c.l.b16 %v2269
      %v2527 = vunpack.c.l.b16 %v2283
      %v2528 = vunpack.c.l.b16 %v2293
      %v2529 = vunpack.c.l.b16 %v2307
      %v2530 = vunpack.c.l.b16 %v2317
      %v2531 = vunpack.c.l.b16 %v2331
      %v2532 = vunpack.c.l.b16 %v2341
      %v2533 = vunpack.c.l.b16 %v2355
      %v2534 = vunpack.c.l.b16 %v2365
      %v2535 = vunpack.c.l.b16 %v2379
      %v2536 = vunpack.c.l.b16 %v2389
      %v2537 = vunpack.c.l.b16 %v2403
      %v2538 = vunpack.c.l.b16 %v2413
      %v2539 = vunpack.c.l.b16 %v2427
      %v2540 = vunpack.c.l.b16 %v2437
      %v2541 = vunpack.c.l.b16 %v2451
      %v2542 = vunpack.c.l.b16 %v2461
      %v2543 = vunpack.c.l.b16 %v2475
      %v2544 = vunpack.c.l.b16 %v2485
      %v2545 = vunpack.c.l.b16 %v2499
      %v2546 = vunpack.c.l.b16 %v2509
      %v2547 = vpack.c.b16 %v2516, %v2515
      %v2548 = vpack.c.b16 %v2518, %v2517
      %v2549 = vpack.c.b16 %v2520, %v2519
      %v2550 = vpack.c.b16 %v2522, %v2521
      %v2551 = vpack.c.b16 %v2524, %v2523
      %v2552 = vpack.c.b16 %v2526, %v2525
      %v2553 = vpack.c.b16 %v2528, %v2527
      %v2554 = vpack.c.b16 %v2530, %v2529
      %v2555 = vpack.c.b16 %v2532, %v2531
      %v2556 = vpack.c.b16 %v2534, %v2533
      %v2557 = vpack.c.b16 %v2536, %v2535
      %v2558 = vpack.c.b16 %v2538, %v2537
      %v2559 = vpack.c.b16 %v2540, %v2539
      %v2560 = vpack.c.b16 %v2542, %v2541
      %v2561 = vpack.c.b16 %v2544, %v2543
      %v2562 = vpack.c.b16 %v2546, %v2545
      %v2567 = vunpack.c.l.b16 %v2511
      %v2568 = vunpack.c.l.b16 %v2512
      %v2569 = vunpack.c.l.b16 %v2513
      %v2570 = vunpack.c.l.b16 %v2514
      %v2571 = vpack.c.b16 %v2568, %v2567
      %v2572 = vpack.c.b16 %v2570, %v2569
      %v2576 = vsel %vm727, %v2547, 0
      %v2579 = vsel %vm727, %v2548, 0
      %v2582 = vsel %vm727, %v2549, 0
      %v2585 = vsel %vm727, %v2550, 0
      %v2588 = vsel %vm727, %v2551, 0
      %v2591 = vsel %vm727, %v2552, 0
      %v2594 = vsel %vm727, %v2553, 0
      %v2597 = vsel %vm727, %v2554, 0
      %v2600 = vsel %vm727, %v2555, 0
      %v2603 = vsel %vm727, %v2556, 0
      %v2606 = vsel %vm727, %v2557, 0
      %v2609 = vsel %vm727, %v2558, 0
      %v2612 = vsel %vm727, %v2559, 0
      %v2615 = vsel %vm727, %v2560, 0
      %v2618 = vsel %vm727, %v2561, 0
      %v2621 = vsel %vm727, %v2562, 0
      %2623 = vmatprep.subr.bf16.mxu0 0
      %2624 = vmatpush1.bf16.msra.mxu0 %v2571
      %2625 = vmatprep.subr.bf16.mxu0 0
      %2626 = vmatpush1.bf16.msra.mxu0 %v2572
      %2627 = vmatprep.subr.bf16.mxu0 0
      %2628 = vmatpush1.bf16.msra.mxu0 0
      %2629 = vmatprep.subr.bf16.mxu0 0
      %2630 = vmatpush1.bf16.msra.mxu0 0
      %2631 = vmatprep.subr.bf16.mxu0 0
      %2632 = vmatpush1.bf16.msra.mxu0 0
      %2633 = vmatprep.subr.bf16.mxu0 0
      %2634 = vmatpush1.bf16.msra.mxu0 0
      %2635 = vmatprep.subr.bf16.mxu0 0
      %2636 = vmatpush1.bf16.msra.mxu0 0
      %2637 = vmatprep.subr.bf16.mxu0 0
      %2638 = vmatpush1.bf16.msra.mxu0 0
      %2639 = vmatprep.subr.bf16.mxu0 0
      %2640 = vmatpush1.bf16.msra.mxu0 0
      %2641 = vmatprep.subr.bf16.mxu0 0
      %2642 = vmatpush1.bf16.msra.mxu0 0
      %2643 = vmatprep.subr.bf16.mxu0 0
      %2644 = vmatpush1.bf16.msra.mxu0 0
      %2645 = vmatprep.subr.bf16.mxu0 0
      %2646 = vmatpush1.bf16.msra.mxu0 0
      %2647 = vmatprep.subr.bf16.mxu0 0
      %2648 = vmatpush1.bf16.msra.mxu0 0
      %2649 = vmatprep.subr.bf16.mxu0 0
      %2650 = vmatpush1.bf16.msra.mxu0 0
      %2651 = vmatprep.subr.bf16.mxu0 0
      %2652 = vmatpush1.bf16.msra.mxu0 0
      %2653 = vmatprep.subr.bf16.mxu0 0
      %2654 = vmatpush1.bf16.msra.mxu0 0
      %2655 = vmatprep.mubr.bf16.mxu0 0
      %2656 = vmatmul.mubr.bf16.gmra.mrb[0].mxu0 %v2576
      %v2657 = vpop.f32.mrb[0].mxu0
      %v2658 = vadd.f32 0.0, %v2657
      %v2659 = vpop.f32.mrb[0].mxu0
      %v2660 = vpop.f32.mrb[0].mxu0
      %v2661 = vadd.f32 0.0, %v2660
      %v2662 = vpop.f32.mrb[0].mxu0
      %2663 = vmatprep.mubr.bf16.mxu0 0
      %2664 = vmatmul.mubr.bf16.gmra.mrb[0].mxu0 %v2579
      %v2665 = vpop.f32.mrb[0].mxu0
      %v2666 = vadd.f32 0.0, %v2665
      %v2667 = vpop.f32.mrb[0].mxu0
      %v2668 = vpop.f32.mrb[0].mxu0
      %v2669 = vadd.f32 0.0, %v2668
      %v2670 = vpop.f32.mrb[0].mxu0
      %2671 = vmatprep.mubr.bf16.mxu0 0
      %2672 = vmatmul.mubr.bf16.gmra.mrb[0].mxu0 %v2582
      %v2673 = vpop.f32.mrb[0].mxu0
      %v2674 = vadd.f32 0.0, %v2673
      %v2675 = vpop.f32.mrb[0].mxu0
      %v2676 = vpop.f32.mrb[0].mxu0
      %v2677 = vadd.f32 0.0, %v2676
      %v2678 = vpop.f32.mrb[0].mxu0
      %2679 = vmatprep.mubr.bf16.mxu0 0
      %2680 = vmatmul.mubr.bf16.gmra.mrb[0].mxu0 %v2585
      %v2681 = vpop.f32.mrb[0].mxu0
      %v2682 = vadd.f32 0.0, %v2681
      %v2683 = vpop.f32.mrb[0].mxu0
      %v2684 = vpop.f32.mrb[0].mxu0
      %v2685 = vadd.f32 0.0, %v2684
      %v2686 = vpop.f32.mrb[0].mxu0
      %2687 = vmatprep.mubr.bf16.mxu0 0
      %2688 = vmatmul.mubr.bf16.gmra.mrb[0].mxu0 %v2588
      %v2689 = vpop.f32.mrb[0].mxu0
      %v2690 = vadd.f32 0.0, %v2689
      %v2691 = vpop.f32.mrb[0].mxu0
      %v2692 = vpop.f32.mrb[0].mxu0
      %v2693 = vadd.f32 0.0, %v2692
      %v2694 = vpop.f32.mrb[0].mxu0
      %2695 = vmatprep.mubr.bf16.mxu0 0
      %2696 = vmatmul.mubr.bf16.gmra.mrb[0].mxu0 %v2591
      %v2697 = vpop.f32.mrb[0].mxu0
      %v2698 = vadd.f32 0.0, %v2697
      %v2699 = vpop.f32.mrb[0].mxu0
      %v2700 = vpop.f32.mrb[0].mxu0
      %v2701 = vadd.f32 0.0, %v2700
      %v2702 = vpop.f32.mrb[0].mxu0
      %2703 = vmatprep.mubr.bf16.mxu0 0
      %2704 = vmatmul.mubr.bf16.gmra.mrb[0].mxu0 %v2594
      %v2705 = vpop.f32.mrb[0].mxu0
      %v2706 = vadd.f32 0.0, %v2705
      %v2707 = vpop.f32.mrb[0].mxu0
      %v2708 = vpop.f32.mrb[0].mxu0
      %v2709 = vadd.f32 0.0, %v2708
      %v2710 = vpop.f32.mrb[0].mxu0
      %2711 = vmatprep.mubr.bf16.mxu0 0
      %2712 = vmatmul.mubr.bf16.gmra.mrb[0].mxu0 %v2597
      %v2713 = vpop.f32.mrb[0].mxu0
      %v2714 = vadd.f32 0.0, %v2713
      %v2715 = vpop.f32.mrb[0].mxu0
      %v2716 = vpop.f32.mrb[0].mxu0
      %v2717 = vadd.f32 0.0, %v2716
      %v2718 = vpop.f32.mrb[0].mxu0
      %2719 = vmatprep.mubr.bf16.mxu0 0
      %2720 = vmatmul.mubr.bf16.gmra.mrb[0].mxu0 %v2600
      %v2721 = vpop.f32.mrb[0].mxu0
      %v2722 = vadd.f32 0.0, %v2721
      %v2723 = vpop.f32.mrb[0].mxu0
      %v2724 = vpop.f32.mrb[0].mxu0
      %v2725 = vadd.f32 0.0, %v2724
      %v2726 = vpop.f32.mrb[0].mxu0
      %2727 = vmatprep.mubr.bf16.mxu0 0
      %2728 = vmatmul.mubr.bf16.gmra.mrb[0].mxu0 %v2603
      %v2729 = vpop.f32.mrb[0].mxu0
      %v2730 = vadd.f32 0.0, %v2729
      %v2731 = vpop.f32.mrb[0].mxu0
      %v2732 = vpop.f32.mrb[0].mxu0
      %v2733 = vadd.f32 0.0, %v2732
      %v2734 = vpop.f32.mrb[0].mxu0
      %2735 = vmatprep.mubr.bf16.mxu0 0
      %2736 = vmatmul.mubr.bf16.gmra.mrb[0].mxu0 %v2606
      %v2737 = vpop.f32.mrb[0].mxu0
      %v2738 = vadd.f32 0.0, %v2737
      %v2739 = vpop.f32.mrb[0].mxu0
      %v2740 = vpop.f32.mrb[0].mxu0
      %v2741 = vadd.f32 0.0, %v2740
      %v2742 = vpop.f32.mrb[0].mxu0
      %2743 = vmatprep.mubr.bf16.mxu0 0
      %2744 = vmatmul.mubr.bf16.gmra.mrb[0].mxu0 %v2609
      %v2745 = vpop.f32.mrb[0].mxu0
      %v2746 = vadd.f32 0.0, %v2745
      %v2747 = vpop.f32.mrb[0].mxu0
      %v2748 = vpop.f32.mrb[0].mxu0
      %v2749 = vadd.f32 0.0, %v2748
      %v2750 = vpop.f32.mrb[0].mxu0
      %2751 = vmatprep.mubr.bf16.mxu0 0
      %2752 = vmatmul.mubr.bf16.gmra.mrb[0].mxu0 %v2612
      %v2753 = vpop.f32.mrb[0].mxu0
      %v2754 = vadd.f32 0.0, %v2753
      %v2755 = vpop.f32.mrb[0].mxu0
      %v2756 = vpop.f32.mrb[0].mxu0
      %v2757 = vadd.f32 0.0, %v2756
      %v2758 = vpop.f32.mrb[0].mxu0
      %2759 = vmatprep.mubr.bf16.mxu0 0
      %2760 = vmatmul.mubr.bf16.gmra.mrb[0].mxu0 %v2615
      %v2761 = vpop.f32.mrb[0].mxu0
      %v2762 = vadd.f32 0.0, %v2761
      %v2763 = vpop.f32.mrb[0].mxu0
      %v2764 = vpop.f32.mrb[0].mxu0
      %v2765 = vadd.f32 0.0, %v2764
      %v2766 = vpop.f32.mrb[0].mxu0
      %2767 = vmatprep.mubr.bf16.mxu0 0
      %2768 = vmatmul.mubr.bf16.gmra.mrb[0].mxu0 %v2618
      %v2769 = vpop.f32.mrb[0].mxu0
      %v2770 = vadd.f32 0.0, %v2769
      %v2771 = vpop.f32.mrb[0].mxu0
      %v2772 = vpop.f32.mrb[0].mxu0
      %v2773 = vadd.f32 0.0, %v2772
      %v2774 = vpop.f32.mrb[0].mxu0
      %2775 = vmatprep.mubr.bf16.mxu0 0
      %2776 = vmatmul.mubr.bf16.gmra.mrb[0].mxu0 %v2621
      %v2777 = vpop.f32.mrb[0].mxu0
      %v2778 = vadd.f32 0.0, %v2777
      %v2779 = vpop.f32.mrb[0].mxu0
      %v2780 = vpop.f32.mrb[0].mxu0
      %v2781 = vadd.f32 0.0, %v2780
      %v2782 = vpop.f32.mrb[0].mxu0
      %2783 = vdwg.mxu0
      %v2784 = vadd.f32 %v2046, %v2658
      %v2785 = vadd.f32 %v2047, %v2661
      %v2786 = vadd.f32 %v2048, %v2666
      %v2787 = vadd.f32 %v2049, %v2669
      %v2788 = vadd.f32 %v2050, %v2674
      %v2789 = vadd.f32 %v2051, %v2677
      %v2790 = vadd.f32 %v2052, %v2682
      %v2791 = vadd.f32 %v2053, %v2685
      %v2792 = vadd.f32 %v2054, %v2690
      %v2793 = vadd.f32 %v2055, %v2693
      %v2794 = vadd.f32 %v2056, %v2698
      %v2795 = vadd.f32 %v2057, %v2701
      %v2796 = vadd.f32 %v2058, %v2706
      %v2797 = vadd.f32 %v2059, %v2709
      %v2798 = vadd.f32 %v2060, %v2714
      %v2799 = vadd.f32 %v2061, %v2717
      %v2800 = vadd.f32 %v2062, %v2722
      %v2801 = vadd.f32 %v2063, %v2725
      %v2802 = vadd.f32 %v2064, %v2730
      %v2803 = vadd.f32 %v2065, %v2733
      %v2804 = vadd.f32 %v2066, %v2738
      %v2805 = vadd.f32 %v2067, %v2741
      %v2806 = vadd.f32 %v2068, %v2746
      %v2807 = vadd.f32 %v2069, %v2749
      %v2808 = vadd.f32 %v2070, %v2754
      %v2809 = vadd.f32 %v2071, %v2757
      %v2810 = vadd.f32 %v2072, %v2762
      %v2811 = vadd.f32 %v2073, %v2765
      %v2812 = vadd.f32 %v2074, %v2770
      %v2813 = vadd.f32 %v2075, %v2773
      %v2814 = vadd.f32 %v2076, %v2778
      %v2815 = vadd.f32 %v2077, %v2781
      %v2816 = vld [vmem:[%s1707] sm:$0xe]
      %v2817 = vld [vmem:[%s1707 + $0xc] sm:$0xe]
      %v2818 = vld [vmem:[%s1707 + $0x18] sm:$0xe]
      %v2819 = vld [vmem:[%s1707 + $0x24] sm:$0xe]
      %v2820 = vld [vmem:[%s1707 + $0x30] sm:$0xe]
      %v2821 = vld [vmem:[%s1707 + $0x3c] sm:$0xe]
      %v2822 = vld [vmem:[%s1707 + $0x48] sm:$0xe]
      %v2823 = vld [vmem:[%s1707 + $0x54] sm:$0xe]
      %v2824 = vld [vmem:[%s1707 + $0x60] sm:$0xe]
      %v2825 = vld [vmem:[%s1707 + $0x6c] sm:$0xe]
      %v2826 = vld [vmem:[%s1707 + $0x78] sm:$0xe]
      %v2827 = vld [vmem:[%s1707 + $0x84] sm:$0xe]
      %v2828 = vld [vmem:[%s1707 + $0x90] sm:$0xe]
      %v2829 = vld [vmem:[%s1707 + $0x9c] sm:$0xe]
      %v2830 = vld [vmem:[%s1707 + $0xa8] sm:$0xe]
      %v2831 = vld [vmem:[%s1707 + $0xb4] sm:$0xe]
      %v2880 = vrot.slane %v2816, 5
      %v2881 = vrot.slane %v2880, 4
      %v2882 = vrot.slane %v2079, 5
      %v2883 = vsel %vm1288, %v2881, %v2882
      %v2884 = vrot.slane %v2882, 4
      %v2885 = vrot.slane %v2080, 5
      %v2886 = vsel %vm1288, %v2884, %v2885
      %v2887 = vrot.slane %v2817, 5
      %v2888 = vrot.slane %v2887, 4
      %v2889 = vrot.slane %v2082, 5
      %v2890 = vsel %vm1288, %v2888, %v2889
      %v2891 = vrot.slane %v2889, 4
      %v2892 = vrot.slane %v2083, 5
      %v2893 = vsel %vm1288, %v2891, %v2892
      %v2894 = vrot.slane %v2818, 5
      %v2895 = vrot.slane %v2894, 4
      %v2896 = vrot.slane %v2085, 5
      %v2897 = vsel %vm1288, %v2895, %v2896
      %v2898 = vrot.slane %v2896, 4
      %v2899 = vrot.slane %v2086, 5
      %v2900 = vsel %vm1288, %v2898, %v2899
      %v2901 = vrot.slane %v2819, 5
      %v2902 = vrot.slane %v2901, 4
      %v2903 = vrot.slane %v2088, 5
      %v2904 = vsel %vm1288, %v2902, %v2903
      %v2905 = vrot.slane %v2903, 4
      %v2906 = vrot.slane %v2089, 5
      %v2907 = vsel %vm1288, %v2905, %v2906
      %v2908 = vrot.slane %v2820, 5
      %v2909 = vrot.slane %v2908, 4
      %v2910 = vrot.slane %v2091, 5
      %v2911 = vsel %vm1288, %v2909, %v2910
      %v2912 = vrot.slane %v2910, 4
      %v2913 = vrot.slane %v2092, 5
      %v2914 = vsel %vm1288, %v2912, %v2913
      %v2915 = vrot.slane %v2821, 5
      %v2916 = vrot.slane %v2915, 4
      %v2917 = vrot.slane %v2094, 5
      %v2918 = vsel %vm1288, %v2916, %v2917
      %v2919 = vrot.slane %v2917, 4
      %v2920 = vrot.slane %v2095, 5
      %v2921 = vsel %vm1288, %v2919, %v2920
      %v2922 = vrot.slane %v2822, 5
      %v2923 = vrot.slane %v2922, 4
      %v2924 = vrot.slane %v2097, 5
      %v2925 = vsel %vm1288, %v2923, %v2924
      %v2926 = vrot.slane %v2924, 4
      %v2927 = vrot.slane %v2098, 5
      %v2928 = vsel %vm1288, %v2926, %v2927
      %v2929 = vrot.slane %v2823, 5
      %v2930 = vrot.slane %v2929, 4
      %v2931 = vrot.slane %v2100, 5
      %v2932 = vsel %vm1288, %v2930, %v2931
      %v2933 = vrot.slane %v2931, 4
      %v2934 = vrot.slane %v2101, 5
      %v2935 = vsel %vm1288, %v2933, %v2934
      %v2936 = vrot.slane %v2824, 5
      %v2937 = vrot.slane %v2936, 4
      %v2938 = vrot.slane %v2103, 5
      %v2939 = vsel %vm1288, %v2937, %v2938
      %v2940 = vrot.slane %v2938, 4
      %v2941 = vrot.slane %v2104, 5
      %v2942 = vsel %vm1288, %v2940, %v2941
      %v2943 = vrot.slane %v2825, 5
      %v2944 = vrot.slane %v2943, 4
      %v2945 = vrot.slane %v2106, 5
      %v2946 = vsel %vm1288, %v2944, %v2945
      %v2947 = vrot.slane %v2945, 4
      %v2948 = vrot.slane %v2107, 5
      %v2949 = vsel %vm1288, %v2947, %v2948
      %v2950 = vrot.slane %v2826, 5
      %v2951 = vrot.slane %v2950, 4
      %v2952 = vrot.slane %v2109, 5
      %v2953 = vsel %vm1288, %v2951, %v2952
      %v2954 = vrot.slane %v2952, 4
      %v2955 = vrot.slane %v2110, 5
      %v2956 = vsel %vm1288, %v2954, %v2955
      %v2957 = vrot.slane %v2827, 5
      %v2958 = vrot.slane %v2957, 4
      %v2959 = vrot.slane %v2112, 5
      %v2960 = vsel %vm1288, %v2958, %v2959
      %v2961 = vrot.slane %v2959, 4
      %v2962 = vrot.slane %v2113, 5
      %v2963 = vsel %vm1288, %v2961, %v2962
      %v2964 = vrot.slane %v2828, 5
      %v2965 = vrot.slane %v2964, 4
      %v2966 = vrot.slane %v2115, 5
      %v2967 = vsel %vm1288, %v2965, %v2966
      %v2968 = vrot.slane %v2966, 4
      %v2969 = vrot.slane %v2116, 5
      %v2970 = vsel %vm1288, %v2968, %v2969
      %v2971 = vrot.slane %v2829, 5
      %v2972 = vrot.slane %v2971, 4
      %v2973 = vrot.slane %v2118, 5
      %v2974 = vsel %vm1288, %v2972, %v2973
      %v2975 = vrot.slane %v2973, 4
      %v2976 = vrot.slane %v2119, 5
      %v2977 = vsel %vm1288, %v2975, %v2976
      %v2978 = vrot.slane %v2830, 5
      %v2979 = vrot.slane %v2978, 4
      %v2980 = vrot.slane %v2121, 5
      %v2981 = vsel %vm1288, %v2979, %v2980
      %v2982 = vrot.slane %v2980, 4
      %v2983 = vrot.slane %v2122, 5
      %v2984 = vsel %vm1288, %v2982, %v2983
      %v2985 = vrot.slane %v2831, 5
      %v2986 = vrot.slane %v2985, 4
      %v2987 = vrot.slane %v2124, 5
      %v2988 = vsel %vm1288, %v2986, %v2987
      %v2989 = vrot.slane %v2987, 4
      %v2990 = vrot.slane %v2125, 5
      %v2991 = vsel %vm1288, %v2989, %v2990
      %s2992 = scalar_lea.vmem %s210, 80
      %v2993 = vld [vmem:[%s2992] sm:$0xf]
      %v2994 = vld [vmem:[%s2992 + $0x4] sm:$0xf]
      %v2995 = vld [vmem:[%s2992 + $0x8] sm:$0xf]
      %v2996 = vld [vmem:[%s2992 + $0xc] sm:$0xf]
      %v2997 = vunpack.c.l.b16 %v2883
      %v2998 = vunpack.c.l.b16 %v2886
      %v2999 = vunpack.c.l.b16 %v2890
      %v3000 = vunpack.c.l.b16 %v2893
      %v3001 = vunpack.c.l.b16 %v2897
      %v3002 = vunpack.c.l.b16 %v2900
      %v3003 = vunpack.c.l.b16 %v2904
      %v3004 = vunpack.c.l.b16 %v2907
      %v3005 = vunpack.c.l.b16 %v2911
      %v3006 = vunpack.c.l.b16 %v2914
      %v3007 = vunpack.c.l.b16 %v2918
      %v3008 = vunpack.c.l.b16 %v2921
      %v3009 = vunpack.c.l.b16 %v2925
      %v3010 = vunpack.c.l.b16 %v2928
      %v3011 = vunpack.c.l.b16 %v2932
      %v3012 = vunpack.c.l.b16 %v2935
      %v3013 = vunpack.c.l.b16 %v2939
      %v3014 = vunpack.c.l.b16 %v2942
      %v3015 = vunpack.c.l.b16 %v2946
      %v3016 = vunpack.c.l.b16 %v2949
      %v3017 = vunpack.c.l.b16 %v2953
      %v3018 = vunpack.c.l.b16 %v2956
      %v3019 = vunpack.c.l.b16 %v2960
      %v3020 = vunpack.c.l.b16 %v2963
      %v3021 = vunpack.c.l.b16 %v2967
      %v3022 = vunpack.c.l.b16 %v2970
      %v3023 = vunpack.c.l.b16 %v2974
      %v3024 = vunpack.c.l.b16 %v2977
      %v3025 = vunpack.c.l.b16 %v2981
      %v3026 = vunpack.c.l.b16 %v2984
      %v3027 = vunpack.c.l.b16 %v2988
      %v3028 = vunpack.c.l.b16 %v2991
      %v3029 = vpack.c.b16 %v2998, %v2997
      %v3030 = vpack.c.b16 %v3000, %v2999
      %v3031 = vpack.c.b16 %v3002, %v3001
      %v3032 = vpack.c.b16 %v3004, %v3003
      %v3033 = vpack.c.b16 %v3006, %v3005
      %v3034 = vpack.c.b16 %v3008, %v3007
      %v3035 = vpack.c.b16 %v3010, %v3009
      %v3036 = vpack.c.b16 %v3012, %v3011
      %v3037 = vpack.c.b16 %v3014, %v3013
      %v3038 = vpack.c.b16 %v3016, %v3015
      %v3039 = vpack.c.b16 %v3018, %v3017
      %v3040 = vpack.c.b16 %v3020, %v3019
      %v3041 = vpack.c.b16 %v3022, %v3021
      %v3042 = vpack.c.b16 %v3024, %v3023
      %v3043 = vpack.c.b16 %v3026, %v3025
      %v3044 = vpack.c.b16 %v3028, %v3027
      %v3049 = vunpack.c.l.b16 %v2993
      %v3050 = vunpack.c.l.b16 %v2994
      %v3051 = vunpack.c.l.b16 %v2995
      %v3052 = vunpack.c.l.b16 %v2996
      %v3053 = vpack.c.b16 %v3050, %v3049
      %v3054 = vpack.c.b16 %v3052, %v3051
      %v3058 = vsel %vm727, %v3029, 0
      %v3061 = vsel %vm727, %v3030, 0
      %v3064 = vsel %vm727, %v3031, 0
      %v3067 = vsel %vm727, %v3032, 0
      %v3070 = vsel %vm727, %v3033, 0
      %v3073 = vsel %vm727, %v3034, 0
      %v3076 = vsel %vm727, %v3035, 0
      %v3079 = vsel %vm727, %v3036, 0
      %v3082 = vsel %vm727, %v3037, 0
      %v3085 = vsel %vm727, %v3038, 0
      %v3088 = vsel %vm727, %v3039, 0
      %v3091 = vsel %vm727, %v3040, 0
      %v3094 = vsel %vm727, %v3041, 0
      %v3097 = vsel %vm727, %v3042, 0
      %v3100 = vsel %vm727, %v3043, 0
      %v3103 = vsel %vm727, %v3044, 0
      %3105 = vmatprep.subr.bf16.mxu0 0
      %3106 = vmatpush1.bf16.msra.mxu0 %v3053
      %3107 = vmatprep.subr.bf16.mxu0 0
      %3108 = vmatpush1.bf16.msra.mxu0 %v3054
      %3109 = vmatprep.subr.bf16.mxu0 0
      %3110 = vmatpush1.bf16.msra.mxu0 0
      %3111 = vmatprep.subr.bf16.mxu0 0
      %3112 = vmatpush1.bf16.msra.mxu0 0
      %3113 = vmatprep.subr.bf16.mxu0 0
      %3114 = vmatpush1.bf16.msra.mxu0 0
      %3115 = vmatprep.subr.bf16.mxu0 0
      %3116 = vmatpush1.bf16.msra.mxu0 0
      %3117 = vmatprep.subr.bf16.mxu0 0
      %3118 = vmatpush1.bf16.msra.mxu0 0
      %3119 = vmatprep.subr.bf16.mxu0 0
      %3120 = vmatpush1.bf16.msra.mxu0 0
      %3121 = vmatprep.subr.bf16.mxu0 0
      %3122 = vmatpush1.bf16.msra.mxu0 0
      %3123 = vmatprep.subr.bf16.mxu0 0
      %3124 = vmatpush1.bf16.msra.mxu0 0
      %3125 = vmatprep.subr.bf16.mxu0 0
      %3126 = vmatpush1.bf16.msra.mxu0 0
      %3127 = vmatprep.subr.bf16.mxu0 0
      %3128 = vmatpush1.bf16.msra.mxu0 0
      %3129 = vmatprep.subr.bf16.mxu0 0
      %3130 = vmatpush1.bf16.msra.mxu0 0
      %3131 = vmatprep.subr.bf16.mxu0 0
      %3132 = vmatpush1.bf16.msra.mxu0 0
      %3133 = vmatprep.subr.bf16.mxu0 0
      %3134 = vmatpush1.bf16.msra.mxu0 0
      %3135 = vmatprep.subr.bf16.mxu0 0
      %3136 = vmatpush1.bf16.msra.mxu0 0
      %3137 = vmatprep.mubr.bf16.mxu0 0
      %3138 = vmatmul.mubr.bf16.gmra.mrb[0].mxu0 %v3058
      %v3139 = vpop.f32.mrb[0].mxu0
      %v3140 = vadd.f32 0.0, %v3139
      %v3141 = vpop.f32.mrb[0].mxu0
      %v3142 = vpop.f32.mrb[0].mxu0
      %v3143 = vadd.f32 0.0, %v3142
      %v3144 = vpop.f32.mrb[0].mxu0
      %3145 = vmatprep.mubr.bf16.mxu0 0
      %3146 = vmatmul.mubr.bf16.gmra.mrb[0].mxu0 %v3061
      %v3147 = vpop.f32.mrb[0].mxu0
      %v3148 = vadd.f32 0.0, %v3147
      %v3149 = vpop.f32.mrb[0].mxu0
      %v3150 = vpop.f32.mrb[0].mxu0
      %v3151 = vadd.f32 0.0, %v3150
      %v3152 = vpop.f32.mrb[0].mxu0
      %3153 = vmatprep.mubr.bf16.mxu0 0
      %3154 = vmatmul.mubr.bf16.gmra.mrb[0].mxu0 %v3064
      %v3155 = vpop.f32.mrb[0].mxu0
      %v3156 = vadd.f32 0.0, %v3155
      %v3157 = vpop.f32.mrb[0].mxu0
      %v3158 = vpop.f32.mrb[0].mxu0
      %v3159 = vadd.f32 0.0, %v3158
      %v3160 = vpop.f32.mrb[0].mxu0
      %3161 = vmatprep.mubr.bf16.mxu0 0
      %3162 = vmatmul.mubr.bf16.gmra.mrb[0].mxu0 %v3067
      %v3163 = vpop.f32.mrb[0].mxu0
      %v3164 = vadd.f32 0.0, %v3163
      %v3165 = vpop.f32.mrb[0].mxu0
      %v3166 = vpop.f32.mrb[0].mxu0
      %v3167 = vadd.f32 0.0, %v3166
      %v3168 = vpop.f32.mrb[0].mxu0
      %3169 = vmatprep.mubr.bf16.mxu0 0
      %3170 = vmatmul.mubr.bf16.gmra.mrb[0].mxu0 %v3070
      %v3171 = vpop.f32.mrb[0].mxu0
      %v3172 = vadd.f32 0.0, %v3171
      %v3173 = vpop.f32.mrb[0].mxu0
      %v3174 = vpop.f32.mrb[0].mxu0
      %v3175 = vadd.f32 0.0, %v3174
      %v3176 = vpop.f32.mrb[0].mxu0
      %3177 = vmatprep.mubr.bf16.mxu0 0
      %3178 = vmatmul.mubr.bf16.gmra.mrb[0].mxu0 %v3073
      %v3179 = vpop.f32.mrb[0].mxu0
      %v3180 = vadd.f32 0.0, %v3179
      %v3181 = vpop.f32.mrb[0].mxu0
      %v3182 = vpop.f32.mrb[0].mxu0
      %v3183 = vadd.f32 0.0, %v3182
      %v3184 = vpop.f32.mrb[0].mxu0
      %3185 = vmatprep.mubr.bf16.mxu0 0
      %3186 = vmatmul.mubr.bf16.gmra.mrb[0].mxu0 %v3076
      %v3187 = vpop.f32.mrb[0].mxu0
      %v3188 = vadd.f32 0.0, %v3187
      %v3189 = vpop.f32.mrb[0].mxu0
      %v3190 = vpop.f32.mrb[0].mxu0
      %v3191 = vadd.f32 0.0, %v3190
      %v3192 = vpop.f32.mrb[0].mxu0
      %3193 = vmatprep.mubr.bf16.mxu0 0
      %3194 = vmatmul.mubr.bf16.gmra.mrb[0].mxu0 %v3079
      %v3195 = vpop.f32.mrb[0].mxu0
      %v3196 = vadd.f32 0.0, %v3195
      %v3197 = vpop.f32.mrb[0].mxu0
      %v3198 = vpop.f32.mrb[0].mxu0
      %v3199 = vadd.f32 0.0, %v3198
      %v3200 = vpop.f32.mrb[0].mxu0
      %3201 = vmatprep.mubr.bf16.mxu0 0
      %3202 = vmatmul.mubr.bf16.gmra.mrb[0].mxu0 %v3082
      %v3203 = vpop.f32.mrb[0].mxu0
      %v3204 = vadd.f32 0.0, %v3203
      %v3205 = vpop.f32.mrb[0].mxu0
      %v3206 = vpop.f32.mrb[0].mxu0
      %v3207 = vadd.f32 0.0, %v3206
      %v3208 = vpop.f32.mrb[0].mxu0
      %3209 = vmatprep.mubr.bf16.mxu0 0
      %3210 = vmatmul.mubr.bf16.gmra.mrb[0].mxu0 %v3085
      %v3211 = vpop.f32.mrb[0].mxu0
      %v3212 = vadd.f32 0.0, %v3211
      %v3213 = vpop.f32.mrb[0].mxu0
      %v3214 = vpop.f32.mrb[0].mxu0
      %v3215 = vadd.f32 0.0, %v3214
      %v3216 = vpop.f32.mrb[0].mxu0
      %3217 = vmatprep.mubr.bf16.mxu0 0
      %3218 = vmatmul.mubr.bf16.gmra.mrb[0].mxu0 %v3088
      %v3219 = vpop.f32.mrb[0].mxu0
      %v3220 = vadd.f32 0.0, %v3219
      %v3221 = vpop.f32.mrb[0].mxu0
      %v3222 = vpop.f32.mrb[0].mxu0
      %v3223 = vadd.f32 0.0, %v3222
      %v3224 = vpop.f32.mrb[0].mxu0
      %3225 = vmatprep.mubr.bf16.mxu0 0
      %3226 = vmatmul.mubr.bf16.gmra.mrb[0].mxu0 %v3091
      %v3227 = vpop.f32.mrb[0].mxu0
      %v3228 = vadd.f32 0.0, %v3227
      %v3229 = vpop.f32.mrb[0].mxu0
      %v3230 = vpop.f32.mrb[0].mxu0
      %v3231 = vadd.f32 0.0, %v3230
      %v3232 = vpop.f32.mrb[0].mxu0
      %3233 = vmatprep.mubr.bf16.mxu0 0
      %3234 = vmatmul.mubr.bf16.gmra.mrb[0].mxu0 %v3094
      %v3235 = vpop.f32.mrb[0].mxu0
      %v3236 = vadd.f32 0.0, %v3235
      %v3237 = vpop.f32.mrb[0].mxu0
      %v3238 = vpop.f32.mrb[0].mxu0
      %v3239 = vadd.f32 0.0, %v3238
      %v3240 = vpop.f32.mrb[0].mxu0
      %3241 = vmatprep.mubr.bf16.mxu0 0
      %3242 = vmatmul.mubr.bf16.gmra.mrb[0].mxu0 %v3097
      %v3243 = vpop.f32.mrb[0].mxu0
      %v3244 = vadd.f32 0.0, %v3243
      %v3245 = vpop.f32.mrb[0].mxu0
      %v3246 = vpop.f32.mrb[0].mxu0
      %v3247 = vadd.f32 0.0, %v3246
      %v3248 = vpop.f32.mrb[0].mxu0
      %3249 = vmatprep.mubr.bf16.mxu0 0
      %3250 = vmatmul.mubr.bf16.gmra.mrb[0].mxu0 %v3100
      %v3251 = vpop.f32.mrb[0].mxu0
      %v3252 = vadd.f32 0.0, %v3251
      %v3253 = vpop.f32.mrb[0].mxu0
      %v3254 = vpop.f32.mrb[0].mxu0
      %v3255 = vadd.f32 0.0, %v3254
      %v3256 = vpop.f32.mrb[0].mxu0
      %3257 = vmatprep.mubr.bf16.mxu0 0
      %3258 = vmatmul.mubr.bf16.gmra.mrb[0].mxu0 %v3103
      %v3259 = vpop.f32.mrb[0].mxu0
      %v3260 = vadd.f32 0.0, %v3259
      %v3261 = vpop.f32.mrb[0].mxu0
      %v3262 = vpop.f32.mrb[0].mxu0
      %v3263 = vadd.f32 0.0, %v3262
      %v3264 = vpop.f32.mrb[0].mxu0
      %3265 = vdwg.mxu0
      %v3266 = vadd.f32 %v2784, %v3140
      %v3267 = vadd.f32 %v2785, %v3143
      %v3268 = vadd.f32 %v2786, %v3148
      %v3269 = vadd.f32 %v2787, %v3151
      %v3270 = vadd.f32 %v2788, %v3156
      %v3271 = vadd.f32 %v2789, %v3159
      %v3272 = vadd.f32 %v2790, %v3164
      %v3273 = vadd.f32 %v2791, %v3167
      %v3274 = vadd.f32 %v2792, %v3172
      %v3275 = vadd.f32 %v2793, %v3175
      %v3276 = vadd.f32 %v2794, %v3180
      %v3277 = vadd.f32 %v2795, %v3183
      %v3278 = vadd.f32 %v2796, %v3188
      %v3279 = vadd.f32 %v2797, %v3191
      %v3280 = vadd.f32 %v2798, %v3196
      %v3281 = vadd.f32 %v2799, %v3199
      %v3282 = vadd.f32 %v2800, %v3204
      %v3283 = vadd.f32 %v2801, %v3207
      %v3284 = vadd.f32 %v2802, %v3212
      %v3285 = vadd.f32 %v2803, %v3215
      %v3286 = vadd.f32 %v2804, %v3220
      %v3287 = vadd.f32 %v2805, %v3223
      %v3288 = vadd.f32 %v2806, %v3228
      %v3289 = vadd.f32 %v2807, %v3231
      %v3290 = vadd.f32 %v2808, %v3236
      %v3291 = vadd.f32 %v2809, %v3239
      %v3292 = vadd.f32 %v2810, %v3244
      %v3293 = vadd.f32 %v2811, %v3247
      %v3294 = vadd.f32 %v2812, %v3252
      %v3295 = vadd.f32 %v2813, %v3255
      %v3296 = vadd.f32 %v2814, %v3260
      %v3297 = vadd.f32 %v2815, %v3263
      %s3298 = scalar_lea.vmem %s206, 24
      %v3299 = vld [vmem:[%s3298] sm:$0xf]
      %v3300 = vld [vmem:[%s3298 + $0x4] sm:$0xf]
      %v3301 = vld [vmem:[%s3298 + $0xc] sm:$0xf]
      %v3302 = vld [vmem:[%s3298 + $0x10] sm:$0xf]
      %v3303 = vld [vmem:[%s3298 + $0x18] sm:$0xf]
      %v3304 = vld [vmem:[%s3298 + $0x1c] sm:$0xf]
      %v3305 = vld [vmem:[%s3298 + $0x24] sm:$0xf]
      %v3306 = vld [vmem:[%s3298 + $0x28] sm:$0xf]
      %v3307 = vld [vmem:[%s3298 + $0x30] sm:$0xf]
      %v3308 = vld [vmem:[%s3298 + $0x34] sm:$0xf]
      %v3309 = vld [vmem:[%s3298 + $0x3c] sm:$0xf]
      %v3310 = vld [vmem:[%s3298 + $0x40] sm:$0xf]
      %v3311 = vld [vmem:[%s3298 + $0x48] sm:$0xf]
      %v3312 = vld [vmem:[%s3298 + $0x4c] sm:$0xf]
      %v3313 = vld [vmem:[%s3298 + $0x54] sm:$0xf]
      %v3314 = vld [vmem:[%s3298 + $0x58] sm:$0xf]
      %v3315 = vld [vmem:[%s3298 + $0x60] sm:$0xf]
      %v3316 = vld [vmem:[%s3298 + $0x64] sm:$0xf]
      %v3317 = vld [vmem:[%s3298 + $0x6c] sm:$0xf]
      %v3318 = vld [vmem:[%s3298 + $0x70] sm:$0xf]
      %v3319 = vld [vmem:[%s3298 + $0x78] sm:$0xf]
      %v3320 = vld [vmem:[%s3298 + $0x7c] sm:$0xf]
      %v3321 = vld [vmem:[%s3298 + $0x84] sm:$0xf]
      %v3322 = vld [vmem:[%s3298 + $0x88] sm:$0xf]
      %v3323 = vld [vmem:[%s3298 + $0x90] sm:$0xf]
      %v3324 = vld [vmem:[%s3298 + $0x94] sm:$0xf]
      %v3325 = vld [vmem:[%s3298 + $0x9c] sm:$0xf]
      %v3326 = vld [vmem:[%s3298 + $0xa0] sm:$0xf]
      %v3327 = vld [vmem:[%s3298 + $0xa8] sm:$0xf]
      %v3328 = vld [vmem:[%s3298 + $0xac] sm:$0xf]
      %v3329 = vld [vmem:[%s3298 + $0xb4] sm:$0xf]
      %v3330 = vld [vmem:[%s3298 + $0xb8] sm:$0xf]
      %s3331 = scalar_lea.vmem %s210, 96
      %v3332 = vld [vmem:[%s3331] sm:$0xf]
      %v3333 = vld [vmem:[%s3331 + $0x4] sm:$0xf]
      %v3334 = vld [vmem:[%s3331 + $0x8] sm:$0xf]
      %v3335 = vld [vmem:[%s3331 + $0xc] sm:$0xf]
      %v3368 = vunpack.c.l.b16 %v3299
      %v3369 = vunpack.c.l.b16 %v3300
      %v3370 = vunpack.c.l.b16 %v3301
      %v3371 = vunpack.c.l.b16 %v3302
      %v3372 = vunpack.c.l.b16 %v3303
      %v3373 = vunpack.c.l.b16 %v3304
      %v3374 = vunpack.c.l.b16 %v3305
      %v3375 = vunpack.c.l.b16 %v3306
      %v3376 = vunpack.c.l.b16 %v3307
      %v3377 = vunpack.c.l.b16 %v3308
      %v3378 = vunpack.c.l.b16 %v3309
      %v3379 = vunpack.c.l.b16 %v3310
      %v3380 = vunpack.c.l.b16 %v3311
      %v3381 = vunpack.c.l.b16 %v3312
      %v3382 = vunpack.c.l.b16 %v3313
      %v3383 = vunpack.c.l.b16 %v3314
      %v3384 = vunpack.c.l.b16 %v3315
      %v3385 = vunpack.c.l.b16 %v3316
      %v3386 = vunpack.c.l.b16 %v3317
      %v3387 = vunpack.c.l.b16 %v3318
      %v3388 = vunpack.c.l.b16 %v3319
      %v3389 = vunpack.c.l.b16 %v3320
      %v3390 = vunpack.c.l.b16 %v3321
      %v3391 = vunpack.c.l.b16 %v3322
      %v3392 = vunpack.c.l.b16 %v3323
      %v3393 = vunpack.c.l.b16 %v3324
      %v3394 = vunpack.c.l.b16 %v3325
      %v3395 = vunpack.c.l.b16 %v3326
      %v3396 = vunpack.c.l.b16 %v3327
      %v3397 = vunpack.c.l.b16 %v3328
      %v3398 = vunpack.c.l.b16 %v3329
      %v3399 = vunpack.c.l.b16 %v3330
      %v3400 = vpack.c.b16 %v3369, %v3368
      %v3401 = vpack.c.b16 %v3371, %v3370
      %v3402 = vpack.c.b16 %v3373, %v3372
      %v3403 = vpack.c.b16 %v3375, %v3374
      %v3404 = vpack.c.b16 %v3377, %v3376
      %v3405 = vpack.c.b16 %v3379, %v3378
      %v3406 = vpack.c.b16 %v3381, %v3380
      %v3407 = vpack.c.b16 %v3383, %v3382
      %v3408 = vpack.c.b16 %v3385, %v3384
      %v3409 = vpack.c.b16 %v3387, %v3386
      %v3410 = vpack.c.b16 %v3389, %v3388
      %v3411 = vpack.c.b16 %v3391, %v3390
      %v3412 = vpack.c.b16 %v3393, %v3392
      %v3413 = vpack.c.b16 %v3395, %v3394
      %v3414 = vpack.c.b16 %v3397, %v3396
      %v3415 = vpack.c.b16 %v3399, %v3398
      %v3420 = vunpack.c.l.b16 %v3332
      %v3421 = vunpack.c.l.b16 %v3333
      %v3422 = vunpack.c.l.b16 %v3334
      %v3423 = vunpack.c.l.b16 %v3335
      %v3424 = vpack.c.b16 %v3421, %v3420
      %v3425 = vpack.c.b16 %v3423, %v3422
      %v3429 = vsel %vm727, %v3400, 0
      %v3432 = vsel %vm727, %v3401, 0
      %v3435 = vsel %vm727, %v3402, 0
      %v3438 = vsel %vm727, %v3403, 0
      %v3441 = vsel %vm727, %v3404, 0
      %v3444 = vsel %vm727, %v3405, 0
      %v3447 = vsel %vm727, %v3406, 0
      %v3450 = vsel %vm727, %v3407, 0
      %v3453 = vsel %vm727, %v3408, 0
      %v3456 = vsel %vm727, %v3409, 0
      %v3459 = vsel %vm727, %v3410, 0
      %v3462 = vsel %vm727, %v3411, 0
      %v3465 = vsel %vm727, %v3412, 0
      %v3468 = vsel %vm727, %v3413, 0
      %v3471 = vsel %vm727, %v3414, 0
      %v3474 = vsel %vm727, %v3415, 0
      %3476 = vmatprep.subr.bf16.mxu0 0
      %3477 = vmatpush1.bf16.msra.mxu0 %v3424
      %3478 = vmatprep.subr.bf16.mxu0 0
      %3479 = vmatpush1.bf16.msra.mxu0 %v3425
      %3480 = vmatprep.subr.bf16.mxu0 0
      %3481 = vmatpush1.bf16.msra.mxu0 0
      %3482 = vmatprep.subr.bf16.mxu0 0
      %3483 = vmatpush1.bf16.msra.mxu0 0
      %3484 = vmatprep.subr.bf16.mxu0 0
      %3485 = vmatpush1.bf16.msra.mxu0 0
      %3486 = vmatprep.subr.bf16.mxu0 0
      %3487 = vmatpush1.bf16.msra.mxu0 0
      %3488 = vmatprep.subr.bf16.mxu0 0
      %3489 = vmatpush1.bf16.msra.mxu0 0
      %3490 = vmatprep.subr.bf16.mxu0 0
      %3491 = vmatpush1.bf16.msra.mxu0 0
      %3492 = vmatprep.subr.bf16.mxu0 0
      %3493 = vmatpush1.bf16.msra.mxu0 0
      %3494 = vmatprep.subr.bf16.mxu0 0
      %3495 = vmatpush1.bf16.msra.mxu0 0
      %3496 = vmatprep.subr.bf16.mxu0 0
      %3497 = vmatpush1.bf16.msra.mxu0 0
      %3498 = vmatprep.subr.bf16.mxu0 0
      %3499 = vmatpush1.bf16.msra.mxu0 0
      %3500 = vmatprep.subr.bf16.mxu0 0
      %3501 = vmatpush1.bf16.msra.mxu0 0
      %3502 = vmatprep.subr.bf16.mxu0 0
      %3503 = vmatpush1.bf16.msra.mxu0 0
      %3504 = vmatprep.subr.bf16.mxu0 0
      %3505 = vmatpush1.bf16.msra.mxu0 0
      %3506 = vmatprep.subr.bf16.mxu0 0
      %3507 = vmatpush1.bf16.msra.mxu0 0
      %3508 = vmatprep.mubr.bf16.mxu0 0
      %3509 = vmatmul.mubr.bf16.gmra.mrb[0].mxu0 %v3429
      %v3510 = vpop.f32.mrb[0].mxu0
      %v3511 = vadd.f32 0.0, %v3510
      %v3512 = vpop.f32.mrb[0].mxu0
      %v3513 = vpop.f32.mrb[0].mxu0
      %v3514 = vadd.f32 0.0, %v3513
      %v3515 = vpop.f32.mrb[0].mxu0
      %3516 = vmatprep.mubr.bf16.mxu0 0
      %3517 = vmatmul.mubr.bf16.gmra.mrb[0].mxu0 %v3432
      %v3518 = vpop.f32.mrb[0].mxu0
      %v3519 = vadd.f32 0.0, %v3518
      %v3520 = vpop.f32.mrb[0].mxu0
      %v3521 = vpop.f32.mrb[0].mxu0
      %v3522 = vadd.f32 0.0, %v3521
      %v3523 = vpop.f32.mrb[0].mxu0
      %3524 = vmatprep.mubr.bf16.mxu0 0
      %3525 = vmatmul.mubr.bf16.gmra.mrb[0].mxu0 %v3435
      %v3526 = vpop.f32.mrb[0].mxu0
      %v3527 = vadd.f32 0.0, %v3526
      %v3528 = vpop.f32.mrb[0].mxu0
      %v3529 = vpop.f32.mrb[0].mxu0
      %v3530 = vadd.f32 0.0, %v3529
      %v3531 = vpop.f32.mrb[0].mxu0
      %3532 = vmatprep.mubr.bf16.mxu0 0
      %3533 = vmatmul.mubr.bf16.gmra.mrb[0].mxu0 %v3438
      %v3534 = vpop.f32.mrb[0].mxu0
      %v3535 = vadd.f32 0.0, %v3534
      %v3536 = vpop.f32.mrb[0].mxu0
      %v3537 = vpop.f32.mrb[0].mxu0
      %v3538 = vadd.f32 0.0, %v3537
      %v3539 = vpop.f32.mrb[0].mxu0
      %3540 = vmatprep.mubr.bf16.mxu0 0
      %3541 = vmatmul.mubr.bf16.gmra.mrb[0].mxu0 %v3441
      %v3542 = vpop.f32.mrb[0].mxu0
      %v3543 = vadd.f32 0.0, %v3542
      %v3544 = vpop.f32.mrb[0].mxu0
      %v3545 = vpop.f32.mrb[0].mxu0
      %v3546 = vadd.f32 0.0, %v3545
      %v3547 = vpop.f32.mrb[0].mxu0
      %3548 = vmatprep.mubr.bf16.mxu0 0
      %3549 = vmatmul.mubr.bf16.gmra.mrb[0].mxu0 %v3444
      %v3550 = vpop.f32.mrb[0].mxu0
      %v3551 = vadd.f32 0.0, %v3550
      %v3552 = vpop.f32.mrb[0].mxu0
      %v3553 = vpop.f32.mrb[0].mxu0
      %v3554 = vadd.f32 0.0, %v3553
      %v3555 = vpop.f32.mrb[0].mxu0
      %3556 = vmatprep.mubr.bf16.mxu0 0
      %3557 = vmatmul.mubr.bf16.gmra.mrb[0].mxu0 %v3447
      %v3558 = vpop.f32.mrb[0].mxu0
      %v3559 = vadd.f32 0.0, %v3558
      %v3560 = vpop.f32.mrb[0].mxu0
      %v3561 = vpop.f32.mrb[0].mxu0
      %v3562 = vadd.f32 0.0, %v3561
      %v3563 = vpop.f32.mrb[0].mxu0
      %3564 = vmatprep.mubr.bf16.mxu0 0
      %3565 = vmatmul.mubr.bf16.gmra.mrb[0].mxu0 %v3450
      %v3566 = vpop.f32.mrb[0].mxu0
      %v3567 = vadd.f32 0.0, %v3566
      %v3568 = vpop.f32.mrb[0].mxu0
      %v3569 = vpop.f32.mrb[0].mxu0
      %v3570 = vadd.f32 0.0, %v3569
      %v3571 = vpop.f32.mrb[0].mxu0
      %3572 = vmatprep.mubr.bf16.mxu0 0
      %3573 = vmatmul.mubr.bf16.gmra.mrb[0].mxu0 %v3453
      %v3574 = vpop.f32.mrb[0].mxu0
      %v3575 = vadd.f32 0.0, %v3574
      %v3576 = vpop.f32.mrb[0].mxu0
      %v3577 = vpop.f32.mrb[0].mxu0
      %v3578 = vadd.f32 0.0, %v3577
      %v3579 = vpop.f32.mrb[0].mxu0
      %3580 = vmatprep.mubr.bf16.mxu0 0
      %3581 = vmatmul.mubr.bf16.gmra.mrb[0].mxu0 %v3456
      %v3582 = vpop.f32.mrb[0].mxu0
      %v3583 = vadd.f32 0.0, %v3582
      %v3584 = vpop.f32.mrb[0].mxu0
      %v3585 = vpop.f32.mrb[0].mxu0
      %v3586 = vadd.f32 0.0, %v3585
      %v3587 = vpop.f32.mrb[0].mxu0
      %3588 = vmatprep.mubr.bf16.mxu0 0
      %3589 = vmatmul.mubr.bf16.gmra.mrb[0].mxu0 %v3459
      %v3590 = vpop.f32.mrb[0].mxu0
      %v3591 = vadd.f32 0.0, %v3590
      %v3592 = vpop.f32.mrb[0].mxu0
      %v3593 = vpop.f32.mrb[0].mxu0
      %v3594 = vadd.f32 0.0, %v3593
      %v3595 = vpop.f32.mrb[0].mxu0
      %3596 = vmatprep.mubr.bf16.mxu0 0
      %3597 = vmatmul.mubr.bf16.gmra.mrb[0].mxu0 %v3462
      %v3598 = vpop.f32.mrb[0].mxu0
      %v3599 = vadd.f32 0.0, %v3598
      %v3600 = vpop.f32.mrb[0].mxu0
      %v3601 = vpop.f32.mrb[0].mxu0
      %v3602 = vadd.f32 0.0, %v3601
      %v3603 = vpop.f32.mrb[0].mxu0
      %3604 = vmatprep.mubr.bf16.mxu0 0
      %3605 = vmatmul.mubr.bf16.gmra.mrb[0].mxu0 %v3465
      %v3606 = vpop.f32.mrb[0].mxu0
      %v3607 = vadd.f32 0.0, %v3606
      %v3608 = vpop.f32.mrb[0].mxu0
      %v3609 = vpop.f32.mrb[0].mxu0
      %v3610 = vadd.f32 0.0, %v3609
      %v3611 = vpop.f32.mrb[0].mxu0
      %3612 = vmatprep.mubr.bf16.mxu0 0
      %3613 = vmatmul.mubr.bf16.gmra.mrb[0].mxu0 %v3468
      %v3614 = vpop.f32.mrb[0].mxu0
      %v3615 = vadd.f32 0.0, %v3614
      %v3616 = vpop.f32.mrb[0].mxu0
      %v3617 = vpop.f32.mrb[0].mxu0
      %v3618 = vadd.f32 0.0, %v3617
      %v3619 = vpop.f32.mrb[0].mxu0
      %3620 = vmatprep.mubr.bf16.mxu0 0
      %3621 = vmatmul.mubr.bf16.gmra.mrb[0].mxu0 %v3471
      %v3622 = vpop.f32.mrb[0].mxu0
      %v3623 = vadd.f32 0.0, %v3622
      %v3624 = vpop.f32.mrb[0].mxu0
      %v3625 = vpop.f32.mrb[0].mxu0
      %v3626 = vadd.f32 0.0, %v3625
      %v3627 = vpop.f32.mrb[0].mxu0
      %3628 = vmatprep.mubr.bf16.mxu0 0
      %3629 = vmatmul.mubr.bf16.gmra.mrb[0].mxu0 %v3474
      %v3630 = vpop.f32.mrb[0].mxu0
      %v3631 = vadd.f32 0.0, %v3630
      %v3632 = vpop.f32.mrb[0].mxu0
      %v3633 = vpop.f32.mrb[0].mxu0
      %v3634 = vadd.f32 0.0, %v3633
      %v3635 = vpop.f32.mrb[0].mxu0
      %3636 = vdwg.mxu0
      %v3637 = vadd.f32 %v3266, %v3511
      %v3638 = vadd.f32 %v3267, %v3514
      %v3639 = vadd.f32 %v3268, %v3519
      %v3640 = vadd.f32 %v3269, %v3522
      %v3641 = vadd.f32 %v3270, %v3527
      %v3642 = vadd.f32 %v3271, %v3530
      %v3643 = vadd.f32 %v3272, %v3535
      %v3644 = vadd.f32 %v3273, %v3538
      %v3645 = vadd.f32 %v3274, %v3543
      %v3646 = vadd.f32 %v3275, %v3546
      %v3647 = vadd.f32 %v3276, %v3551
      %v3648 = vadd.f32 %v3277, %v3554
      %v3649 = vadd.f32 %v3278, %v3559
      %v3650 = vadd.f32 %v3279, %v3562
      %v3651 = vadd.f32 %v3280, %v3567
      %v3652 = vadd.f32 %v3281, %v3570
      %v3653 = vadd.f32 %v3282, %v3575
      %v3654 = vadd.f32 %v3283, %v3578
      %v3655 = vadd.f32 %v3284, %v3583
      %v3656 = vadd.f32 %v3285, %v3586
      %v3657 = vadd.f32 %v3286, %v3591
      %v3658 = vadd.f32 %v3287, %v3594
      %v3659 = vadd.f32 %v3288, %v3599
      %v3660 = vadd.f32 %v3289, %v3602
      %v3661 = vadd.f32 %v3290, %v3607
      %v3662 = vadd.f32 %v3291, %v3610
      %v3663 = vadd.f32 %v3292, %v3615
      %v3664 = vadd.f32 %v3293, %v3618
      %v3665 = vadd.f32 %v3294, %v3623
      %v3666 = vadd.f32 %v3295, %v3626
      %v3667 = vadd.f32 %v3296, %v3631
      %v3668 = vadd.f32 %v3297, %v3634
      %v3669 = vld [vmem:[%s3298] sm:$0xf]
      %v3670 = vld [vmem:[%s3298 + $0x4] sm:$0xf]
      %v3671 = vld [vmem:[%s3298 + $0x8] sm:$0x1]
      %v3672 = vld [vmem:[%s3298 + $0xc] sm:$0xf]
      %v3673 = vld [vmem:[%s3298 + $0x10] sm:$0xf]
      %v3674 = vld [vmem:[%s3298 + $0x14] sm:$0x1]
      %v3675 = vld [vmem:[%s3298 + $0x18] sm:$0xf]
      %v3676 = vld [vmem:[%s3298 + $0x1c] sm:$0xf]
      %v3677 = vld [vmem:[%s3298 + $0x20] sm:$0x1]
      %v3678 = vld [vmem:[%s3298 + $0x24] sm:$0xf]
      %v3679 = vld [vmem:[%s3298 + $0x28] sm:$0xf]
      %v3680 = vld [vmem:[%s3298 + $0x2c] sm:$0x1]
      %v3681 = vld [vmem:[%s3298 + $0x30] sm:$0xf]
      %v3682 = vld [vmem:[%s3298 + $0x34] sm:$0xf]
      %v3683 = vld [vmem:[%s3298 + $0x38] sm:$0x1]
      %v3684 = vld [vmem:[%s3298 + $0x3c] sm:$0xf]
      %v3685 = vld [vmem:[%s3298 + $0x40] sm:$0xf]
      %v3686 = vld [vmem:[%s3298 + $0x44] sm:$0x1]
      %v3687 = vld [vmem:[%s3298 + $0x48] sm:$0xf]
      %v3688 = vld [vmem:[%s3298 + $0x4c] sm:$0xf]
      %v3689 = vld [vmem:[%s3298 + $0x50] sm:$0x1]
      %v3690 = vld [vmem:[%s3298 + $0x54] sm:$0xf]
      %v3691 = vld [vmem:[%s3298 + $0x58] sm:$0xf]
      %v3692 = vld [vmem:[%s3298 + $0x5c] sm:$0x1]
      %v3693 = vld [vmem:[%s3298 + $0x60] sm:$0xf]
      %v3694 = vld [vmem:[%s3298 + $0x64] sm:$0xf]
      %v3695 = vld [vmem:[%s3298 + $0x68] sm:$0x1]
      %v3696 = vld [vmem:[%s3298 + $0x6c] sm:$0xf]
      %v3697 = vld [vmem:[%s3298 + $0x70] sm:$0xf]
      %v3698 = vld [vmem:[%s3298 + $0x74] sm:$0x1]
      %v3699 = vld [vmem:[%s3298 + $0x78] sm:$0xf]
      %v3700 = vld [vmem:[%s3298 + $0x7c] sm:$0xf]
      %v3701 = vld [vmem:[%s3298 + $0x80] sm:$0x1]
      %v3702 = vld [vmem:[%s3298 + $0x84] sm:$0xf]
      %v3703 = vld [vmem:[%s3298 + $0x88] sm:$0xf]
      %v3704 = vld [vmem:[%s3298 + $0x8c] sm:$0x1]
      %v3705 = vld [vmem:[%s3298 + $0x90] sm:$0xf]
      %v3706 = vld [vmem:[%s3298 + $0x94] sm:$0xf]
      %v3707 = vld [vmem:[%s3298 + $0x98] sm:$0x1]
      %v3708 = vld [vmem:[%s3298 + $0x9c] sm:$0xf]
      %v3709 = vld [vmem:[%s3298 + $0xa0] sm:$0xf]
      %v3710 = vld [vmem:[%s3298 + $0xa4] sm:$0x1]
      %v3711 = vld [vmem:[%s3298 + $0xa8] sm:$0xf]
      %v3712 = vld [vmem:[%s3298 + $0xac] sm:$0xf]
      %v3713 = vld [vmem:[%s3298 + $0xb0] sm:$0x1]
      %v3714 = vld [vmem:[%s3298 + $0xb4] sm:$0xf]
      %v3715 = vld [vmem:[%s3298 + $0xb8] sm:$0xf]
      %v3716 = vld [vmem:[%s3298 + $0xbc] sm:$0x1]
      %v3718 = vshrl.u32 %v3669, 16
      %v3720 = vrot.slane %v3718, 4
      %v3721 = vshll.u32 %v3669, 16
      %v3723 = vrot.slane %v3721, 5
      %v3724 = vor.u32 %v3720, %v3723
      %v3725 = vrot.slane %v3724, 4
      %v3727 = vshll.u32 %v3670, 16
      %v3729 = vrot.slane %v3727, 5
      %v3730 = vsel %vm277, %v3725, %v3729
      %v3731 = vshrl.u32 %v3670, 16
      %v3733 = vrot.slane %v3731, 4
      %v3734 = vor.u32 %v3733, %v3729
      %v3735 = vrot.slane %v3734, 4
      %v3737 = vshll.u32 %v3671, 16
      %v3739 = vrot.slane %v3737, 5
      %v3740 = vsel %vm277, %v3735, %v3739
      %v3742 = vshrl.u32 %v3672, 16
      %v3744 = vrot.slane %v3742, 4
      %v3745 = vshll.u32 %v3672, 16
      %v3747 = vrot.slane %v3745, 5
      %v3748 = vor.u32 %v3744, %v3747
      %v3749 = vrot.slane %v3748, 4
      %v3751 = vshll.u32 %v3673, 16
      %v3753 = vrot.slane %v3751, 5
      %v3754 = vsel %vm277, %v3749, %v3753
      %v3755 = vshrl.u32 %v3673, 16
      %v3757 = vrot.slane %v3755, 4
      %v3758 = vor.u32 %v3757, %v3753
      %v3759 = vrot.slane %v3758, 4
      %v3761 = vshll.u32 %v3674, 16
      %v3763 = vrot.slane %v3761, 5
      %v3764 = vsel %vm277, %v3759, %v3763
      %v3766 = vshrl.u32 %v3675, 16
      %v3768 = vrot.slane %v3766, 4
      %v3769 = vshll.u32 %v3675, 16
      %v3771 = vrot.slane %v3769, 5
      %v3772 = vor.u32 %v3768, %v3771
      %v3773 = vrot.slane %v3772, 4
      %v3775 = vshll.u32 %v3676, 16
      %v3777 = vrot.slane %v3775, 5
      %v3778 = vsel %vm277, %v3773, %v3777
      %v3779 = vshrl.u32 %v3676, 16
      %v3781 = vrot.slane %v3779, 4
      %v3782 = vor.u32 %v3781, %v3777
      %v3783 = vrot.slane %v3782, 4
      %v3785 = vshll.u32 %v3677, 16
      %v3787 = vrot.slane %v3785, 5
      %v3788 = vsel %vm277, %v3783, %v3787
      %v3790 = vshrl.u32 %v3678, 16
      %v3792 = vrot.slane %v3790, 4
      %v3793 = vshll.u32 %v3678, 16
      %v3795 = vrot.slane %v3793, 5
      %v3796 = vor.u32 %v3792, %v3795
      %v3797 = vrot.slane %v3796, 4
      %v3799 = vshll.u32 %v3679, 16
      %v3801 = vrot.slane %v3799, 5
      %v3802 = vsel %vm277, %v3797, %v3801
      %v3803 = vshrl.u32 %v3679, 16
      %v3805 = vrot.slane %v3803, 4
      %v3806 = vor.u32 %v3805, %v3801
      %v3807 = vrot.slane %v3806, 4
      %v3809 = vshll.u32 %v3680, 16
      %v3811 = vrot.slane %v3809, 5
      %v3812 = vsel %vm277, %v3807, %v3811
      %v3814 = vshrl.u32 %v3681, 16
      %v3816 = vrot.slane %v3814, 4
      %v3817 = vshll.u32 %v3681, 16
      %v3819 = vrot.slane %v3817, 5
      %v3820 = vor.u32 %v3816, %v3819
      %v3821 = vrot.slane %v3820, 4
      %v3823 = vshll.u32 %v3682, 16
      %v3825 = vrot.slane %v3823, 5
      %v3826 = vsel %vm277, %v3821, %v3825
      %v3827 = vshrl.u32 %v3682, 16
      %v3829 = vrot.slane %v3827, 4
      %v3830 = vor.u32 %v3829, %v3825
      %v3831 = vrot.slane %v3830, 4
      %v3833 = vshll.u32 %v3683, 16
      %v3835 = vrot.slane %v3833, 5
      %v3836 = vsel %vm277, %v3831, %v3835
      %v3838 = vshrl.u32 %v3684, 16
      %v3840 = vrot.slane %v3838, 4
      %v3841 = vshll.u32 %v3684, 16
      %v3843 = vrot.slane %v3841, 5
      %v3844 = vor.u32 %v3840, %v3843
      %v3845 = vrot.slane %v3844, 4
      %v3847 = vshll.u32 %v3685, 16
      %v3849 = vrot.slane %v3847, 5
      %v3850 = vsel %vm277, %v3845, %v3849
      %v3851 = vshrl.u32 %v3685, 16
      %v3853 = vrot.slane %v3851, 4
      %v3854 = vor.u32 %v3853, %v3849
      %v3855 = vrot.slane %v3854, 4
      %v3857 = vshll.u32 %v3686, 16
      %v3859 = vrot.slane %v3857, 5
      %v3860 = vsel %vm277, %v3855, %v3859
      %v3862 = vshrl.u32 %v3687, 16
      %v3864 = vrot.slane %v3862, 4
      %v3865 = vshll.u32 %v3687, 16
      %v3867 = vrot.slane %v3865, 5
      %v3868 = vor.u32 %v3864, %v3867
      %v3869 = vrot.slane %v3868, 4
      %v3871 = vshll.u32 %v3688, 16
      %v3873 = vrot.slane %v3871, 5
      %v3874 = vsel %vm277, %v3869, %v3873
      %v3875 = vshrl.u32 %v3688, 16
      %v3877 = vrot.slane %v3875, 4
      %v3878 = vor.u32 %v3877, %v3873
      %v3879 = vrot.slane %v3878, 4
      %v3881 = vshll.u32 %v3689, 16
      %v3883 = vrot.slane %v3881, 5
      %v3884 = vsel %vm277, %v3879, %v3883
      %v3886 = vshrl.u32 %v3690, 16
      %v3888 = vrot.slane %v3886, 4
      %v3889 = vshll.u32 %v3690, 16
      %v3891 = vrot.slane %v3889, 5
      %v3892 = vor.u32 %v3888, %v3891
      %v3893 = vrot.slane %v3892, 4
      %v3895 = vshll.u32 %v3691, 16
      %v3897 = vrot.slane %v3895, 5
      %v3898 = vsel %vm277, %v3893, %v3897
      %v3899 = vshrl.u32 %v3691, 16
      %v3901 = vrot.slane %v3899, 4
      %v3902 = vor.u32 %v3901, %v3897
      %v3903 = vrot.slane %v3902, 4
      %v3905 = vshll.u32 %v3692, 16
      %v3907 = vrot.slane %v3905, 5
      %v3908 = vsel %vm277, %v3903, %v3907
      %v3910 = vshrl.u32 %v3693, 16
      %v3912 = vrot.slane %v3910, 4
      %v3913 = vshll.u32 %v3693, 16
      %v3915 = vrot.slane %v3913, 5
      %v3916 = vor.u32 %v3912, %v3915
      %v3917 = vrot.slane %v3916, 4
      %v3919 = vshll.u32 %v3694, 16
      %v3921 = vrot.slane %v3919, 5
      %v3922 = vsel %vm277, %v3917, %v3921
      %v3923 = vshrl.u32 %v3694, 16
      %v3925 = vrot.slane %v3923, 4
      %v3926 = vor.u32 %v3925, %v3921
      %v3927 = vrot.slane %v3926, 4
      %v3929 = vshll.u32 %v3695, 16
      %v3931 = vrot.slane %v3929, 5
      %v3932 = vsel %vm277, %v3927, %v3931
      %v3934 = vshrl.u32 %v3696, 16
      %v3936 = vrot.slane %v3934, 4
      %v3937 = vshll.u32 %v3696, 16
      %v3939 = vrot.slane %v3937, 5
      %v3940 = vor.u32 %v3936, %v3939
      %v3941 = vrot.slane %v3940, 4
      %v3943 = vshll.u32 %v3697, 16
      %v3945 = vrot.slane %v3943, 5
      %v3946 = vsel %vm277, %v3941, %v3945
      %v3947 = vshrl.u32 %v3697, 16
      %v3949 = vrot.slane %v3947, 4
      %v3950 = vor.u32 %v3949, %v3945
      %v3951 = vrot.slane %v3950, 4
      %v3953 = vshll.u32 %v3698, 16
      %v3955 = vrot.slane %v3953, 5
      %v3956 = vsel %vm277, %v3951, %v3955
      %v3958 = vshrl.u32 %v3699, 16
      %v3960 = vrot.slane %v3958, 4
      %v3961 = vshll.u32 %v3699, 16
      %v3963 = vrot.slane %v3961, 5
      %v3964 = vor.u32 %v3960, %v3963
      %v3965 = vrot.slane %v3964, 4
      %v3967 = vshll.u32 %v3700, 16
      %v3969 = vrot.slane %v3967, 5
      %v3970 = vsel %vm277, %v3965, %v3969
      %v3971 = vshrl.u32 %v3700, 16
      %v3973 = vrot.slane %v3971, 4
      %v3974 = vor.u32 %v3973, %v3969
      %v3975 = vrot.slane %v3974, 4
      %v3977 = vshll.u32 %v3701, 16
      %v3979 = vrot.slane %v3977, 5
      %v3980 = vsel %vm277, %v3975, %v3979
      %v3982 = vshrl.u32 %v3702, 16
      %v3984 = vrot.slane %v3982, 4
      %v3985 = vshll.u32 %v3702, 16
      %v3987 = vrot.slane %v3985, 5
      %v3988 = vor.u32 %v3984, %v3987
      %v3989 = vrot.slane %v3988, 4
      %v3991 = vshll.u32 %v3703, 16
      %v3993 = vrot.slane %v3991, 5
      %v3994 = vsel %vm277, %v3989, %v3993
      %v3995 = vshrl.u32 %v3703, 16
      %v3997 = vrot.slane %v3995, 4
      %v3998 = vor.u32 %v3997, %v3993
      %v3999 = vrot.slane %v3998, 4
      %v4001 = vshll.u32 %v3704, 16
      %v4003 = vrot.slane %v4001, 5
      %v4004 = vsel %vm277, %v3999, %v4003
      %v4006 = vshrl.u32 %v3705, 16
      %v4008 = vrot.slane %v4006, 4
      %v4009 = vshll.u32 %v3705, 16
      %v4011 = vrot.slane %v4009, 5
      %v4012 = vor.u32 %v4008, %v4011
      %v4013 = vrot.slane %v4012, 4
      %v4015 = vshll.u32 %v3706, 16
      %v4017 = vrot.slane %v4015, 5
      %v4018 = vsel %vm277, %v4013, %v4017
      %v4019 = vshrl.u32 %v3706, 16
      %v4021 = vrot.slane %v4019, 4
      %v4022 = vor.u32 %v4021, %v4017
      %v4023 = vrot.slane %v4022, 4
      %v4025 = vshll.u32 %v3707, 16
      %v4027 = vrot.slane %v4025, 5
      %v4028 = vsel %vm277, %v4023, %v4027
      %v4030 = vshrl.u32 %v3708, 16
      %v4032 = vrot.slane %v4030, 4
      %v4033 = vshll.u32 %v3708, 16
      %v4035 = vrot.slane %v4033, 5
      %v4036 = vor.u32 %v4032, %v4035
      %v4037 = vrot.slane %v4036, 4
      %v4039 = vshll.u32 %v3709, 16
      %v4041 = vrot.slane %v4039, 5
      %v4042 = vsel %vm277, %v4037, %v4041
      %v4043 = vshrl.u32 %v3709, 16
      %v4045 = vrot.slane %v4043, 4
      %v4046 = vor.u32 %v4045, %v4041
      %v4047 = vrot.slane %v4046, 4
      %v4049 = vshll.u32 %v3710, 16
      %v4051 = vrot.slane %v4049, 5
      %v4052 = vsel %vm277, %v4047, %v4051
      %v4054 = vshrl.u32 %v3711, 16
      %v4056 = vrot.slane %v4054, 4
      %v4057 = vshll.u32 %v3711, 16
      %v4059 = vrot.slane %v4057, 5
      %v4060 = vor.u32 %v4056, %v4059
      %v4061 = vrot.slane %v4060, 4
      %v4063 = vshll.u32 %v3712, 16
      %v4065 = vrot.slane %v4063, 5
      %v4066 = vsel %vm277, %v4061, %v4065
      %v4067 = vshrl.u32 %v3712, 16
      %v4069 = vrot.slane %v4067, 4
      %v4070 = vor.u32 %v4069, %v4065
      %v4071 = vrot.slane %v4070, 4
      %v4073 = vshll.u32 %v3713, 16
      %v4075 = vrot.slane %v4073, 5
      %v4076 = vsel %vm277, %v4071, %v4075
      %v4078 = vshrl.u32 %v3714, 16
      %v4080 = vrot.slane %v4078, 4
      %v4081 = vshll.u32 %v3714, 16
      %v4083 = vrot.slane %v4081, 5
      %v4084 = vor.u32 %v4080, %v4083
      %v4085 = vrot.slane %v4084, 4
      %v4087 = vshll.u32 %v3715, 16
      %v4089 = vrot.slane %v4087, 5
      %v4090 = vsel %vm277, %v4085, %v4089
      %v4091 = vshrl.u32 %v3715, 16
      %v4093 = vrot.slane %v4091, 4
      %v4094 = vor.u32 %v4093, %v4089
      %v4095 = vrot.slane %v4094, 4
      %v4097 = vshll.u32 %v3716, 16
      %v4099 = vrot.slane %v4097, 5
      %v4100 = vsel %vm277, %v4095, %v4099
      %s4101 = scalar_lea.vmem %s210, 112
      %v4102 = vld [vmem:[%s4101] sm:$0xf]
      %v4103 = vld [vmem:[%s4101 + $0x4] sm:$0xf]
      %v4104 = vld [vmem:[%s4101 + $0x8] sm:$0xf]
      %v4105 = vld [vmem:[%s4101 + $0xc] sm:$0xf]
      %v4106 = vunpack.c.l.b16 %v3730
      %v4107 = vunpack.c.l.b16 %v3740
      %v4108 = vunpack.c.l.b16 %v3754
      %v4109 = vunpack.c.l.b16 %v3764
      %v4110 = vunpack.c.l.b16 %v3778
      %v4111 = vunpack.c.l.b16 %v3788
      %v4112 = vunpack.c.l.b16 %v3802
      %v4113 = vunpack.c.l.b16 %v3812
      %v4114 = vunpack.c.l.b16 %v3826
      %v4115 = vunpack.c.l.b16 %v3836
      %v4116 = vunpack.c.l.b16 %v3850
      %v4117 = vunpack.c.l.b16 %v3860
      %v4118 = vunpack.c.l.b16 %v3874
      %v4119 = vunpack.c.l.b16 %v3884
      %v4120 = vunpack.c.l.b16 %v3898
      %v4121 = vunpack.c.l.b16 %v3908
      %v4122 = vunpack.c.l.b16 %v3922
      %v4123 = vunpack.c.l.b16 %v3932
      %v4124 = vunpack.c.l.b16 %v3946
      %v4125 = vunpack.c.l.b16 %v3956
      %v4126 = vunpack.c.l.b16 %v3970
      %v4127 = vunpack.c.l.b16 %v3980
      %v4128 = vunpack.c.l.b16 %v3994
      %v4129 = vunpack.c.l.b16 %v4004
      %v4130 = vunpack.c.l.b16 %v4018
      %v4131 = vunpack.c.l.b16 %v4028
      %v4132 = vunpack.c.l.b16 %v4042
      %v4133 = vunpack.c.l.b16 %v4052
      %v4134 = vunpack.c.l.b16 %v4066
      %v4135 = vunpack.c.l.b16 %v4076
      %v4136 = vunpack.c.l.b16 %v4090
      %v4137 = vunpack.c.l.b16 %v4100
      %v4138 = vpack.c.b16 %v4107, %v4106
      %v4139 = vpack.c.b16 %v4109, %v4108
      %v4140 = vpack.c.b16 %v4111, %v4110
      %v4141 = vpack.c.b16 %v4113, %v4112
      %v4142 = vpack.c.b16 %v4115, %v4114
      %v4143 = vpack.c.b16 %v4117, %v4116
      %v4144 = vpack.c.b16 %v4119, %v4118
      %v4145 = vpack.c.b16 %v4121, %v4120
      %v4146 = vpack.c.b16 %v4123, %v4122
      %v4147 = vpack.c.b16 %v4125, %v4124
      %v4148 = vpack.c.b16 %v4127, %v4126
      %v4149 = vpack.c.b16 %v4129, %v4128
      %v4150 = vpack.c.b16 %v4131, %v4130
      %v4151 = vpack.c.b16 %v4133, %v4132
      %v4152 = vpack.c.b16 %v4135, %v4134
      %v4153 = vpack.c.b16 %v4137, %v4136
      %v4158 = vunpack.c.l.b16 %v4102
      %v4159 = vunpack.c.l.b16 %v4103
      %v4160 = vunpack.c.l.b16 %v4104
      %v4161 = vunpack.c.l.b16 %v4105
      %v4162 = vpack.c.b16 %v4159, %v4158
      %v4163 = vpack.c.b16 %v4161, %v4160
      %v4167 = vsel %vm727, %v4138, 0
      %v4170 = vsel %vm727, %v4139, 0
      %v4173 = vsel %vm727, %v4140, 0
      %v4176 = vsel %vm727, %v4141, 0
      %v4179 = vsel %vm727, %v4142, 0
      %v4182 = vsel %vm727, %v4143, 0
      %v4185 = vsel %vm727, %v4144, 0
      %v4188 = vsel %vm727, %v4145, 0
      %v4191 = vsel %vm727, %v4146, 0
      %v4194 = vsel %vm727, %v4147, 0
      %v4197 = vsel %vm727, %v4148, 0
      %v4200 = vsel %vm727, %v4149, 0
      %v4203 = vsel %vm727, %v4150, 0
      %v4206 = vsel %vm727, %v4151, 0
      %v4209 = vsel %vm727, %v4152, 0
      %v4212 = vsel %vm727, %v4153, 0
      %4214 = vmatprep.subr.bf16.mxu0 0
      %4215 = vmatpush1.bf16.msra.mxu0 %v4162
      %4216 = vmatprep.subr.bf16.mxu0 0
      %4217 = vmatpush1.bf16.msra.mxu0 %v4163
      %4218 = vmatprep.subr.bf16.mxu0 0
      %4219 = vmatpush1.bf16.msra.mxu0 0
      %4220 = vmatprep.subr.bf16.mxu0 0
      %4221 = vmatpush1.bf16.msra.mxu0 0
      %4222 = vmatprep.subr.bf16.mxu0 0
      %4223 = vmatpush1.bf16.msra.mxu0 0
      %4224 = vmatprep.subr.bf16.mxu0 0
      %4225 = vmatpush1.bf16.msra.mxu0 0
      %4226 = vmatprep.subr.bf16.mxu0 0
      %4227 = vmatpush1.bf16.msra.mxu0 0
      %4228 = vmatprep.subr.bf16.mxu0 0
      %4229 = vmatpush1.bf16.msra.mxu0 0
      %4230 = vmatprep.subr.bf16.mxu0 0
      %4231 = vmatpush1.bf16.msra.mxu0 0
      %4232 = vmatprep.subr.bf16.mxu0 0
      %4233 = vmatpush1.bf16.msra.mxu0 0
      %4234 = vmatprep.subr.bf16.mxu0 0
      %4235 = vmatpush1.bf16.msra.mxu0 0
      %4236 = vmatprep.subr.bf16.mxu0 0
      %4237 = vmatpush1.bf16.msra.mxu0 0
      %4238 = vmatprep.subr.bf16.mxu0 0
      %4239 = vmatpush1.bf16.msra.mxu0 0
      %4240 = vmatprep.subr.bf16.mxu0 0
      %4241 = vmatpush1.bf16.msra.mxu0 0
      %4242 = vmatprep.subr.bf16.mxu0 0
      %4243 = vmatpush1.bf16.msra.mxu0 0
      %4244 = vmatprep.subr.bf16.mxu0 0
      %4245 = vmatpush1.bf16.msra.mxu0 0
      %4246 = vmatprep.mubr.bf16.mxu0 0
      %4247 = vmatmul.mubr.bf16.gmra.mrb[0].mxu0 %v4167
      %v4248 = vpop.f32.mrb[0].mxu0
      %v4249 = vadd.f32 0.0, %v4248
      %v4250 = vpop.f32.mrb[0].mxu0
      %v4251 = vpop.f32.mrb[0].mxu0
      %v4252 = vadd.f32 0.0, %v4251
      %v4253 = vpop.f32.mrb[0].mxu0
      %4254 = vmatprep.mubr.bf16.mxu0 0
      %4255 = vmatmul.mubr.bf16.gmra.mrb[0].mxu0 %v4170
      %v4256 = vpop.f32.mrb[0].mxu0
      %v4257 = vadd.f32 0.0, %v4256
      %v4258 = vpop.f32.mrb[0].mxu0
      %v4259 = vpop.f32.mrb[0].mxu0
      %v4260 = vadd.f32 0.0, %v4259
      %v4261 = vpop.f32.mrb[0].mxu0
      %4262 = vmatprep.mubr.bf16.mxu0 0
      %4263 = vmatmul.mubr.bf16.gmra.mrb[0].mxu0 %v4173
      %v4264 = vpop.f32.mrb[0].mxu0
      %v4265 = vadd.f32 0.0, %v4264
      %v4266 = vpop.f32.mrb[0].mxu0
      %v4267 = vpop.f32.mrb[0].mxu0
      %v4268 = vadd.f32 0.0, %v4267
      %v4269 = vpop.f32.mrb[0].mxu0
      %4270 = vmatprep.mubr.bf16.mxu0 0
      %4271 = vmatmul.mubr.bf16.gmra.mrb[0].mxu0 %v4176
      %v4272 = vpop.f32.mrb[0].mxu0
      %v4273 = vadd.f32 0.0, %v4272
      %v4274 = vpop.f32.mrb[0].mxu0
      %v4275 = vpop.f32.mrb[0].mxu0
      %v4276 = vadd.f32 0.0, %v4275
      %v4277 = vpop.f32.mrb[0].mxu0
      %4278 = vmatprep.mubr.bf16.mxu0 0
      %4279 = vmatmul.mubr.bf16.gmra.mrb[0].mxu0 %v4179
      %v4280 = vpop.f32.mrb[0].mxu0
      %v4281 = vadd.f32 0.0, %v4280
      %v4282 = vpop.f32.mrb[0].mxu0
      %v4283 = vpop.f32.mrb[0].mxu0
      %v4284 = vadd.f32 0.0, %v4283
      %v4285 = vpop.f32.mrb[0].mxu0
      %4286 = vmatprep.mubr.bf16.mxu0 0
      %4287 = vmatmul.mubr.bf16.gmra.mrb[0].mxu0 %v4182
      %v4288 = vpop.f32.mrb[0].mxu0
      %v4289 = vadd.f32 0.0, %v4288
      %v4290 = vpop.f32.mrb[0].mxu0
      %v4291 = vpop.f32.mrb[0].mxu0
      %v4292 = vadd.f32 0.0, %v4291
      %v4293 = vpop.f32.mrb[0].mxu0
      %4294 = vmatprep.mubr.bf16.mxu0 0
      %4295 = vmatmul.mubr.bf16.gmra.mrb[0].mxu0 %v4185
      %v4296 = vpop.f32.mrb[0].mxu0
      %v4297 = vadd.f32 0.0, %v4296
      %v4298 = vpop.f32.mrb[0].mxu0
      %v4299 = vpop.f32.mrb[0].mxu0
      %v4300 = vadd.f32 0.0, %v4299
      %v4301 = vpop.f32.mrb[0].mxu0
      %4302 = vmatprep.mubr.bf16.mxu0 0
      %4303 = vmatmul.mubr.bf16.gmra.mrb[0].mxu0 %v4188
      %v4304 = vpop.f32.mrb[0].mxu0
      %v4305 = vadd.f32 0.0, %v4304
      %v4306 = vpop.f32.mrb[0].mxu0
      %v4307 = vpop.f32.mrb[0].mxu0
      %v4308 = vadd.f32 0.0, %v4307
      %v4309 = vpop.f32.mrb[0].mxu0
      %4310 = vmatprep.mubr.bf16.mxu0 0
      %4311 = vmatmul.mubr.bf16.gmra.mrb[0].mxu0 %v4191
      %v4312 = vpop.f32.mrb[0].mxu0
      %v4313 = vadd.f32 0.0, %v4312
      %v4314 = vpop.f32.mrb[0].mxu0
      %v4315 = vpop.f32.mrb[0].mxu0
      %v4316 = vadd.f32 0.0, %v4315
      %v4317 = vpop.f32.mrb[0].mxu0
      %4318 = vmatprep.mubr.bf16.mxu0 0
      %4319 = vmatmul.mubr.bf16.gmra.mrb[0].mxu0 %v4194
      %v4320 = vpop.f32.mrb[0].mxu0
      %v4321 = vadd.f32 0.0, %v4320
      %v4322 = vpop.f32.mrb[0].mxu0
      %v4323 = vpop.f32.mrb[0].mxu0
      %v4324 = vadd.f32 0.0, %v4323
      %v4325 = vpop.f32.mrb[0].mxu0
      %4326 = vmatprep.mubr.bf16.mxu0 0
      %4327 = vmatmul.mubr.bf16.gmra.mrb[0].mxu0 %v4197
      %v4328 = vpop.f32.mrb[0].mxu0
      %v4329 = vadd.f32 0.0, %v4328
      %v4330 = vpop.f32.mrb[0].mxu0
      %v4331 = vpop.f32.mrb[0].mxu0
      %v4332 = vadd.f32 0.0, %v4331
      %v4333 = vpop.f32.mrb[0].mxu0
      %4334 = vmatprep.mubr.bf16.mxu0 0
      %4335 = vmatmul.mubr.bf16.gmra.mrb[0].mxu0 %v4200
      %v4336 = vpop.f32.mrb[0].mxu0
      %v4337 = vadd.f32 0.0, %v4336
      %v4338 = vpop.f32.mrb[0].mxu0
      %v4339 = vpop.f32.mrb[0].mxu0
      %v4340 = vadd.f32 0.0, %v4339
      %v4341 = vpop.f32.mrb[0].mxu0
      %4342 = vmatprep.mubr.bf16.mxu0 0
      %4343 = vmatmul.mubr.bf16.gmra.mrb[0].mxu0 %v4203
      %v4344 = vpop.f32.mrb[0].mxu0
      %v4345 = vadd.f32 0.0, %v4344
      %v4346 = vpop.f32.mrb[0].mxu0
      %v4347 = vpop.f32.mrb[0].mxu0
      %v4348 = vadd.f32 0.0, %v4347
      %v4349 = vpop.f32.mrb[0].mxu0
      %4350 = vmatprep.mubr.bf16.mxu0 0
      %4351 = vmatmul.mubr.bf16.gmra.mrb[0].mxu0 %v4206
      %v4352 = vpop.f32.mrb[0].mxu0
      %v4353 = vadd.f32 0.0, %v4352
      %v4354 = vpop.f32.mrb[0].mxu0
      %v4355 = vpop.f32.mrb[0].mxu0
      %v4356 = vadd.f32 0.0, %v4355
      %v4357 = vpop.f32.mrb[0].mxu0
      %4358 = vmatprep.mubr.bf16.mxu0 0
      %4359 = vmatmul.mubr.bf16.gmra.mrb[0].mxu0 %v4209
      %v4360 = vpop.f32.mrb[0].mxu0
      %v4361 = vadd.f32 0.0, %v4360
      %v4362 = vpop.f32.mrb[0].mxu0
      %v4363 = vpop.f32.mrb[0].mxu0
      %v4364 = vadd.f32 0.0, %v4363
      %v4365 = vpop.f32.mrb[0].mxu0
      %4366 = vmatprep.mubr.bf16.mxu0 0
      %4367 = vmatmul.mubr.bf16.gmra.mrb[0].mxu0 %v4212
      %v4368 = vpop.f32.mrb[0].mxu0
      %v4369 = vadd.f32 0.0, %v4368
      %v4370 = vpop.f32.mrb[0].mxu0
      %v4371 = vpop.f32.mrb[0].mxu0
      %v4372 = vadd.f32 0.0, %v4371
      %v4373 = vpop.f32.mrb[0].mxu0
      %4374 = vdwg.mxu0
      %v4375 = vadd.f32 %v3637, %v4249
      %v4376 = vadd.f32 %v3638, %v4252
      %v4377 = vadd.f32 %v3639, %v4257
      %v4378 = vadd.f32 %v3640, %v4260
      %v4379 = vadd.f32 %v3641, %v4265
      %v4380 = vadd.f32 %v3642, %v4268
      %v4381 = vadd.f32 %v3643, %v4273
      %v4382 = vadd.f32 %v3644, %v4276
      %v4383 = vadd.f32 %v3645, %v4281
      %v4384 = vadd.f32 %v3646, %v4284
      %v4385 = vadd.f32 %v3647, %v4289
      %v4386 = vadd.f32 %v3648, %v4292
      %v4387 = vadd.f32 %v3649, %v4297
      %v4388 = vadd.f32 %v3650, %v4300
      %v4389 = vadd.f32 %v3651, %v4305
      %v4390 = vadd.f32 %v3652, %v4308
      %v4391 = vadd.f32 %v3653, %v4313
      %v4392 = vadd.f32 %v3654, %v4316
      %v4393 = vadd.f32 %v3655, %v4321
      %v4394 = vadd.f32 %v3656, %v4324
      %v4395 = vadd.f32 %v3657, %v4329
      %v4396 = vadd.f32 %v3658, %v4332
      %v4397 = vadd.f32 %v3659, %v4337
      %v4398 = vadd.f32 %v3660, %v4340
      %v4399 = vadd.f32 %v3661, %v4345
      %v4400 = vadd.f32 %v3662, %v4348
      %v4401 = vadd.f32 %v3663, %v4353
      %v4402 = vadd.f32 %v3664, %v4356
      %v4403 = vadd.f32 %v3665, %v4361
      %v4404 = vadd.f32 %v3666, %v4364
      %v4405 = vadd.f32 %v3667, %v4369
      %v4406 = vadd.f32 %v3668, %v4372
      %v4407 = vld [vmem:[%s3298] sm:$0xe]
      %v4408 = vld [vmem:[%s3298 + $0xc] sm:$0xe]
      %v4409 = vld [vmem:[%s3298 + $0x18] sm:$0xe]
      %v4410 = vld [vmem:[%s3298 + $0x24] sm:$0xe]
      %v4411 = vld [vmem:[%s3298 + $0x30] sm:$0xe]
      %v4412 = vld [vmem:[%s3298 + $0x3c] sm:$0xe]
      %v4413 = vld [vmem:[%s3298 + $0x48] sm:$0xe]
      %v4414 = vld [vmem:[%s3298 + $0x54] sm:$0xe]
      %v4415 = vld [vmem:[%s3298 + $0x60] sm:$0xe]
      %v4416 = vld [vmem:[%s3298 + $0x6c] sm:$0xe]
      %v4417 = vld [vmem:[%s3298 + $0x78] sm:$0xe]
      %v4418 = vld [vmem:[%s3298 + $0x84] sm:$0xe]
      %v4419 = vld [vmem:[%s3298 + $0x90] sm:$0xe]
      %v4420 = vld [vmem:[%s3298 + $0x9c] sm:$0xe]
      %v4421 = vld [vmem:[%s3298 + $0xa8] sm:$0xe]
      %v4422 = vld [vmem:[%s3298 + $0xb4] sm:$0xe]
      %v4471 = vrot.slane %v4407, 5
      %v4472 = vrot.slane %v4471, 4
      %v4473 = vrot.slane %v3670, 5
      %v4474 = vsel %vm1288, %v4472, %v4473
      %v4475 = vrot.slane %v4473, 4
      %v4476 = vrot.slane %v3671, 5
      %v4477 = vsel %vm1288, %v4475, %v4476
      %v4478 = vrot.slane %v4408, 5
      %v4479 = vrot.slane %v4478, 4
      %v4480 = vrot.slane %v3673, 5
      %v4481 = vsel %vm1288, %v4479, %v4480
      %v4482 = vrot.slane %v4480, 4
      %v4483 = vrot.slane %v3674, 5
      %v4484 = vsel %vm1288, %v4482, %v4483
      %v4485 = vrot.slane %v4409, 5
      %v4486 = vrot.slane %v4485, 4
      %v4487 = vrot.slane %v3676, 5
      %v4488 = vsel %vm1288, %v4486, %v4487
      %v4489 = vrot.slane %v4487, 4
      %v4490 = vrot.slane %v3677, 5
      %v4491 = vsel %vm1288, %v4489, %v4490
      %v4492 = vrot.slane %v4410, 5
      %v4493 = vrot.slane %v4492, 4
      %v4494 = vrot.slane %v3679, 5
      %v4495 = vsel %vm1288, %v4493, %v4494
      %v4496 = vrot.slane %v4494, 4
      %v4497 = vrot.slane %v3680, 5
      %v4498 = vsel %vm1288, %v4496, %v4497
      %v4499 = vrot.slane %v4411, 5
      %v4500 = vrot.slane %v4499, 4
      %v4501 = vrot.slane %v3682, 5
      %v4502 = vsel %vm1288, %v4500, %v4501
      %v4503 = vrot.slane %v4501, 4
      %v4504 = vrot.slane %v3683, 5
      %v4505 = vsel %vm1288, %v4503, %v4504
      %v4506 = vrot.slane %v4412, 5
      %v4507 = vrot.slane %v4506, 4
      %v4508 = vrot.slane %v3685, 5
      %v4509 = vsel %vm1288, %v4507, %v4508
      %v4510 = vrot.slane %v4508, 4
      %v4511 = vrot.slane %v3686, 5
      %v4512 = vsel %vm1288, %v4510, %v4511
      %v4513 = vrot.slane %v4413, 5
      %v4514 = vrot.slane %v4513, 4
      %v4515 = vrot.slane %v3688, 5
      %v4516 = vsel %vm1288, %v4514, %v4515
      %v4517 = vrot.slane %v4515, 4
      %v4518 = vrot.slane %v3689, 5
      %v4519 = vsel %vm1288, %v4517, %v4518
      %v4520 = vrot.slane %v4414, 5
      %v4521 = vrot.slane %v4520, 4
      %v4522 = vrot.slane %v3691, 5
      %v4523 = vsel %vm1288, %v4521, %v4522
      %v4524 = vrot.slane %v4522, 4
      %v4525 = vrot.slane %v3692, 5
      %v4526 = vsel %vm1288, %v4524, %v4525
      %v4527 = vrot.slane %v4415, 5
      %v4528 = vrot.slane %v4527, 4
      %v4529 = vrot.slane %v3694, 5
      %v4530 = vsel %vm1288, %v4528, %v4529
      %v4531 = vrot.slane %v4529, 4
      %v4532 = vrot.slane %v3695, 5
      %v4533 = vsel %vm1288, %v4531, %v4532
      %v4534 = vrot.slane %v4416, 5
      %v4535 = vrot.slane %v4534, 4
      %v4536 = vrot.slane %v3697, 5
      %v4537 = vsel %vm1288, %v4535, %v4536
      %v4538 = vrot.slane %v4536, 4
      %v4539 = vrot.slane %v3698, 5
      %v4540 = vsel %vm1288, %v4538, %v4539
      %v4541 = vrot.slane %v4417, 5
      %v4542 = vrot.slane %v4541, 4
      %v4543 = vrot.slane %v3700, 5
      %v4544 = vsel %vm1288, %v4542, %v4543
      %v4545 = vrot.slane %v4543, 4
      %v4546 = vrot.slane %v3701, 5
      %v4547 = vsel %vm1288, %v4545, %v4546
      %v4548 = vrot.slane %v4418, 5
      %v4549 = vrot.slane %v4548, 4
      %v4550 = vrot.slane %v3703, 5
      %v4551 = vsel %vm1288, %v4549, %v4550
      %v4552 = vrot.slane %v4550, 4
      %v4553 = vrot.slane %v3704, 5
      %v4554 = vsel %vm1288, %v4552, %v4553
      %v4555 = vrot.slane %v4419, 5
      %v4556 = vrot.slane %v4555, 4
      %v4557 = vrot.slane %v3706, 5
      %v4558 = vsel %vm1288, %v4556, %v4557
      %v4559 = vrot.slane %v4557, 4
      %v4560 = vrot.slane %v3707, 5
      %v4561 = vsel %vm1288, %v4559, %v4560
      %v4562 = vrot.slane %v4420, 5
      %v4563 = vrot.slane %v4562, 4
      %v4564 = vrot.slane %v3709, 5
      %v4565 = vsel %vm1288, %v4563, %v4564
      %v4566 = vrot.slane %v4564, 4
      %v4567 = vrot.slane %v3710, 5
      %v4568 = vsel %vm1288, %v4566, %v4567
      %v4569 = vrot.slane %v4421, 5
      %v4570 = vrot.slane %v4569, 4
      %v4571 = vrot.slane %v3712, 5
      %v4572 = vsel %vm1288, %v4570, %v4571
      %v4573 = vrot.slane %v4571, 4
      %v4574 = vrot.slane %v3713, 5
      %v4575 = vsel %vm1288, %v4573, %v4574
      %v4576 = vrot.slane %v4422, 5
      %v4577 = vrot.slane %v4576, 4
      %v4578 = vrot.slane %v3715, 5
      %v4579 = vsel %vm1288, %v4577, %v4578
      %v4580 = vrot.slane %v4578, 4
      %v4581 = vrot.slane %v3716, 5
      %v4582 = vsel %vm1288, %v4580, %v4581
      %s4583 = scalar_lea.vmem %s210, 128
      %v4584 = vld [vmem:[%s4583] sm:$0xf]
      %v4585 = vld [vmem:[%s4583 + $0x4] sm:$0xf]
      %v4586 = vld [vmem:[%s4583 + $0x8] sm:$0xf]
      %v4587 = vld [vmem:[%s4583 + $0xc] sm:$0xf]
      %v4588 = vunpack.c.l.b16 %v4474
      %v4589 = vunpack.c.l.b16 %v4477
      %v4590 = vunpack.c.l.b16 %v4481
      %v4591 = vunpack.c.l.b16 %v4484
      %v4592 = vunpack.c.l.b16 %v4488
      %v4593 = vunpack.c.l.b16 %v4491
      %v4594 = vunpack.c.l.b16 %v4495
      %v4595 = vunpack.c.l.b16 %v4498
      %v4596 = vunpack.c.l.b16 %v4502
      %v4597 = vunpack.c.l.b16 %v4505
      %v4598 = vunpack.c.l.b16 %v4509
      %v4599 = vunpack.c.l.b16 %v4512
      %v4600 = vunpack.c.l.b16 %v4516
      %v4601 = vunpack.c.l.b16 %v4519
      %v4602 = vunpack.c.l.b16 %v4523
      %v4603 = vunpack.c.l.b16 %v4526
      %v4604 = vunpack.c.l.b16 %v4530
      %v4605 = vunpack.c.l.b16 %v4533
      %v4606 = vunpack.c.l.b16 %v4537
      %v4607 = vunpack.c.l.b16 %v4540
      %v4608 = vunpack.c.l.b16 %v4544
      %v4609 = vunpack.c.l.b16 %v4547
      %v4610 = vunpack.c.l.b16 %v4551
      %v4611 = vunpack.c.l.b16 %v4554
      %v4612 = vunpack.c.l.b16 %v4558
      %v4613 = vunpack.c.l.b16 %v4561
      %v4614 = vunpack.c.l.b16 %v4565
      %v4615 = vunpack.c.l.b16 %v4568
      %v4616 = vunpack.c.l.b16 %v4572
      %v4617 = vunpack.c.l.b16 %v4575
      %v4618 = vunpack.c.l.b16 %v4579
      %v4619 = vunpack.c.l.b16 %v4582
      %v4620 = vpack.c.b16 %v4589, %v4588
      %v4621 = vpack.c.b16 %v4591, %v4590
      %v4622 = vpack.c.b16 %v4593, %v4592
      %v4623 = vpack.c.b16 %v4595, %v4594
      %v4624 = vpack.c.b16 %v4597, %v4596
      %v4625 = vpack.c.b16 %v4599, %v4598
      %v4626 = vpack.c.b16 %v4601, %v4600
      %v4627 = vpack.c.b16 %v4603, %v4602
      %v4628 = vpack.c.b16 %v4605, %v4604
      %v4629 = vpack.c.b16 %v4607, %v4606
      %v4630 = vpack.c.b16 %v4609, %v4608
      %v4631 = vpack.c.b16 %v4611, %v4610
      %v4632 = vpack.c.b16 %v4613, %v4612
      %v4633 = vpack.c.b16 %v4615, %v4614
      %v4634 = vpack.c.b16 %v4617, %v4616
      %v4635 = vpack.c.b16 %v4619, %v4618
      %v4640 = vunpack.c.l.b16 %v4584
      %v4641 = vunpack.c.l.b16 %v4585
      %v4642 = vunpack.c.l.b16 %v4586
      %v4643 = vunpack.c.l.b16 %v4587
      %v4644 = vpack.c.b16 %v4641, %v4640
      %v4645 = vpack.c.b16 %v4643, %v4642
      %v4649 = vsel %vm727, %v4620, 0
      %v4652 = vsel %vm727, %v4621, 0
      %v4655 = vsel %vm727, %v4622, 0
      %v4658 = vsel %vm727, %v4623, 0
      %v4661 = vsel %vm727, %v4624, 0
      %v4664 = vsel %vm727, %v4625, 0
      %v4667 = vsel %vm727, %v4626, 0
      %v4670 = vsel %vm727, %v4627, 0
      %v4673 = vsel %vm727, %v4628, 0
      %v4676 = vsel %vm727, %v4629, 0
      %v4679 = vsel %vm727, %v4630, 0
      %v4682 = vsel %vm727, %v4631, 0
      %v4685 = vsel %vm727, %v4632, 0
      %v4688 = vsel %vm727, %v4633, 0
      %v4691 = vsel %vm727, %v4634, 0
      %v4694 = vsel %vm727, %v4635, 0
      %4696 = vmatprep.subr.bf16.mxu0 0
      %4697 = vmatpush1.bf16.msra.mxu0 %v4644
      %4698 = vmatprep.subr.bf16.mxu0 0
      %4699 = vmatpush1.bf16.msra.mxu0 %v4645
      %4700 = vmatprep.subr.bf16.mxu0 0
      %4701 = vmatpush1.bf16.msra.mxu0 0
      %4702 = vmatprep.subr.bf16.mxu0 0
      %4703 = vmatpush1.bf16.msra.mxu0 0
      %4704 = vmatprep.subr.bf16.mxu0 0
      %4705 = vmatpush1.bf16.msra.mxu0 0
      %4706 = vmatprep.subr.bf16.mxu0 0
      %4707 = vmatpush1.bf16.msra.mxu0 0
      %4708 = vmatprep.subr.bf16.mxu0 0
      %4709 = vmatpush1.bf16.msra.mxu0 0
      %4710 = vmatprep.subr.bf16.mxu0 0
      %4711 = vmatpush1.bf16.msra.mxu0 0
      %4712 = vmatprep.subr.bf16.mxu0 0
      %4713 = vmatpush1.bf16.msra.mxu0 0
      %4714 = vmatprep.subr.bf16.mxu0 0
      %4715 = vmatpush1.bf16.msra.mxu0 0
      %4716 = vmatprep.subr.bf16.mxu0 0
      %4717 = vmatpush1.bf16.msra.mxu0 0
      %4718 = vmatprep.subr.bf16.mxu0 0
      %4719 = vmatpush1.bf16.msra.mxu0 0
      %4720 = vmatprep.subr.bf16.mxu0 0
      %4721 = vmatpush1.bf16.msra.mxu0 0
      %4722 = vmatprep.subr.bf16.mxu0 0
      %4723 = vmatpush1.bf16.msra.mxu0 0
      %4724 = vmatprep.subr.bf16.mxu0 0
      %4725 = vmatpush1.bf16.msra.mxu0 0
      %4726 = vmatprep.subr.bf16.mxu0 0
      %4727 = vmatpush1.bf16.msra.mxu0 0
      %4728 = vmatprep.mubr.bf16.mxu0 0
      %4729 = vmatmul.mubr.bf16.gmra.mrb[0].mxu0 %v4649
      %v4730 = vpop.f32.mrb[0].mxu0
      %v4731 = vadd.f32 0.0, %v4730
      %v4732 = vpop.f32.mrb[0].mxu0
      %v4733 = vpop.f32.mrb[0].mxu0
      %v4734 = vadd.f32 0.0, %v4733
      %v4735 = vpop.f32.mrb[0].mxu0
      %4736 = vmatprep.mubr.bf16.mxu0 0
      %4737 = vmatmul.mubr.bf16.gmra.mrb[0].mxu0 %v4652
      %v4738 = vpop.f32.mrb[0].mxu0
      %v4739 = vadd.f32 0.0, %v4738
      %v4740 = vpop.f32.mrb[0].mxu0
      %v4741 = vpop.f32.mrb[0].mxu0
      %v4742 = vadd.f32 0.0, %v4741
      %v4743 = vpop.f32.mrb[0].mxu0
      %4744 = vmatprep.mubr.bf16.mxu0 0
      %4745 = vmatmul.mubr.bf16.gmra.mrb[0].mxu0 %v4655
      %v4746 = vpop.f32.mrb[0].mxu0
      %v4747 = vadd.f32 0.0, %v4746
      %v4748 = vpop.f32.mrb[0].mxu0
      %v4749 = vpop.f32.mrb[0].mxu0
      %v4750 = vadd.f32 0.0, %v4749
      %v4751 = vpop.f32.mrb[0].mxu0
      %4752 = vmatprep.mubr.bf16.mxu0 0
      %4753 = vmatmul.mubr.bf16.gmra.mrb[0].mxu0 %v4658
      %v4754 = vpop.f32.mrb[0].mxu0
      %v4755 = vadd.f32 0.0, %v4754
      %v4756 = vpop.f32.mrb[0].mxu0
      %v4757 = vpop.f32.mrb[0].mxu0
      %v4758 = vadd.f32 0.0, %v4757
      %v4759 = vpop.f32.mrb[0].mxu0
      %4760 = vmatprep.mubr.bf16.mxu0 0
      %4761 = vmatmul.mubr.bf16.gmra.mrb[0].mxu0 %v4661
      %v4762 = vpop.f32.mrb[0].mxu0
      %v4763 = vadd.f32 0.0, %v4762
      %v4764 = vpop.f32.mrb[0].mxu0
      %v4765 = vpop.f32.mrb[0].mxu0
      %v4766 = vadd.f32 0.0, %v4765
      %v4767 = vpop.f32.mrb[0].mxu0
      %4768 = vmatprep.mubr.bf16.mxu0 0
      %4769 = vmatmul.mubr.bf16.gmra.mrb[0].mxu0 %v4664
      %v4770 = vpop.f32.mrb[0].mxu0
      %v4771 = vadd.f32 0.0, %v4770
      %v4772 = vpop.f32.mrb[0].mxu0
      %v4773 = vpop.f32.mrb[0].mxu0
      %v4774 = vadd.f32 0.0, %v4773
      %v4775 = vpop.f32.mrb[0].mxu0
      %4776 = vmatprep.mubr.bf16.mxu0 0
      %4777 = vmatmul.mubr.bf16.gmra.mrb[0].mxu0 %v4667
      %v4778 = vpop.f32.mrb[0].mxu0
      %v4779 = vadd.f32 0.0, %v4778
      %v4780 = vpop.f32.mrb[0].mxu0
      %v4781 = vpop.f32.mrb[0].mxu0
      %v4782 = vadd.f32 0.0, %v4781
      %v4783 = vpop.f32.mrb[0].mxu0
      %4784 = vmatprep.mubr.bf16.mxu0 0
      %4785 = vmatmul.mubr.bf16.gmra.mrb[0].mxu0 %v4670
      %v4786 = vpop.f32.mrb[0].mxu0
      %v4787 = vadd.f32 0.0, %v4786
      %v4788 = vpop.f32.mrb[0].mxu0
      %v4789 = vpop.f32.mrb[0].mxu0
      %v4790 = vadd.f32 0.0, %v4789
      %v4791 = vpop.f32.mrb[0].mxu0
      %4792 = vmatprep.mubr.bf16.mxu0 0
      %4793 = vmatmul.mubr.bf16.gmra.mrb[0].mxu0 %v4673
      %v4794 = vpop.f32.mrb[0].mxu0
      %v4795 = vadd.f32 0.0, %v4794
      %v4796 = vpop.f32.mrb[0].mxu0
      %v4797 = vpop.f32.mrb[0].mxu0
      %v4798 = vadd.f32 0.0, %v4797
      %v4799 = vpop.f32.mrb[0].mxu0
      %4800 = vmatprep.mubr.bf16.mxu0 0
      %4801 = vmatmul.mubr.bf16.gmra.mrb[0].mxu0 %v4676
      %v4802 = vpop.f32.mrb[0].mxu0
      %v4803 = vadd.f32 0.0, %v4802
      %v4804 = vpop.f32.mrb[0].mxu0
      %v4805 = vpop.f32.mrb[0].mxu0
      %v4806 = vadd.f32 0.0, %v4805
      %v4807 = vpop.f32.mrb[0].mxu0
      %4808 = vmatprep.mubr.bf16.mxu0 0
      %4809 = vmatmul.mubr.bf16.gmra.mrb[0].mxu0 %v4679
      %v4810 = vpop.f32.mrb[0].mxu0
      %v4811 = vadd.f32 0.0, %v4810
      %v4812 = vpop.f32.mrb[0].mxu0
      %v4813 = vpop.f32.mrb[0].mxu0
      %v4814 = vadd.f32 0.0, %v4813
      %v4815 = vpop.f32.mrb[0].mxu0
      %4816 = vmatprep.mubr.bf16.mxu0 0
      %4817 = vmatmul.mubr.bf16.gmra.mrb[0].mxu0 %v4682
      %v4818 = vpop.f32.mrb[0].mxu0
      %v4819 = vadd.f32 0.0, %v4818
      %v4820 = vpop.f32.mrb[0].mxu0
      %v4821 = vpop.f32.mrb[0].mxu0
      %v4822 = vadd.f32 0.0, %v4821
      %v4823 = vpop.f32.mrb[0].mxu0
      %4824 = vmatprep.mubr.bf16.mxu0 0
      %4825 = vmatmul.mubr.bf16.gmra.mrb[0].mxu0 %v4685
      %v4826 = vpop.f32.mrb[0].mxu0
      %v4827 = vadd.f32 0.0, %v4826
      %v4828 = vpop.f32.mrb[0].mxu0
      %v4829 = vpop.f32.mrb[0].mxu0
      %v4830 = vadd.f32 0.0, %v4829
      %v4831 = vpop.f32.mrb[0].mxu0
      %4832 = vmatprep.mubr.bf16.mxu0 0
      %4833 = vmatmul.mubr.bf16.gmra.mrb[0].mxu0 %v4688
      %v4834 = vpop.f32.mrb[0].mxu0
      %v4835 = vadd.f32 0.0, %v4834
      %v4836 = vpop.f32.mrb[0].mxu0
      %v4837 = vpop.f32.mrb[0].mxu0
      %v4838 = vadd.f32 0.0, %v4837
      %v4839 = vpop.f32.mrb[0].mxu0
      %4840 = vmatprep.mubr.bf16.mxu0 0
      %4841 = vmatmul.mubr.bf16.gmra.mrb[0].mxu0 %v4691
      %v4842 = vpop.f32.mrb[0].mxu0
      %v4843 = vadd.f32 0.0, %v4842
      %v4844 = vpop.f32.mrb[0].mxu0
      %v4845 = vpop.f32.mrb[0].mxu0
      %v4846 = vadd.f32 0.0, %v4845
      %v4847 = vpop.f32.mrb[0].mxu0
      %4848 = vmatprep.mubr.bf16.mxu0 0
      %4849 = vmatmul.mubr.bf16.gmra.mrb[0].mxu0 %v4694
      %v4850 = vpop.f32.mrb[0].mxu0
      %v4851 = vadd.f32 0.0, %v4850
      %v4852 = vpop.f32.mrb[0].mxu0
      %v4853 = vpop.f32.mrb[0].mxu0
      %v4854 = vadd.f32 0.0, %v4853
      %v4855 = vpop.f32.mrb[0].mxu0
      %4856 = vdwg.mxu0
      %v4857 = vadd.f32 %v4375, %v4731
      %v4858 = vadd.f32 %v4376, %v4734
      %v4859 = vadd.f32 %v4377, %v4739
      %v4860 = vadd.f32 %v4378, %v4742
      %v4861 = vadd.f32 %v4379, %v4747
      %v4862 = vadd.f32 %v4380, %v4750
      %v4863 = vadd.f32 %v4381, %v4755
      %v4864 = vadd.f32 %v4382, %v4758
      %v4865 = vadd.f32 %v4383, %v4763
      %v4866 = vadd.f32 %v4384, %v4766
      %v4867 = vadd.f32 %v4385, %v4771
      %v4868 = vadd.f32 %v4386, %v4774
      %v4869 = vadd.f32 %v4387, %v4779
      %v4870 = vadd.f32 %v4388, %v4782
      %v4871 = vadd.f32 %v4389, %v4787
      %v4872 = vadd.f32 %v4390, %v4790
      %v4873 = vadd.f32 %v4391, %v4795
      %v4874 = vadd.f32 %v4392, %v4798
      %v4875 = vadd.f32 %v4393, %v4803
      %v4876 = vadd.f32 %v4394, %v4806
      %v4877 = vadd.f32 %v4395, %v4811
      %v4878 = vadd.f32 %v4396, %v4814
      %v4879 = vadd.f32 %v4397, %v4819
      %v4880 = vadd.f32 %v4398, %v4822
      %v4881 = vadd.f32 %v4399, %v4827
      %v4882 = vadd.f32 %v4400, %v4830
      %v4883 = vadd.f32 %v4401, %v4835
      %v4884 = vadd.f32 %v4402, %v4838
      %v4885 = vadd.f32 %v4403, %v4843
      %v4886 = vadd.f32 %v4404, %v4846
      %v4887 = vadd.f32 %v4405, %v4851
      %v4888 = vadd.f32 %v4406, %v4854
      %v4889 = vld [vmem:[%s213] sm:$0x1]
      %v4891 = vlaneseq
      %v4892 = vshrl.u32 %v4891, 7
      %v4893 = vsub.s32 0, %v4892
      %v4894 = vrot.slane %v4889, %v4893
      %v4896 = vadd.f32 %v4857, %v4894
      %v4897 = vadd.f32 %v4858, %v4894
      %v4898 = vadd.f32 %v4859, %v4894
      %v4899 = vadd.f32 %v4860, %v4894
      %v4900 = vadd.f32 %v4861, %v4894
      %v4901 = vadd.f32 %v4862, %v4894
      %v4902 = vadd.f32 %v4863, %v4894
      %v4903 = vadd.f32 %v4864, %v4894
      %v4904 = vadd.f32 %v4865, %v4894
      %v4905 = vadd.f32 %v4866, %v4894
      %v4906 = vadd.f32 %v4867, %v4894
      %v4907 = vadd.f32 %v4868, %v4894
      %v4908 = vadd.f32 %v4869, %v4894
      %v4909 = vadd.f32 %v4870, %v4894
      %v4910 = vadd.f32 %v4871, %v4894
      %v4911 = vadd.f32 %v4872, %v4894
      %v4912 = vadd.f32 %v4873, %v4894
      %v4913 = vadd.f32 %v4874, %v4894
      %v4914 = vadd.f32 %v4875, %v4894
      %v4915 = vadd.f32 %v4876, %v4894
      %v4916 = vadd.f32 %v4877, %v4894
      %v4917 = vadd.f32 %v4878, %v4894
      %v4918 = vadd.f32 %v4879, %v4894
      %v4919 = vadd.f32 %v4880, %v4894
      %v4920 = vadd.f32 %v4881, %v4894
      %v4921 = vadd.f32 %v4882, %v4894
      %v4922 = vadd.f32 %v4883, %v4894
      %v4923 = vadd.f32 %v4884, %v4894
      %v4924 = vadd.f32 %v4885, %v4894
      %v4925 = vadd.f32 %v4886, %v4894
      %v4926 = vadd.f32 %v4887, %v4894
      %v4927 = vadd.f32 %v4888, %v4894
      %v4928 = vmax.f32 %v4896, 0.0
      %v4929 = vmax.f32 %v4897, 0.0
      %v4930 = vmax.f32 %v4898, 0.0
      %v4931 = vmax.f32 %v4899, 0.0
      %v4932 = vmax.f32 %v4900, 0.0
      %v4933 = vmax.f32 %v4901, 0.0
      %v4934 = vmax.f32 %v4902, 0.0
      %v4935 = vmax.f32 %v4903, 0.0
      %v4936 = vmax.f32 %v4904, 0.0
      %v4937 = vmax.f32 %v4905, 0.0
      %v4938 = vmax.f32 %v4906, 0.0
      %v4939 = vmax.f32 %v4907, 0.0
      %v4940 = vmax.f32 %v4908, 0.0
      %v4941 = vmax.f32 %v4909, 0.0
      %v4942 = vmax.f32 %v4910, 0.0
      %v4943 = vmax.f32 %v4911, 0.0
      %v4944 = vmax.f32 %v4912, 0.0
      %v4945 = vmax.f32 %v4913, 0.0
      %v4946 = vmax.f32 %v4914, 0.0
      %v4947 = vmax.f32 %v4915, 0.0
      %v4948 = vmax.f32 %v4916, 0.0
      %v4949 = vmax.f32 %v4917, 0.0
      %v4950 = vmax.f32 %v4918, 0.0
      %v4951 = vmax.f32 %v4919, 0.0
      %v4952 = vmax.f32 %v4920, 0.0
      %v4953 = vmax.f32 %v4921, 0.0
      %v4954 = vmax.f32 %v4922, 0.0
      %v4955 = vmax.f32 %v4923, 0.0
      %v4956 = vmax.f32 %v4924, 0.0
      %v4957 = vmax.f32 %v4925, 0.0
      %v4958 = vmax.f32 %v4926, 0.0
      %v4959 = vmax.f32 %v4927, 0.0
      %4960 = vst.msk [vmem:[%s221] sm:$0xff] %vm727, %v4928
      %4961 = vst.msk [vmem:[%s221 + $0x8] sm:$0xff] %vm727, %v4929
      %4962 = vst.msk [vmem:[%s221 + $0x10] sm:$0xff] %vm727, %v4930
      %4963 = vst.msk [vmem:[%s221 + $0x18] sm:$0xff] %vm727, %v4931
      %4964 = vst.msk [vmem:[%s221 + $0x20] sm:$0xff] %vm727, %v4932
      %4965 = vst.msk [vmem:[%s221 + $0x28] sm:$0xff] %vm727, %v4933
      %4966 = vst.msk [vmem:[%s221 + $0x30] sm:$0xff] %vm727, %v4934
      %4967 = vst.msk [vmem:[%s221 + $0x38] sm:$0xff] %vm727, %v4935
      %4968 = vst.msk [vmem:[%s221 + $0x40] sm:$0xff] %vm727, %v4936
      %4969 = vst.msk [vmem:[%s221 + $0x48] sm:$0xff] %vm727, %v4937
      %4970 = vst.msk [vmem:[%s221 + $0x50] sm:$0xff] %vm727, %v4938
      %4971 = vst.msk [vmem:[%s221 + $0x58] sm:$0xff] %vm727, %v4939
      %4972 = vst.msk [vmem:[%s221 + $0x60] sm:$0xff] %vm727, %v4940
      %4973 = vst.msk [vmem:[%s221 + $0x68] sm:$0xff] %vm727, %v4941
      %4974 = vst.msk [vmem:[%s221 + $0x70] sm:$0xff] %vm727, %v4942
      %4975 = vst.msk [vmem:[%s221 + $0x78] sm:$0xff] %vm727, %v4943
      %4976 = vst.msk [vmem:[%s221 + $0x80] sm:$0xff] %vm727, %v4944
      %4977 = vst.msk [vmem:[%s221 + $0x88] sm:$0xff] %vm727, %v4945
      %4978 = vst.msk [vmem:[%s221 + $0x90] sm:$0xff] %vm727, %v4946
      %4979 = vst.msk [vmem:[%s221 + $0x98] sm:$0xff] %vm727, %v4947
      %4980 = vst.msk [vmem:[%s221 + $0xa0] sm:$0xff] %vm727, %v4948
      %4981 = vst.msk [vmem:[%s221 + $0xa8] sm:$0xff] %vm727, %v4949
      %4982 = vst.msk [vmem:[%s221 + $0xb0] sm:$0xff] %vm727, %v4950
      %4983 = vst.msk [vmem:[%s221 + $0xb8] sm:$0xff] %vm727, %v4951
      %4984 = vst.msk [vmem:[%s221 + $0xc0] sm:$0xff] %vm727, %v4952
      %4985 = vst.msk [vmem:[%s221 + $0xc8] sm:$0xff] %vm727, %v4953
      %4986 = vst.msk [vmem:[%s221 + $0xd0] sm:$0xff] %vm727, %v4954
      %4987 = vst.msk [vmem:[%s221 + $0xd8] sm:$0xff] %vm727, %v4955
      %4988 = vst.msk [vmem:[%s221 + $0xe0] sm:$0xff] %vm727, %v4956
      %4989 = vst.msk [vmem:[%s221 + $0xe8] sm:$0xff] %vm727, %v4957
      %4990 = vst.msk [vmem:[%s221 + $0xf0] sm:$0xff] %vm727, %v4958
      %4991 = vst.msk [vmem:[%s221 + $0xf8] sm:$0xff] %vm727, %v4959
      %p4992 = scmp.lt.s32.totalorder %s18, 1
      %s4993 = scalar_select %p4992, %s18, 1
      %p4994 = scmp.lt.s32.totalorder %s19, 0
      %s4995 = scalar_select %p4994, %s19, 0
      %s4996 = smul.addr %s4993, 32
      %s4997 = sadd.s32 %s4995, %s4996
      %s4998 = smul.addr %s4997, 8
      %s4999 = scalar_lea.vmem %s3, %s4998
      // Predicated region
      $region33: #{bottleneck_forward.5} parent=31 // pred_check
        %p5000 = pneg %p124
      $region34: #{bottleneck_forward.5} parent=31 // pred_check_branch
        %5002 = sbr.rel (%p5000) target = $region36
      $region35: #{bottleneck_forward.5} parent=31 // pred_region
        _
      $region36: #{bottleneck_forward.5} parent=31 // pred_fallthru
        _
    $region32: #{bottleneck_forward.5} parent=5 // pred_fallthru
      _
    %p5003 = scmp.le.s32.totalorder 2, %s9
    // Predicated region
    $region37: #{bottleneck_forward.5} parent=5 // pred_check
      %p5004 = pneg %p5003
    $region38: #{bottleneck_forward.5} parent=5 // pred_check_branch
      %5006 = sbr.rel (%p5004) target = $region40
    $region39: #{bottleneck_forward.5} parent=5 // pred_region
      %s5007 = ssub.s32 %s9, 2
      // Predicated region
      $region41: #{bottleneck_forward.5} parent=39 // pred_check
        %p5008 = pneg %p130
      $region42: #{bottleneck_forward.5} parent=39 // pred_check_branch
        %5010 = sbr.rel (%p5008) target = $region44
      $region43: #{bottleneck_forward.5} parent=39 // pred_region
        %p5011 = scmp.lt.s32.totalorder %s20, 1
        %s5012 = scalar_select %p5011, %s20, 1
        %p5013 = scmp.lt.s32.totalorder %s21, 0
        %s5014 = scalar_select %p5013, %s21, 0
        %s5015 = smul.addr %s5012, 32
        %s5016 = sadd.s32 %s5014, %s5015
        %s5017 = smul.addr %s5016, 8
        %s5018 = scalar_lea.vmem %s3, %s5017
      $region44: #{bottleneck_forward.5} parent=39 // pred_fallthru
        _
    $region40: #{bottleneck_forward.5} parent=5 // pred_fallthru
      _
  $region6: #{bottleneck_forward.5} parent=0 // loop_footer
    %s13 = sadd.s32 1, %s9
  $region7: #{bottleneck_forward.5} parent=0 // loop_footer_branch
    %8 = sbr.rel target = $region3
  $region8: #{bottleneck_forward.5} parent=0 // loop_exit
    _

</llo_original>
